<compile_context>
chip_gen: v5e
topology: v5e:2x2
jax: 0.10.0
libtpu: 0.0.40
codegen_flags: <defaults>
</compile_context>

<pallas_src>
import functools

import jax
import jax.numpy as jnp
from jax import lax
from jax.experimental import pallas as pl
from jax.experimental.pallas import tpu as pltpu


N_PROJ = 100        # fc_proj output width / SPD size (fixed by the module)
N_PAD_COLS = 128    # lane-dense padding of the SPD column dim (LogEig slab)
N_PAD_ROWS = 112    # sublane padding of the SPD row dim (bf16 tile multiple)
C_PAD = 128         # lane-dense padding of the class dimension
NUM_CLASSES = 10


# ---------- kernel 1: fc_proj + centering + covariance + stem BiMap ---------- #

def _cov_bimap_kernel(x_ref, fcw_ref, fcb_ref, stemw_ref, o_ref, cov_ref, *,
                      factor, eps, total_t, tile_t, ragged):
    kt = pl.program_id(1)

    @pl.when(kt == 0)
    def _():
        cov_ref[...] = jnp.zeros_like(cov_ref)

    # fc_proj on the native (512, tile_t) frame tile:
    # (100,512)@(512,tile_t), bf16 operands / f32 accumulation; bias is
    # per-feature (sublane) and broadcasts over frames (lanes).
    x_bf = x_ref[0].astype(jnp.bfloat16)
    proj = jnp.dot(fcw_ref[...], x_bf, preferred_element_type=jnp.float32)
    proj = proj + fcb_ref[...]
    # torch: current_frame - mean(current_frame, dim=2).unsqueeze(2)
    # i.e. per-frame centering over the 100 projected features (sublane reduce).
    proj = proj - jnp.mean(proj, axis=0, keepdims=True)
    if ragged:
        # Ragged last tile (cdiv grid): zero the frames past T so they
        # contribute nothing to the covariance accumulation.
        fidx = kt * tile_t + lax.broadcasted_iota(jnp.int32, (1, tile_t), 1)
        proj = jnp.where(fidx < total_t, proj, 0.0)
    # Accumulate sum_t c_t c_t^T in f32 (SPD-critical path).
    cov_ref[...] += lax.dot_general(
        proj, proj, (((1,), (1,)), ((), ())), preferred_element_type=jnp.float32)

    @pl.when(kt == pl.num_programs(1) - 1)
    def _():
        cov = factor * cov_ref[...]
        d = cov.shape[0]
        diag = (lax.broadcasted_iota(jnp.int32, (d, d), 0) ==
                lax.broadcasted_iota(jnp.int32, (d, d), 1))
        # eps * trace regularization added on the diagonal (no eye input, no
        # per-step trace work -- one-time diagonal reduce at finalize only).
        lam = eps * jnp.sum(jnp.where(diag, cov, 0.0), keepdims=True)   # (1, 1)
        cov = jnp.where(diag, cov + lam, cov)
        # stem BiMap  W^T X W  (f32: conditioning feeds eigh/log downstream).
        w = stemw_ref[...]
        wtx = lax.dot_general(w, cov, (((0,), (0,)), ((), ())),
                              preferred_element_type=jnp.float32)
        o_ref[0] = jnp.dot(wtx, w, preferred_element_type=jnp.float32)
        # TODO(synk): BatchNormSPD at deterministic init == identity (header).


def _pick_tile_t(T):
    """Frame-tile size: big tiles (>=512) when possible, masked cdiv fallback."""
    if T <= 1024:
        return T, False                     # single tile; block == full dim
    for cand in (2048, 1024, 512, 256, 128):
        if T % cand == 0:
            return cand, False
    return 512, True                        # cdiv grid + in-kernel tail mask


def pooled_spd(x, fc_w_t, fc_b, stem_w):
    """x: (B, 512, T) f32 (native layout) -> stem-BiMap'd SPD (B, 100, 100) f32."""
    B, K, T = x.shape
    D = fc_w_t.shape[0]
    tile_t, ragged = _pick_tile_t(T)
    n_t = pl.cdiv(T, tile_t)
    factor = 1.0 / (T - 1)

    grid_spec = pltpu.PrefetchScalarGridSpec(
        num_scalar_prefetch=0,
        grid=(B, n_t),
        in_specs=[
            pl.BlockSpec((1, K, tile_t), lambda b, kt: (b, 0, kt)),   # x (native)
            pl.BlockSpec((D, K), lambda b, kt: (0, 0)),               # fc_w^T (resident)
            pl.BlockSpec((D, 1), lambda b, kt: (0, 0)),               # fc_b
            pl.BlockSpec((D, D), lambda b, kt: (0, 0)),               # stem_w
        ],
        out_specs=pl.BlockSpec((1, D, D), lambda b, kt: (b, 0, 0)),
        scratch_shapes=[pltpu.VMEM((D, D), jnp.float32)],
    )
    return pl.pallas_call(
        functools.partial(_cov_bimap_kernel, factor=factor, eps=1e-05,
                          total_t=T, tile_t=tile_t, ragged=ragged),
        out_shape=jax.ShapeDtypeStruct((B, D, D), jnp.float32),
        grid_spec=grid_spec,
        compiler_params=pltpu.CompilerParams(
            dimension_semantics=("parallel", "arbitrary")),
    )(x, fc_w_t, fc_b, stem_w)


# ------------------- kernel 2: LogEig reconstruction (padded) ---------------- #

def _logeig_kernel(u_ref, logl_ref, o_ref):
    u = u_ref[0]                                       # (128, 128) f32, zero-padded
    # Scale eigenvector columns by log(l) in f32, round the product to bf16
    # only for the MXU operands.
    scaled = (u * logl_ref[0]).astype(jnp.bfloat16)    # (128, 128)
    m = lax.dot_general(scaled, u.astype(jnp.bfloat16),
                        (((1,), (1,)), ((), ())),
                        preferred_element_type=jnp.float32)   # (128, 128) f32
    # Store only the 112 padded rows (bf16 sublane multiple): trims the
    # classifier K from 16384 to 14336 while keeping 128 lanes dense.
    o_ref[0] = m[:N_PAD_ROWS].astype(o_ref.dtype)


def logeig_reconstruct(eigvecs_pad, log_eigvals_pad):
    B, n, _ = eigvecs_pad.shape
    grid_spec = pltpu.PrefetchScalarGridSpec(
        num_scalar_prefetch=0,
        grid=(B,),
        in_specs=[pl.BlockSpec((1, n, n), lambda b: (b, 0, 0)),
                  pl.BlockSpec((1, 1, n), lambda b: (b, 0, 0))],
        out_specs=pl.BlockSpec((1, N_PAD_ROWS, n), lambda b: (b, 0, 0)),
    )
    return pl.pallas_call(
        _logeig_kernel,
        out_shape=jax.ShapeDtypeStruct((B, N_PAD_ROWS, n), jnp.bfloat16),
        grid_spec=grid_spec,
        compiler_params=pltpu.CompilerParams(dimension_semantics=("parallel",)),
    )(eigvecs_pad, log_eigvals_pad)


# ------------------ kernel 3: classifier (K-tiled, padded N) ----------------- #

def _classifier_kernel(x_ref, w_ref, b_ref, o_ref):
    k = pl.program_id(0)

    @pl.when(k == 0)
    def _():
        # Output block is resident across k (constant index_map): accumulate
        # directly into it, seeded with the bias (no f32 scratch, no epilogue).
        o_ref[...] = jnp.broadcast_to(b_ref[...], o_ref.shape)

    o_ref[...] += jnp.dot(x_ref[...], w_ref[...],
                          preferred_element_type=jnp.float32)


def classifier(feat, w, b):
    M, K = feat.shape
    _, N = w.shape
    # Few, large K tiles: the kernel is weight-streaming bound and per-step
    # overhead (~0.35us) is a real fraction of it at these sizes.
    tile_k = K
    if K > 8192:
        for cand in (8192, 7168, 6144, 4096, 2048, 1024, 512, 256, 128):
            if K % cand == 0:
                tile_k = cand
                break
    n_k = K // tile_k
    grid_spec = pltpu.PrefetchScalarGridSpec(
        num_scalar_prefetch=0,
        grid=(n_k,),
        in_specs=[pl.BlockSpec((M, tile_k), lambda k: (0, k)),
                  pl.BlockSpec((tile_k, N), lambda k: (k, 0)),
                  pl.BlockSpec((1, N), lambda k: (0, 0))],
        out_specs=pl.BlockSpec((M, N), lambda k: (0, 0)),
    )
    return pl.pallas_call(
        _classifier_kernel,
        out_shape=jax.ShapeDtypeStruct((M, N), jnp.float32),
        grid_spec=grid_spec,
        compiler_params=pltpu.CompilerParams(dimension_semantics=("arbitrary",)),
    )(feat, w, b)


# ------------------------------ Network forward ------------------------------ #

@jax.jit
def network_forward(x, params):
    # x: (B, 512, T) as in the PyTorch module -- consumed natively by kernel 1.
    B = x.shape[0]

    # Fused fc_proj -> centering -> covariance -> eps*trace reg -> stem BiMap.
    spd = pooled_spd(x, params["fc_w_t"], params["fc_b"],
                     params["stem_w"])                          # (B, 100, 100) f32

    # TODO(synk): genotype cells skipped (dependencies not provided, header).

    # LogEig: eigh is XLA glue (see header); reconstruction runs in Pallas on a
    # zero-padded slab so every store is lane/sublane dense.
    eigvals, eigvecs = jnp.linalg.eigh(spd)
    pad = N_PAD_COLS - N_PROJ
    u_pad = jnp.pad(eigvecs, ((0, 0), (0, pad), (0, pad)))       # f32
    logl_pad = jnp.pad(jnp.log(eigvals), ((0, 0), (0, pad)))[:, None, :]
    feat = logeig_reconstruct(u_pad, logl_pad)                   # (B, 112, 128) bf16

    # Classifier on the flattened padded LogEig features; class dim padded 10->128.
    logits_pad = classifier(feat.reshape(B, N_PAD_ROWS * N_PAD_COLS),
                            params["cls_w"], params["cls_b"])    # (B, 128) f32
    return logits_pad[:, :NUM_CLASSES]


# ----------------------------------- main ------------------------------------ #

if __name__ == "__main__":
    key = jax.random.PRNGKey(0)
    k_x, k_fc, k_stem, k_cls = jax.random.split(key, 4)

    B, T = 2, 8                  # small batch, few frames
    D_FEAT = 512                 # fixed by fc_proj = Linear(512, 100)

    x = jax.random.normal(k_x, (B, D_FEAT, T), jnp.float32)

    # fc_proj weights, stored pre-transposed (100, 512) bf16 so kernel 1 runs a
    # standard GEMM on the native (512, T) tile; f32 accumulate in-kernel.
    fc_w = 0.02 * jax.random.normal(k_fc, (D_FEAT, N_PROJ), jnp.float32)
    fc_w_t = fc_w.T.astype(jnp.bfloat16)                        # (100, 512)
    fc_b = jnp.zeros((N_PROJ, 1), jnp.float32)
    # BiMap weight: semi-orthogonal (Stiefel) matrix via QR; kept f32 (SPD path).
    stem_w = jnp.linalg.qr(
        jax.random.normal(k_stem, (N_PROJ, N_PROJ), jnp.float32))[0]

    # Classifier sized to the tensor flowing out of the implemented path
    # (one 100x100 channel; cells skipped): Linear(100*100, 10), packed once
    # into the padded layout used by the kernels:
    #   rows (i*100 + j) -> (i*128 + j) with i < 112, class dim 10 -> 128.
    cls_w = 0.01 * jax.random.normal(
        k_cls, (N_PROJ * N_PROJ, NUM_CLASSES), jnp.float32)
    cls_b = jnp.zeros((NUM_CLASSES,), jnp.float32)
    cls_w_pack = jnp.zeros((N_PAD_ROWS, N_PAD_COLS, C_PAD), jnp.float32)
    cls_w_pack = cls_w_pack.at[:N_PROJ, :N_PROJ, :NUM_CLASSES].set(
        cls_w.reshape(N_PROJ, N_PROJ, NUM_CLASSES))
    cls_w_pack = cls_w_pack.reshape(
        N_PAD_ROWS * N_PAD_COLS, C_PAD).astype(jnp.bfloat16)
    cls_b_pack = jnp.zeros((1, C_PAD), jnp.float32).at[0, :NUM_CLASSES].set(cls_b)

    params = dict(fc_w_t=fc_w_t, fc_b=fc_b, stem_w=stem_w,
                  cls_w=cls_w_pack, cls_b=cls_b_pack)

    logits = network_forward(x, params)
    jax.block_until_ready(logits)
    assert logits.shape == (B, NUM_CLASSES)
    assert bool(jnp.all(jnp.isfinite(logits)))
    print("KERNEL_OK")
</pallas_src>

<mosaic_0001>
module attributes {stable_mosaic.version = 11 : i64} {
  func.func @_cov_bimap_kernel(%arg0: i32, %arg1: i32, %arg2: memref<1x512x8xf32, #tpu.memory_space<vmem>>, %arg3: memref<100x512xbf16, #tpu.memory_space<vmem>>, %arg4: memref<100x1xf32, #tpu.memory_space<vmem>>, %arg5: memref<100x100xf32, #tpu.memory_space<vmem>>, %arg6: memref<1x100x100xf32, #tpu.memory_space<vmem>>, %arg7: memref<100x100xf32, #tpu.memory_space<vmem>>) attributes {dimension_semantics = [#tpu.dimension_semantics<parallel>, #tpu.dimension_semantics<arbitrary>], iteration_bounds = array<i64: 2, 1>, scalar_prefetch = 0 : i64, scratch_operands = 1 : i64, tpu.core_type = #tpu.core_type<tc>, window_params = [{transform_indices = @transform_0, window_bounds = array<i64: 1, 512, 8>}, {pipeline_mode = #tpu.pipeline_mode<synchronous>, transform_indices = @transform_1, window_bounds = array<i64: 100, 512>}, {pipeline_mode = #tpu.pipeline_mode<synchronous>, transform_indices = @transform_2, window_bounds = array<i64: 100, 1>}, {pipeline_mode = #tpu.pipeline_mode<synchronous>, transform_indices = @transform_3, window_bounds = array<i64: 100, 100>}, {transform_indices = @transform_4, window_bounds = array<i64: 1, 100, 100>}]} {
    %c0_i32 = arith.constant 0 : i32
    %0 = arith.cmpi eq, %arg1, %c0_i32 : i32
    %1 = arith.extui %0 : i1 to i32
    %c0_i32_0 = arith.constant 0 : i32
    %2 = arith.cmpi ne, %1, %c0_i32_0 : i32
    scf.if %2 {
      %cst_16 = arith.constant 0.000000e+00 : f32
      %24 = vector.broadcast %cst_16 : f32 to vector<100x100xf32>
      %c0_17 = arith.constant 0 : index
      %c0_18 = arith.constant 0 : index
      %25 = vector.load %arg7[%c0_17, %c0_18] : memref<100x100xf32, #tpu.memory_space<vmem>>, vector<100x100xf32>
      tpu.vector_store %arg7[%c0_17, %c0_18], %24 {strides = array<i32>} : memref<100x100xf32, #tpu.memory_space<vmem>>, vector<100x100xf32>,
    } else {
    }
    %c0 = arith.constant 0 : index
    %c0_1 = arith.constant 0 : index
    %c0_2 = arith.constant 0 : index
    %3 = vector.load %arg2[%c0, %c0_1, %c0_2] : memref<1x512x8xf32, #tpu.memory_space<vmem>>, vector<1x512x8xf32>
    %4 = vector.shape_cast %3 : vector<1x512x8xf32> to vector<512x8xf32>
    %5 = arith.truncf %4 : vector<512x8xf32> to vector<512x8xbf16>
    %c0_3 = arith.constant 0 : index
    %c0_4 = arith.constant 0 : index
    %6 = vector.load %arg3[%c0_3, %c0_4] : memref<100x512xbf16, #tpu.memory_space<vmem>>, vector<100x512xbf16>
    %cst = arith.constant dense<0.000000e+00> : vector<100x8xf32>
    %7 = tpu.matmul %6, %5, %cst {dimension_numbers = #tpu.dot_dimension_numbers<[1], [0], [0], [1], [0, 0, 1, 1], [], []>} : vector<100x512xbf16>, vector<512x8xbf16>, vector<100x8xf32> -> vector<100x8xf32>
    %c0_5 = arith.constant 0 : index
    %c0_6 = arith.constant 0 : index
    %8 = vector.load %arg4[%c0_5, %c0_6] : memref<100x1xf32, #tpu.memory_space<vmem>>, vector<100x1xf32>
    %9 = vector.broadcast %8 : vector<100x1xf32> to vector<100x8xf32>
    %10 = arith.addf %7, %9 : vector<100x8xf32>
    %cst_7 = arith.constant dense<0.000000e+00> : vector<8xf32>
    %11 = vector.multi_reduction <add>, %10, %cst_7 [0] : vector<100x8xf32> to vector<8xf32>
    %12 = vector.shape_cast %11 : vector<8xf32> to vector<1x8xf32>
    %cst_8 = arith.constant 1.000000e+02 : f32
    %13 = vector.broadcast %cst_8 : f32 to vector<1x8xf32>
    %14 = arith.divf %12, %13 : vector<1x8xf32>
    %15 = vector.broadcast %14 : vector<1x8xf32> to vector<100x8xf32>
    %16 = arith.subf %10, %15 : vector<100x8xf32>
    %c0_9 = arith.constant 0 : index
    %c0_10 = arith.constant 0 : index
    %17 = vector.load %arg7[%c0_9, %c0_10] : memref<100x100xf32, #tpu.memory_space<vmem>>, vector<100x100xf32>
    %cst_11 = arith.constant dense<0.000000e+00> : vector<100x100xf32>
    %18 = tpu.matmul %16, %16, %cst_11 {dimension_numbers = #tpu.dot_dimension_numbers<[1], [1], [0], [0], [0, 0, 1, 0], [], []>} : vector<100x8xf32>, vector<100x8xf32>, vector<100x100xf32> -> vector<100x100xf32>
    %19 = arith.addf %17, %18 : vector<100x100xf32>
    %c0_12 = arith.constant 0 : index
    %c0_13 = arith.constant 0 : index
    %20 = vector.load %arg7[%c0_12, %c0_13] : memref<100x100xf32, #tpu.memory_space<vmem>>, vector<100x100xf32>
    tpu.vector_store %arg7[%c0_12, %c0_13], %19 {strides = array<i32>} : memref<100x100xf32, #tpu.memory_space<vmem>>, vector<100x100xf32>,
    %c0_i32_14 = arith.constant 0 : i32
    %21 = arith.cmpi eq, %arg1, %c0_i32_14 : i32
    %22 = arith.extui %21 : i1 to i32
    %c0_i32_15 = arith.constant 0 : i32
    %23 = arith.cmpi ne, %22, %c0_i32_15 : i32
    scf.if %23 {
      %c0_16 = arith.constant 0 : index
      %c0_17 = arith.constant 0 : index
      %24 = vector.load %arg7[%c0_16, %c0_17] : memref<100x100xf32, #tpu.memory_space<vmem>>, vector<100x100xf32>
      %cst_18 = arith.constant 0.142857149 : f32
      %25 = vector.broadcast %cst_18 : f32 to vector<100x100xf32>
      %26 = arith.mulf %25, %24 : vector<100x100xf32>
      %27 = tpu.iota {dimensions = array<i32: 0>} : vector<100x100xi32>
      %28 = tpu.iota {dimensions = array<i32: 1>} : vector<100x100xi32>
      %29 = arith.cmpi eq, %27, %28 : vector<100x100xi32>
      %cst_19 = arith.constant 0.000000e+00 : f32
      %30 = vector.broadcast %cst_19 : f32 to vector<100x100xf32>
      %31 = arith.select %29, %26, %30 : vector<100x100xi1>, vector<100x100xf32>
      %32 = vector.shape_cast %31 : vector<100x100xf32> to vector<1x100x100xf32>
      %cst_20 = arith.constant dense<0.000000e+00> : vector<1xf32>
      %33 = vector.multi_reduction <add>, %32, %cst_20 [1, 2] : vector<1x100x100xf32> to vector<1xf32>
      %34 = vector.shape_cast %33 : vector<1xf32> to vector<1x1x1xf32>
      %35 = vector.extract %34[0, 0, 0] : f32 from vector<1x1x1xf32>
      %36 = vector.broadcast %35 : f32 to vector<1x1xf32>
      %cst_21 = arith.constant 9.99999974E-6 : f32
      %37 = vector.broadcast %cst_21 : f32 to vector<1x1xf32>
      %38 = arith.mulf %37, %36 : vector<1x1xf32>
      %39 = vector.broadcast %38 : vector<1x1xf32> to vector<100x100xf32>
      %40 = arith.addf %26, %39 : vector<100x100xf32>
      %41 = arith.select %29, %40, %26 : vector<100x100xi1>, vector<100x100xf32>
      %c0_22 = arith.constant 0 : index
      %c0_23 = arith.constant 0 : index
      %42 = vector.load %arg5[%c0_22, %c0_23] : memref<100x100xf32, #tpu.memory_space<vmem>>, vector<100x100xf32>
      %cst_24 = arith.constant dense<0.000000e+00> : vector<100x100xf32>
      %43 = tpu.matmul %42, %41, %cst_24 {dimension_numbers = #tpu.dot_dimension_numbers<[0], [0], [1], [1], [0, 1, 1, 1], [], []>} : vector<100x100xf32>, vector<100x100xf32>, vector<100x100xf32> -> vector<100x100xf32>
      %cst_25 = arith.constant dense<0.000000e+00> : vector<100x100xf32>
      %44 = tpu.matmul %43, %42, %cst_25 {dimension_numbers = #tpu.dot_dimension_numbers<[1], [0], [0], [1], [0, 0, 1, 1], [], []>} : vector<100x100xf32>, vector<100x100xf32>, vector<100x100xf32> -> vector<100x100xf32>
      %c0_26 = arith.constant 0 : index
      %c0_27 = arith.constant 0 : index
      %c0_28 = arith.constant 0 : index
      %45 = vector.load %arg6[%c0_26, %c0_27, %c0_28] : memref<1x100x100xf32, #tpu.memory_space<vmem>>, vector<1x100x100xf32>
      %46 = vector.shape_cast %45 : vector<1x100x100xf32> to vector<100x100xf32>
      %47 = vector.shape_cast %44 : vector<100x100xf32> to vector<1x100x100xf32>
      tpu.vector_store %arg6[%c0_26, %c0_27, %c0_28], %47 {strides = array<i32>} : memref<1x100x100xf32, #tpu.memory_space<vmem>>, vector<1x100x100xf32>,
    } else {
    }
    return
  }
  func.func @transform_0(%arg0: i32, %arg1: i32) -> (i32, i32, i32) {
    %c0_i32 = arith.constant 0 : i32
    %c0_i32_0 = arith.constant 0 : i32
    return %arg0, %c0_i32, %arg1 : i32, i32, i32
  }
  func.func @transform_1(%arg0: i32, %arg1: i32) -> (i32, i32) {
    %c0_i32 = arith.constant 0 : i32
    %c0_i32_0 = arith.constant 0 : i32
    %c0_i32_1 = arith.constant 0 : i32
    return %c0_i32, %c0_i32_0 : i32, i32
  }
  func.func @transform_2(%arg0: i32, %arg1: i32) -> (i32, i32) {
    %c0_i32 = arith.constant 0 : i32
    %c0_i32_0 = arith.constant 0 : i32
    %c0_i32_1 = arith.constant 0 : i32
    return %c0_i32, %c0_i32_0 : i32, i32
  }
  func.func @transform_3(%arg0: i32, %arg1: i32) -> (i32, i32) {
    %c0_i32 = arith.constant 0 : i32
    %c0_i32_0 = arith.constant 0 : i32
    %c0_i32_1 = arith.constant 0 : i32
    return %c0_i32, %c0_i32_0 : i32, i32
  }
  func.func @transform_4(%arg0: i32, %arg1: i32) -> (i32, i32, i32) {
    %c0_i32 = arith.constant 0 : i32
    %c0_i32_0 = arith.constant 0 : i32
    %c0_i32_1 = arith.constant 0 : i32
    return %arg0, %c0_i32, %c0_i32_0 : i32, i32, i32
  }
}

module attributes {stable_mosaic.version = 11 : i64} {
  func.func @_logeig_kernel(%arg0: i32, %arg1: memref<1x128x128xf32, #tpu.memory_space<vmem>>, %arg2: memref<1x1x128xf32, #tpu.memory_space<vmem>>, %arg3: memref<1x112x128xbf16, #tpu.memory_space<vmem>>) attributes {dimension_semantics = [#tpu.dimension_semantics<parallel>], iteration_bounds = array<i64: 2>, scalar_prefetch = 0 : i64, scratch_operands = 0 : i64, tpu.core_type = #tpu.core_type<tc>, window_params = [{transform_indices = @transform_0, window_bounds = array<i64: 1, 128, 128>}, {transform_indices = @transform_1, window_bounds = array<i64: 1, 1, 128>}, {transform_indices = @transform_2, window_bounds = array<i64: 1, 112, 128>}]} {
    %c0 = arith.constant 0 : index
    %c0_0 = arith.constant 0 : index
    %c0_1 = arith.constant 0 : index
    %0 = vector.load %arg1[%c0, %c0_0, %c0_1] : memref<1x128x128xf32, #tpu.memory_space<vmem>>, vector<1x128x128xf32>
    %1 = vector.shape_cast %0 : vector<1x128x128xf32> to vector<128x128xf32>
    %c0_2 = arith.constant 0 : index
    %c0_3 = arith.constant 0 : index
    %c0_4 = arith.constant 0 : index
    %2 = vector.load %arg2[%c0_2, %c0_3, %c0_4] : memref<1x1x128xf32, #tpu.memory_space<vmem>>, vector<1x1x128xf32>
    %3 = vector.shape_cast %2 : vector<1x1x128xf32> to vector<1x128xf32>
    %4 = vector.broadcast %3 : vector<1x128xf32> to vector<128x128xf32>
    %5 = arith.mulf %1, %4 : vector<128x128xf32>
    %6 = arith.truncf %5 : vector<128x128xf32> to vector<128x128xbf16>
    %7 = arith.truncf %1 : vector<128x128xf32> to vector<128x128xbf16>
    %cst = arith.constant dense<0.000000e+00> : vector<128x128xf32>
    %8 = tpu.matmul %6, %7, %cst {dimension_numbers = #tpu.dot_dimension_numbers<[1], [1], [0], [0], [0, 0, 1, 0], [], []>} : vector<128x128xbf16>, vector<128x128xbf16>, vector<128x128xf32> -> vector<128x128xf32>
    %9 = vector.extract_strided_slice %8 {offsets = [0, 0], sizes = [112, 128], strides = [1, 1]} : vector<128x128xf32> to vector<112x128xf32>
    %10 = arith.truncf %9 : vector<112x128xf32> to vector<112x128xbf16>
    %c0_5 = arith.constant 0 : index
    %c0_6 = arith.constant 0 : index
    %c0_7 = arith.constant 0 : index
    %11 = vector.load %arg3[%c0_5, %c0_6, %c0_7] : memref<1x112x128xbf16, #tpu.memory_space<vmem>>, vector<1x112x128xbf16>
    %12 = vector.shape_cast %11 : vector<1x112x128xbf16> to vector<112x128xbf16>
    %13 = vector.shape_cast %10 : vector<112x128xbf16> to vector<1x112x128xbf16>
    tpu.vector_store %arg3[%c0_5, %c0_6, %c0_7], %13 {strides = array<i32>} : memref<1x112x128xbf16, #tpu.memory_space<vmem>>, vector<1x112x128xbf16>,
    return
  }
  func.func @transform_0(%arg0: i32) -> (i32, i32, i32) {
    %c0_i32 = arith.constant 0 : i32
    %c0_i32_0 = arith.constant 0 : i32
    %c0_i32_1 = arith.constant 0 : i32
    return %arg0, %c0_i32, %c0_i32_0 : i32, i32, i32
  }
  func.func @transform_1(%arg0: i32) -> (i32, i32, i32) {
    %c0_i32 = arith.constant 0 : i32
    %c0_i32_0 = arith.constant 0 : i32
    %c0_i32_1 = arith.constant 0 : i32
    return %arg0, %c0_i32, %c0_i32_0 : i32, i32, i32
  }
  func.func @transform_2(%arg0: i32) -> (i32, i32, i32) {
    %c0_i32 = arith.constant 0 : i32
    %c0_i32_0 = arith.constant 0 : i32
    %c0_i32_1 = arith.constant 0 : i32
    return %arg0, %c0_i32, %c0_i32_0 : i32, i32, i32
  }
}

module attributes {stable_mosaic.version = 11 : i64} {
  func.func @_classifier_kernel(%arg0: i32, %arg1: memref<2x7168xbf16, #tpu.memory_space<vmem>>, %arg2: memref<7168x128xbf16, #tpu.memory_space<vmem>>, %arg3: memref<1x128xf32, #tpu.memory_space<vmem>>, %arg4: memref<2x128xf32, #tpu.memory_space<vmem>>) attributes {dimension_semantics = [#tpu.dimension_semantics<arbitrary>], iteration_bounds = array<i64: 2>, scalar_prefetch = 0 : i64, scratch_operands = 0 : i64, tpu.core_type = #tpu.core_type<tc>, window_params = [{transform_indices = @transform_0, window_bounds = array<i64: 2, 7168>}, {transform_indices = @transform_1, window_bounds = array<i64: 7168, 128>}, {pipeline_mode = #tpu.pipeline_mode<synchronous>, transform_indices = @transform_2, window_bounds = array<i64: 1, 128>}, {pipeline_mode = #tpu.pipeline_mode<synchronous>, transform_indices = @transform_3, window_bounds = array<i64: 2, 128>}]} {
    %c0_i32 = arith.constant 0 : i32
    %0 = arith.cmpi eq, %arg0, %c0_i32 : i32
    %1 = arith.extui %0 : i1 to i32
    %c0_i32_0 = arith.constant 0 : i32
    %2 = arith.cmpi ne, %1, %c0_i32_0 : i32
    scf.if %2 {
      %c0_8 = arith.constant 0 : index
      %c0_9 = arith.constant 0 : index
      %9 = vector.load %arg3[%c0_8, %c0_9] : memref<1x128xf32, #tpu.memory_space<vmem>>, vector<1x128xf32>
      %10 = vector.shape_cast %9 : vector<1x128xf32> to vector<1x128xf32>
      %11 = vector.broadcast %10 : vector<1x128xf32> to vector<2x128xf32>
      %c0_10 = arith.constant 0 : index
      %c0_11 = arith.constant 0 : index
      %12 = vector.load %arg4[%c0_10, %c0_11] : memref<2x128xf32, #tpu.memory_space<vmem>>, vector<2x128xf32>
      tpu.vector_store %arg4[%c0_10, %c0_11], %11 {strides = array<i32>} : memref<2x128xf32, #tpu.memory_space<vmem>>, vector<2x128xf32>,
    } else {
    }
    %c0 = arith.constant 0 : index
    %c0_1 = arith.constant 0 : index
    %3 = vector.load %arg4[%c0, %c0_1] : memref<2x128xf32, #tpu.memory_space<vmem>>, vector<2x128xf32>
    %c0_2 = arith.constant 0 : index
    %c0_3 = arith.constant 0 : index
    %4 = vector.load %arg1[%c0_2, %c0_3] : memref<2x7168xbf16, #tpu.memory_space<vmem>>, vector<2x7168xbf16>
    %c0_4 = arith.constant 0 : index
    %c0_5 = arith.constant 0 : index
    %5 = vector.load %arg2[%c0_4, %c0_5] : memref<7168x128xbf16, #tpu.memory_space<vmem>>, vector<7168x128xbf16>
    %cst = arith.constant dense<0.000000e+00> : vector<2x128xf32>
    %6 = tpu.matmul %4, %5, %cst {dimension_numbers = #tpu.dot_dimension_numbers<[1], [0], [0], [1], [0, 0, 1, 1], [], []>} : vector<2x7168xbf16>, vector<7168x128xbf16>, vector<2x128xf32> -> vector<2x128xf32>
    %7 = arith.addf %3, %6 : vector<2x128xf32>
    %c0_6 = arith.constant 0 : index
    %c0_7 = arith.constant 0 : index
    %8 = vector.load %arg4[%c0_6, %c0_7] : memref<2x128xf32, #tpu.memory_space<vmem>>, vector<2x128xf32>
    tpu.vector_store %arg4[%c0_6, %c0_7], %7 {strides = array<i32>} : memref<2x128xf32, #tpu.memory_space<vmem>>, vector<2x128xf32>,
    return
  }
  func.func @transform_0(%arg0: i32) -> (i32, i32) {
    %c0_i32 = arith.constant 0 : i32
    %c0_i32_0 = arith.constant 0 : i32
    return %c0_i32, %arg0 : i32, i32
  }
  func.func @transform_1(%arg0: i32) -> (i32, i32) {
    %c0_i32 = arith.constant 0 : i32
    %c0_i32_0 = arith.constant 0 : i32
    return %arg0, %c0_i32 : i32, i32
  }
  func.func @transform_2(%arg0: i32) -> (i32, i32) {
    %c0_i32 = arith.constant 0 : i32
    %c0_i32_0 = arith.constant 0 : i32
    %c0_i32_1 = arith.constant 0 : i32
    return %c0_i32, %c0_i32_0 : i32, i32
  }
  func.func @transform_3(%arg0: i32) -> (i32, i32) {
    %c0_i32 = arith.constant 0 : i32
    %c0_i32_0 = arith.constant 0 : i32
    %c0_i32_1 = arith.constant 0 : i32
    return %c0_i32, %c0_i32_0 : i32, i32
  }
}

</mosaic_0001>

<llo_original>
// kernel: custom-call.2
$region0: #{custom-call.2}
  %s0 = inlined_call_operand.vmem [shape: f32[2,50,50], index: 0, kind: input, shape index: {}]
  %s1 = inlined_call_operand.vmem [shape: f32[2,50,50], index: 1, kind: input, shape index: {}]
  %s2 = inlined_call_operand.vmem [shape: f32[2,50,50], index: 2, kind: input, shape index: {}]
  %s3 = inlined_call_operand.vmem [shape: f32[2,50,50], index: 3, kind: input, shape index: {}]
  %s4 = inlined_call_operand.vmem [shape: f32[2,50], index: 4, kind: output, shape index: {0}]
  %s5 = inlined_call_operand.vmem [shape: f32[2,50], index: 5, kind: output, shape index: {1}]
  %s6 = inlined_call_operand.vmem [shape: f32[2,50,50], index: 6, kind: output, shape index: {2}]
  %s7 = inlined_call_operand.vmem [shape: f32[2,50,50], index: 7, kind: output, shape index: {3}]
  %s8 = inlined_call_operand.vmem [shape: f32[2,50,50], index: 8, kind: output, shape index: {4}]
  %s9 = inlined_call_operand.vmem [shape: f32[2,50,50], index: 9, kind: output, shape index: {5}]
  %10 = xla_tuple %s4, %s5, %s6, %s7, %s8, %s9
  $region1: #{custom-call.2} parent=0
    #allocation0 [shape = 'u8[57344]{0}', space=vmem, size = 0xe000, scoped, tag = 'operand span for operand 0']
    #allocation1 [shape = 'u8[57344]{0}', space=vmem, size = 0xe000, scoped, tag = 'operand span for operand 1']
    #allocation2 [shape = 'u8[57344]{0}', space=vmem, size = 0xe000, scoped, tag = 'operand span for operand 2']
    #allocation3 [shape = 'u8[57344]{0}', space=vmem, size = 0xe000, scoped, tag = 'operand span for operand 3']
    #allocation4 [shape = 'u8[4096]{0}', space=vmem, size = 0x1000, scoped, tag = 'operand span for operand 4']
    #allocation5 [shape = 'u8[2048]{0}', space=vmem, size = 0x800, scoped, tag = 'packed  for operand 4']
    #allocation6 [shape = 'u8[4096]{0}', space=vmem, size = 0x1000, scoped, tag = 'operand span for operand 5']
    #allocation7 [shape = 'u8[2048]{0}', space=vmem, size = 0x800, scoped, tag = 'packed  for operand 5']
    #allocation8 [shape = 'u8[57344]{0}', space=vmem, size = 0xe000, scoped, tag = 'operand span for operand 6']
    #allocation9 [shape = 'u8[57344]{0}', space=vmem, size = 0xe000, scoped, tag = 'operand span for operand 7']
    #allocation10 [shape = 'u8[57344]{0}', space=vmem, size = 0xe000, scoped, tag = 'operand span for operand 8']
    #allocation11 [shape = 'u8[57344]{0}', space=vmem, size = 0xe000, scoped, tag = 'operand span for operand 9']
    loop: start=0, step=1, limit=4
    $region2: #{custom-call.2} parent=1 // loop_pre_header
      _
    $region3: #{custom-call.2} parent=1 // loop_header
      %s12 = sphi 0, %s16
      %p13 = scmp.ge.s32.totalorder %s12, 4
      %s24 = sphi 0, %s26
      %s27 = sphi 0, %s24
      %s28 = sphi 0, %s27
      %s44 = sphi 0, %s28
      %s52 = sphi 0, %s54
      %s55 = sphi 0, %s52
      %s56 = sphi 0, %s55
      %s72 = sphi 0, %s56
    $region4: #{custom-call.2} parent=1 // loop_header_branch
      %15 = sbr.rel (%p13) target = $region8
    $region5: #{custom-call.2} parent=1 // loop_body
      %s17 = ssub.s32 %s12, 1
      %s18 = ssub.s32 %s12, 2
      %s19 = sadd.s32 %s12, 1
      %s20 = sshrl.u32 %s12, 3
      %s21 = sshrl.u32 %s19, 3
      %s22 = ssub.s32 %s20, %s21
      %p23 = scmp.eq.s32.totalorder %s22, 0
      %s25 = sadd.s32 %s24, 1
      %s26 = scalar_select %p23, %s24, %s25
      %p29 = pneg %p23
      %p30 = scmp.eq.s32.totalorder %s12, 1
      %p31 = por %p29, %p30
      %p32 = scmp.ne.s32.totalorder %s24, %s27
      %p33 = scmp.eq.s32.totalorder %s12, 0
      %p34 = por %p32, %p33
      %p35 = scmp.ne.s32.totalorder %s24, %s27
      %p36 = scmp.eq.s32.totalorder %s17, 1
      %p37 = por %p35, %p36
      %p38 = scmp.ne.s32.totalorder %s27, %s28
      %p39 = scmp.eq.s32.totalorder %s17, 0
      %p40 = por %p38, %p39
      %p41 = scmp.ne.s32.totalorder %s27, %s28
      %p42 = scmp.eq.s32.totalorder %s18, 1
      %p43 = por %p41, %p42
      %p45 = scmp.ne.s32.totalorder %s28, %s44
      %p46 = scmp.eq.s32.totalorder %s18, 0
      %p47 = por %p45, %p46
      %s48 = sshrl.u32 %s12, 3
      %s49 = sshrl.u32 %s19, 3
      %s50 = ssub.s32 %s48, %s49
      %p51 = scmp.eq.s32.totalorder %s50, 0
      %s53 = sadd.s32 %s52, 1
      %s54 = scalar_select %p51, %s52, %s53
      %p57 = pneg %p51
      %p58 = scmp.eq.s32.totalorder %s12, 1
      %p59 = por %p57, %p58
      %p60 = scmp.ne.s32.totalorder %s52, %s55
      %p61 = scmp.eq.s32.totalorder %s12, 0
      %p62 = por %p60, %p61
      %p63 = scmp.ne.s32.totalorder %s52, %s55
      %p64 = scmp.eq.s32.totalorder %s17, 1
      %p65 = por %p63, %p64
      %p66 = scmp.ne.s32.totalorder %s55, %s56
      %p67 = scmp.eq.s32.totalorder %s17, 0
      %p68 = por %p66, %p67
      %p69 = scmp.ne.s32.totalorder %s55, %s56
      %p70 = scmp.eq.s32.totalorder %s18, 1
      %p71 = por %p69, %p70
      %p73 = scmp.ne.s32.totalorder %s56, %s72
      %p74 = scmp.eq.s32.totalorder %s18, 0
      %p75 = por %p73, %p74
      %p76 = scmp.le.s32.totalorder 1, %s12
      %p77 = scmp.lt.s32.totalorder %s12, 3
      %p78 = pnand %p76, %p77
      %p79 = pneg %p78
      // Predicated region
      $region9: #{custom-call.2} parent=5 // pred_check
        _
      $region10: #{custom-call.2} parent=5 // pred_check_branch
        %81 = sbr.rel (%p78) target = $region12
      $region11: #{custom-call.2} parent=5 // pred_region
        %s82 = ssub.s32 %s12, 1
      $region12: #{custom-call.2} parent=5 // pred_fallthru
        _
      %p83 = scmp.lt.s32.totalorder %s12, 2
      // Predicated region
      $region13: #{custom-call.2} parent=5 // pred_check
        %p84 = pneg %p83
      $region14: #{custom-call.2} parent=5 // pred_check_branch
        %86 = sbr.rel (%p84) target = $region16
      $region15: #{custom-call.2} parent=5 // pred_region
        %s87 = sand.u32 %s12, 1
        %s88 = sand.u32 %s12, 1
        %s89 = smul.addr %s88, 56
        %s90 = scalar_lea.vmem [#allocation0], %s89
        %s91 = smul.addr %s12, 56
        %s92 = scalar_lea.vmem %s0, %s91
        // Predicated region
        $region17: #{custom-call.2} parent=15 // pred_check
          _
        $region18: #{custom-call.2} parent=15 // pred_check_branch
          %94 = sbr.rel (0) target = $region20
        $region19: #{custom-call.2} parent=15 // pred_region
          // Predicated region
          $region21: #{custom-call.2} parent=19 // pred_check
            _
          $region22: #{custom-call.2} parent=19 // pred_check_branch
            %96 = sbr.rel (0) target = $region24
          $region23: #{custom-call.2} parent=19 // pred_region
            loop: start=0, step=1, limit=1
            $region25: #{custom-call.2} parent=23 // loop_pre_header
              _
            $region26: #{custom-call.2} parent=23 // loop_header
              %s98 = sphi 0, %s102
              %p99 = scmp.ge.s32.totalorder %s98, 1
              %s103 = sphi %s92, %s92
              %s104 = sphi %s90, %s90
            $region27: #{custom-call.2} parent=23 // loop_header_branch
              %101 = sbr.rel (%p99) target = $region31
            $region28: #{custom-call.2} parent=23 // loop_body
              %v105 = vld [vmem:[%s103] sm:$0xff]
              %106 = vst [vmem:[%s104] sm:$0xff] %v105
              %v107 = vld [vmem:[%s103 + $0x8] sm:$0xff]
              %108 = vst [vmem:[%s104 + $0x8] sm:$0xff] %v107
              %v109 = vld [vmem:[%s103 + $0x10] sm:$0xff]
              %110 = vst [vmem:[%s104 + $0x10] sm:$0xff] %v109
              %v111 = vld [vmem:[%s103 + $0x18] sm:$0xff]
              %112 = vst [vmem:[%s104 + $0x18] sm:$0xff] %v111
              %v113 = vld [vmem:[%s103 + $0x20] sm:$0xff]
              %114 = vst [vmem:[%s104 + $0x20] sm:$0xff] %v113
              %v115 = vld [vmem:[%s103 + $0x28] sm:$0xff]
              %116 = vst [vmem:[%s104 + $0x28] sm:$0xff] %v115
              %v117 = vld [vmem:[%s103 + $0x30] sm:$0xff]
              %118 = vst [vmem:[%s104 + $0x30] sm:$0xff] %v117
            $region29: #{custom-call.2} parent=23 // loop_footer
              %s102 = sadd.s32 1, %s98
            $region30: #{custom-call.2} parent=23 // loop_footer_branch
              %97 = sbr.rel target = $region26
            $region31: #{custom-call.2} parent=23 // loop_exit
              _
          $region24: #{custom-call.2} parent=19 // pred_fallthru
            _
          // Predicated region
          $region32: #{custom-call.2} parent=19 // pred_check
            _
          $region33: #{custom-call.2} parent=19 // pred_check_branch
            %120 = sbr.rel target = $region35
          $region34: #{custom-call.2} parent=19 // pred_region
            _
          $region35: #{custom-call.2} parent=19 // pred_fallthru
            _
        $region20: #{custom-call.2} parent=15 // pred_fallthru
          _
        %121 = vnop
        %s122 = sand.u32 %s12, 1
        %s123 = sand.u32 %s12, 1
        %s124 = smul.addr %s123, 56
        %s125 = scalar_lea.vmem [#allocation1], %s124
        %s126 = smul.addr %s12, 56
        %s127 = scalar_lea.vmem %s1, %s126
        // Predicated region
        $region36: #{custom-call.2} parent=15 // pred_check
          _
        $region37: #{custom-call.2} parent=15 // pred_check_branch
          %129 = sbr.rel (0) target = $region39
        $region38: #{custom-call.2} parent=15 // pred_region
          // Predicated region
          $region40: #{custom-call.2} parent=38 // pred_check
            _
          $region41: #{custom-call.2} parent=38 // pred_check_branch
            %131 = sbr.rel (0) target = $region43
          $region42: #{custom-call.2} parent=38 // pred_region
            loop: start=0, step=1, limit=1
            $region44: #{custom-call.2} parent=42 // loop_pre_header
              _
            $region45: #{custom-call.2} parent=42 // loop_header
              %s133 = sphi 0, %s137
              %p134 = scmp.ge.s32.totalorder %s133, 1
              %s138 = sphi %s127, %s127
              %s139 = sphi %s125, %s125
            $region46: #{custom-call.2} parent=42 // loop_header_branch
              %136 = sbr.rel (%p134) target = $region50
            $region47: #{custom-call.2} parent=42 // loop_body
              %v140 = vld [vmem:[%s138] sm:$0xff]
              %141 = vst [vmem:[%s139] sm:$0xff] %v140
              %v142 = vld [vmem:[%s138 + $0x8] sm:$0xff]
              %143 = vst [vmem:[%s139 + $0x8] sm:$0xff] %v142
              %v144 = vld [vmem:[%s138 + $0x10] sm:$0xff]
              %145 = vst [vmem:[%s139 + $0x10] sm:$0xff] %v144
              %v146 = vld [vmem:[%s138 + $0x18] sm:$0xff]
              %147 = vst [vmem:[%s139 + $0x18] sm:$0xff] %v146
              %v148 = vld [vmem:[%s138 + $0x20] sm:$0xff]
              %149 = vst [vmem:[%s139 + $0x20] sm:$0xff] %v148
              %v150 = vld [vmem:[%s138 + $0x28] sm:$0xff]
              %151 = vst [vmem:[%s139 + $0x28] sm:$0xff] %v150
              %v152 = vld [vmem:[%s138 + $0x30] sm:$0xff]
              %153 = vst [vmem:[%s139 + $0x30] sm:$0xff] %v152
            $region48: #{custom-call.2} parent=42 // loop_footer
              %s137 = sadd.s32 1, %s133
            $region49: #{custom-call.2} parent=42 // loop_footer_branch
              %132 = sbr.rel target = $region45
            $region50: #{custom-call.2} parent=42 // loop_exit
              _
          $region43: #{custom-call.2} parent=38 // pred_fallthru
            _
          // Predicated region
          $region51: #{custom-call.2} parent=38 // pred_check
            _
          $region52: #{custom-call.2} parent=38 // pred_check_branch
            %155 = sbr.rel target = $region54
          $region53: #{custom-call.2} parent=38 // pred_region
            _
          $region54: #{custom-call.2} parent=38 // pred_fallthru
            _
        $region39: #{custom-call.2} parent=15 // pred_fallthru
          _
        %156 = vnop
        %s157 = sand.u32 %s12, 1
        %s158 = sand.u32 %s12, 1
        %s159 = smul.addr %s158, 56
        %s160 = scalar_lea.vmem [#allocation2], %s159
        %s161 = smul.addr %s12, 56
        %s162 = scalar_lea.vmem %s2, %s161
        // Predicated region
        $region55: #{custom-call.2} parent=15 // pred_check
          _
        $region56: #{custom-call.2} parent=15 // pred_check_branch
          %164 = sbr.rel (0) target = $region58
        $region57: #{custom-call.2} parent=15 // pred_region
          // Predicated region
          $region59: #{custom-call.2} parent=57 // pred_check
            _
          $region60: #{custom-call.2} parent=57 // pred_check_branch
            %166 = sbr.rel (0) target = $region62
          $region61: #{custom-call.2} parent=57 // pred_region
            loop: start=0, step=1, limit=1
            $region63: #{custom-call.2} parent=61 // loop_pre_header
              _
            $region64: #{custom-call.2} parent=61 // loop_header
              %s168 = sphi 0, %s172
              %p169 = scmp.ge.s32.totalorder %s168, 1
              %s173 = sphi %s162, %s162
              %s174 = sphi %s160, %s160
            $region65: #{custom-call.2} parent=61 // loop_header_branch
              %171 = sbr.rel (%p169) target = $region69
            $region66: #{custom-call.2} parent=61 // loop_body
              %v175 = vld [vmem:[%s173] sm:$0xff]
              %176 = vst [vmem:[%s174] sm:$0xff] %v175
              %v177 = vld [vmem:[%s173 + $0x8] sm:$0xff]
              %178 = vst [vmem:[%s174 + $0x8] sm:$0xff] %v177
              %v179 = vld [vmem:[%s173 + $0x10] sm:$0xff]
              %180 = vst [vmem:[%s174 + $0x10] sm:$0xff] %v179
              %v181 = vld [vmem:[%s173 + $0x18] sm:$0xff]
              %182 = vst [vmem:[%s174 + $0x18] sm:$0xff] %v181
              %v183 = vld [vmem:[%s173 + $0x20] sm:$0xff]
              %184 = vst [vmem:[%s174 + $0x20] sm:$0xff] %v183
              %v185 = vld [vmem:[%s173 + $0x28] sm:$0xff]
              %186 = vst [vmem:[%s174 + $0x28] sm:$0xff] %v185
              %v187 = vld [vmem:[%s173 + $0x30] sm:$0xff]
              %188 = vst [vmem:[%s174 + $0x30] sm:$0xff] %v187
            $region67: #{custom-call.2} parent=61 // loop_footer
              %s172 = sadd.s32 1, %s168
            $region68: #{custom-call.2} parent=61 // loop_footer_branch
              %167 = sbr.rel target = $region64
            $region69: #{custom-call.2} parent=61 // loop_exit
              _
          $region62: #{custom-call.2} parent=57 // pred_fallthru
            _
          // Predicated region
          $region70: #{custom-call.2} parent=57 // pred_check
            _
          $region71: #{custom-call.2} parent=57 // pred_check_branch
            %190 = sbr.rel target = $region73
          $region72: #{custom-call.2} parent=57 // pred_region
            _
          $region73: #{custom-call.2} parent=57 // pred_fallthru
            _
        $region58: #{custom-call.2} parent=15 // pred_fallthru
          _
        %191 = vnop
        %s192 = sand.u32 %s12, 1
        %s193 = sand.u32 %s12, 1
        %s194 = smul.addr %s193, 56
        %s195 = scalar_lea.vmem [#allocation3], %s194
        %s196 = smul.addr %s12, 56
        %s197 = scalar_lea.vmem %s3, %s196
        // Predicated region
        $region74: #{custom-call.2} parent=15 // pred_check
          _
        $region75: #{custom-call.2} parent=15 // pred_check_branch
          %199 = sbr.rel (0) target = $region77
        $region76: #{custom-call.2} parent=15 // pred_region
          // Predicated region
          $region78: #{custom-call.2} parent=76 // pred_check
            _
          $region79: #{custom-call.2} parent=76 // pred_check_branch
            %201 = sbr.rel (0) target = $region81
          $region80: #{custom-call.2} parent=76 // pred_region
            loop: start=0, step=1, limit=1
            $region82: #{custom-call.2} parent=80 // loop_pre_header
              _
            $region83: #{custom-call.2} parent=80 // loop_header
              %s203 = sphi 0, %s207
              %p204 = scmp.ge.s32.totalorder %s203, 1
              %s208 = sphi %s197, %s197
              %s209 = sphi %s195, %s195
            $region84: #{custom-call.2} parent=80 // loop_header_branch
              %206 = sbr.rel (%p204) target = $region88
            $region85: #{custom-call.2} parent=80 // loop_body
              %v210 = vld [vmem:[%s208] sm:$0xff]
              %211 = vst [vmem:[%s209] sm:$0xff] %v210
              %v212 = vld [vmem:[%s208 + $0x8] sm:$0xff]
              %213 = vst [vmem:[%s209 + $0x8] sm:$0xff] %v212
              %v214 = vld [vmem:[%s208 + $0x10] sm:$0xff]
              %215 = vst [vmem:[%s209 + $0x10] sm:$0xff] %v214
              %v216 = vld [vmem:[%s208 + $0x18] sm:$0xff]
              %217 = vst [vmem:[%s209 + $0x18] sm:$0xff] %v216
              %v218 = vld [vmem:[%s208 + $0x20] sm:$0xff]
              %219 = vst [vmem:[%s209 + $0x20] sm:$0xff] %v218
              %v220 = vld [vmem:[%s208 + $0x28] sm:$0xff]
              %221 = vst [vmem:[%s209 + $0x28] sm:$0xff] %v220
              %v222 = vld [vmem:[%s208 + $0x30] sm:$0xff]
              %223 = vst [vmem:[%s209 + $0x30] sm:$0xff] %v222
            $region86: #{custom-call.2} parent=80 // loop_footer
              %s207 = sadd.s32 1, %s203
            $region87: #{custom-call.2} parent=80 // loop_footer_branch
              %202 = sbr.rel target = $region83
            $region88: #{custom-call.2} parent=80 // loop_exit
              _
          $region81: #{custom-call.2} parent=76 // pred_fallthru
            _
          // Predicated region
          $region89: #{custom-call.2} parent=76 // pred_check
            _
          $region90: #{custom-call.2} parent=76 // pred_check_branch
            %225 = sbr.rel target = $region92
          $region91: #{custom-call.2} parent=76 // pred_region
            _
          $region92: #{custom-call.2} parent=76 // pred_fallthru
            _
        $region77: #{custom-call.2} parent=15 // pred_fallthru
          _
        %226 = vnop
      $region16: #{custom-call.2} parent=5 // pred_fallthru
        _
      %p227 = scmp.le.s32.totalorder 1, %s12
      %p228 = scmp.lt.s32.totalorder %s12, 3
      %p229 = pnand %p227, %p228
      %p230 = pneg %p229
      // Predicated region
      $region93: #{custom-call.2} parent=5 // pred_check
        _
      $region94: #{custom-call.2} parent=5 // pred_check_branch
        %232 = sbr.rel (%p229) target = $region96
      $region95: #{custom-call.2} parent=5 // pred_region
        #allocation12 [shape = 'f32[50,50]{1,0}', space=vmem, size = 0x7000, scoped, tag = 'a top-left matrix']
        #allocation13 [shape = 'f32[50,50]{1,0}', space=vmem, size = 0x7000, scoped, tag = 'a top-right matrix']
        #allocation14 [shape = 'f32[50,50]{1,0}', space=vmem, size = 0x7000, scoped, tag = 'a bottom-left matrix']
        #allocation15 [shape = 'f32[50,50]{1,0}', space=vmem, size = 0x7000, scoped, tag = 'a bottom-right matrix']
        %s233 = ssub.s32 %s12, 1
        %s234 = sand.u32 %s17, 1
        %s235 = sand.u32 %s17, 1
        %s236 = smul.addr %s235, 56
        %s237 = scalar_lea.vmem [#allocation0], %s236
        %s238 = sand.u32 %s17, 1
        %s239 = sand.u32 %s17, 1
        %s240 = smul.addr %s239, 56
        %s241 = scalar_lea.vmem [#allocation1], %s240
        %s242 = sand.u32 %s17, 1
        %s243 = sand.u32 %s17, 1
        %s244 = smul.addr %s243, 56
        %s245 = scalar_lea.vmem [#allocation2], %s244
        %s246 = sand.u32 %s17, 1
        %s247 = sand.u32 %s17, 1
        %s248 = smul.addr %s247, 56
        %s249 = scalar_lea.vmem [#allocation3], %s248
        %s250 = sand.u32 %s17, 1
        %s251 = sand.u32 %s17, 1
        %s252 = smul.addr %s251, 56
        %s253 = scalar_lea.vmem [#allocation0], %s252
        %s254 = sand.u32 %s17, 1
        %s255 = sand.u32 %s17, 1
        %s256 = smul.addr %s255, 56
        %s257 = scalar_lea.vmem [#allocation1], %s256
        %s258 = sand.u32 %s17, 1
        %s259 = sand.u32 %s17, 1
        %s260 = smul.addr %s259, 56
        %s261 = scalar_lea.vmem [#allocation2], %s260
        %s262 = sand.u32 %s17, 1
        %s263 = sand.u32 %s17, 1
        %s264 = smul.addr %s263, 56
        %s265 = scalar_lea.vmem [#allocation3], %s264
        %p266 = pneg %p40
        %p267 = pneg %p37
        %s268 = sand.u32 %s27, 1
        %s269 = sand.u32 %s27, 1
        %s270 = smul.addr %s269, 2
        %s271 = scalar_lea.vmem [#allocation5], %s270
        %p272 = pneg %p68
        %p273 = pneg %p65
        %s274 = sand.u32 %s55, 1
        %s275 = sand.u32 %s55, 1
        %s276 = smul.addr %s275, 2
        %s277 = scalar_lea.vmem [#allocation7], %s276
        %s278 = sand.u32 %s17, 1
        %s279 = sand.u32 %s17, 1
        %s280 = smul.addr %s279, 56
        %s281 = scalar_lea.vmem [#allocation8], %s280
        %s282 = sand.u32 %s17, 1
        %s283 = sand.u32 %s17, 1
        %s284 = smul.addr %s283, 56
        %s285 = scalar_lea.vmem [#allocation9], %s284
        %s286 = sand.u32 %s17, 1
        %s287 = sand.u32 %s17, 1
        %s288 = smul.addr %s287, 56
        %s289 = scalar_lea.vmem [#allocation10], %s288
        %s290 = sand.u32 %s17, 1
        %s291 = sand.u32 %s17, 1
        %s292 = smul.addr %s291, 56
        %s293 = scalar_lea.vmem [#allocation11], %s292
        %s294 = sshrl.u32 %s17, 3
        %s295 = sshrl.u32 %s17, 3
        %s296 = smov [#allocation12]
        %v297 = vld [vmem:[%s237] sm:$0xff]
        %298 = vst [vmem:[%s296] sm:$0xff] %v297
        %s299 = scalar_lea.vmem %s296, 8
        %s300 = scalar_lea.vmem %s237, 8 [#allocation0]
        %v301 = vld [vmem:[%s300] sm:$0xff]
        %302 = vst [vmem:[%s299] sm:$0xff] %v301
        %s303 = scalar_lea.vmem %s296, 16
        %s304 = scalar_lea.vmem %s237, 16 [#allocation0]
        %v305 = vld [vmem:[%s304] sm:$0xff]
        %306 = vst [vmem:[%s303] sm:$0xff] %v305
        %s307 = scalar_lea.vmem %s296, 24
        %s308 = scalar_lea.vmem %s237, 24 [#allocation0]
        %v309 = vld [vmem:[%s308] sm:$0xff]
        %310 = vst [vmem:[%s307] sm:$0xff] %v309
        %s311 = scalar_lea.vmem %s296, 32
        %s312 = scalar_lea.vmem %s237, 32 [#allocation0]
        %v313 = vld [vmem:[%s312] sm:$0xff]
        %314 = vst [vmem:[%s311] sm:$0xff] %v313
        %s315 = scalar_lea.vmem %s296, 40
        %s316 = scalar_lea.vmem %s237, 40 [#allocation0]
        %v317 = vld [vmem:[%s316] sm:$0xff]
        %318 = vst [vmem:[%s315] sm:$0xff] %v317
        %s319 = scalar_lea.vmem %s296, 48
        %s320 = scalar_lea.vmem %s237, 48 [#allocation0]
        %v321 = vld [vmem:[%s320] sm:$0xff]
        %322 = vst [vmem:[%s319] sm:$0xff] %v321
        %s323 = smov [#allocation13]
        %v324 = vld [vmem:[%s241] sm:$0xff]
        %325 = vst [vmem:[%s323] sm:$0xff] %v324
        %s326 = scalar_lea.vmem %s323, 8
        %s327 = scalar_lea.vmem %s241, 8 [#allocation1]
        %v328 = vld [vmem:[%s327] sm:$0xff]
        %329 = vst [vmem:[%s326] sm:$0xff] %v328
        %s330 = scalar_lea.vmem %s323, 16
        %s331 = scalar_lea.vmem %s241, 16 [#allocation1]
        %v332 = vld [vmem:[%s331] sm:$0xff]
        %333 = vst [vmem:[%s330] sm:$0xff] %v332
        %s334 = scalar_lea.vmem %s323, 24
        %s335 = scalar_lea.vmem %s241, 24 [#allocation1]
        %v336 = vld [vmem:[%s335] sm:$0xff]
        %337 = vst [vmem:[%s334] sm:$0xff] %v336
        %s338 = scalar_lea.vmem %s323, 32
        %s339 = scalar_lea.vmem %s241, 32 [#allocation1]
        %v340 = vld [vmem:[%s339] sm:$0xff]
        %341 = vst [vmem:[%s338] sm:$0xff] %v340
        %s342 = scalar_lea.vmem %s323, 40
        %s343 = scalar_lea.vmem %s241, 40 [#allocation1]
        %v344 = vld [vmem:[%s343] sm:$0xff]
        %345 = vst [vmem:[%s342] sm:$0xff] %v344
        %s346 = scalar_lea.vmem %s323, 48
        %s347 = scalar_lea.vmem %s241, 48 [#allocation1]
        %v348 = vld [vmem:[%s347] sm:$0xff]
        %349 = vst [vmem:[%s346] sm:$0xff] %v348
        %s350 = smov [#allocation14]
        %v351 = vld [vmem:[%s245] sm:$0xff]
        %352 = vst [vmem:[%s350] sm:$0xff] %v351
        %s353 = scalar_lea.vmem %s350, 8
        %s354 = scalar_lea.vmem %s245, 8 [#allocation2]
        %v355 = vld [vmem:[%s354] sm:$0xff]
        %356 = vst [vmem:[%s353] sm:$0xff] %v355
        %s357 = scalar_lea.vmem %s350, 16
        %s358 = scalar_lea.vmem %s245, 16 [#allocation2]
        %v359 = vld [vmem:[%s358] sm:$0xff]
        %360 = vst [vmem:[%s357] sm:$0xff] %v359
        %s361 = scalar_lea.vmem %s350, 24
        %s362 = scalar_lea.vmem %s245, 24 [#allocation2]
        %v363 = vld [vmem:[%s362] sm:$0xff]
        %364 = vst [vmem:[%s361] sm:$0xff] %v363
        %s365 = scalar_lea.vmem %s350, 32
        %s366 = scalar_lea.vmem %s245, 32 [#allocation2]
        %v367 = vld [vmem:[%s366] sm:$0xff]
        %368 = vst [vmem:[%s365] sm:$0xff] %v367
        %s369 = scalar_lea.vmem %s350, 40
        %s370 = scalar_lea.vmem %s245, 40 [#allocation2]
        %v371 = vld [vmem:[%s370] sm:$0xff]
        %372 = vst [vmem:[%s369] sm:$0xff] %v371
        %s373 = scalar_lea.vmem %s350, 48
        %s374 = scalar_lea.vmem %s245, 48 [#allocation2]
        %v375 = vld [vmem:[%s374] sm:$0xff]
        %376 = vst [vmem:[%s373] sm:$0xff] %v375
        %s377 = smov [#allocation15]
        %v378 = vld [vmem:[%s249] sm:$0xff]
        %379 = vst [vmem:[%s377] sm:$0xff] %v378
        %s380 = scalar_lea.vmem %s377, 8
        %s381 = scalar_lea.vmem %s249, 8 [#allocation3]
        %v382 = vld [vmem:[%s381] sm:$0xff]
        %383 = vst [vmem:[%s380] sm:$0xff] %v382
        %s384 = scalar_lea.vmem %s377, 16
        %s385 = scalar_lea.vmem %s249, 16 [#allocation3]
        %v386 = vld [vmem:[%s385] sm:$0xff]
        %387 = vst [vmem:[%s384] sm:$0xff] %v386
        %s388 = scalar_lea.vmem %s377, 24
        %s389 = scalar_lea.vmem %s249, 24 [#allocation3]
        %v390 = vld [vmem:[%s389] sm:$0xff]
        %391 = vst [vmem:[%s388] sm:$0xff] %v390
        %s392 = scalar_lea.vmem %s377, 32
        %s393 = scalar_lea.vmem %s249, 32 [#allocation3]
        %v394 = vld [vmem:[%s393] sm:$0xff]
        %395 = vst [vmem:[%s392] sm:$0xff] %v394
        %s396 = scalar_lea.vmem %s377, 40
        %s397 = scalar_lea.vmem %s249, 40 [#allocation3]
        %v398 = vld [vmem:[%s397] sm:$0xff]
        %399 = vst [vmem:[%s396] sm:$0xff] %v398
        %s400 = scalar_lea.vmem %s377, 48
        %s401 = scalar_lea.vmem %s249, 48 [#allocation3]
        %v402 = vld [vmem:[%s401] sm:$0xff]
        %403 = vst [vmem:[%s400] sm:$0xff] %v402
        %404 = vst [vmem:[%s281] sm:$0xff] 0.0
        %s405 = scalar_lea.vmem %s281, 8 [#allocation8]
        %406 = vst [vmem:[%s405] sm:$0xff] 0.0
        %s407 = scalar_lea.vmem %s281, 16 [#allocation8]
        %408 = vst [vmem:[%s407] sm:$0xff] 0.0
        %s409 = scalar_lea.vmem %s281, 24 [#allocation8]
        %410 = vst [vmem:[%s409] sm:$0xff] 0.0
        %s411 = scalar_lea.vmem %s281, 32 [#allocation8]
        %412 = vst [vmem:[%s411] sm:$0xff] 0.0
        %s413 = scalar_lea.vmem %s281, 40 [#allocation8]
        %414 = vst [vmem:[%s413] sm:$0xff] 0.0
        %s415 = scalar_lea.vmem %s281, 48 [#allocation8]
        %416 = vst [vmem:[%s415] sm:$0xff] 0.0
        %417 = vst [vmem:[%s285] sm:$0xff] 0.0
        %s418 = scalar_lea.vmem %s285, 8 [#allocation9]
        %419 = vst [vmem:[%s418] sm:$0xff] 0.0
        %s420 = scalar_lea.vmem %s285, 16 [#allocation9]
        %421 = vst [vmem:[%s420] sm:$0xff] 0.0
        %s422 = scalar_lea.vmem %s285, 24 [#allocation9]
        %423 = vst [vmem:[%s422] sm:$0xff] 0.0
        %s424 = scalar_lea.vmem %s285, 32 [#allocation9]
        %425 = vst [vmem:[%s424] sm:$0xff] 0.0
        %s426 = scalar_lea.vmem %s285, 40 [#allocation9]
        %427 = vst [vmem:[%s426] sm:$0xff] 0.0
        %s428 = scalar_lea.vmem %s285, 48 [#allocation9]
        %429 = vst [vmem:[%s428] sm:$0xff] 0.0
        %430 = vst [vmem:[%s289] sm:$0xff] 0.0
        %s431 = scalar_lea.vmem %s289, 8 [#allocation10]
        %432 = vst [vmem:[%s431] sm:$0xff] 0.0
        %s433 = scalar_lea.vmem %s289, 16 [#allocation10]
        %434 = vst [vmem:[%s433] sm:$0xff] 0.0
        %s435 = scalar_lea.vmem %s289, 24 [#allocation10]
        %436 = vst [vmem:[%s435] sm:$0xff] 0.0
        %s437 = scalar_lea.vmem %s289, 32 [#allocation10]
        %438 = vst [vmem:[%s437] sm:$0xff] 0.0
        %s439 = scalar_lea.vmem %s289, 40 [#allocation10]
        %440 = vst [vmem:[%s439] sm:$0xff] 0.0
        %s441 = scalar_lea.vmem %s289, 48 [#allocation10]
        %442 = vst [vmem:[%s441] sm:$0xff] 0.0
        %443 = vst [vmem:[%s293] sm:$0xff] 0.0
        %s444 = scalar_lea.vmem %s293, 8 [#allocation11]
        %445 = vst [vmem:[%s444] sm:$0xff] 0.0
        %s446 = scalar_lea.vmem %s293, 16 [#allocation11]
        %447 = vst [vmem:[%s446] sm:$0xff] 0.0
        %s448 = scalar_lea.vmem %s293, 24 [#allocation11]
        %449 = vst [vmem:[%s448] sm:$0xff] 0.0
        %s450 = scalar_lea.vmem %s293, 32 [#allocation11]
        %451 = vst [vmem:[%s450] sm:$0xff] 0.0
        %s452 = scalar_lea.vmem %s293, 40 [#allocation11]
        %453 = vst [vmem:[%s452] sm:$0xff] 0.0
        %s454 = scalar_lea.vmem %s293, 48 [#allocation11]
        %455 = vst [vmem:[%s454] sm:$0xff] 0.0
        %s456 = smov %s281
        %v457 = vlaneseq
        %v458 = vand.u32 %v457, 127
        %v459 = vmov %v458
        %v460 = vlaneseq
        %v461 = vshrl.u32 %v460, 7
        %v462 = vmov %v461
        %v463 = vld [vmem:[%s456] sm:$0xff]
        %vm466 = vcmp.eq.s32.totalorder %v462, %v459
        %v467 = vsel %vm466, 1.0, %v463
        %468 = vst [vmem:[%s456] sm:$0xff] %v467
        %s469 = scalar_lea.vmem %s456, 8
        %v470 = vld [vmem:[%s469] sm:$0xff]
        %v472 = vadd.s32 %v462, 8
        %vm473 = vcmp.eq.s32.totalorder %v472, %v459
        %v474 = vsel %vm473, 1.0, %v470
        %475 = vst [vmem:[%s469] sm:$0xff] %v474
        %s476 = scalar_lea.vmem %s456, 16
        %v477 = vld [vmem:[%s476] sm:$0xff]
        %v479 = vadd.s32 %v462, 16
        %vm480 = vcmp.eq.s32.totalorder %v479, %v459
        %v481 = vsel %vm480, 1.0, %v477
        %482 = vst [vmem:[%s476] sm:$0xff] %v481
        %s483 = scalar_lea.vmem %s456, 24
        %v484 = vld [vmem:[%s483] sm:$0xff]
        %v486 = vadd.s32 %v462, 24
        %vm487 = vcmp.eq.s32.totalorder %v486, %v459
        %v488 = vsel %vm487, 1.0, %v484
        %489 = vst [vmem:[%s483] sm:$0xff] %v488
        %s490 = scalar_lea.vmem %s456, 32
        %v491 = vld [vmem:[%s490] sm:$0xff]
        %v493 = vadd.s32 %v462, 32
        %vm494 = vcmp.eq.s32.totalorder %v493, %v459
        %v495 = vsel %vm494, 1.0, %v491
        %496 = vst [vmem:[%s490] sm:$0xff] %v495
        %s497 = scalar_lea.vmem %s456, 40
        %v498 = vld [vmem:[%s497] sm:$0xff]
        %v500 = vadd.s32 %v462, 40
        %vm501 = vcmp.eq.s32.totalorder %v500, %v459
        %v502 = vsel %vm501, 1.0, %v498
        %503 = vst [vmem:[%s497] sm:$0xff] %v502
        %s504 = scalar_lea.vmem %s456, 48
        %v505 = vld [vmem:[%s504] sm:$0x3]
        %v507 = vadd.s32 %v462, 48
        %vm508 = vcmp.eq.s32.totalorder %v507, %v459
        %v509 = vsel %vm508, 1.0, %v505
        %510 = vst [vmem:[%s504] sm:$0x3] %v509
        %s511 = smov %s293
        %v512 = vlaneseq
        %v513 = vand.u32 %v512, 127
        %v514 = vmov %v513
        %v515 = vlaneseq
        %v516 = vshrl.u32 %v515, 7
        %v517 = vmov %v516
        %v518 = vld [vmem:[%s511] sm:$0xff]
        %vm521 = vcmp.eq.s32.totalorder %v517, %v514
        %v522 = vsel %vm521, 1.0, %v518
        %523 = vst [vmem:[%s511] sm:$0xff] %v522
        %s524 = scalar_lea.vmem %s511, 8
        %v525 = vld [vmem:[%s524] sm:$0xff]
        %v527 = vadd.s32 %v517, 8
        %vm528 = vcmp.eq.s32.totalorder %v527, %v514
        %v529 = vsel %vm528, 1.0, %v525
        %530 = vst [vmem:[%s524] sm:$0xff] %v529
        %s531 = scalar_lea.vmem %s511, 16
        %v532 = vld [vmem:[%s531] sm:$0xff]
        %v534 = vadd.s32 %v517, 16
        %vm535 = vcmp.eq.s32.totalorder %v534, %v514
        %v536 = vsel %vm535, 1.0, %v532
        %537 = vst [vmem:[%s531] sm:$0xff] %v536
        %s538 = scalar_lea.vmem %s511, 24
        %v539 = vld [vmem:[%s538] sm:$0xff]
        %v541 = vadd.s32 %v517, 24
        %vm542 = vcmp.eq.s32.totalorder %v541, %v514
        %v543 = vsel %vm542, 1.0, %v539
        %544 = vst [vmem:[%s538] sm:$0xff] %v543
        %s545 = scalar_lea.vmem %s511, 32
        %v546 = vld [vmem:[%s545] sm:$0xff]
        %v548 = vadd.s32 %v517, 32
        %vm549 = vcmp.eq.s32.totalorder %v548, %v514
        %v550 = vsel %vm549, 1.0, %v546
        %551 = vst [vmem:[%s545] sm:$0xff] %v550
        %s552 = scalar_lea.vmem %s511, 40
        %v553 = vld [vmem:[%s552] sm:$0xff]
        %v555 = vadd.s32 %v517, 40
        %vm556 = vcmp.eq.s32.totalorder %v555, %v514
        %v557 = vsel %vm556, 1.0, %v553
        %558 = vst [vmem:[%s552] sm:$0xff] %v557
        %s559 = scalar_lea.vmem %s511, 48
        %v560 = vld [vmem:[%s559] sm:$0x3]
        %v562 = vadd.s32 %v517, 48
        %vm563 = vcmp.eq.s32.totalorder %v562, %v514
        %v564 = vsel %vm563, 1.0, %v560
        %565 = vst [vmem:[%s559] sm:$0x3] %v564
        // While loop
        $region97: #{custom-call.2} parent=95 // loop_pre_header
          _
        $region98: #{custom-call.2} parent=95 // loop_header
          %s567 = sphi 0, %s3285
          %v568 = vlaneseq
          %v569 = vand.u32 %v568, 127
          %v570 = vmov %v569
          %v571 = vlaneseq
          %v572 = vshrl.u32 %v571, 7
          %v573 = vmov %v572
          %s574 = smov [#allocation12]
          %v575 = vlaneseq
          %v576 = vand.u32 %v575, 127
          %vm577 = vcmp.ge.s32.totalorder %v576, 0
          %vm578 = vcmp.lt.s32.totalorder %v576, 50
          %vm579 = vmand %vm577, %vm578
          %v580 = vld [vmem:[%s574] sm:$0xff]
          %v581 = vsel %vm579, %v580, 0.0
          %v582 = vmul.f32 %v581, %v581
          %vm585 = vcmp.eq.s32.totalorder %v573, %v570
          %v586 = vsel %vm585, 0.0, %v582
          %s587 = scalar_lea.vmem %s574, 8
          %v588 = vld [vmem:[%s587] sm:$0xff]
          %v589 = vsel %vm579, %v588, 0.0
          %v590 = vmul.f32 %v589, %v589
          %v592 = vadd.s32 %v573, 8
          %vm593 = vcmp.eq.s32.totalorder %v592, %v570
          %v594 = vsel %vm593, 0.0, %v590
          %v595 = vadd.f32 %v586, %v594
          %v596 = vadd.f32 %v582, %v590
          %s597 = scalar_lea.vmem %s574, 16
          %v598 = vld [vmem:[%s597] sm:$0xff]
          %v599 = vsel %vm579, %v598, 0.0
          %v600 = vmul.f32 %v599, %v599
          %v602 = vadd.s32 %v573, 16
          %vm603 = vcmp.eq.s32.totalorder %v602, %v570
          %v604 = vsel %vm603, 0.0, %v600
          %v605 = vadd.f32 %v595, %v604
          %v606 = vadd.f32 %v596, %v600
          %s607 = scalar_lea.vmem %s574, 24
          %v608 = vld [vmem:[%s607] sm:$0xff]
          %v609 = vsel %vm579, %v608, 0.0
          %v610 = vmul.f32 %v609, %v609
          %v612 = vadd.s32 %v573, 24
          %vm613 = vcmp.eq.s32.totalorder %v612, %v570
          %v614 = vsel %vm613, 0.0, %v610
          %v615 = vadd.f32 %v605, %v614
          %v616 = vadd.f32 %v606, %v610
          %s617 = scalar_lea.vmem %s574, 32
          %v618 = vld [vmem:[%s617] sm:$0xff]
          %v619 = vsel %vm579, %v618, 0.0
          %v620 = vmul.f32 %v619, %v619
          %v622 = vadd.s32 %v573, 32
          %vm623 = vcmp.eq.s32.totalorder %v622, %v570
          %v624 = vsel %vm623, 0.0, %v620
          %v625 = vadd.f32 %v615, %v624
          %v626 = vadd.f32 %v616, %v620
          %s627 = scalar_lea.vmem %s574, 40
          %v628 = vld [vmem:[%s627] sm:$0xff]
          %v629 = vsel %vm579, %v628, 0.0
          %v630 = vmul.f32 %v629, %v629
          %v632 = vadd.s32 %v573, 40
          %vm633 = vcmp.eq.s32.totalorder %v632, %v570
          %v634 = vsel %vm633, 0.0, %v630
          %v635 = vadd.f32 %v625, %v634
          %v636 = vadd.f32 %v626, %v630
          %s637 = scalar_lea.vmem %s574, 48
          %v638 = vld [vmem:[%s637] sm:$0x3]
          %v639 = vsel %vm579, %v638, 0.0
          %v640 = vmul.f32 %v639, %v639
          %v642 = vadd.s32 %v573, 48
          %vm643 = vcmp.eq.s32.totalorder %v642, %v570
          %v644 = vsel %vm643, 0.0, %v640
          %v645 = vadd.f32 %v635, %v644
          %v646 = vadd.f32 %v636, %v640
          %v647 = vlaneseq
          %v648 = vand.u32 %v647, 127
          %v649 = vmov %v648
          %v650 = vlaneseq
          %v651 = vshrl.u32 %v650, 7
          %v652 = vmov %v651
          %s653 = smov [#allocation13]
          %v654 = vlaneseq
          %v655 = vand.u32 %v654, 127
          %vm656 = vcmp.ge.s32.totalorder %v655, 0
          %vm657 = vcmp.lt.s32.totalorder %v655, 50
          %vm658 = vmand %vm656, %vm657
          %v659 = vld [vmem:[%s653] sm:$0xff]
          %v660 = vsel %vm658, %v659, 0.0
          %v661 = vmul.f32 %v660, %v660
          %v662 = vadd.f32 %v645, %v661
          %v663 = vadd.f32 %v646, %v661
          %s664 = scalar_lea.vmem %s653, 8
          %v665 = vld [vmem:[%s664] sm:$0xff]
          %v666 = vsel %vm658, %v665, 0.0
          %v667 = vmul.f32 %v666, %v666
          %v668 = vadd.f32 %v662, %v667
          %v669 = vadd.f32 %v663, %v667
          %s670 = scalar_lea.vmem %s653, 16
          %v671 = vld [vmem:[%s670] sm:$0xff]
          %v672 = vsel %vm658, %v671, 0.0
          %v673 = vmul.f32 %v672, %v672
          %v674 = vadd.f32 %v668, %v673
          %v675 = vadd.f32 %v669, %v673
          %s676 = scalar_lea.vmem %s653, 24
          %v677 = vld [vmem:[%s676] sm:$0xff]
          %v678 = vsel %vm658, %v677, 0.0
          %v679 = vmul.f32 %v678, %v678
          %v680 = vadd.f32 %v674, %v679
          %v681 = vadd.f32 %v675, %v679
          %s682 = scalar_lea.vmem %s653, 32
          %v683 = vld [vmem:[%s682] sm:$0xff]
          %v684 = vsel %vm658, %v683, 0.0
          %v685 = vmul.f32 %v684, %v684
          %v686 = vadd.f32 %v680, %v685
          %v687 = vadd.f32 %v681, %v685
          %s688 = scalar_lea.vmem %s653, 40
          %v689 = vld [vmem:[%s688] sm:$0xff]
          %v690 = vsel %vm658, %v689, 0.0
          %v691 = vmul.f32 %v690, %v690
          %v692 = vadd.f32 %v686, %v691
          %v693 = vadd.f32 %v687, %v691
          %s694 = scalar_lea.vmem %s653, 48
          %v695 = vld [vmem:[%s694] sm:$0x3]
          %v696 = vsel %vm658, %v695, 0.0
          %v697 = vmul.f32 %v696, %v696
          %v698 = vadd.f32 %v692, %v697
          %v699 = vadd.f32 %v693, %v697
          %v700 = vlaneseq
          %v701 = vand.u32 %v700, 127
          %v702 = vmov %v701
          %v703 = vlaneseq
          %v704 = vshrl.u32 %v703, 7
          %v705 = vmov %v704
          %s706 = smov [#allocation14]
          %v707 = vlaneseq
          %v708 = vand.u32 %v707, 127
          %vm709 = vcmp.ge.s32.totalorder %v708, 0
          %vm710 = vcmp.lt.s32.totalorder %v708, 50
          %vm711 = vmand %vm709, %vm710
          %v712 = vld [vmem:[%s706] sm:$0xff]
          %v713 = vsel %vm711, %v712, 0.0
          %v714 = vmul.f32 %v713, %v713
          %v715 = vadd.f32 %v698, %v714
          %v716 = vadd.f32 %v699, %v714
          %s717 = scalar_lea.vmem %s706, 8
          %v718 = vld [vmem:[%s717] sm:$0xff]
          %v719 = vsel %vm711, %v718, 0.0
          %v720 = vmul.f32 %v719, %v719
          %v721 = vadd.f32 %v715, %v720
          %v722 = vadd.f32 %v716, %v720
          %s723 = scalar_lea.vmem %s706, 16
          %v724 = vld [vmem:[%s723] sm:$0xff]
          %v725 = vsel %vm711, %v724, 0.0
          %v726 = vmul.f32 %v725, %v725
          %v727 = vadd.f32 %v721, %v726
          %v728 = vadd.f32 %v722, %v726
          %s729 = scalar_lea.vmem %s706, 24
          %v730 = vld [vmem:[%s729] sm:$0xff]
          %v731 = vsel %vm711, %v730, 0.0
          %v732 = vmul.f32 %v731, %v731
          %v733 = vadd.f32 %v727, %v732
          %v734 = vadd.f32 %v728, %v732
          %s735 = scalar_lea.vmem %s706, 32
          %v736 = vld [vmem:[%s735] sm:$0xff]
          %v737 = vsel %vm711, %v736, 0.0
          %v738 = vmul.f32 %v737, %v737
          %v739 = vadd.f32 %v733, %v738
          %v740 = vadd.f32 %v734, %v738
          %s741 = scalar_lea.vmem %s706, 40
          %v742 = vld [vmem:[%s741] sm:$0xff]
          %v743 = vsel %vm711, %v742, 0.0
          %v744 = vmul.f32 %v743, %v743
          %v745 = vadd.f32 %v739, %v744
          %v746 = vadd.f32 %v740, %v744
          %s747 = scalar_lea.vmem %s706, 48
          %v748 = vld [vmem:[%s747] sm:$0x3]
          %v749 = vsel %vm711, %v748, 0.0
          %v750 = vmul.f32 %v749, %v749
          %v751 = vadd.f32 %v745, %v750
          %v752 = vadd.f32 %v746, %v750
          %v753 = vlaneseq
          %v754 = vand.u32 %v753, 127
          %v755 = vmov %v754
          %v756 = vlaneseq
          %v757 = vshrl.u32 %v756, 7
          %v758 = vmov %v757
          %s759 = smov [#allocation15]
          %v760 = vlaneseq
          %v761 = vand.u32 %v760, 127
          %vm762 = vcmp.ge.s32.totalorder %v761, 0
          %vm763 = vcmp.lt.s32.totalorder %v761, 50
          %vm764 = vmand %vm762, %vm763
          %v765 = vld [vmem:[%s759] sm:$0xff]
          %v766 = vsel %vm764, %v765, 0.0
          %v767 = vmul.f32 %v766, %v766
          %vm770 = vcmp.eq.s32.totalorder %v758, %v755
          %v771 = vsel %vm770, 0.0, %v767
          %v772 = vadd.f32 %v751, %v771
          %v773 = vadd.f32 %v752, %v767
          %s774 = scalar_lea.vmem %s759, 8
          %v775 = vld [vmem:[%s774] sm:$0xff]
          %v776 = vsel %vm764, %v775, 0.0
          %v777 = vmul.f32 %v776, %v776
          %v779 = vadd.s32 %v758, 8
          %vm780 = vcmp.eq.s32.totalorder %v779, %v755
          %v781 = vsel %vm780, 0.0, %v777
          %v782 = vadd.f32 %v772, %v781
          %v783 = vadd.f32 %v773, %v777
          %s784 = scalar_lea.vmem %s759, 16
          %v785 = vld [vmem:[%s784] sm:$0xff]
          %v786 = vsel %vm764, %v785, 0.0
          %v787 = vmul.f32 %v786, %v786
          %v789 = vadd.s32 %v758, 16
          %vm790 = vcmp.eq.s32.totalorder %v789, %v755
          %v791 = vsel %vm790, 0.0, %v787
          %v792 = vadd.f32 %v782, %v791
          %v793 = vadd.f32 %v783, %v787
          %s794 = scalar_lea.vmem %s759, 24
          %v795 = vld [vmem:[%s794] sm:$0xff]
          %v796 = vsel %vm764, %v795, 0.0
          %v797 = vmul.f32 %v796, %v796
          %v799 = vadd.s32 %v758, 24
          %vm800 = vcmp.eq.s32.totalorder %v799, %v755
          %v801 = vsel %vm800, 0.0, %v797
          %v802 = vadd.f32 %v792, %v801
          %v803 = vadd.f32 %v793, %v797
          %s804 = scalar_lea.vmem %s759, 32
          %v805 = vld [vmem:[%s804] sm:$0xff]
          %v806 = vsel %vm764, %v805, 0.0
          %v807 = vmul.f32 %v806, %v806
          %v809 = vadd.s32 %v758, 32
          %vm810 = vcmp.eq.s32.totalorder %v809, %v755
          %v811 = vsel %vm810, 0.0, %v807
          %v812 = vadd.f32 %v802, %v811
          %v813 = vadd.f32 %v803, %v807
          %s814 = scalar_lea.vmem %s759, 40
          %v815 = vld [vmem:[%s814] sm:$0xff]
          %v816 = vsel %vm764, %v815, 0.0
          %v817 = vmul.f32 %v816, %v816
          %v819 = vadd.s32 %v758, 40
          %vm820 = vcmp.eq.s32.totalorder %v819, %v755
          %v821 = vsel %vm820, 0.0, %v817
          %v822 = vadd.f32 %v812, %v821
          %v823 = vadd.f32 %v813, %v817
          %s824 = scalar_lea.vmem %s759, 48
          %v825 = vld [vmem:[%s824] sm:$0x3]
          %v826 = vsel %vm764, %v825, 0.0
          %v827 = vmul.f32 %v826, %v826
          %v829 = vadd.s32 %v758, 48
          %vm830 = vcmp.eq.s32.totalorder %v829, %v755
          %v831 = vsel %vm830, 0.0, %v827
          %v832 = vadd.f32 %v822, %v831
          %v833 = vadd.f32 %v823, %v827
          %834 = vadd.xlane.f32.xlu0 %v833
          %v835 = vpop.xlane.xlu0 %834
          %v836 = vrot.slane %v835, 4
          %v837 = vadd.f32 %v835, %v836
          %v838 = vrot.slane %v837, 2
          %v839 = vadd.f32 %v837, %v838
          %v840 = vrot.slane %v839, 1
          %v841 = vadd.f32 %v839, %v840
          %842 = vadd.xlane.f32.xlu0 %v832
          %v843 = vpop.xlane.xlu0 %842
          %v844 = vrot.slane %v843, 4
          %v845 = vadd.f32 %v843, %v844
          %v846 = vrot.slane %v845, 2
          %v847 = vadd.f32 %v845, %v846
          %v848 = vrot.slane %v847, 1
          %v849 = vadd.f32 %v847, %v848
          %s850 = vtos %v849
          %s851 = vtos %v841
          %s852 = smul.f32 1e-10, %s851
          %p853 = scmp.le.f32.partialorder %s850, %s852
          %p854 = scmp.ge.s32.totalorder %s567, 15
          %p855 = por %p853, %p854
        $region99: #{custom-call.2} parent=95 // loop_header_branch
          %3287 = sbr.rel (%p855) target = $region103
        $region100: #{custom-call.2} parent=95 // loop_body
          loop: start=0, step=1, limit=99
          $region104: #{custom-call.2} parent=100 // loop_pre_header
            _
          $region105: #{custom-call.2} parent=100 // loop_header
            %s857 = sphi 0, %s861
            %p858 = scmp.ge.s32.totalorder %s857, 99
          $region106: #{custom-call.2} parent=100 // loop_header_branch
            %860 = sbr.rel (%p858) target = $region110
          $region107: #{custom-call.2} parent=100 // loop_body
            #allocation16 [shape = 'f32[1024]{0}', space=vmem, size = 0x1000, scoped, tag = 'a_tl_diag vmem']
            #allocation17 [shape = 'f32[1024]{0}', space=vmem, size = 0x1000, scoped, tag = 'a_tr_diag vmem']
            #allocation18 [shape = 'f32[1024]{0}', space=vmem, size = 0x1000, scoped, tag = 'a_br_diag vmem']
            #allocation19 [shape = 'f32[1024]{0}', space=vmem, size = 0x1000, scoped, tag = 'rt1 vmem']
            #allocation20 [shape = 'f32[1024]{0}', space=vmem, size = 0x1000, scoped, tag = 'rt2 vmem']
            #allocation21 [shape = 'f32[1024]{0}', space=vmem, size = 0x1000, scoped, tag = 'c vmem']
            #allocation22 [shape = 'f32[1024]{0}', space=vmem, size = 0x1000, scoped, tag = 's vmem']
            #allocation23 [shape = 'f32[28672]{0}', space=vmem, size = 0x1c000, scoped, tag = 'c broadcast']
            #allocation24 [shape = 'f32[28672]{0}', space=vmem, size = 0x1c000, scoped, tag = 's broadcast']
            %s862 = smov [#allocation12]
            %s863 = smov [#allocation16]
            %v864 = vlaneseq
            %v865 = vand.u32 %v864, 127
            %v866 = vmov %v865
            %v867 = vlaneseq
            %v868 = vshrl.u32 %v867, 7
            %v869 = vmov %v868
            %v870 = vld [vmem:[%s862] sm:$0xff]
            %vm873 = vcmp.eq.s32.totalorder %v869, %v866
            %v874 = vsel %vm873, %v870, 0.0
            %s875 = scalar_lea.vmem %s862, 8
            %v876 = vld [vmem:[%s875] sm:$0xff]
            %v878 = vadd.s32 %v869, 8
            %vm879 = vcmp.eq.s32.totalorder %v878, %v866
            %v880 = vsel %vm879, %v876, %v874
            %s881 = scalar_lea.vmem %s862, 16
            %v882 = vld [vmem:[%s881] sm:$0xff]
            %v884 = vadd.s32 %v869, 16
            %vm885 = vcmp.eq.s32.totalorder %v884, %v866
            %v886 = vsel %vm885, %v882, %v880
            %s887 = scalar_lea.vmem %s862, 24
            %v888 = vld [vmem:[%s887] sm:$0xff]
            %v890 = vadd.s32 %v869, 24
            %vm891 = vcmp.eq.s32.totalorder %v890, %v866
            %v892 = vsel %vm891, %v888, %v886
            %s893 = scalar_lea.vmem %s862, 32
            %v894 = vld [vmem:[%s893] sm:$0xff]
            %v896 = vadd.s32 %v869, 32
            %vm897 = vcmp.eq.s32.totalorder %v896, %v866
            %v898 = vsel %vm897, %v894, %v892
            %s899 = scalar_lea.vmem %s862, 40
            %v900 = vld [vmem:[%s899] sm:$0xff]
            %v902 = vadd.s32 %v869, 40
            %vm903 = vcmp.eq.s32.totalorder %v902, %v866
            %v904 = vsel %vm903, %v900, %v898
            %s905 = scalar_lea.vmem %s862, 48
            %v906 = vld [vmem:[%s905] sm:$0x3]
            %v908 = vadd.s32 %v869, 48
            %vm909 = vcmp.eq.s32.totalorder %v908, %v866
            %v910 = vsel %vm909, %v906, %v904
            %v911 = vrot.slane %v910, 4
            %v912 = vadd.f32 %v910, %v911
            %v913 = vrot.slane %v912, 2
            %v914 = vadd.f32 %v912, %v913
            %v915 = vrot.slane %v914, 1
            %v916 = vadd.f32 %v914, %v915
            %917 = vst [vmem:[%s863] sm:$0x1] %v916
            %s918 = smov [#allocation13]
            %s919 = smov [#allocation17]
            %v920 = vlaneseq
            %v921 = vand.u32 %v920, 127
            %v922 = vmov %v921
            %v923 = vlaneseq
            %v924 = vshrl.u32 %v923, 7
            %v925 = vmov %v924
            %v926 = vld [vmem:[%s918] sm:$0xff]
            %vm929 = vcmp.eq.s32.totalorder %v925, %v922
            %v930 = vsel %vm929, %v926, 0.0
            %s931 = scalar_lea.vmem %s918, 8
            %v932 = vld [vmem:[%s931] sm:$0xff]
            %v934 = vadd.s32 %v925, 8
            %vm935 = vcmp.eq.s32.totalorder %v934, %v922
            %v936 = vsel %vm935, %v932, %v930
            %s937 = scalar_lea.vmem %s918, 16
            %v938 = vld [vmem:[%s937] sm:$0xff]
            %v940 = vadd.s32 %v925, 16
            %vm941 = vcmp.eq.s32.totalorder %v940, %v922
            %v942 = vsel %vm941, %v938, %v936
            %s943 = scalar_lea.vmem %s918, 24
            %v944 = vld [vmem:[%s943] sm:$0xff]
            %v946 = vadd.s32 %v925, 24
            %vm947 = vcmp.eq.s32.totalorder %v946, %v922
            %v948 = vsel %vm947, %v944, %v942
            %s949 = scalar_lea.vmem %s918, 32
            %v950 = vld [vmem:[%s949] sm:$0xff]
            %v952 = vadd.s32 %v925, 32
            %vm953 = vcmp.eq.s32.totalorder %v952, %v922
            %v954 = vsel %vm953, %v950, %v948
            %s955 = scalar_lea.vmem %s918, 40
            %v956 = vld [vmem:[%s955] sm:$0xff]
            %v958 = vadd.s32 %v925, 40
            %vm959 = vcmp.eq.s32.totalorder %v958, %v922
            %v960 = vsel %vm959, %v956, %v954
            %s961 = scalar_lea.vmem %s918, 48
            %v962 = vld [vmem:[%s961] sm:$0x3]
            %v964 = vadd.s32 %v925, 48
            %vm965 = vcmp.eq.s32.totalorder %v964, %v922
            %v966 = vsel %vm965, %v962, %v960
            %v967 = vrot.slane %v966, 4
            %v968 = vadd.f32 %v966, %v967
            %v969 = vrot.slane %v968, 2
            %v970 = vadd.f32 %v968, %v969
            %v971 = vrot.slane %v970, 1
            %v972 = vadd.f32 %v970, %v971
            %973 = vst [vmem:[%s919] sm:$0x1] %v972
            %s974 = smov [#allocation15]
            %s975 = smov [#allocation18]
            %v976 = vlaneseq
            %v977 = vand.u32 %v976, 127
            %v978 = vmov %v977
            %v979 = vlaneseq
            %v980 = vshrl.u32 %v979, 7
            %v981 = vmov %v980
            %v982 = vld [vmem:[%s974] sm:$0xff]
            %vm985 = vcmp.eq.s32.totalorder %v981, %v978
            %v986 = vsel %vm985, %v982, 0.0
            %s987 = scalar_lea.vmem %s974, 8
            %v988 = vld [vmem:[%s987] sm:$0xff]
            %v990 = vadd.s32 %v981, 8
            %vm991 = vcmp.eq.s32.totalorder %v990, %v978
            %v992 = vsel %vm991, %v988, %v986
            %s993 = scalar_lea.vmem %s974, 16
            %v994 = vld [vmem:[%s993] sm:$0xff]
            %v996 = vadd.s32 %v981, 16
            %vm997 = vcmp.eq.s32.totalorder %v996, %v978
            %v998 = vsel %vm997, %v994, %v992
            %s999 = scalar_lea.vmem %s974, 24
            %v1000 = vld [vmem:[%s999] sm:$0xff]
            %v1002 = vadd.s32 %v981, 24
            %vm1003 = vcmp.eq.s32.totalorder %v1002, %v978
            %v1004 = vsel %vm1003, %v1000, %v998
            %s1005 = scalar_lea.vmem %s974, 32
            %v1006 = vld [vmem:[%s1005] sm:$0xff]
            %v1008 = vadd.s32 %v981, 32
            %vm1009 = vcmp.eq.s32.totalorder %v1008, %v978
            %v1010 = vsel %vm1009, %v1006, %v1004
            %s1011 = scalar_lea.vmem %s974, 40
            %v1012 = vld [vmem:[%s1011] sm:$0xff]
            %v1014 = vadd.s32 %v981, 40
            %vm1015 = vcmp.eq.s32.totalorder %v1014, %v978
            %v1016 = vsel %vm1015, %v1012, %v1010
            %s1017 = scalar_lea.vmem %s974, 48
            %v1018 = vld [vmem:[%s1017] sm:$0x3]
            %v1020 = vadd.s32 %v981, 48
            %vm1021 = vcmp.eq.s32.totalorder %v1020, %v978
            %v1022 = vsel %vm1021, %v1018, %v1016
            %v1023 = vrot.slane %v1022, 4
            %v1024 = vadd.f32 %v1022, %v1023
            %v1025 = vrot.slane %v1024, 2
            %v1026 = vadd.f32 %v1024, %v1025
            %v1027 = vrot.slane %v1026, 1
            %v1028 = vadd.f32 %v1026, %v1027
            %1029 = vst [vmem:[%s975] sm:$0x1] %v1028
            %s1030 = smov [#allocation21]
            %s1031 = smov [#allocation22]
            %s1032 = smov [#allocation16]
            %v1033 = vld [vmem:[%s1032] sm:$0xff]
            %s1034 = smov [#allocation17]
            %v1035 = vld [vmem:[%s1034] sm:$0xff]
            %s1036 = smov [#allocation18]
            %v1037 = vld [vmem:[%s1036] sm:$0xff]
            %v1038 = vsub.f32 %v1037, %v1033
            %v1039 = vmul.f32 2.0, %v1035
            %v1040 = vrcp.pop %v1039
            %v1041 = vmul.f32 %v1039, %v1040
            %v1042 = vsub.f32 1.0, %v1041
            %v1043 = vmul.f32 %v1040, %v1042
            %v1044 = vadd.f32 %v1040, %v1043
            %vm1045 = vweird.f32 %v1039
            %vm1046 = vweird.f32 %v1040
            %vm1047 = vmor %vm1045, %vm1046
            %v1048 = vsel %vm1047, %v1040, %v1044
            %v1049 = vand.u32 2147483647, %v1039
            %vm1050 = vcmp.eq.f32.partialorder %v1049, 8.507059e+37
            %v1051 = vand.u32 %v1039, 2147483648
            %v1052 = vor.u32 1.1754944e-38, %v1051
            %v1053 = vsel %vm1050, %v1052, %v1048
            %v1054 = vmul.f32 %v1038, %v1053
            %vm1055 = vcmp.ge.f32.partialorder %v1054, 0.0
            %v1056 = vmul.f32 %v1054, %v1054
            %v1057 = vadd.f32 1.0, %v1056
            %v1058 = vrsqrt.pop %v1057
            %v1059 = vmul.f32 %v1058, %v1057
            %v1060 = vmul.f32 %v1059, %v1058
            %v1061 = vmul.f32 0.5, %v1060
            %v1062 = vsub.f32 1.5, %v1061
            %v1063 = vmul.f32 %v1058, %v1062
            %v1064 = vmul.f32 %v1057, %v1063
            %vm1065 = vcmp.eq.f32.partialorder %v1057, inf
            %v1066 = vsel %vm1065, %v1057, %v1064
            %vm1067 = vcmp.eq.f32.partialorder %v1057, 0.0
            %v1068 = vand.u32 %v1057, 2147483648
            %v1069 = vsel %vm1067, %v1068, %v1066
            %v1070 = vxor.u32 %v1069, 2147483648
            %v1071 = vsel %vm1055, %v1069, %v1070
            %v1072 = vadd.f32 %v1054, %v1071
            %v1073 = vrcp.pop %v1072
            %v1074 = vmul.f32 %v1072, %v1073
            %v1075 = vsub.f32 1.0, %v1074
            %v1076 = vmul.f32 %v1073, %v1075
            %v1077 = vadd.f32 %v1073, %v1076
            %vm1078 = vweird.f32 %v1072
            %vm1079 = vweird.f32 %v1073
            %vm1080 = vmor %vm1078, %vm1079
            %v1081 = vsel %vm1080, %v1073, %v1077
            %v1082 = vand.u32 2147483647, %v1072
            %vm1083 = vcmp.eq.f32.partialorder %v1082, 8.507059e+37
            %v1084 = vand.u32 %v1072, 2147483648
            %v1085 = vor.u32 1.1754944e-38, %v1084
            %v1086 = vsel %vm1083, %v1085, %v1081
            %v1087 = vand.u32 2147483647, %v1033
            %v1088 = vand.u32 2147483647, %v1035
            %v1089 = vand.u32 2147483647, %v1037
            %v1090 = vmin.f32 %v1087, %v1089
            %v1091 = vmul.f32 1.1920929e-08, %v1090
            %vm1092 = vcmp.le.f32.partialorder %v1088, %v1091
            %v1093 = vsel %vm1092, 0.0, %v1086
            %v1094 = vmul.f32 %v1093, %v1093
            %v1095 = vadd.f32 1.0, %v1094
            %v1096 = vrsqrt.pop %v1095
            %v1097 = vmul.f32 %v1096, %v1095
            %v1098 = vmul.f32 %v1097, %v1096
            %v1099 = vmul.f32 0.5, %v1098
            %v1100 = vsub.f32 1.5, %v1099
            %v1101 = vmul.f32 %v1096, %v1100
            %vm1102 = vweird.f32 %v1095
            %vm1103 = vweird.f32 %v1096
            %vm1104 = vmor %vm1102, %vm1103
            %v1105 = vsel %vm1104, %v1096, %v1101
            %v1106 = vmul.f32 %v1093, %v1105
            %v1107 = vmul.f32 %v1093, %v1035
            %v1108 = vsub.f32 %v1033, %v1107
            %v1109 = vmul.f32 %v1093, %v1035
            %v1110 = vadd.f32 %v1037, %v1109
            %s1111 = smov [#allocation19]
            %1112 = vst [vmem:[%s1111] sm:$0xff] %v1108
            %s1113 = smov [#allocation20]
            %1114 = vst [vmem:[%s1113] sm:$0xff] %v1110
            %s1115 = smov %s1030
            %1116 = vst [vmem:[%s1115] sm:$0xff] %v1105
            %s1117 = smov %s1031
            %1118 = vst [vmem:[%s1117] sm:$0xff] %v1106
            %s1119 = smov [#allocation21]
            %v1120 = vld [vmem:[%s1119] ss:$0 sm:$0xff]
            %v1121 = vlaneseq
            %v1122 = vand.u32 %v1121, 127
            %v1123 = vmov %v1122
            %v1124 = vlaneseq
            %v1125 = vshrl.u32 %v1124, 7
            %v1126 = vmov %v1125
            %vm1128 = vcmp.eq.s32.totalorder %v1126, %v1123
            %v1129 = vsel %vm1128, %v1120, 0.0
            %1130 = vadd.xlane.f32.xlu0 %v1129
            %v1131 = vpop.xlane.xlu0 %1130
            %s1132 = smov [#allocation23]
            %1133 = vst [vmem:[%s1132] sm:$0xff] %v1131
            %s1134 = smov [#allocation21]
            %v1135 = vld [vmem:[%s1134] ss:$0 sm:$0xff]
            %v1136 = vlaneseq
            %v1137 = vand.u32 %v1136, 127
            %v1138 = vmov %v1137
            %v1139 = vlaneseq
            %v1140 = vshrl.u32 %v1139, 7
            %v1141 = vmov %v1140
            %v1142 = vadd.s32 %v1141, 8
            %vm1143 = vcmp.eq.s32.totalorder %v1142, %v1138
            %v1144 = vsel %vm1143, %v1135, 0.0
            %1145 = vadd.xlane.f32.xlu0 %v1144
            %v1146 = vpop.xlane.xlu0 %1145
            %s1147 = smov [#allocation23]
            %s1148 = scalar_lea.vmem %s1147, 8
            %1149 = vst [vmem:[%s1148] sm:$0xff] %v1146
            %s1150 = smov [#allocation21]
            %v1151 = vld [vmem:[%s1150] ss:$0 sm:$0xff]
            %v1152 = vlaneseq
            %v1153 = vand.u32 %v1152, 127
            %v1154 = vmov %v1153
            %v1155 = vlaneseq
            %v1156 = vshrl.u32 %v1155, 7
            %v1157 = vmov %v1156
            %v1158 = vadd.s32 %v1157, 16
            %vm1159 = vcmp.eq.s32.totalorder %v1158, %v1154
            %v1160 = vsel %vm1159, %v1151, 0.0
            %1161 = vadd.xlane.f32.xlu0 %v1160
            %v1162 = vpop.xlane.xlu0 %1161
            %s1163 = smov [#allocation23]
            %s1164 = scalar_lea.vmem %s1163, 16
            %1165 = vst [vmem:[%s1164] sm:$0xff] %v1162
            %s1166 = smov [#allocation21]
            %v1167 = vld [vmem:[%s1166] ss:$0 sm:$0xff]
            %v1168 = vlaneseq
            %v1169 = vand.u32 %v1168, 127
            %v1170 = vmov %v1169
            %v1171 = vlaneseq
            %v1172 = vshrl.u32 %v1171, 7
            %v1173 = vmov %v1172
            %v1174 = vadd.s32 %v1173, 24
            %vm1175 = vcmp.eq.s32.totalorder %v1174, %v1170
            %v1176 = vsel %vm1175, %v1167, 0.0
            %1177 = vadd.xlane.f32.xlu0 %v1176
            %v1178 = vpop.xlane.xlu0 %1177
            %s1179 = smov [#allocation23]
            %s1180 = scalar_lea.vmem %s1179, 24
            %1181 = vst [vmem:[%s1180] sm:$0xff] %v1178
            %s1182 = smov [#allocation21]
            %v1183 = vld [vmem:[%s1182] ss:$0 sm:$0xff]
            %v1184 = vlaneseq
            %v1185 = vand.u32 %v1184, 127
            %v1186 = vmov %v1185
            %v1187 = vlaneseq
            %v1188 = vshrl.u32 %v1187, 7
            %v1189 = vmov %v1188
            %v1190 = vadd.s32 %v1189, 32
            %vm1191 = vcmp.eq.s32.totalorder %v1190, %v1186
            %v1192 = vsel %vm1191, %v1183, 0.0
            %1193 = vadd.xlane.f32.xlu0 %v1192
            %v1194 = vpop.xlane.xlu0 %1193
            %s1195 = smov [#allocation23]
            %s1196 = scalar_lea.vmem %s1195, 32
            %1197 = vst [vmem:[%s1196] sm:$0xff] %v1194
            %s1198 = smov [#allocation21]
            %v1199 = vld [vmem:[%s1198] ss:$0 sm:$0xff]
            %v1200 = vlaneseq
            %v1201 = vand.u32 %v1200, 127
            %v1202 = vmov %v1201
            %v1203 = vlaneseq
            %v1204 = vshrl.u32 %v1203, 7
            %v1205 = vmov %v1204
            %v1206 = vadd.s32 %v1205, 40
            %vm1207 = vcmp.eq.s32.totalorder %v1206, %v1202
            %v1208 = vsel %vm1207, %v1199, 0.0
            %1209 = vadd.xlane.f32.xlu0 %v1208
            %v1210 = vpop.xlane.xlu0 %1209
            %s1211 = smov [#allocation23]
            %s1212 = scalar_lea.vmem %s1211, 40
            %1213 = vst [vmem:[%s1212] sm:$0xff] %v1210
            %s1214 = smov [#allocation21]
            %v1215 = vld [vmem:[%s1214] ss:$0 sm:$0xff]
            %v1216 = vlaneseq
            %v1217 = vand.u32 %v1216, 127
            %v1218 = vmov %v1217
            %v1219 = vlaneseq
            %v1220 = vshrl.u32 %v1219, 7
            %v1221 = vmov %v1220
            %v1222 = vadd.s32 %v1221, 48
            %vm1223 = vcmp.eq.s32.totalorder %v1222, %v1218
            %v1224 = vsel %vm1223, %v1215, 0.0
            %1225 = vadd.xlane.f32.xlu0 %v1224
            %v1226 = vpop.xlane.xlu0 %1225
            %s1227 = smov [#allocation23]
            %s1228 = scalar_lea.vmem %s1227, 48
            %1229 = vst [vmem:[%s1228] sm:$0xff] %v1226
            %s1230 = smov [#allocation22]
            %v1231 = vld [vmem:[%s1230] ss:$0 sm:$0xff]
            %v1232 = vlaneseq
            %v1233 = vand.u32 %v1232, 127
            %v1234 = vmov %v1233
            %v1235 = vlaneseq
            %v1236 = vshrl.u32 %v1235, 7
            %v1237 = vmov %v1236
            %vm1239 = vcmp.eq.s32.totalorder %v1237, %v1234
            %v1240 = vsel %vm1239, %v1231, 0.0
            %1241 = vadd.xlane.f32.xlu0 %v1240
            %v1242 = vpop.xlane.xlu0 %1241
            %s1243 = smov [#allocation24]
            %1244 = vst [vmem:[%s1243] sm:$0xff] %v1242
            %s1245 = smov [#allocation22]
            %v1246 = vld [vmem:[%s1245] ss:$0 sm:$0xff]
            %v1247 = vlaneseq
            %v1248 = vand.u32 %v1247, 127
            %v1249 = vmov %v1248
            %v1250 = vlaneseq
            %v1251 = vshrl.u32 %v1250, 7
            %v1252 = vmov %v1251
            %v1253 = vadd.s32 %v1252, 8
            %vm1254 = vcmp.eq.s32.totalorder %v1253, %v1249
            %v1255 = vsel %vm1254, %v1246, 0.0
            %1256 = vadd.xlane.f32.xlu0 %v1255
            %v1257 = vpop.xlane.xlu0 %1256
            %s1258 = smov [#allocation24]
            %s1259 = scalar_lea.vmem %s1258, 8
            %1260 = vst [vmem:[%s1259] sm:$0xff] %v1257
            %s1261 = smov [#allocation22]
            %v1262 = vld [vmem:[%s1261] ss:$0 sm:$0xff]
            %v1263 = vlaneseq
            %v1264 = vand.u32 %v1263, 127
            %v1265 = vmov %v1264
            %v1266 = vlaneseq
            %v1267 = vshrl.u32 %v1266, 7
            %v1268 = vmov %v1267
            %v1269 = vadd.s32 %v1268, 16
            %vm1270 = vcmp.eq.s32.totalorder %v1269, %v1265
            %v1271 = vsel %vm1270, %v1262, 0.0
            %1272 = vadd.xlane.f32.xlu0 %v1271
            %v1273 = vpop.xlane.xlu0 %1272
            %s1274 = smov [#allocation24]
            %s1275 = scalar_lea.vmem %s1274, 16
            %1276 = vst [vmem:[%s1275] sm:$0xff] %v1273
            %s1277 = smov [#allocation22]
            %v1278 = vld [vmem:[%s1277] ss:$0 sm:$0xff]
            %v1279 = vlaneseq
            %v1280 = vand.u32 %v1279, 127
            %v1281 = vmov %v1280
            %v1282 = vlaneseq
            %v1283 = vshrl.u32 %v1282, 7
            %v1284 = vmov %v1283
            %v1285 = vadd.s32 %v1284, 24
            %vm1286 = vcmp.eq.s32.totalorder %v1285, %v1281
            %v1287 = vsel %vm1286, %v1278, 0.0
            %1288 = vadd.xlane.f32.xlu0 %v1287
            %v1289 = vpop.xlane.xlu0 %1288
            %s1290 = smov [#allocation24]
            %s1291 = scalar_lea.vmem %s1290, 24
            %1292 = vst [vmem:[%s1291] sm:$0xff] %v1289
            %s1293 = smov [#allocation22]
            %v1294 = vld [vmem:[%s1293] ss:$0 sm:$0xff]
            %v1295 = vlaneseq
            %v1296 = vand.u32 %v1295, 127
            %v1297 = vmov %v1296
            %v1298 = vlaneseq
            %v1299 = vshrl.u32 %v1298, 7
            %v1300 = vmov %v1299
            %v1301 = vadd.s32 %v1300, 32
            %vm1302 = vcmp.eq.s32.totalorder %v1301, %v1297
            %v1303 = vsel %vm1302, %v1294, 0.0
            %1304 = vadd.xlane.f32.xlu0 %v1303
            %v1305 = vpop.xlane.xlu0 %1304
            %s1306 = smov [#allocation24]
            %s1307 = scalar_lea.vmem %s1306, 32
            %1308 = vst [vmem:[%s1307] sm:$0xff] %v1305
            %s1309 = smov [#allocation22]
            %v1310 = vld [vmem:[%s1309] ss:$0 sm:$0xff]
            %v1311 = vlaneseq
            %v1312 = vand.u32 %v1311, 127
            %v1313 = vmov %v1312
            %v1314 = vlaneseq
            %v1315 = vshrl.u32 %v1314, 7
            %v1316 = vmov %v1315
            %v1317 = vadd.s32 %v1316, 40
            %vm1318 = vcmp.eq.s32.totalorder %v1317, %v1313
            %v1319 = vsel %vm1318, %v1310, 0.0
            %1320 = vadd.xlane.f32.xlu0 %v1319
            %v1321 = vpop.xlane.xlu0 %1320
            %s1322 = smov [#allocation24]
            %s1323 = scalar_lea.vmem %s1322, 40
            %1324 = vst [vmem:[%s1323] sm:$0xff] %v1321
            %s1325 = smov [#allocation22]
            %v1326 = vld [vmem:[%s1325] ss:$0 sm:$0xff]
            %v1327 = vlaneseq
            %v1328 = vand.u32 %v1327, 127
            %v1329 = vmov %v1328
            %v1330 = vlaneseq
            %v1331 = vshrl.u32 %v1330, 7
            %v1332 = vmov %v1331
            %v1333 = vadd.s32 %v1332, 48
            %vm1334 = vcmp.eq.s32.totalorder %v1333, %v1329
            %v1335 = vsel %vm1334, %v1326, 0.0
            %1336 = vadd.xlane.f32.xlu0 %v1335
            %v1337 = vpop.xlane.xlu0 %1336
            %s1338 = smov [#allocation24]
            %s1339 = scalar_lea.vmem %s1338, 48
            %1340 = vst [vmem:[%s1339] sm:$0xff] %v1337
            %s1341 = smov [#allocation23]
            %v1342 = vld [vmem:[%s1341] sm:$0xff]
            %s1343 = smov [#allocation24]
            %v1344 = vld [vmem:[%s1343] sm:$0xff]
            %s1345 = smov [#allocation12]
            %s1346 = smov [#allocation13]
            %s1347 = smov [#allocation14]
            %s1348 = smov [#allocation15]
            %v1349 = vld [vmem:[%s1345] sm:$0xff]
            %v1350 = vld [vmem:[%s1346] sm:$0xff]
            %v1351 = vld [vmem:[%s1347] sm:$0xff]
            %v1352 = vld [vmem:[%s1348] sm:$0xff]
            %v1353 = vmul.f32 %v1342, %v1349
            %v1354 = vmul.f32 %v1344, %v1351
            %v1355 = vsub.f32 %v1353, %v1354
            %v1356 = vmul.f32 %v1342, %v1350
            %v1357 = vmul.f32 %v1344, %v1352
            %v1358 = vsub.f32 %v1356, %v1357
            %v1359 = vmul.f32 %v1344, %v1349
            %v1360 = vmul.f32 %v1342, %v1351
            %v1361 = vadd.f32 %v1359, %v1360
            %v1362 = vmul.f32 %v1344, %v1350
            %v1363 = vmul.f32 %v1342, %v1352
            %v1364 = vadd.f32 %v1362, %v1363
            %1365 = vst [vmem:[%s1345] sm:$0xff] %v1355
            %1366 = vst [vmem:[%s1346] sm:$0xff] %v1358
            %1367 = vst [vmem:[%s1347] sm:$0xff] %v1361
            %1368 = vst [vmem:[%s1348] sm:$0xff] %v1364
            %s1369 = smov [#allocation23]
            %s1370 = scalar_lea.vmem %s1369, 8
            %v1371 = vld [vmem:[%s1370] sm:$0xff]
            %s1372 = smov [#allocation24]
            %s1373 = scalar_lea.vmem %s1372, 8
            %v1374 = vld [vmem:[%s1373] sm:$0xff]
            %s1375 = smov [#allocation12]
            %s1376 = scalar_lea.vmem %s1375, 8
            %s1377 = smov [#allocation13]
            %s1378 = scalar_lea.vmem %s1377, 8
            %s1379 = smov [#allocation14]
            %s1380 = scalar_lea.vmem %s1379, 8
            %s1381 = smov [#allocation15]
            %s1382 = scalar_lea.vmem %s1381, 8
            %v1383 = vld [vmem:[%s1376] sm:$0xff]
            %v1384 = vld [vmem:[%s1378] sm:$0xff]
            %v1385 = vld [vmem:[%s1380] sm:$0xff]
            %v1386 = vld [vmem:[%s1382] sm:$0xff]
            %v1387 = vmul.f32 %v1371, %v1383
            %v1388 = vmul.f32 %v1374, %v1385
            %v1389 = vsub.f32 %v1387, %v1388
            %v1390 = vmul.f32 %v1371, %v1384
            %v1391 = vmul.f32 %v1374, %v1386
            %v1392 = vsub.f32 %v1390, %v1391
            %v1393 = vmul.f32 %v1374, %v1383
            %v1394 = vmul.f32 %v1371, %v1385
            %v1395 = vadd.f32 %v1393, %v1394
            %v1396 = vmul.f32 %v1374, %v1384
            %v1397 = vmul.f32 %v1371, %v1386
            %v1398 = vadd.f32 %v1396, %v1397
            %1399 = vst [vmem:[%s1376] sm:$0xff] %v1389
            %1400 = vst [vmem:[%s1378] sm:$0xff] %v1392
            %1401 = vst [vmem:[%s1380] sm:$0xff] %v1395
            %1402 = vst [vmem:[%s1382] sm:$0xff] %v1398
            %s1403 = smov [#allocation23]
            %s1404 = scalar_lea.vmem %s1403, 16
            %v1405 = vld [vmem:[%s1404] sm:$0xff]
            %s1406 = smov [#allocation24]
            %s1407 = scalar_lea.vmem %s1406, 16
            %v1408 = vld [vmem:[%s1407] sm:$0xff]
            %s1409 = smov [#allocation12]
            %s1410 = scalar_lea.vmem %s1409, 16
            %s1411 = smov [#allocation13]
            %s1412 = scalar_lea.vmem %s1411, 16
            %s1413 = smov [#allocation14]
            %s1414 = scalar_lea.vmem %s1413, 16
            %s1415 = smov [#allocation15]
            %s1416 = scalar_lea.vmem %s1415, 16
            %v1417 = vld [vmem:[%s1410] sm:$0xff]
            %v1418 = vld [vmem:[%s1412] sm:$0xff]
            %v1419 = vld [vmem:[%s1414] sm:$0xff]
            %v1420 = vld [vmem:[%s1416] sm:$0xff]
            %v1421 = vmul.f32 %v1405, %v1417
            %v1422 = vmul.f32 %v1408, %v1419
            %v1423 = vsub.f32 %v1421, %v1422
            %v1424 = vmul.f32 %v1405, %v1418
            %v1425 = vmul.f32 %v1408, %v1420
            %v1426 = vsub.f32 %v1424, %v1425
            %v1427 = vmul.f32 %v1408, %v1417
            %v1428 = vmul.f32 %v1405, %v1419
            %v1429 = vadd.f32 %v1427, %v1428
            %v1430 = vmul.f32 %v1408, %v1418
            %v1431 = vmul.f32 %v1405, %v1420
            %v1432 = vadd.f32 %v1430, %v1431
            %1433 = vst [vmem:[%s1410] sm:$0xff] %v1423
            %1434 = vst [vmem:[%s1412] sm:$0xff] %v1426
            %1435 = vst [vmem:[%s1414] sm:$0xff] %v1429
            %1436 = vst [vmem:[%s1416] sm:$0xff] %v1432
            %s1437 = smov [#allocation23]
            %s1438 = scalar_lea.vmem %s1437, 24
            %v1439 = vld [vmem:[%s1438] sm:$0xff]
            %s1440 = smov [#allocation24]
            %s1441 = scalar_lea.vmem %s1440, 24
            %v1442 = vld [vmem:[%s1441] sm:$0xff]
            %s1443 = smov [#allocation12]
            %s1444 = scalar_lea.vmem %s1443, 24
            %s1445 = smov [#allocation13]
            %s1446 = scalar_lea.vmem %s1445, 24
            %s1447 = smov [#allocation14]
            %s1448 = scalar_lea.vmem %s1447, 24
            %s1449 = smov [#allocation15]
            %s1450 = scalar_lea.vmem %s1449, 24
            %v1451 = vld [vmem:[%s1444] sm:$0xff]
            %v1452 = vld [vmem:[%s1446] sm:$0xff]
            %v1453 = vld [vmem:[%s1448] sm:$0xff]
            %v1454 = vld [vmem:[%s1450] sm:$0xff]
            %v1455 = vmul.f32 %v1439, %v1451
            %v1456 = vmul.f32 %v1442, %v1453
            %v1457 = vsub.f32 %v1455, %v1456
            %v1458 = vmul.f32 %v1439, %v1452
            %v1459 = vmul.f32 %v1442, %v1454
            %v1460 = vsub.f32 %v1458, %v1459
            %v1461 = vmul.f32 %v1442, %v1451
            %v1462 = vmul.f32 %v1439, %v1453
            %v1463 = vadd.f32 %v1461, %v1462
            %v1464 = vmul.f32 %v1442, %v1452
            %v1465 = vmul.f32 %v1439, %v1454
            %v1466 = vadd.f32 %v1464, %v1465
            %1467 = vst [vmem:[%s1444] sm:$0xff] %v1457
            %1468 = vst [vmem:[%s1446] sm:$0xff] %v1460
            %1469 = vst [vmem:[%s1448] sm:$0xff] %v1463
            %1470 = vst [vmem:[%s1450] sm:$0xff] %v1466
            %s1471 = smov [#allocation23]
            %s1472 = scalar_lea.vmem %s1471, 32
            %v1473 = vld [vmem:[%s1472] sm:$0xff]
            %s1474 = smov [#allocation24]
            %s1475 = scalar_lea.vmem %s1474, 32
            %v1476 = vld [vmem:[%s1475] sm:$0xff]
            %s1477 = smov [#allocation12]
            %s1478 = scalar_lea.vmem %s1477, 32
            %s1479 = smov [#allocation13]
            %s1480 = scalar_lea.vmem %s1479, 32
            %s1481 = smov [#allocation14]
            %s1482 = scalar_lea.vmem %s1481, 32
            %s1483 = smov [#allocation15]
            %s1484 = scalar_lea.vmem %s1483, 32
            %v1485 = vld [vmem:[%s1478] sm:$0xff]
            %v1486 = vld [vmem:[%s1480] sm:$0xff]
            %v1487 = vld [vmem:[%s1482] sm:$0xff]
            %v1488 = vld [vmem:[%s1484] sm:$0xff]
            %v1489 = vmul.f32 %v1473, %v1485
            %v1490 = vmul.f32 %v1476, %v1487
            %v1491 = vsub.f32 %v1489, %v1490
            %v1492 = vmul.f32 %v1473, %v1486
            %v1493 = vmul.f32 %v1476, %v1488
            %v1494 = vsub.f32 %v1492, %v1493
            %v1495 = vmul.f32 %v1476, %v1485
            %v1496 = vmul.f32 %v1473, %v1487
            %v1497 = vadd.f32 %v1495, %v1496
            %v1498 = vmul.f32 %v1476, %v1486
            %v1499 = vmul.f32 %v1473, %v1488
            %v1500 = vadd.f32 %v1498, %v1499
            %1501 = vst [vmem:[%s1478] sm:$0xff] %v1491
            %1502 = vst [vmem:[%s1480] sm:$0xff] %v1494
            %1503 = vst [vmem:[%s1482] sm:$0xff] %v1497
            %1504 = vst [vmem:[%s1484] sm:$0xff] %v1500
            %s1505 = smov [#allocation23]
            %s1506 = scalar_lea.vmem %s1505, 40
            %v1507 = vld [vmem:[%s1506] sm:$0xff]
            %s1508 = smov [#allocation24]
            %s1509 = scalar_lea.vmem %s1508, 40
            %v1510 = vld [vmem:[%s1509] sm:$0xff]
            %s1511 = smov [#allocation12]
            %s1512 = scalar_lea.vmem %s1511, 40
            %s1513 = smov [#allocation13]
            %s1514 = scalar_lea.vmem %s1513, 40
            %s1515 = smov [#allocation14]
            %s1516 = scalar_lea.vmem %s1515, 40
            %s1517 = smov [#allocation15]
            %s1518 = scalar_lea.vmem %s1517, 40
            %v1519 = vld [vmem:[%s1512] sm:$0xff]
            %v1520 = vld [vmem:[%s1514] sm:$0xff]
            %v1521 = vld [vmem:[%s1516] sm:$0xff]
            %v1522 = vld [vmem:[%s1518] sm:$0xff]
            %v1523 = vmul.f32 %v1507, %v1519
            %v1524 = vmul.f32 %v1510, %v1521
            %v1525 = vsub.f32 %v1523, %v1524
            %v1526 = vmul.f32 %v1507, %v1520
            %v1527 = vmul.f32 %v1510, %v1522
            %v1528 = vsub.f32 %v1526, %v1527
            %v1529 = vmul.f32 %v1510, %v1519
            %v1530 = vmul.f32 %v1507, %v1521
            %v1531 = vadd.f32 %v1529, %v1530
            %v1532 = vmul.f32 %v1510, %v1520
            %v1533 = vmul.f32 %v1507, %v1522
            %v1534 = vadd.f32 %v1532, %v1533
            %1535 = vst [vmem:[%s1512] sm:$0xff] %v1525
            %1536 = vst [vmem:[%s1514] sm:$0xff] %v1528
            %1537 = vst [vmem:[%s1516] sm:$0xff] %v1531
            %1538 = vst [vmem:[%s1518] sm:$0xff] %v1534
            %s1539 = smov [#allocation23]
            %s1540 = scalar_lea.vmem %s1539, 48
            %v1541 = vld [vmem:[%s1540] sm:$0xff]
            %s1542 = smov [#allocation24]
            %s1543 = scalar_lea.vmem %s1542, 48
            %v1544 = vld [vmem:[%s1543] sm:$0xff]
            %s1545 = smov [#allocation12]
            %s1546 = scalar_lea.vmem %s1545, 48
            %s1547 = smov [#allocation13]
            %s1548 = scalar_lea.vmem %s1547, 48
            %s1549 = smov [#allocation14]
            %s1550 = scalar_lea.vmem %s1549, 48
            %s1551 = smov [#allocation15]
            %s1552 = scalar_lea.vmem %s1551, 48
            %v1553 = vld [vmem:[%s1546] sm:$0x3]
            %v1554 = vld [vmem:[%s1548] sm:$0x3]
            %v1555 = vld [vmem:[%s1550] sm:$0x3]
            %v1556 = vld [vmem:[%s1552] sm:$0x3]
            %v1557 = vmul.f32 %v1541, %v1553
            %v1558 = vmul.f32 %v1544, %v1555
            %v1559 = vsub.f32 %v1557, %v1558
            %v1560 = vmul.f32 %v1541, %v1554
            %v1561 = vmul.f32 %v1544, %v1556
            %v1562 = vsub.f32 %v1560, %v1561
            %v1563 = vmul.f32 %v1544, %v1553
            %v1564 = vmul.f32 %v1541, %v1555
            %v1565 = vadd.f32 %v1563, %v1564
            %v1566 = vmul.f32 %v1544, %v1554
            %v1567 = vmul.f32 %v1541, %v1556
            %v1568 = vadd.f32 %v1566, %v1567
            %1569 = vst [vmem:[%s1546] sm:$0x3] %v1559
            %1570 = vst [vmem:[%s1548] sm:$0x3] %v1562
            %1571 = vst [vmem:[%s1550] sm:$0x3] %v1565
            %1572 = vst [vmem:[%s1552] sm:$0x3] %v1568
            %s1573 = smov [#allocation21]
            %v1574 = vld [vmem:[%s1573] ss:$0 sm:$0xff]
            %s1575 = smov [#allocation22]
            %v1576 = vld [vmem:[%s1575] ss:$0 sm:$0xff]
            %s1577 = smov [#allocation12]
            %s1578 = smov [#allocation13]
            %s1579 = smov [#allocation14]
            %s1580 = smov [#allocation15]
            %v1581 = vld [vmem:[%s1577] sm:$0xff]
            %v1582 = vld [vmem:[%s1578] sm:$0xff]
            %v1583 = vld [vmem:[%s1579] sm:$0xff]
            %v1584 = vld [vmem:[%s1580] sm:$0xff]
            %v1585 = vmul.f32 %v1574, %v1581
            %v1586 = vmul.f32 %v1576, %v1582
            %v1587 = vsub.f32 %v1585, %v1586
            %v1588 = vmul.f32 %v1576, %v1581
            %v1589 = vmul.f32 %v1574, %v1582
            %v1590 = vadd.f32 %v1588, %v1589
            %v1591 = vmul.f32 %v1574, %v1583
            %v1592 = vmul.f32 %v1576, %v1584
            %v1593 = vsub.f32 %v1591, %v1592
            %v1594 = vmul.f32 %v1576, %v1583
            %v1595 = vmul.f32 %v1574, %v1584
            %v1596 = vadd.f32 %v1594, %v1595
            %1597 = vst [vmem:[%s1577] sm:$0xff] %v1587
            %1598 = vst [vmem:[%s1578] sm:$0xff] %v1590
            %1599 = vst [vmem:[%s1579] sm:$0xff] %v1593
            %1600 = vst [vmem:[%s1580] sm:$0xff] %v1596
            %s1601 = smov [#allocation12]
            %s1602 = scalar_lea.vmem %s1601, 8
            %s1603 = smov [#allocation13]
            %s1604 = scalar_lea.vmem %s1603, 8
            %s1605 = smov [#allocation14]
            %s1606 = scalar_lea.vmem %s1605, 8
            %s1607 = smov [#allocation15]
            %s1608 = scalar_lea.vmem %s1607, 8
            %v1609 = vld [vmem:[%s1602] sm:$0xff]
            %v1610 = vld [vmem:[%s1604] sm:$0xff]
            %v1611 = vld [vmem:[%s1606] sm:$0xff]
            %v1612 = vld [vmem:[%s1608] sm:$0xff]
            %v1613 = vmul.f32 %v1574, %v1609
            %v1614 = vmul.f32 %v1576, %v1610
            %v1615 = vsub.f32 %v1613, %v1614
            %v1616 = vmul.f32 %v1576, %v1609
            %v1617 = vmul.f32 %v1574, %v1610
            %v1618 = vadd.f32 %v1616, %v1617
            %v1619 = vmul.f32 %v1574, %v1611
            %v1620 = vmul.f32 %v1576, %v1612
            %v1621 = vsub.f32 %v1619, %v1620
            %v1622 = vmul.f32 %v1576, %v1611
            %v1623 = vmul.f32 %v1574, %v1612
            %v1624 = vadd.f32 %v1622, %v1623
            %1625 = vst [vmem:[%s1602] sm:$0xff] %v1615
            %1626 = vst [vmem:[%s1604] sm:$0xff] %v1618
            %1627 = vst [vmem:[%s1606] sm:$0xff] %v1621
            %1628 = vst [vmem:[%s1608] sm:$0xff] %v1624
            %s1629 = smov [#allocation12]
            %s1630 = scalar_lea.vmem %s1629, 16
            %s1631 = smov [#allocation13]
            %s1632 = scalar_lea.vmem %s1631, 16
            %s1633 = smov [#allocation14]
            %s1634 = scalar_lea.vmem %s1633, 16
            %s1635 = smov [#allocation15]
            %s1636 = scalar_lea.vmem %s1635, 16
            %v1637 = vld [vmem:[%s1630] sm:$0xff]
            %v1638 = vld [vmem:[%s1632] sm:$0xff]
            %v1639 = vld [vmem:[%s1634] sm:$0xff]
            %v1640 = vld [vmem:[%s1636] sm:$0xff]
            %v1641 = vmul.f32 %v1574, %v1637
            %v1642 = vmul.f32 %v1576, %v1638
            %v1643 = vsub.f32 %v1641, %v1642
            %v1644 = vmul.f32 %v1576, %v1637
            %v1645 = vmul.f32 %v1574, %v1638
            %v1646 = vadd.f32 %v1644, %v1645
            %v1647 = vmul.f32 %v1574, %v1639
            %v1648 = vmul.f32 %v1576, %v1640
            %v1649 = vsub.f32 %v1647, %v1648
            %v1650 = vmul.f32 %v1576, %v1639
            %v1651 = vmul.f32 %v1574, %v1640
            %v1652 = vadd.f32 %v1650, %v1651
            %1653 = vst [vmem:[%s1630] sm:$0xff] %v1643
            %1654 = vst [vmem:[%s1632] sm:$0xff] %v1646
            %1655 = vst [vmem:[%s1634] sm:$0xff] %v1649
            %1656 = vst [vmem:[%s1636] sm:$0xff] %v1652
            %s1657 = smov [#allocation12]
            %s1658 = scalar_lea.vmem %s1657, 24
            %s1659 = smov [#allocation13]
            %s1660 = scalar_lea.vmem %s1659, 24
            %s1661 = smov [#allocation14]
            %s1662 = scalar_lea.vmem %s1661, 24
            %s1663 = smov [#allocation15]
            %s1664 = scalar_lea.vmem %s1663, 24
            %v1665 = vld [vmem:[%s1658] sm:$0xff]
            %v1666 = vld [vmem:[%s1660] sm:$0xff]
            %v1667 = vld [vmem:[%s1662] sm:$0xff]
            %v1668 = vld [vmem:[%s1664] sm:$0xff]
            %v1669 = vmul.f32 %v1574, %v1665
            %v1670 = vmul.f32 %v1576, %v1666
            %v1671 = vsub.f32 %v1669, %v1670
            %v1672 = vmul.f32 %v1576, %v1665
            %v1673 = vmul.f32 %v1574, %v1666
            %v1674 = vadd.f32 %v1672, %v1673
            %v1675 = vmul.f32 %v1574, %v1667
            %v1676 = vmul.f32 %v1576, %v1668
            %v1677 = vsub.f32 %v1675, %v1676
            %v1678 = vmul.f32 %v1576, %v1667
            %v1679 = vmul.f32 %v1574, %v1668
            %v1680 = vadd.f32 %v1678, %v1679
            %1681 = vst [vmem:[%s1658] sm:$0xff] %v1671
            %1682 = vst [vmem:[%s1660] sm:$0xff] %v1674
            %1683 = vst [vmem:[%s1662] sm:$0xff] %v1677
            %1684 = vst [vmem:[%s1664] sm:$0xff] %v1680
            %s1685 = smov [#allocation12]
            %s1686 = scalar_lea.vmem %s1685, 32
            %s1687 = smov [#allocation13]
            %s1688 = scalar_lea.vmem %s1687, 32
            %s1689 = smov [#allocation14]
            %s1690 = scalar_lea.vmem %s1689, 32
            %s1691 = smov [#allocation15]
            %s1692 = scalar_lea.vmem %s1691, 32
            %v1693 = vld [vmem:[%s1686] sm:$0xff]
            %v1694 = vld [vmem:[%s1688] sm:$0xff]
            %v1695 = vld [vmem:[%s1690] sm:$0xff]
            %v1696 = vld [vmem:[%s1692] sm:$0xff]
            %v1697 = vmul.f32 %v1574, %v1693
            %v1698 = vmul.f32 %v1576, %v1694
            %v1699 = vsub.f32 %v1697, %v1698
            %v1700 = vmul.f32 %v1576, %v1693
            %v1701 = vmul.f32 %v1574, %v1694
            %v1702 = vadd.f32 %v1700, %v1701
            %v1703 = vmul.f32 %v1574, %v1695
            %v1704 = vmul.f32 %v1576, %v1696
            %v1705 = vsub.f32 %v1703, %v1704
            %v1706 = vmul.f32 %v1576, %v1695
            %v1707 = vmul.f32 %v1574, %v1696
            %v1708 = vadd.f32 %v1706, %v1707
            %1709 = vst [vmem:[%s1686] sm:$0xff] %v1699
            %1710 = vst [vmem:[%s1688] sm:$0xff] %v1702
            %1711 = vst [vmem:[%s1690] sm:$0xff] %v1705
            %1712 = vst [vmem:[%s1692] sm:$0xff] %v1708
            %s1713 = smov [#allocation12]
            %s1714 = scalar_lea.vmem %s1713, 40
            %s1715 = smov [#allocation13]
            %s1716 = scalar_lea.vmem %s1715, 40
            %s1717 = smov [#allocation14]
            %s1718 = scalar_lea.vmem %s1717, 40
            %s1719 = smov [#allocation15]
            %s1720 = scalar_lea.vmem %s1719, 40
            %v1721 = vld [vmem:[%s1714] sm:$0xff]
            %v1722 = vld [vmem:[%s1716] sm:$0xff]
            %v1723 = vld [vmem:[%s1718] sm:$0xff]
            %v1724 = vld [vmem:[%s1720] sm:$0xff]
            %v1725 = vmul.f32 %v1574, %v1721
            %v1726 = vmul.f32 %v1576, %v1722
            %v1727 = vsub.f32 %v1725, %v1726
            %v1728 = vmul.f32 %v1576, %v1721
            %v1729 = vmul.f32 %v1574, %v1722
            %v1730 = vadd.f32 %v1728, %v1729
            %v1731 = vmul.f32 %v1574, %v1723
            %v1732 = vmul.f32 %v1576, %v1724
            %v1733 = vsub.f32 %v1731, %v1732
            %v1734 = vmul.f32 %v1576, %v1723
            %v1735 = vmul.f32 %v1574, %v1724
            %v1736 = vadd.f32 %v1734, %v1735
            %1737 = vst [vmem:[%s1714] sm:$0xff] %v1727
            %1738 = vst [vmem:[%s1716] sm:$0xff] %v1730
            %1739 = vst [vmem:[%s1718] sm:$0xff] %v1733
            %1740 = vst [vmem:[%s1720] sm:$0xff] %v1736
            %s1741 = smov [#allocation12]
            %s1742 = scalar_lea.vmem %s1741, 48
            %s1743 = smov [#allocation13]
            %s1744 = scalar_lea.vmem %s1743, 48
            %s1745 = smov [#allocation14]
            %s1746 = scalar_lea.vmem %s1745, 48
            %s1747 = smov [#allocation15]
            %s1748 = scalar_lea.vmem %s1747, 48
            %v1749 = vld [vmem:[%s1742] sm:$0x3]
            %v1750 = vld [vmem:[%s1744] sm:$0x3]
            %v1751 = vld [vmem:[%s1746] sm:$0x3]
            %v1752 = vld [vmem:[%s1748] sm:$0x3]
            %v1753 = vmul.f32 %v1574, %v1749
            %v1754 = vmul.f32 %v1576, %v1750
            %v1755 = vsub.f32 %v1753, %v1754
            %v1756 = vmul.f32 %v1576, %v1749
            %v1757 = vmul.f32 %v1574, %v1750
            %v1758 = vadd.f32 %v1756, %v1757
            %v1759 = vmul.f32 %v1574, %v1751
            %v1760 = vmul.f32 %v1576, %v1752
            %v1761 = vsub.f32 %v1759, %v1760
            %v1762 = vmul.f32 %v1576, %v1751
            %v1763 = vmul.f32 %v1574, %v1752
            %v1764 = vadd.f32 %v1762, %v1763
            %1765 = vst [vmem:[%s1742] sm:$0x3] %v1755
            %1766 = vst [vmem:[%s1744] sm:$0x3] %v1758
            %1767 = vst [vmem:[%s1746] sm:$0x3] %v1761
            %1768 = vst [vmem:[%s1748] sm:$0x3] %v1764
            %s1769 = smov [#allocation12]
            %s1770 = smov [#allocation19]
            %v1771 = vlaneseq
            %v1772 = vand.u32 %v1771, 127
            %v1773 = vmov %v1772
            %v1774 = vlaneseq
            %v1775 = vshrl.u32 %v1774, 7
            %v1776 = vmov %v1775
            %v1777 = vld [vmem:[%s1770] ss:$0 sm:$0xff]
            %v1778 = vld [vmem:[%s1769] sm:$0xff]
            %vm1781 = vcmp.eq.s32.totalorder %v1776, %v1773
            %v1782 = vsel %vm1781, %v1777, %v1778
            %1783 = vst [vmem:[%s1769] sm:$0xff] %v1782
            %v1784 = vld [vmem:[%s1770] ss:$0 sm:$0xff]
            %s1785 = scalar_lea.vmem %s1769, 8
            %v1786 = vld [vmem:[%s1785] sm:$0xff]
            %v1788 = vadd.s32 %v1776, 8
            %vm1789 = vcmp.eq.s32.totalorder %v1788, %v1773
            %v1790 = vsel %vm1789, %v1784, %v1786
            %1791 = vst [vmem:[%s1785] sm:$0xff] %v1790
            %v1792 = vld [vmem:[%s1770] ss:$0 sm:$0xff]
            %s1793 = scalar_lea.vmem %s1769, 16
            %v1794 = vld [vmem:[%s1793] sm:$0xff]
            %v1796 = vadd.s32 %v1776, 16
            %vm1797 = vcmp.eq.s32.totalorder %v1796, %v1773
            %v1798 = vsel %vm1797, %v1792, %v1794
            %1799 = vst [vmem:[%s1793] sm:$0xff] %v1798
            %v1800 = vld [vmem:[%s1770] ss:$0 sm:$0xff]
            %s1801 = scalar_lea.vmem %s1769, 24
            %v1802 = vld [vmem:[%s1801] sm:$0xff]
            %v1804 = vadd.s32 %v1776, 24
            %vm1805 = vcmp.eq.s32.totalorder %v1804, %v1773
            %v1806 = vsel %vm1805, %v1800, %v1802
            %1807 = vst [vmem:[%s1801] sm:$0xff] %v1806
            %v1808 = vld [vmem:[%s1770] ss:$0 sm:$0xff]
            %s1809 = scalar_lea.vmem %s1769, 32
            %v1810 = vld [vmem:[%s1809] sm:$0xff]
            %v1812 = vadd.s32 %v1776, 32
            %vm1813 = vcmp.eq.s32.totalorder %v1812, %v1773
            %v1814 = vsel %vm1813, %v1808, %v1810
            %1815 = vst [vmem:[%s1809] sm:$0xff] %v1814
            %v1816 = vld [vmem:[%s1770] ss:$0 sm:$0xff]
            %s1817 = scalar_lea.vmem %s1769, 40
            %v1818 = vld [vmem:[%s1817] sm:$0xff]
            %v1820 = vadd.s32 %v1776, 40
            %vm1821 = vcmp.eq.s32.totalorder %v1820, %v1773
            %v1822 = vsel %vm1821, %v1816, %v1818
            %1823 = vst [vmem:[%s1817] sm:$0xff] %v1822
            %v1824 = vld [vmem:[%s1770] ss:$0 sm:$0xff]
            %s1825 = scalar_lea.vmem %s1769, 48
            %v1826 = vld [vmem:[%s1825] sm:$0x3]
            %v1828 = vadd.s32 %v1776, 48
            %vm1829 = vcmp.eq.s32.totalorder %v1828, %v1773
            %v1830 = vsel %vm1829, %v1824, %v1826
            %1831 = vst [vmem:[%s1825] sm:$0x3] %v1830
            %s1832 = smov [#allocation13]
            %v1833 = vlaneseq
            %v1834 = vand.u32 %v1833, 127
            %v1835 = vmov %v1834
            %v1836 = vlaneseq
            %v1837 = vshrl.u32 %v1836, 7
            %v1838 = vmov %v1837
            %v1839 = vld [vmem:[%s1832] sm:$0xff]
            %vm1842 = vcmp.eq.s32.totalorder %v1838, %v1835
            %v1843 = vsel %vm1842, 0.0, %v1839
            %1844 = vst [vmem:[%s1832] sm:$0xff] %v1843
            %s1845 = scalar_lea.vmem %s1832, 8
            %v1846 = vld [vmem:[%s1845] sm:$0xff]
            %v1848 = vadd.s32 %v1838, 8
            %vm1849 = vcmp.eq.s32.totalorder %v1848, %v1835
            %v1850 = vsel %vm1849, 0.0, %v1846
            %1851 = vst [vmem:[%s1845] sm:$0xff] %v1850
            %s1852 = scalar_lea.vmem %s1832, 16
            %v1853 = vld [vmem:[%s1852] sm:$0xff]
            %v1855 = vadd.s32 %v1838, 16
            %vm1856 = vcmp.eq.s32.totalorder %v1855, %v1835
            %v1857 = vsel %vm1856, 0.0, %v1853
            %1858 = vst [vmem:[%s1852] sm:$0xff] %v1857
            %s1859 = scalar_lea.vmem %s1832, 24
            %v1860 = vld [vmem:[%s1859] sm:$0xff]
            %v1862 = vadd.s32 %v1838, 24
            %vm1863 = vcmp.eq.s32.totalorder %v1862, %v1835
            %v1864 = vsel %vm1863, 0.0, %v1860
            %1865 = vst [vmem:[%s1859] sm:$0xff] %v1864
            %s1866 = scalar_lea.vmem %s1832, 32
            %v1867 = vld [vmem:[%s1866] sm:$0xff]
            %v1869 = vadd.s32 %v1838, 32
            %vm1870 = vcmp.eq.s32.totalorder %v1869, %v1835
            %v1871 = vsel %vm1870, 0.0, %v1867
            %1872 = vst [vmem:[%s1866] sm:$0xff] %v1871
            %s1873 = scalar_lea.vmem %s1832, 40
            %v1874 = vld [vmem:[%s1873] sm:$0xff]
            %v1876 = vadd.s32 %v1838, 40
            %vm1877 = vcmp.eq.s32.totalorder %v1876, %v1835
            %v1878 = vsel %vm1877, 0.0, %v1874
            %1879 = vst [vmem:[%s1873] sm:$0xff] %v1878
            %s1880 = scalar_lea.vmem %s1832, 48
            %v1881 = vld [vmem:[%s1880] sm:$0x3]
            %v1883 = vadd.s32 %v1838, 48
            %vm1884 = vcmp.eq.s32.totalorder %v1883, %v1835
            %v1885 = vsel %vm1884, 0.0, %v1881
            %1886 = vst [vmem:[%s1880] sm:$0x3] %v1885
            %s1887 = smov [#allocation14]
            %v1888 = vlaneseq
            %v1889 = vand.u32 %v1888, 127
            %v1890 = vmov %v1889
            %v1891 = vlaneseq
            %v1892 = vshrl.u32 %v1891, 7
            %v1893 = vmov %v1892
            %v1894 = vld [vmem:[%s1887] sm:$0xff]
            %vm1897 = vcmp.eq.s32.totalorder %v1893, %v1890
            %v1898 = vsel %vm1897, 0.0, %v1894
            %1899 = vst [vmem:[%s1887] sm:$0xff] %v1898
            %s1900 = scalar_lea.vmem %s1887, 8
            %v1901 = vld [vmem:[%s1900] sm:$0xff]
            %v1903 = vadd.s32 %v1893, 8
            %vm1904 = vcmp.eq.s32.totalorder %v1903, %v1890
            %v1905 = vsel %vm1904, 0.0, %v1901
            %1906 = vst [vmem:[%s1900] sm:$0xff] %v1905
            %s1907 = scalar_lea.vmem %s1887, 16
            %v1908 = vld [vmem:[%s1907] sm:$0xff]
            %v1910 = vadd.s32 %v1893, 16
            %vm1911 = vcmp.eq.s32.totalorder %v1910, %v1890
            %v1912 = vsel %vm1911, 0.0, %v1908
            %1913 = vst [vmem:[%s1907] sm:$0xff] %v1912
            %s1914 = scalar_lea.vmem %s1887, 24
            %v1915 = vld [vmem:[%s1914] sm:$0xff]
            %v1917 = vadd.s32 %v1893, 24
            %vm1918 = vcmp.eq.s32.totalorder %v1917, %v1890
            %v1919 = vsel %vm1918, 0.0, %v1915
            %1920 = vst [vmem:[%s1914] sm:$0xff] %v1919
            %s1921 = scalar_lea.vmem %s1887, 32
            %v1922 = vld [vmem:[%s1921] sm:$0xff]
            %v1924 = vadd.s32 %v1893, 32
            %vm1925 = vcmp.eq.s32.totalorder %v1924, %v1890
            %v1926 = vsel %vm1925, 0.0, %v1922
            %1927 = vst [vmem:[%s1921] sm:$0xff] %v1926
            %s1928 = scalar_lea.vmem %s1887, 40
            %v1929 = vld [vmem:[%s1928] sm:$0xff]
            %v1931 = vadd.s32 %v1893, 40
            %vm1932 = vcmp.eq.s32.totalorder %v1931, %v1890
            %v1933 = vsel %vm1932, 0.0, %v1929
            %1934 = vst [vmem:[%s1928] sm:$0xff] %v1933
            %s1935 = scalar_lea.vmem %s1887, 48
            %v1936 = vld [vmem:[%s1935] sm:$0x3]
            %v1938 = vadd.s32 %v1893, 48
            %vm1939 = vcmp.eq.s32.totalorder %v1938, %v1890
            %v1940 = vsel %vm1939, 0.0, %v1936
            %1941 = vst [vmem:[%s1935] sm:$0x3] %v1940
            %s1942 = smov [#allocation15]
            %s1943 = smov [#allocation20]
            %v1944 = vlaneseq
            %v1945 = vand.u32 %v1944, 127
            %v1946 = vmov %v1945
            %v1947 = vlaneseq
            %v1948 = vshrl.u32 %v1947, 7
            %v1949 = vmov %v1948
            %v1950 = vld [vmem:[%s1943] ss:$0 sm:$0xff]
            %v1951 = vld [vmem:[%s1942] sm:$0xff]
            %vm1954 = vcmp.eq.s32.totalorder %v1949, %v1946
            %v1955 = vsel %vm1954, %v1950, %v1951
            %1956 = vst [vmem:[%s1942] sm:$0xff] %v1955
            %v1957 = vld [vmem:[%s1943] ss:$0 sm:$0xff]
            %s1958 = scalar_lea.vmem %s1942, 8
            %v1959 = vld [vmem:[%s1958] sm:$0xff]
            %v1961 = vadd.s32 %v1949, 8
            %vm1962 = vcmp.eq.s32.totalorder %v1961, %v1946
            %v1963 = vsel %vm1962, %v1957, %v1959
            %1964 = vst [vmem:[%s1958] sm:$0xff] %v1963
            %v1965 = vld [vmem:[%s1943] ss:$0 sm:$0xff]
            %s1966 = scalar_lea.vmem %s1942, 16
            %v1967 = vld [vmem:[%s1966] sm:$0xff]
            %v1969 = vadd.s32 %v1949, 16
            %vm1970 = vcmp.eq.s32.totalorder %v1969, %v1946
            %v1971 = vsel %vm1970, %v1965, %v1967
            %1972 = vst [vmem:[%s1966] sm:$0xff] %v1971
            %v1973 = vld [vmem:[%s1943] ss:$0 sm:$0xff]
            %s1974 = scalar_lea.vmem %s1942, 24
            %v1975 = vld [vmem:[%s1974] sm:$0xff]
            %v1977 = vadd.s32 %v1949, 24
            %vm1978 = vcmp.eq.s32.totalorder %v1977, %v1946
            %v1979 = vsel %vm1978, %v1973, %v1975
            %1980 = vst [vmem:[%s1974] sm:$0xff] %v1979
            %v1981 = vld [vmem:[%s1943] ss:$0 sm:$0xff]
            %s1982 = scalar_lea.vmem %s1942, 32
            %v1983 = vld [vmem:[%s1982] sm:$0xff]
            %v1985 = vadd.s32 %v1949, 32
            %vm1986 = vcmp.eq.s32.totalorder %v1985, %v1946
            %v1987 = vsel %vm1986, %v1981, %v1983
            %1988 = vst [vmem:[%s1982] sm:$0xff] %v1987
            %v1989 = vld [vmem:[%s1943] ss:$0 sm:$0xff]
            %s1990 = scalar_lea.vmem %s1942, 40
            %v1991 = vld [vmem:[%s1990] sm:$0xff]
            %v1993 = vadd.s32 %v1949, 40
            %vm1994 = vcmp.eq.s32.totalorder %v1993, %v1946
            %v1995 = vsel %vm1994, %v1989, %v1991
            %1996 = vst [vmem:[%s1990] sm:$0xff] %v1995
            %v1997 = vld [vmem:[%s1943] ss:$0 sm:$0xff]
            %s1998 = scalar_lea.vmem %s1942, 48
            %v1999 = vld [vmem:[%s1998] sm:$0x3]
            %v2001 = vadd.s32 %v1949, 48
            %vm2002 = vcmp.eq.s32.totalorder %v2001, %v1946
            %v2003 = vsel %vm2002, %v1997, %v1999
            %2004 = vst [vmem:[%s1998] sm:$0x3] %v2003
            %s2005 = smov [#allocation12]
            %s2006 = smov [#allocation13]
            %v2007 = vld [vmem:[%s2006] sm:$0xff]
            %2008 = vrot.lane.b32.xlu0 %v2007, 1
            %v2009 = vpop.permute.xlu0 %2008
            %v2010 = vld [vmem:[%s2005] sm:$0xff]
            %v2011 = vld [vmem:[%s2005] sm:$0xff]
            %2012 = vrot.lane.b32.xlu0 %v2011, 1
            %v2013 = vpop.permute.xlu0 %2012
            %v2014 = vlaneseq
            %v2015 = vand.u32 %v2014, 127
            %vm2016 = vcmp.eq.s32.totalorder %v2015, 0
            %v2017 = vsel %vm2016, %v2011, %v2013
            %v2018 = vlaneseq
            %v2019 = vand.u32 %v2018, 127
            %vm2020 = vcmp.eq.s32.totalorder %v2019, 1
            %v2021 = vsel %vm2020, %v2009, %v2017
            %v2022 = vlaneseq
            %v2023 = vand.u32 %v2022, 127
            %vm2024 = vcmp.ge.s32.totalorder %v2023, 0
            %vm2025 = vcmp.lt.s32.totalorder %v2023, 50
            %vm2026 = vmand %vm2024, %vm2025
            %v2027 = vsel %vm2026, %v2021, 0.0
            %v2028 = vld [vmem:[%s2006] sm:$0xff]
            %2029 = vrot.lane.b32.xlu0 %v2028, 127
            %v2030 = vpop.permute.xlu0 %2029
            %v2031 = vlaneseq
            %v2032 = vand.u32 %v2031, 127
            %vm2033 = vcmp.eq.s32.totalorder %v2032, 49
            %v2034 = vsel %vm2033, %v2010, %v2030
            %s2035 = smov [#allocation12]
            %s2036 = scalar_lea.vmem %s2035, 8
            %s2037 = smov [#allocation13]
            %s2038 = scalar_lea.vmem %s2037, 8
            %v2039 = vld [vmem:[%s2038] sm:$0xff]
            %2040 = vrot.lane.b32.xlu0 %v2039, 1
            %v2041 = vpop.permute.xlu0 %2040
            %v2042 = vld [vmem:[%s2036] sm:$0xff]
            %v2043 = vld [vmem:[%s2036] sm:$0xff]
            %2044 = vrot.lane.b32.xlu0 %v2043, 1
            %v2045 = vpop.permute.xlu0 %2044
            %v2046 = vlaneseq
            %v2047 = vand.u32 %v2046, 127
            %vm2048 = vcmp.eq.s32.totalorder %v2047, 0
            %v2049 = vsel %vm2048, %v2043, %v2045
            %v2050 = vlaneseq
            %v2051 = vand.u32 %v2050, 127
            %vm2052 = vcmp.eq.s32.totalorder %v2051, 1
            %v2053 = vsel %vm2052, %v2041, %v2049
            %v2054 = vlaneseq
            %v2055 = vand.u32 %v2054, 127
            %vm2056 = vcmp.ge.s32.totalorder %v2055, 0
            %vm2057 = vcmp.lt.s32.totalorder %v2055, 50
            %vm2058 = vmand %vm2056, %vm2057
            %v2059 = vsel %vm2058, %v2053, 0.0
            %v2060 = vld [vmem:[%s2038] sm:$0xff]
            %2061 = vrot.lane.b32.xlu0 %v2060, 127
            %v2062 = vpop.permute.xlu0 %2061
            %v2063 = vlaneseq
            %v2064 = vand.u32 %v2063, 127
            %vm2065 = vcmp.eq.s32.totalorder %v2064, 49
            %v2066 = vsel %vm2065, %v2042, %v2062
            %s2067 = smov [#allocation12]
            %s2068 = scalar_lea.vmem %s2067, 16
            %s2069 = smov [#allocation13]
            %s2070 = scalar_lea.vmem %s2069, 16
            %v2071 = vld [vmem:[%s2070] sm:$0xff]
            %2072 = vrot.lane.b32.xlu0 %v2071, 1
            %v2073 = vpop.permute.xlu0 %2072
            %v2074 = vld [vmem:[%s2068] sm:$0xff]
            %v2075 = vld [vmem:[%s2068] sm:$0xff]
            %2076 = vrot.lane.b32.xlu0 %v2075, 1
            %v2077 = vpop.permute.xlu0 %2076
            %v2078 = vlaneseq
            %v2079 = vand.u32 %v2078, 127
            %vm2080 = vcmp.eq.s32.totalorder %v2079, 0
            %v2081 = vsel %vm2080, %v2075, %v2077
            %v2082 = vlaneseq
            %v2083 = vand.u32 %v2082, 127
            %vm2084 = vcmp.eq.s32.totalorder %v2083, 1
            %v2085 = vsel %vm2084, %v2073, %v2081
            %v2086 = vlaneseq
            %v2087 = vand.u32 %v2086, 127
            %vm2088 = vcmp.ge.s32.totalorder %v2087, 0
            %vm2089 = vcmp.lt.s32.totalorder %v2087, 50
            %vm2090 = vmand %vm2088, %vm2089
            %v2091 = vsel %vm2090, %v2085, 0.0
            %v2092 = vld [vmem:[%s2070] sm:$0xff]
            %2093 = vrot.lane.b32.xlu0 %v2092, 127
            %v2094 = vpop.permute.xlu0 %2093
            %v2095 = vlaneseq
            %v2096 = vand.u32 %v2095, 127
            %vm2097 = vcmp.eq.s32.totalorder %v2096, 49
            %v2098 = vsel %vm2097, %v2074, %v2094
            %s2099 = smov [#allocation12]
            %s2100 = scalar_lea.vmem %s2099, 24
            %s2101 = smov [#allocation13]
            %s2102 = scalar_lea.vmem %s2101, 24
            %v2103 = vld [vmem:[%s2102] sm:$0xff]
            %2104 = vrot.lane.b32.xlu0 %v2103, 1
            %v2105 = vpop.permute.xlu0 %2104
            %v2106 = vld [vmem:[%s2100] sm:$0xff]
            %v2107 = vld [vmem:[%s2100] sm:$0xff]
            %2108 = vrot.lane.b32.xlu0 %v2107, 1
            %v2109 = vpop.permute.xlu0 %2108
            %v2110 = vlaneseq
            %v2111 = vand.u32 %v2110, 127
            %vm2112 = vcmp.eq.s32.totalorder %v2111, 0
            %v2113 = vsel %vm2112, %v2107, %v2109
            %v2114 = vlaneseq
            %v2115 = vand.u32 %v2114, 127
            %vm2116 = vcmp.eq.s32.totalorder %v2115, 1
            %v2117 = vsel %vm2116, %v2105, %v2113
            %v2118 = vlaneseq
            %v2119 = vand.u32 %v2118, 127
            %vm2120 = vcmp.ge.s32.totalorder %v2119, 0
            %vm2121 = vcmp.lt.s32.totalorder %v2119, 50
            %vm2122 = vmand %vm2120, %vm2121
            %v2123 = vsel %vm2122, %v2117, 0.0
            %v2124 = vld [vmem:[%s2102] sm:$0xff]
            %2125 = vrot.lane.b32.xlu0 %v2124, 127
            %v2126 = vpop.permute.xlu0 %2125
            %v2127 = vlaneseq
            %v2128 = vand.u32 %v2127, 127
            %vm2129 = vcmp.eq.s32.totalorder %v2128, 49
            %v2130 = vsel %vm2129, %v2106, %v2126
            %s2131 = smov [#allocation12]
            %s2132 = scalar_lea.vmem %s2131, 32
            %s2133 = smov [#allocation13]
            %s2134 = scalar_lea.vmem %s2133, 32
            %v2135 = vld [vmem:[%s2134] sm:$0xff]
            %2136 = vrot.lane.b32.xlu0 %v2135, 1
            %v2137 = vpop.permute.xlu0 %2136
            %v2138 = vld [vmem:[%s2132] sm:$0xff]
            %v2139 = vld [vmem:[%s2132] sm:$0xff]
            %2140 = vrot.lane.b32.xlu0 %v2139, 1
            %v2141 = vpop.permute.xlu0 %2140
            %v2142 = vlaneseq
            %v2143 = vand.u32 %v2142, 127
            %vm2144 = vcmp.eq.s32.totalorder %v2143, 0
            %v2145 = vsel %vm2144, %v2139, %v2141
            %v2146 = vlaneseq
            %v2147 = vand.u32 %v2146, 127
            %vm2148 = vcmp.eq.s32.totalorder %v2147, 1
            %v2149 = vsel %vm2148, %v2137, %v2145
            %v2150 = vlaneseq
            %v2151 = vand.u32 %v2150, 127
            %vm2152 = vcmp.ge.s32.totalorder %v2151, 0
            %vm2153 = vcmp.lt.s32.totalorder %v2151, 50
            %vm2154 = vmand %vm2152, %vm2153
            %v2155 = vsel %vm2154, %v2149, 0.0
            %v2156 = vld [vmem:[%s2134] sm:$0xff]
            %2157 = vrot.lane.b32.xlu0 %v2156, 127
            %v2158 = vpop.permute.xlu0 %2157
            %v2159 = vlaneseq
            %v2160 = vand.u32 %v2159, 127
            %vm2161 = vcmp.eq.s32.totalorder %v2160, 49
            %v2162 = vsel %vm2161, %v2138, %v2158
            %s2163 = smov [#allocation12]
            %s2164 = scalar_lea.vmem %s2163, 40
            %s2165 = smov [#allocation13]
            %s2166 = scalar_lea.vmem %s2165, 40
            %v2167 = vld [vmem:[%s2166] sm:$0xff]
            %2168 = vrot.lane.b32.xlu0 %v2167, 1
            %v2169 = vpop.permute.xlu0 %2168
            %v2170 = vld [vmem:[%s2164] sm:$0xff]
            %v2171 = vld [vmem:[%s2164] sm:$0xff]
            %2172 = vrot.lane.b32.xlu0 %v2171, 1
            %v2173 = vpop.permute.xlu0 %2172
            %v2174 = vlaneseq
            %v2175 = vand.u32 %v2174, 127
            %vm2176 = vcmp.eq.s32.totalorder %v2175, 0
            %v2177 = vsel %vm2176, %v2171, %v2173
            %v2178 = vlaneseq
            %v2179 = vand.u32 %v2178, 127
            %vm2180 = vcmp.eq.s32.totalorder %v2179, 1
            %v2181 = vsel %vm2180, %v2169, %v2177
            %v2182 = vlaneseq
            %v2183 = vand.u32 %v2182, 127
            %vm2184 = vcmp.ge.s32.totalorder %v2183, 0
            %vm2185 = vcmp.lt.s32.totalorder %v2183, 50
            %vm2186 = vmand %vm2184, %vm2185
            %v2187 = vsel %vm2186, %v2181, 0.0
            %v2188 = vld [vmem:[%s2166] sm:$0xff]
            %2189 = vrot.lane.b32.xlu0 %v2188, 127
            %v2190 = vpop.permute.xlu0 %2189
            %v2191 = vlaneseq
            %v2192 = vand.u32 %v2191, 127
            %vm2193 = vcmp.eq.s32.totalorder %v2192, 49
            %v2194 = vsel %vm2193, %v2170, %v2190
            %s2195 = smov [#allocation12]
            %s2196 = scalar_lea.vmem %s2195, 48
            %s2197 = smov [#allocation13]
            %s2198 = scalar_lea.vmem %s2197, 48
            %v2199 = vld [vmem:[%s2198] sm:$0x3]
            %2200 = vrot.lane.b32.xlu0 %v2199, 1
            %v2201 = vpop.permute.xlu0 %2200
            %v2202 = vld [vmem:[%s2196] sm:$0x3]
            %v2203 = vld [vmem:[%s2196] sm:$0x3]
            %2204 = vrot.lane.b32.xlu0 %v2203, 1
            %v2205 = vpop.permute.xlu0 %2204
            %v2206 = vlaneseq
            %v2207 = vand.u32 %v2206, 127
            %vm2208 = vcmp.eq.s32.totalorder %v2207, 0
            %v2209 = vsel %vm2208, %v2203, %v2205
            %v2210 = vlaneseq
            %v2211 = vand.u32 %v2210, 127
            %vm2212 = vcmp.eq.s32.totalorder %v2211, 1
            %v2213 = vsel %vm2212, %v2201, %v2209
            %v2214 = vlaneseq
            %v2215 = vand.u32 %v2214, 127
            %vm2216 = vcmp.ge.s32.totalorder %v2215, 0
            %vm2217 = vcmp.lt.s32.totalorder %v2215, 50
            %vm2218 = vmand %vm2216, %vm2217
            %v2219 = vsel %vm2218, %v2213, 0.0
            %v2220 = vld [vmem:[%s2198] sm:$0x3]
            %2221 = vrot.lane.b32.xlu0 %v2220, 127
            %v2222 = vpop.permute.xlu0 %2221
            %v2223 = vlaneseq
            %v2224 = vand.u32 %v2223, 127
            %vm2225 = vcmp.eq.s32.totalorder %v2224, 49
            %v2226 = vsel %vm2225, %v2202, %v2222
            %2227 = vst [vmem:[%s2005] sm:$0xff] %v2027
            %2228 = vst [vmem:[%s2006] sm:$0xff] %v2034
            %2229 = vst [vmem:[%s2036] sm:$0xff] %v2059
            %2230 = vst [vmem:[%s2038] sm:$0xff] %v2066
            %2231 = vst [vmem:[%s2068] sm:$0xff] %v2091
            %2232 = vst [vmem:[%s2070] sm:$0xff] %v2098
            %2233 = vst [vmem:[%s2100] sm:$0xff] %v2123
            %2234 = vst [vmem:[%s2102] sm:$0xff] %v2130
            %2235 = vst [vmem:[%s2132] sm:$0xff] %v2155
            %2236 = vst [vmem:[%s2134] sm:$0xff] %v2162
            %2237 = vst [vmem:[%s2164] sm:$0xff] %v2187
            %2238 = vst [vmem:[%s2166] sm:$0xff] %v2194
            %2239 = vst [vmem:[%s2196] sm:$0x3] %v2219
            %2240 = vst [vmem:[%s2198] sm:$0x3] %v2226
            %s2241 = smov [#allocation14]
            %s2242 = smov [#allocation15]
            %v2243 = vld [vmem:[%s2242] sm:$0xff]
            %2244 = vrot.lane.b32.xlu0 %v2243, 1
            %v2245 = vpop.permute.xlu0 %2244
            %v2246 = vld [vmem:[%s2241] sm:$0xff]
            %v2247 = vld [vmem:[%s2241] sm:$0xff]
            %2248 = vrot.lane.b32.xlu0 %v2247, 1
            %v2249 = vpop.permute.xlu0 %2248
            %v2250 = vlaneseq
            %v2251 = vand.u32 %v2250, 127
            %vm2252 = vcmp.eq.s32.totalorder %v2251, 0
            %v2253 = vsel %vm2252, %v2247, %v2249
            %v2254 = vlaneseq
            %v2255 = vand.u32 %v2254, 127
            %vm2256 = vcmp.eq.s32.totalorder %v2255, 1
            %v2257 = vsel %vm2256, %v2245, %v2253
            %v2258 = vlaneseq
            %v2259 = vand.u32 %v2258, 127
            %vm2260 = vcmp.ge.s32.totalorder %v2259, 0
            %vm2261 = vcmp.lt.s32.totalorder %v2259, 50
            %vm2262 = vmand %vm2260, %vm2261
            %v2263 = vsel %vm2262, %v2257, 0.0
            %v2264 = vld [vmem:[%s2242] sm:$0xff]
            %2265 = vrot.lane.b32.xlu0 %v2264, 127
            %v2266 = vpop.permute.xlu0 %2265
            %v2267 = vlaneseq
            %v2268 = vand.u32 %v2267, 127
            %vm2269 = vcmp.eq.s32.totalorder %v2268, 49
            %v2270 = vsel %vm2269, %v2246, %v2266
            %s2271 = smov [#allocation14]
            %s2272 = scalar_lea.vmem %s2271, 8
            %s2273 = smov [#allocation15]
            %s2274 = scalar_lea.vmem %s2273, 8
            %v2275 = vld [vmem:[%s2274] sm:$0xff]
            %2276 = vrot.lane.b32.xlu0 %v2275, 1
            %v2277 = vpop.permute.xlu0 %2276
            %v2278 = vld [vmem:[%s2272] sm:$0xff]
            %v2279 = vld [vmem:[%s2272] sm:$0xff]
            %2280 = vrot.lane.b32.xlu0 %v2279, 1
            %v2281 = vpop.permute.xlu0 %2280
            %v2282 = vlaneseq
            %v2283 = vand.u32 %v2282, 127
            %vm2284 = vcmp.eq.s32.totalorder %v2283, 0
            %v2285 = vsel %vm2284, %v2279, %v2281
            %v2286 = vlaneseq
            %v2287 = vand.u32 %v2286, 127
            %vm2288 = vcmp.eq.s32.totalorder %v2287, 1
            %v2289 = vsel %vm2288, %v2277, %v2285
            %v2290 = vlaneseq
            %v2291 = vand.u32 %v2290, 127
            %vm2292 = vcmp.ge.s32.totalorder %v2291, 0
            %vm2293 = vcmp.lt.s32.totalorder %v2291, 50
            %vm2294 = vmand %vm2292, %vm2293
            %v2295 = vsel %vm2294, %v2289, 0.0
            %v2296 = vld [vmem:[%s2274] sm:$0xff]
            %2297 = vrot.lane.b32.xlu0 %v2296, 127
            %v2298 = vpop.permute.xlu0 %2297
            %v2299 = vlaneseq
            %v2300 = vand.u32 %v2299, 127
            %vm2301 = vcmp.eq.s32.totalorder %v2300, 49
            %v2302 = vsel %vm2301, %v2278, %v2298
            %s2303 = smov [#allocation14]
            %s2304 = scalar_lea.vmem %s2303, 16
            %s2305 = smov [#allocation15]
            %s2306 = scalar_lea.vmem %s2305, 16
            %v2307 = vld [vmem:[%s2306] sm:$0xff]
            %2308 = vrot.lane.b32.xlu0 %v2307, 1
            %v2309 = vpop.permute.xlu0 %2308
            %v2310 = vld [vmem:[%s2304] sm:$0xff]
            %v2311 = vld [vmem:[%s2304] sm:$0xff]
            %2312 = vrot.lane.b32.xlu0 %v2311, 1
            %v2313 = vpop.permute.xlu0 %2312
            %v2314 = vlaneseq
            %v2315 = vand.u32 %v2314, 127
            %vm2316 = vcmp.eq.s32.totalorder %v2315, 0
            %v2317 = vsel %vm2316, %v2311, %v2313
            %v2318 = vlaneseq
            %v2319 = vand.u32 %v2318, 127
            %vm2320 = vcmp.eq.s32.totalorder %v2319, 1
            %v2321 = vsel %vm2320, %v2309, %v2317
            %v2322 = vlaneseq
            %v2323 = vand.u32 %v2322, 127
            %vm2324 = vcmp.ge.s32.totalorder %v2323, 0
            %vm2325 = vcmp.lt.s32.totalorder %v2323, 50
            %vm2326 = vmand %vm2324, %vm2325
            %v2327 = vsel %vm2326, %v2321, 0.0
            %v2328 = vld [vmem:[%s2306] sm:$0xff]
            %2329 = vrot.lane.b32.xlu0 %v2328, 127
            %v2330 = vpop.permute.xlu0 %2329
            %v2331 = vlaneseq
            %v2332 = vand.u32 %v2331, 127
            %vm2333 = vcmp.eq.s32.totalorder %v2332, 49
            %v2334 = vsel %vm2333, %v2310, %v2330
            %s2335 = smov [#allocation14]
            %s2336 = scalar_lea.vmem %s2335, 24
            %s2337 = smov [#allocation15]
            %s2338 = scalar_lea.vmem %s2337, 24
            %v2339 = vld [vmem:[%s2338] sm:$0xff]
            %2340 = vrot.lane.b32.xlu0 %v2339, 1
            %v2341 = vpop.permute.xlu0 %2340
            %v2342 = vld [vmem:[%s2336] sm:$0xff]
            %v2343 = vld [vmem:[%s2336] sm:$0xff]
            %2344 = vrot.lane.b32.xlu0 %v2343, 1
            %v2345 = vpop.permute.xlu0 %2344
            %v2346 = vlaneseq
            %v2347 = vand.u32 %v2346, 127
            %vm2348 = vcmp.eq.s32.totalorder %v2347, 0
            %v2349 = vsel %vm2348, %v2343, %v2345
            %v2350 = vlaneseq
            %v2351 = vand.u32 %v2350, 127
            %vm2352 = vcmp.eq.s32.totalorder %v2351, 1
            %v2353 = vsel %vm2352, %v2341, %v2349
            %v2354 = vlaneseq
            %v2355 = vand.u32 %v2354, 127
            %vm2356 = vcmp.ge.s32.totalorder %v2355, 0
            %vm2357 = vcmp.lt.s32.totalorder %v2355, 50
            %vm2358 = vmand %vm2356, %vm2357
            %v2359 = vsel %vm2358, %v2353, 0.0
            %v2360 = vld [vmem:[%s2338] sm:$0xff]
            %2361 = vrot.lane.b32.xlu0 %v2360, 127
            %v2362 = vpop.permute.xlu0 %2361
            %v2363 = vlaneseq
            %v2364 = vand.u32 %v2363, 127
            %vm2365 = vcmp.eq.s32.totalorder %v2364, 49
            %v2366 = vsel %vm2365, %v2342, %v2362
            %s2367 = smov [#allocation14]
            %s2368 = scalar_lea.vmem %s2367, 32
            %s2369 = smov [#allocation15]
            %s2370 = scalar_lea.vmem %s2369, 32
            %v2371 = vld [vmem:[%s2370] sm:$0xff]
            %2372 = vrot.lane.b32.xlu0 %v2371, 1
            %v2373 = vpop.permute.xlu0 %2372
            %v2374 = vld [vmem:[%s2368] sm:$0xff]
            %v2375 = vld [vmem:[%s2368] sm:$0xff]
            %2376 = vrot.lane.b32.xlu0 %v2375, 1
            %v2377 = vpop.permute.xlu0 %2376
            %v2378 = vlaneseq
            %v2379 = vand.u32 %v2378, 127
            %vm2380 = vcmp.eq.s32.totalorder %v2379, 0
            %v2381 = vsel %vm2380, %v2375, %v2377
            %v2382 = vlaneseq
            %v2383 = vand.u32 %v2382, 127
            %vm2384 = vcmp.eq.s32.totalorder %v2383, 1
            %v2385 = vsel %vm2384, %v2373, %v2381
            %v2386 = vlaneseq
            %v2387 = vand.u32 %v2386, 127
            %vm2388 = vcmp.ge.s32.totalorder %v2387, 0
            %vm2389 = vcmp.lt.s32.totalorder %v2387, 50
            %vm2390 = vmand %vm2388, %vm2389
            %v2391 = vsel %vm2390, %v2385, 0.0
            %v2392 = vld [vmem:[%s2370] sm:$0xff]
            %2393 = vrot.lane.b32.xlu0 %v2392, 127
            %v2394 = vpop.permute.xlu0 %2393
            %v2395 = vlaneseq
            %v2396 = vand.u32 %v2395, 127
            %vm2397 = vcmp.eq.s32.totalorder %v2396, 49
            %v2398 = vsel %vm2397, %v2374, %v2394
            %s2399 = smov [#allocation14]
            %s2400 = scalar_lea.vmem %s2399, 40
            %s2401 = smov [#allocation15]
            %s2402 = scalar_lea.vmem %s2401, 40
            %v2403 = vld [vmem:[%s2402] sm:$0xff]
            %2404 = vrot.lane.b32.xlu0 %v2403, 1
            %v2405 = vpop.permute.xlu0 %2404
            %v2406 = vld [vmem:[%s2400] sm:$0xff]
            %v2407 = vld [vmem:[%s2400] sm:$0xff]
            %2408 = vrot.lane.b32.xlu0 %v2407, 1
            %v2409 = vpop.permute.xlu0 %2408
            %v2410 = vlaneseq
            %v2411 = vand.u32 %v2410, 127
            %vm2412 = vcmp.eq.s32.totalorder %v2411, 0
            %v2413 = vsel %vm2412, %v2407, %v2409
            %v2414 = vlaneseq
            %v2415 = vand.u32 %v2414, 127
            %vm2416 = vcmp.eq.s32.totalorder %v2415, 1
            %v2417 = vsel %vm2416, %v2405, %v2413
            %v2418 = vlaneseq
            %v2419 = vand.u32 %v2418, 127
            %vm2420 = vcmp.ge.s32.totalorder %v2419, 0
            %vm2421 = vcmp.lt.s32.totalorder %v2419, 50
            %vm2422 = vmand %vm2420, %vm2421
            %v2423 = vsel %vm2422, %v2417, 0.0
            %v2424 = vld [vmem:[%s2402] sm:$0xff]
            %2425 = vrot.lane.b32.xlu0 %v2424, 127
            %v2426 = vpop.permute.xlu0 %2425
            %v2427 = vlaneseq
            %v2428 = vand.u32 %v2427, 127
            %vm2429 = vcmp.eq.s32.totalorder %v2428, 49
            %v2430 = vsel %vm2429, %v2406, %v2426
            %s2431 = smov [#allocation14]
            %s2432 = scalar_lea.vmem %s2431, 48
            %s2433 = smov [#allocation15]
            %s2434 = scalar_lea.vmem %s2433, 48
            %v2435 = vld [vmem:[%s2434] sm:$0x3]
            %2436 = vrot.lane.b32.xlu0 %v2435, 1
            %v2437 = vpop.permute.xlu0 %2436
            %v2438 = vld [vmem:[%s2432] sm:$0x3]
            %v2439 = vld [vmem:[%s2432] sm:$0x3]
            %2440 = vrot.lane.b32.xlu0 %v2439, 1
            %v2441 = vpop.permute.xlu0 %2440
            %v2442 = vlaneseq
            %v2443 = vand.u32 %v2442, 127
            %vm2444 = vcmp.eq.s32.totalorder %v2443, 0
            %v2445 = vsel %vm2444, %v2439, %v2441
            %v2446 = vlaneseq
            %v2447 = vand.u32 %v2446, 127
            %vm2448 = vcmp.eq.s32.totalorder %v2447, 1
            %v2449 = vsel %vm2448, %v2437, %v2445
            %v2450 = vlaneseq
            %v2451 = vand.u32 %v2450, 127
            %vm2452 = vcmp.ge.s32.totalorder %v2451, 0
            %vm2453 = vcmp.lt.s32.totalorder %v2451, 50
            %vm2454 = vmand %vm2452, %vm2453
            %v2455 = vsel %vm2454, %v2449, 0.0
            %v2456 = vld [vmem:[%s2434] sm:$0x3]
            %2457 = vrot.lane.b32.xlu0 %v2456, 127
            %v2458 = vpop.permute.xlu0 %2457
            %v2459 = vlaneseq
            %v2460 = vand.u32 %v2459, 127
            %vm2461 = vcmp.eq.s32.totalorder %v2460, 49
            %v2462 = vsel %vm2461, %v2438, %v2458
            %2463 = vst [vmem:[%s2241] sm:$0xff] %v2263
            %2464 = vst [vmem:[%s2242] sm:$0xff] %v2270
            %2465 = vst [vmem:[%s2272] sm:$0xff] %v2295
            %2466 = vst [vmem:[%s2274] sm:$0xff] %v2302
            %2467 = vst [vmem:[%s2304] sm:$0xff] %v2327
            %2468 = vst [vmem:[%s2306] sm:$0xff] %v2334
            %2469 = vst [vmem:[%s2336] sm:$0xff] %v2359
            %2470 = vst [vmem:[%s2338] sm:$0xff] %v2366
            %2471 = vst [vmem:[%s2368] sm:$0xff] %v2391
            %2472 = vst [vmem:[%s2370] sm:$0xff] %v2398
            %2473 = vst [vmem:[%s2400] sm:$0xff] %v2423
            %2474 = vst [vmem:[%s2402] sm:$0xff] %v2430
            %2475 = vst [vmem:[%s2432] sm:$0x3] %v2455
            %2476 = vst [vmem:[%s2434] sm:$0x3] %v2462
            %s2477 = smov [#allocation12]
            %s2478 = smov [#allocation14]
            %v2479 = vld [vmem:[%s2477] ss:$0 sm:$0xff]
            %s2481 = scalar_lea.vmem %s2477, 4294967295
            %v2482 = vld [vmem:[%s2481] sm:$0xfe]
            %v2483 = vlaneseq
            %v2484 = vshrl.u32 %v2483, 7
            %vm2485 = vcmp.eq.s32.totalorder %v2484, 0
            %v2486 = vsel %vm2485, %v2479, %v2482
            %s2487 = scalar_lea.vmem %s2477, 7
            %v2488 = vld [vmem:[%s2487] ss:$0 sm:$0xff]
            %2489 = vst [vmem:[%s2477] sm:$0xff] %v2486
            %s2490 = scalar_lea.vmem %s2477, 8
            %s2492 = scalar_lea.vmem %s2490, 4294967295
            %v2493 = vld [vmem:[%s2492] sm:$0xfe]
            %v2494 = vlaneseq
            %v2495 = vshrl.u32 %v2494, 7
            %vm2496 = vcmp.eq.s32.totalorder %v2495, 0
            %v2497 = vsel %vm2496, %v2488, %v2493
            %s2498 = scalar_lea.vmem %s2490, 7
            %v2499 = vld [vmem:[%s2498] ss:$0 sm:$0xff]
            %2500 = vst [vmem:[%s2490] sm:$0xff] %v2497
            %s2501 = scalar_lea.vmem %s2477, 16
            %s2503 = scalar_lea.vmem %s2501, 4294967295
            %v2504 = vld [vmem:[%s2503] sm:$0xfe]
            %v2505 = vlaneseq
            %v2506 = vshrl.u32 %v2505, 7
            %vm2507 = vcmp.eq.s32.totalorder %v2506, 0
            %v2508 = vsel %vm2507, %v2499, %v2504
            %s2509 = scalar_lea.vmem %s2501, 7
            %v2510 = vld [vmem:[%s2509] ss:$0 sm:$0xff]
            %2511 = vst [vmem:[%s2501] sm:$0xff] %v2508
            %s2512 = scalar_lea.vmem %s2477, 24
            %s2514 = scalar_lea.vmem %s2512, 4294967295
            %v2515 = vld [vmem:[%s2514] sm:$0xfe]
            %v2516 = vlaneseq
            %v2517 = vshrl.u32 %v2516, 7
            %vm2518 = vcmp.eq.s32.totalorder %v2517, 0
            %v2519 = vsel %vm2518, %v2510, %v2515
            %s2520 = scalar_lea.vmem %s2512, 7
            %v2521 = vld [vmem:[%s2520] ss:$0 sm:$0xff]
            %2522 = vst [vmem:[%s2512] sm:$0xff] %v2519
            %s2523 = scalar_lea.vmem %s2477, 32
            %s2525 = scalar_lea.vmem %s2523, 4294967295
            %v2526 = vld [vmem:[%s2525] sm:$0xfe]
            %v2527 = vlaneseq
            %v2528 = vshrl.u32 %v2527, 7
            %vm2529 = vcmp.eq.s32.totalorder %v2528, 0
            %v2530 = vsel %vm2529, %v2521, %v2526
            %s2531 = scalar_lea.vmem %s2523, 7
            %v2532 = vld [vmem:[%s2531] ss:$0 sm:$0xff]
            %2533 = vst [vmem:[%s2523] sm:$0xff] %v2530
            %s2534 = scalar_lea.vmem %s2477, 40
            %s2536 = scalar_lea.vmem %s2534, 4294967295
            %v2537 = vld [vmem:[%s2536] sm:$0xfe]
            %v2538 = vlaneseq
            %v2539 = vshrl.u32 %v2538, 7
            %vm2540 = vcmp.eq.s32.totalorder %v2539, 0
            %v2541 = vsel %vm2540, %v2532, %v2537
            %s2542 = scalar_lea.vmem %s2534, 7
            %v2543 = vld [vmem:[%s2542] ss:$0 sm:$0xff]
            %2544 = vst [vmem:[%s2534] sm:$0xff] %v2541
            %s2545 = scalar_lea.vmem %s2477, 48
            %s2547 = scalar_lea.vmem %s2545, 4294967295
            %v2548 = vld [vmem:[%s2547] sm:$0x2]
            %v2549 = vlaneseq
            %v2550 = vshrl.u32 %v2549, 7
            %vm2551 = vcmp.eq.s32.totalorder %v2550, 0
            %v2552 = vsel %vm2551, %v2543, %v2548
            %s2553 = scalar_lea.vmem %s2545, 1
            %v2554 = vld [vmem:[%s2553] ss:$0 sm:$0xff]
            %2555 = vst [vmem:[%s2545] sm:$0x3] %v2552
            %v2556 = vld [vmem:[%s2478] ss:$0 sm:$0xff]
            %s2557 = scalar_lea.vmem %s2477, 1
            %2558 = vst [vmem:[%s2557] sm:$0x1] %v2556
            %s2559 = scalar_lea.vmem %s2478, 48
            %s2560 = scalar_lea.vmem %s2559, 1
            %v2561 = vld [vmem:[%s2560] sm:$0x1]
            %v2562 = vlaneseq
            %v2563 = vshrl.u32 %v2562, 7
            %vm2564 = vcmp.eq.s32.totalorder %v2563, 1
            %v2565 = vsel %vm2564, %v2554, %v2561
            %v2566 = vld [vmem:[%s2559] ss:$0 sm:$0xff]
            %2567 = vst [vmem:[%s2559] sm:$0x3] %v2565
            %s2568 = scalar_lea.vmem %s2478, 40
            %s2569 = scalar_lea.vmem %s2568, 1
            %v2570 = vld [vmem:[%s2569] sm:$0x7f]
            %v2571 = vlaneseq
            %v2572 = vshrl.u32 %v2571, 7
            %vm2573 = vcmp.eq.s32.totalorder %v2572, 7
            %v2574 = vsel %vm2573, %v2566, %v2570
            %v2575 = vld [vmem:[%s2568] ss:$0 sm:$0xff]
            %2576 = vst [vmem:[%s2568] sm:$0xff] %v2574
            %s2577 = scalar_lea.vmem %s2478, 32
            %s2578 = scalar_lea.vmem %s2577, 1
            %v2579 = vld [vmem:[%s2578] sm:$0x7f]
            %v2580 = vlaneseq
            %v2581 = vshrl.u32 %v2580, 7
            %vm2582 = vcmp.eq.s32.totalorder %v2581, 7
            %v2583 = vsel %vm2582, %v2575, %v2579
            %v2584 = vld [vmem:[%s2577] ss:$0 sm:$0xff]
            %2585 = vst [vmem:[%s2577] sm:$0xff] %v2583
            %s2586 = scalar_lea.vmem %s2478, 24
            %s2587 = scalar_lea.vmem %s2586, 1
            %v2588 = vld [vmem:[%s2587] sm:$0x7f]
            %v2589 = vlaneseq
            %v2590 = vshrl.u32 %v2589, 7
            %vm2591 = vcmp.eq.s32.totalorder %v2590, 7
            %v2592 = vsel %vm2591, %v2584, %v2588
            %v2593 = vld [vmem:[%s2586] ss:$0 sm:$0xff]
            %2594 = vst [vmem:[%s2586] sm:$0xff] %v2592
            %s2595 = scalar_lea.vmem %s2478, 16
            %s2596 = scalar_lea.vmem %s2595, 1
            %v2597 = vld [vmem:[%s2596] sm:$0x7f]
            %v2598 = vlaneseq
            %v2599 = vshrl.u32 %v2598, 7
            %vm2600 = vcmp.eq.s32.totalorder %v2599, 7
            %v2601 = vsel %vm2600, %v2593, %v2597
            %v2602 = vld [vmem:[%s2595] ss:$0 sm:$0xff]
            %2603 = vst [vmem:[%s2595] sm:$0xff] %v2601
            %s2604 = scalar_lea.vmem %s2478, 8
            %s2605 = scalar_lea.vmem %s2604, 1
            %v2606 = vld [vmem:[%s2605] sm:$0x7f]
            %v2607 = vlaneseq
            %v2608 = vshrl.u32 %v2607, 7
            %vm2609 = vcmp.eq.s32.totalorder %v2608, 7
            %v2610 = vsel %vm2609, %v2602, %v2606
            %v2611 = vld [vmem:[%s2604] ss:$0 sm:$0xff]
            %2612 = vst [vmem:[%s2604] sm:$0xff] %v2610
            %s2613 = scalar_lea.vmem %s2478, 1
            %v2614 = vld [vmem:[%s2613] sm:$0x7f]
            %v2615 = vlaneseq
            %v2616 = vshrl.u32 %v2615, 7
            %vm2617 = vcmp.eq.s32.totalorder %v2616, 7
            %v2618 = vsel %vm2617, %v2611, %v2614
            %v2619 = vld [vmem:[%s2478] ss:$0 sm:$0xff]
            %2620 = vst [vmem:[%s2478] sm:$0xff] %v2618
            %s2621 = smov [#allocation13]
            %s2622 = smov [#allocation15]
            %v2623 = vld [vmem:[%s2621] ss:$0 sm:$0xff]
            %s2625 = scalar_lea.vmem %s2621, 4294967295
            %v2626 = vld [vmem:[%s2625] sm:$0xfe]
            %v2627 = vlaneseq
            %v2628 = vshrl.u32 %v2627, 7
            %vm2629 = vcmp.eq.s32.totalorder %v2628, 0
            %v2630 = vsel %vm2629, %v2623, %v2626
            %s2631 = scalar_lea.vmem %s2621, 7
            %v2632 = vld [vmem:[%s2631] ss:$0 sm:$0xff]
            %2633 = vst [vmem:[%s2621] sm:$0xff] %v2630
            %s2634 = scalar_lea.vmem %s2621, 8
            %s2636 = scalar_lea.vmem %s2634, 4294967295
            %v2637 = vld [vmem:[%s2636] sm:$0xfe]
            %v2638 = vlaneseq
            %v2639 = vshrl.u32 %v2638, 7
            %vm2640 = vcmp.eq.s32.totalorder %v2639, 0
            %v2641 = vsel %vm2640, %v2632, %v2637
            %s2642 = scalar_lea.vmem %s2634, 7
            %v2643 = vld [vmem:[%s2642] ss:$0 sm:$0xff]
            %2644 = vst [vmem:[%s2634] sm:$0xff] %v2641
            %s2645 = scalar_lea.vmem %s2621, 16
            %s2647 = scalar_lea.vmem %s2645, 4294967295
            %v2648 = vld [vmem:[%s2647] sm:$0xfe]
            %v2649 = vlaneseq
            %v2650 = vshrl.u32 %v2649, 7
            %vm2651 = vcmp.eq.s32.totalorder %v2650, 0
            %v2652 = vsel %vm2651, %v2643, %v2648
            %s2653 = scalar_lea.vmem %s2645, 7
            %v2654 = vld [vmem:[%s2653] ss:$0 sm:$0xff]
            %2655 = vst [vmem:[%s2645] sm:$0xff] %v2652
            %s2656 = scalar_lea.vmem %s2621, 24
            %s2658 = scalar_lea.vmem %s2656, 4294967295
            %v2659 = vld [vmem:[%s2658] sm:$0xfe]
            %v2660 = vlaneseq
            %v2661 = vshrl.u32 %v2660, 7
            %vm2662 = vcmp.eq.s32.totalorder %v2661, 0
            %v2663 = vsel %vm2662, %v2654, %v2659
            %s2664 = scalar_lea.vmem %s2656, 7
            %v2665 = vld [vmem:[%s2664] ss:$0 sm:$0xff]
            %2666 = vst [vmem:[%s2656] sm:$0xff] %v2663
            %s2667 = scalar_lea.vmem %s2621, 32
            %s2669 = scalar_lea.vmem %s2667, 4294967295
            %v2670 = vld [vmem:[%s2669] sm:$0xfe]
            %v2671 = vlaneseq
            %v2672 = vshrl.u32 %v2671, 7
            %vm2673 = vcmp.eq.s32.totalorder %v2672, 0
            %v2674 = vsel %vm2673, %v2665, %v2670
            %s2675 = scalar_lea.vmem %s2667, 7
            %v2676 = vld [vmem:[%s2675] ss:$0 sm:$0xff]
            %2677 = vst [vmem:[%s2667] sm:$0xff] %v2674
            %s2678 = scalar_lea.vmem %s2621, 40
            %s2680 = scalar_lea.vmem %s2678, 4294967295
            %v2681 = vld [vmem:[%s2680] sm:$0xfe]
            %v2682 = vlaneseq
            %v2683 = vshrl.u32 %v2682, 7
            %vm2684 = vcmp.eq.s32.totalorder %v2683, 0
            %v2685 = vsel %vm2684, %v2676, %v2681
            %s2686 = scalar_lea.vmem %s2678, 7
            %v2687 = vld [vmem:[%s2686] ss:$0 sm:$0xff]
            %2688 = vst [vmem:[%s2678] sm:$0xff] %v2685
            %s2689 = scalar_lea.vmem %s2621, 48
            %s2691 = scalar_lea.vmem %s2689, 4294967295
            %v2692 = vld [vmem:[%s2691] sm:$0x2]
            %v2693 = vlaneseq
            %v2694 = vshrl.u32 %v2693, 7
            %vm2695 = vcmp.eq.s32.totalorder %v2694, 0
            %v2696 = vsel %vm2695, %v2687, %v2692
            %s2697 = scalar_lea.vmem %s2689, 1
            %v2698 = vld [vmem:[%s2697] ss:$0 sm:$0xff]
            %2699 = vst [vmem:[%s2689] sm:$0x3] %v2696
            %v2700 = vld [vmem:[%s2622] ss:$0 sm:$0xff]
            %s2701 = scalar_lea.vmem %s2621, 1
            %2702 = vst [vmem:[%s2701] sm:$0x1] %v2700
            %s2703 = scalar_lea.vmem %s2622, 48
            %s2704 = scalar_lea.vmem %s2703, 1
            %v2705 = vld [vmem:[%s2704] sm:$0x1]
            %v2706 = vlaneseq
            %v2707 = vshrl.u32 %v2706, 7
            %vm2708 = vcmp.eq.s32.totalorder %v2707, 1
            %v2709 = vsel %vm2708, %v2698, %v2705
            %v2710 = vld [vmem:[%s2703] ss:$0 sm:$0xff]
            %2711 = vst [vmem:[%s2703] sm:$0x3] %v2709
            %s2712 = scalar_lea.vmem %s2622, 40
            %s2713 = scalar_lea.vmem %s2712, 1
            %v2714 = vld [vmem:[%s2713] sm:$0x7f]
            %v2715 = vlaneseq
            %v2716 = vshrl.u32 %v2715, 7
            %vm2717 = vcmp.eq.s32.totalorder %v2716, 7
            %v2718 = vsel %vm2717, %v2710, %v2714
            %v2719 = vld [vmem:[%s2712] ss:$0 sm:$0xff]
            %2720 = vst [vmem:[%s2712] sm:$0xff] %v2718
            %s2721 = scalar_lea.vmem %s2622, 32
            %s2722 = scalar_lea.vmem %s2721, 1
            %v2723 = vld [vmem:[%s2722] sm:$0x7f]
            %v2724 = vlaneseq
            %v2725 = vshrl.u32 %v2724, 7
            %vm2726 = vcmp.eq.s32.totalorder %v2725, 7
            %v2727 = vsel %vm2726, %v2719, %v2723
            %v2728 = vld [vmem:[%s2721] ss:$0 sm:$0xff]
            %2729 = vst [vmem:[%s2721] sm:$0xff] %v2727
            %s2730 = scalar_lea.vmem %s2622, 24
            %s2731 = scalar_lea.vmem %s2730, 1
            %v2732 = vld [vmem:[%s2731] sm:$0x7f]
            %v2733 = vlaneseq
            %v2734 = vshrl.u32 %v2733, 7
            %vm2735 = vcmp.eq.s32.totalorder %v2734, 7
            %v2736 = vsel %vm2735, %v2728, %v2732
            %v2737 = vld [vmem:[%s2730] ss:$0 sm:$0xff]
            %2738 = vst [vmem:[%s2730] sm:$0xff] %v2736
            %s2739 = scalar_lea.vmem %s2622, 16
            %s2740 = scalar_lea.vmem %s2739, 1
            %v2741 = vld [vmem:[%s2740] sm:$0x7f]
            %v2742 = vlaneseq
            %v2743 = vshrl.u32 %v2742, 7
            %vm2744 = vcmp.eq.s32.totalorder %v2743, 7
            %v2745 = vsel %vm2744, %v2737, %v2741
            %v2746 = vld [vmem:[%s2739] ss:$0 sm:$0xff]
            %2747 = vst [vmem:[%s2739] sm:$0xff] %v2745
            %s2748 = scalar_lea.vmem %s2622, 8
            %s2749 = scalar_lea.vmem %s2748, 1
            %v2750 = vld [vmem:[%s2749] sm:$0x7f]
            %v2751 = vlaneseq
            %v2752 = vshrl.u32 %v2751, 7
            %vm2753 = vcmp.eq.s32.totalorder %v2752, 7
            %v2754 = vsel %vm2753, %v2746, %v2750
            %v2755 = vld [vmem:[%s2748] ss:$0 sm:$0xff]
            %2756 = vst [vmem:[%s2748] sm:$0xff] %v2754
            %s2757 = scalar_lea.vmem %s2622, 1
            %v2758 = vld [vmem:[%s2757] sm:$0x7f]
            %v2759 = vlaneseq
            %v2760 = vshrl.u32 %v2759, 7
            %vm2761 = vcmp.eq.s32.totalorder %v2760, 7
            %v2762 = vsel %vm2761, %v2755, %v2758
            %v2763 = vld [vmem:[%s2622] ss:$0 sm:$0xff]
            %2764 = vst [vmem:[%s2622] sm:$0xff] %v2762
            %s2765 = smov [#allocation23]
            %v2766 = vld [vmem:[%s2765] sm:$0xff]
            %s2767 = smov [#allocation24]
            %v2768 = vld [vmem:[%s2767] sm:$0xff]
            %s2769 = smov %s281
            %s2770 = smov %s285
            %s2771 = smov %s289
            %s2772 = smov %s293
            %v2773 = vld [vmem:[%s2769] sm:$0xff]
            %v2774 = vld [vmem:[%s2770] sm:$0xff]
            %v2775 = vld [vmem:[%s2771] sm:$0xff]
            %v2776 = vld [vmem:[%s2772] sm:$0xff]
            %v2777 = vmul.f32 %v2766, %v2773
            %v2778 = vmul.f32 %v2768, %v2775
            %v2779 = vsub.f32 %v2777, %v2778
            %v2780 = vmul.f32 %v2766, %v2774
            %v2781 = vmul.f32 %v2768, %v2776
            %v2782 = vsub.f32 %v2780, %v2781
            %v2783 = vmul.f32 %v2768, %v2773
            %v2784 = vmul.f32 %v2766, %v2775
            %v2785 = vadd.f32 %v2783, %v2784
            %v2786 = vmul.f32 %v2768, %v2774
            %v2787 = vmul.f32 %v2766, %v2776
            %v2788 = vadd.f32 %v2786, %v2787
            %2789 = vst [vmem:[%s2769] sm:$0xff] %v2779
            %2790 = vst [vmem:[%s2770] sm:$0xff] %v2782
            %2791 = vst [vmem:[%s2771] sm:$0xff] %v2785
            %2792 = vst [vmem:[%s2772] sm:$0xff] %v2788
            %s2793 = smov [#allocation23]
            %s2794 = scalar_lea.vmem %s2793, 8
            %v2795 = vld [vmem:[%s2794] sm:$0xff]
            %s2796 = smov [#allocation24]
            %s2797 = scalar_lea.vmem %s2796, 8
            %v2798 = vld [vmem:[%s2797] sm:$0xff]
            %s2799 = smov %s281
            %s2800 = scalar_lea.vmem %s2799, 8
            %s2801 = smov %s285
            %s2802 = scalar_lea.vmem %s2801, 8
            %s2803 = smov %s289
            %s2804 = scalar_lea.vmem %s2803, 8
            %s2805 = smov %s293
            %s2806 = scalar_lea.vmem %s2805, 8
            %v2807 = vld [vmem:[%s2800] sm:$0xff]
            %v2808 = vld [vmem:[%s2802] sm:$0xff]
            %v2809 = vld [vmem:[%s2804] sm:$0xff]
            %v2810 = vld [vmem:[%s2806] sm:$0xff]
            %v2811 = vmul.f32 %v2795, %v2807
            %v2812 = vmul.f32 %v2798, %v2809
            %v2813 = vsub.f32 %v2811, %v2812
            %v2814 = vmul.f32 %v2795, %v2808
            %v2815 = vmul.f32 %v2798, %v2810
            %v2816 = vsub.f32 %v2814, %v2815
            %v2817 = vmul.f32 %v2798, %v2807
            %v2818 = vmul.f32 %v2795, %v2809
            %v2819 = vadd.f32 %v2817, %v2818
            %v2820 = vmul.f32 %v2798, %v2808
            %v2821 = vmul.f32 %v2795, %v2810
            %v2822 = vadd.f32 %v2820, %v2821
            %2823 = vst [vmem:[%s2800] sm:$0xff] %v2813
            %2824 = vst [vmem:[%s2802] sm:$0xff] %v2816
            %2825 = vst [vmem:[%s2804] sm:$0xff] %v2819
            %2826 = vst [vmem:[%s2806] sm:$0xff] %v2822
            %s2827 = smov [#allocation23]
            %s2828 = scalar_lea.vmem %s2827, 16
            %v2829 = vld [vmem:[%s2828] sm:$0xff]
            %s2830 = smov [#allocation24]
            %s2831 = scalar_lea.vmem %s2830, 16
            %v2832 = vld [vmem:[%s2831] sm:$0xff]
            %s2833 = smov %s281
            %s2834 = scalar_lea.vmem %s2833, 16
            %s2835 = smov %s285
            %s2836 = scalar_lea.vmem %s2835, 16
            %s2837 = smov %s289
            %s2838 = scalar_lea.vmem %s2837, 16
            %s2839 = smov %s293
            %s2840 = scalar_lea.vmem %s2839, 16
            %v2841 = vld [vmem:[%s2834] sm:$0xff]
            %v2842 = vld [vmem:[%s2836] sm:$0xff]
            %v2843 = vld [vmem:[%s2838] sm:$0xff]
            %v2844 = vld [vmem:[%s2840] sm:$0xff]
            %v2845 = vmul.f32 %v2829, %v2841
            %v2846 = vmul.f32 %v2832, %v2843
            %v2847 = vsub.f32 %v2845, %v2846
            %v2848 = vmul.f32 %v2829, %v2842
            %v2849 = vmul.f32 %v2832, %v2844
            %v2850 = vsub.f32 %v2848, %v2849
            %v2851 = vmul.f32 %v2832, %v2841
            %v2852 = vmul.f32 %v2829, %v2843
            %v2853 = vadd.f32 %v2851, %v2852
            %v2854 = vmul.f32 %v2832, %v2842
            %v2855 = vmul.f32 %v2829, %v2844
            %v2856 = vadd.f32 %v2854, %v2855
            %2857 = vst [vmem:[%s2834] sm:$0xff] %v2847
            %2858 = vst [vmem:[%s2836] sm:$0xff] %v2850
            %2859 = vst [vmem:[%s2838] sm:$0xff] %v2853
            %2860 = vst [vmem:[%s2840] sm:$0xff] %v2856
            %s2861 = smov [#allocation23]
            %s2862 = scalar_lea.vmem %s2861, 24
            %v2863 = vld [vmem:[%s2862] sm:$0xff]
            %s2864 = smov [#allocation24]
            %s2865 = scalar_lea.vmem %s2864, 24
            %v2866 = vld [vmem:[%s2865] sm:$0xff]
            %s2867 = smov %s281
            %s2868 = scalar_lea.vmem %s2867, 24
            %s2869 = smov %s285
            %s2870 = scalar_lea.vmem %s2869, 24
            %s2871 = smov %s289
            %s2872 = scalar_lea.vmem %s2871, 24
            %s2873 = smov %s293
            %s2874 = scalar_lea.vmem %s2873, 24
            %v2875 = vld [vmem:[%s2868] sm:$0xff]
            %v2876 = vld [vmem:[%s2870] sm:$0xff]
            %v2877 = vld [vmem:[%s2872] sm:$0xff]
            %v2878 = vld [vmem:[%s2874] sm:$0xff]
            %v2879 = vmul.f32 %v2863, %v2875
            %v2880 = vmul.f32 %v2866, %v2877
            %v2881 = vsub.f32 %v2879, %v2880
            %v2882 = vmul.f32 %v2863, %v2876
            %v2883 = vmul.f32 %v2866, %v2878
            %v2884 = vsub.f32 %v2882, %v2883
            %v2885 = vmul.f32 %v2866, %v2875
            %v2886 = vmul.f32 %v2863, %v2877
            %v2887 = vadd.f32 %v2885, %v2886
            %v2888 = vmul.f32 %v2866, %v2876
            %v2889 = vmul.f32 %v2863, %v2878
            %v2890 = vadd.f32 %v2888, %v2889
            %2891 = vst [vmem:[%s2868] sm:$0xff] %v2881
            %2892 = vst [vmem:[%s2870] sm:$0xff] %v2884
            %2893 = vst [vmem:[%s2872] sm:$0xff] %v2887
            %2894 = vst [vmem:[%s2874] sm:$0xff] %v2890
            %s2895 = smov [#allocation23]
            %s2896 = scalar_lea.vmem %s2895, 32
            %v2897 = vld [vmem:[%s2896] sm:$0xff]
            %s2898 = smov [#allocation24]
            %s2899 = scalar_lea.vmem %s2898, 32
            %v2900 = vld [vmem:[%s2899] sm:$0xff]
            %s2901 = smov %s281
            %s2902 = scalar_lea.vmem %s2901, 32
            %s2903 = smov %s285
            %s2904 = scalar_lea.vmem %s2903, 32
            %s2905 = smov %s289
            %s2906 = scalar_lea.vmem %s2905, 32
            %s2907 = smov %s293
            %s2908 = scalar_lea.vmem %s2907, 32
            %v2909 = vld [vmem:[%s2902] sm:$0xff]
            %v2910 = vld [vmem:[%s2904] sm:$0xff]
            %v2911 = vld [vmem:[%s2906] sm:$0xff]
            %v2912 = vld [vmem:[%s2908] sm:$0xff]
            %v2913 = vmul.f32 %v2897, %v2909
            %v2914 = vmul.f32 %v2900, %v2911
            %v2915 = vsub.f32 %v2913, %v2914
            %v2916 = vmul.f32 %v2897, %v2910
            %v2917 = vmul.f32 %v2900, %v2912
            %v2918 = vsub.f32 %v2916, %v2917
            %v2919 = vmul.f32 %v2900, %v2909
            %v2920 = vmul.f32 %v2897, %v2911
            %v2921 = vadd.f32 %v2919, %v2920
            %v2922 = vmul.f32 %v2900, %v2910
            %v2923 = vmul.f32 %v2897, %v2912
            %v2924 = vadd.f32 %v2922, %v2923
            %2925 = vst [vmem:[%s2902] sm:$0xff] %v2915
            %2926 = vst [vmem:[%s2904] sm:$0xff] %v2918
            %2927 = vst [vmem:[%s2906] sm:$0xff] %v2921
            %2928 = vst [vmem:[%s2908] sm:$0xff] %v2924
            %s2929 = smov [#allocation23]
            %s2930 = scalar_lea.vmem %s2929, 40
            %v2931 = vld [vmem:[%s2930] sm:$0xff]
            %s2932 = smov [#allocation24]
            %s2933 = scalar_lea.vmem %s2932, 40
            %v2934 = vld [vmem:[%s2933] sm:$0xff]
            %s2935 = smov %s281
            %s2936 = scalar_lea.vmem %s2935, 40
            %s2937 = smov %s285
            %s2938 = scalar_lea.vmem %s2937, 40
            %s2939 = smov %s289
            %s2940 = scalar_lea.vmem %s2939, 40
            %s2941 = smov %s293
            %s2942 = scalar_lea.vmem %s2941, 40
            %v2943 = vld [vmem:[%s2936] sm:$0xff]
            %v2944 = vld [vmem:[%s2938] sm:$0xff]
            %v2945 = vld [vmem:[%s2940] sm:$0xff]
            %v2946 = vld [vmem:[%s2942] sm:$0xff]
            %v2947 = vmul.f32 %v2931, %v2943
            %v2948 = vmul.f32 %v2934, %v2945
            %v2949 = vsub.f32 %v2947, %v2948
            %v2950 = vmul.f32 %v2931, %v2944
            %v2951 = vmul.f32 %v2934, %v2946
            %v2952 = vsub.f32 %v2950, %v2951
            %v2953 = vmul.f32 %v2934, %v2943
            %v2954 = vmul.f32 %v2931, %v2945
            %v2955 = vadd.f32 %v2953, %v2954
            %v2956 = vmul.f32 %v2934, %v2944
            %v2957 = vmul.f32 %v2931, %v2946
            %v2958 = vadd.f32 %v2956, %v2957
            %2959 = vst [vmem:[%s2936] sm:$0xff] %v2949
            %2960 = vst [vmem:[%s2938] sm:$0xff] %v2952
            %2961 = vst [vmem:[%s2940] sm:$0xff] %v2955
            %2962 = vst [vmem:[%s2942] sm:$0xff] %v2958
            %s2963 = smov [#allocation23]
            %s2964 = scalar_lea.vmem %s2963, 48
            %v2965 = vld [vmem:[%s2964] sm:$0xff]
            %s2966 = smov [#allocation24]
            %s2967 = scalar_lea.vmem %s2966, 48
            %v2968 = vld [vmem:[%s2967] sm:$0xff]
            %s2969 = smov %s281
            %s2970 = scalar_lea.vmem %s2969, 48
            %s2971 = smov %s285
            %s2972 = scalar_lea.vmem %s2971, 48
            %s2973 = smov %s289
            %s2974 = scalar_lea.vmem %s2973, 48
            %s2975 = smov %s293
            %s2976 = scalar_lea.vmem %s2975, 48
            %v2977 = vld [vmem:[%s2970] sm:$0x3]
            %v2978 = vld [vmem:[%s2972] sm:$0x3]
            %v2979 = vld [vmem:[%s2974] sm:$0x3]
            %v2980 = vld [vmem:[%s2976] sm:$0x3]
            %v2981 = vmul.f32 %v2965, %v2977
            %v2982 = vmul.f32 %v2968, %v2979
            %v2983 = vsub.f32 %v2981, %v2982
            %v2984 = vmul.f32 %v2965, %v2978
            %v2985 = vmul.f32 %v2968, %v2980
            %v2986 = vsub.f32 %v2984, %v2985
            %v2987 = vmul.f32 %v2968, %v2977
            %v2988 = vmul.f32 %v2965, %v2979
            %v2989 = vadd.f32 %v2987, %v2988
            %v2990 = vmul.f32 %v2968, %v2978
            %v2991 = vmul.f32 %v2965, %v2980
            %v2992 = vadd.f32 %v2990, %v2991
            %2993 = vst [vmem:[%s2970] sm:$0x3] %v2983
            %2994 = vst [vmem:[%s2972] sm:$0x3] %v2986
            %2995 = vst [vmem:[%s2974] sm:$0x3] %v2989
            %2996 = vst [vmem:[%s2976] sm:$0x3] %v2992
            %s2997 = smov %s281
            %s2998 = smov %s289
            %v2999 = vld [vmem:[%s2997] ss:$0 sm:$0xff]
            %s3001 = scalar_lea.vmem %s2997, 4294967295
            %v3002 = vld [vmem:[%s3001] sm:$0xfe]
            %v3003 = vlaneseq
            %v3004 = vshrl.u32 %v3003, 7
            %vm3005 = vcmp.eq.s32.totalorder %v3004, 0
            %v3006 = vsel %vm3005, %v2999, %v3002
            %s3007 = scalar_lea.vmem %s2997, 7
            %v3008 = vld [vmem:[%s3007] ss:$0 sm:$0xff]
            %3009 = vst [vmem:[%s2997] sm:$0xff] %v3006
            %s3010 = scalar_lea.vmem %s2997, 8
            %s3012 = scalar_lea.vmem %s3010, 4294967295
            %v3013 = vld [vmem:[%s3012] sm:$0xfe]
            %v3014 = vlaneseq
            %v3015 = vshrl.u32 %v3014, 7
            %vm3016 = vcmp.eq.s32.totalorder %v3015, 0
            %v3017 = vsel %vm3016, %v3008, %v3013
            %s3018 = scalar_lea.vmem %s3010, 7
            %v3019 = vld [vmem:[%s3018] ss:$0 sm:$0xff]
            %3020 = vst [vmem:[%s3010] sm:$0xff] %v3017
            %s3021 = scalar_lea.vmem %s2997, 16
            %s3023 = scalar_lea.vmem %s3021, 4294967295
            %v3024 = vld [vmem:[%s3023] sm:$0xfe]
            %v3025 = vlaneseq
            %v3026 = vshrl.u32 %v3025, 7
            %vm3027 = vcmp.eq.s32.totalorder %v3026, 0
            %v3028 = vsel %vm3027, %v3019, %v3024
            %s3029 = scalar_lea.vmem %s3021, 7
            %v3030 = vld [vmem:[%s3029] ss:$0 sm:$0xff]
            %3031 = vst [vmem:[%s3021] sm:$0xff] %v3028
            %s3032 = scalar_lea.vmem %s2997, 24
            %s3034 = scalar_lea.vmem %s3032, 4294967295
            %v3035 = vld [vmem:[%s3034] sm:$0xfe]
            %v3036 = vlaneseq
            %v3037 = vshrl.u32 %v3036, 7
            %vm3038 = vcmp.eq.s32.totalorder %v3037, 0
            %v3039 = vsel %vm3038, %v3030, %v3035
            %s3040 = scalar_lea.vmem %s3032, 7
            %v3041 = vld [vmem:[%s3040] ss:$0 sm:$0xff]
            %3042 = vst [vmem:[%s3032] sm:$0xff] %v3039
            %s3043 = scalar_lea.vmem %s2997, 32
            %s3045 = scalar_lea.vmem %s3043, 4294967295
            %v3046 = vld [vmem:[%s3045] sm:$0xfe]
            %v3047 = vlaneseq
            %v3048 = vshrl.u32 %v3047, 7
            %vm3049 = vcmp.eq.s32.totalorder %v3048, 0
            %v3050 = vsel %vm3049, %v3041, %v3046
            %s3051 = scalar_lea.vmem %s3043, 7
            %v3052 = vld [vmem:[%s3051] ss:$0 sm:$0xff]
            %3053 = vst [vmem:[%s3043] sm:$0xff] %v3050
            %s3054 = scalar_lea.vmem %s2997, 40
            %s3056 = scalar_lea.vmem %s3054, 4294967295
            %v3057 = vld [vmem:[%s3056] sm:$0xfe]
            %v3058 = vlaneseq
            %v3059 = vshrl.u32 %v3058, 7
            %vm3060 = vcmp.eq.s32.totalorder %v3059, 0
            %v3061 = vsel %vm3060, %v3052, %v3057
            %s3062 = scalar_lea.vmem %s3054, 7
            %v3063 = vld [vmem:[%s3062] ss:$0 sm:$0xff]
            %3064 = vst [vmem:[%s3054] sm:$0xff] %v3061
            %s3065 = scalar_lea.vmem %s2997, 48
            %s3067 = scalar_lea.vmem %s3065, 4294967295
            %v3068 = vld [vmem:[%s3067] sm:$0x2]
            %v3069 = vlaneseq
            %v3070 = vshrl.u32 %v3069, 7
            %vm3071 = vcmp.eq.s32.totalorder %v3070, 0
            %v3072 = vsel %vm3071, %v3063, %v3068
            %s3073 = scalar_lea.vmem %s3065, 1
            %v3074 = vld [vmem:[%s3073] ss:$0 sm:$0xff]
            %3075 = vst [vmem:[%s3065] sm:$0x3] %v3072
            %v3076 = vld [vmem:[%s2998] ss:$0 sm:$0xff]
            %s3077 = scalar_lea.vmem %s2997, 1
            %3078 = vst [vmem:[%s3077] sm:$0x1] %v3076
            %s3079 = scalar_lea.vmem %s2998, 48
            %s3080 = scalar_lea.vmem %s3079, 1
            %v3081 = vld [vmem:[%s3080] sm:$0x1]
            %v3082 = vlaneseq
            %v3083 = vshrl.u32 %v3082, 7
            %vm3084 = vcmp.eq.s32.totalorder %v3083, 1
            %v3085 = vsel %vm3084, %v3074, %v3081
            %v3086 = vld [vmem:[%s3079] ss:$0 sm:$0xff]
            %3087 = vst [vmem:[%s3079] sm:$0x3] %v3085
            %s3088 = scalar_lea.vmem %s2998, 40
            %s3089 = scalar_lea.vmem %s3088, 1
            %v3090 = vld [vmem:[%s3089] sm:$0x7f]
            %v3091 = vlaneseq
            %v3092 = vshrl.u32 %v3091, 7
            %vm3093 = vcmp.eq.s32.totalorder %v3092, 7
            %v3094 = vsel %vm3093, %v3086, %v3090
            %v3095 = vld [vmem:[%s3088] ss:$0 sm:$0xff]
            %3096 = vst [vmem:[%s3088] sm:$0xff] %v3094
            %s3097 = scalar_lea.vmem %s2998, 32
            %s3098 = scalar_lea.vmem %s3097, 1
            %v3099 = vld [vmem:[%s3098] sm:$0x7f]
            %v3100 = vlaneseq
            %v3101 = vshrl.u32 %v3100, 7
            %vm3102 = vcmp.eq.s32.totalorder %v3101, 7
            %v3103 = vsel %vm3102, %v3095, %v3099
            %v3104 = vld [vmem:[%s3097] ss:$0 sm:$0xff]
            %3105 = vst [vmem:[%s3097] sm:$0xff] %v3103
            %s3106 = scalar_lea.vmem %s2998, 24
            %s3107 = scalar_lea.vmem %s3106, 1
            %v3108 = vld [vmem:[%s3107] sm:$0x7f]
            %v3109 = vlaneseq
            %v3110 = vshrl.u32 %v3109, 7
            %vm3111 = vcmp.eq.s32.totalorder %v3110, 7
            %v3112 = vsel %vm3111, %v3104, %v3108
            %v3113 = vld [vmem:[%s3106] ss:$0 sm:$0xff]
            %3114 = vst [vmem:[%s3106] sm:$0xff] %v3112
            %s3115 = scalar_lea.vmem %s2998, 16
            %s3116 = scalar_lea.vmem %s3115, 1
            %v3117 = vld [vmem:[%s3116] sm:$0x7f]
            %v3118 = vlaneseq
            %v3119 = vshrl.u32 %v3118, 7
            %vm3120 = vcmp.eq.s32.totalorder %v3119, 7
            %v3121 = vsel %vm3120, %v3113, %v3117
            %v3122 = vld [vmem:[%s3115] ss:$0 sm:$0xff]
            %3123 = vst [vmem:[%s3115] sm:$0xff] %v3121
            %s3124 = scalar_lea.vmem %s2998, 8
            %s3125 = scalar_lea.vmem %s3124, 1
            %v3126 = vld [vmem:[%s3125] sm:$0x7f]
            %v3127 = vlaneseq
            %v3128 = vshrl.u32 %v3127, 7
            %vm3129 = vcmp.eq.s32.totalorder %v3128, 7
            %v3130 = vsel %vm3129, %v3122, %v3126
            %v3131 = vld [vmem:[%s3124] ss:$0 sm:$0xff]
            %3132 = vst [vmem:[%s3124] sm:$0xff] %v3130
            %s3133 = scalar_lea.vmem %s2998, 1
            %v3134 = vld [vmem:[%s3133] sm:$0x7f]
            %v3135 = vlaneseq
            %v3136 = vshrl.u32 %v3135, 7
            %vm3137 = vcmp.eq.s32.totalorder %v3136, 7
            %v3138 = vsel %vm3137, %v3131, %v3134
            %v3139 = vld [vmem:[%s2998] ss:$0 sm:$0xff]
            %3140 = vst [vmem:[%s2998] sm:$0xff] %v3138
            %s3141 = smov %s285
            %s3142 = smov %s293
            %v3143 = vld [vmem:[%s3141] ss:$0 sm:$0xff]
            %s3145 = scalar_lea.vmem %s3141, 4294967295
            %v3146 = vld [vmem:[%s3145] sm:$0xfe]
            %v3147 = vlaneseq
            %v3148 = vshrl.u32 %v3147, 7
            %vm3149 = vcmp.eq.s32.totalorder %v3148, 0
            %v3150 = vsel %vm3149, %v3143, %v3146
            %s3151 = scalar_lea.vmem %s3141, 7
            %v3152 = vld [vmem:[%s3151] ss:$0 sm:$0xff]
            %3153 = vst [vmem:[%s3141] sm:$0xff] %v3150
            %s3154 = scalar_lea.vmem %s3141, 8
            %s3156 = scalar_lea.vmem %s3154, 4294967295
            %v3157 = vld [vmem:[%s3156] sm:$0xfe]
            %v3158 = vlaneseq
            %v3159 = vshrl.u32 %v3158, 7
            %vm3160 = vcmp.eq.s32.totalorder %v3159, 0
            %v3161 = vsel %vm3160, %v3152, %v3157
            %s3162 = scalar_lea.vmem %s3154, 7
            %v3163 = vld [vmem:[%s3162] ss:$0 sm:$0xff]
            %3164 = vst [vmem:[%s3154] sm:$0xff] %v3161
            %s3165 = scalar_lea.vmem %s3141, 16
            %s3167 = scalar_lea.vmem %s3165, 4294967295
            %v3168 = vld [vmem:[%s3167] sm:$0xfe]
            %v3169 = vlaneseq
            %v3170 = vshrl.u32 %v3169, 7
            %vm3171 = vcmp.eq.s32.totalorder %v3170, 0
            %v3172 = vsel %vm3171, %v3163, %v3168
            %s3173 = scalar_lea.vmem %s3165, 7
            %v3174 = vld [vmem:[%s3173] ss:$0 sm:$0xff]
            %3175 = vst [vmem:[%s3165] sm:$0xff] %v3172
            %s3176 = scalar_lea.vmem %s3141, 24
            %s3178 = scalar_lea.vmem %s3176, 4294967295
            %v3179 = vld [vmem:[%s3178] sm:$0xfe]
            %v3180 = vlaneseq
            %v3181 = vshrl.u32 %v3180, 7
            %vm3182 = vcmp.eq.s32.totalorder %v3181, 0
            %v3183 = vsel %vm3182, %v3174, %v3179
            %s3184 = scalar_lea.vmem %s3176, 7
            %v3185 = vld [vmem:[%s3184] ss:$0 sm:$0xff]
            %3186 = vst [vmem:[%s3176] sm:$0xff] %v3183
            %s3187 = scalar_lea.vmem %s3141, 32
            %s3189 = scalar_lea.vmem %s3187, 4294967295
            %v3190 = vld [vmem:[%s3189] sm:$0xfe]
            %v3191 = vlaneseq
            %v3192 = vshrl.u32 %v3191, 7
            %vm3193 = vcmp.eq.s32.totalorder %v3192, 0
            %v3194 = vsel %vm3193, %v3185, %v3190
            %s3195 = scalar_lea.vmem %s3187, 7
            %v3196 = vld [vmem:[%s3195] ss:$0 sm:$0xff]
            %3197 = vst [vmem:[%s3187] sm:$0xff] %v3194
            %s3198 = scalar_lea.vmem %s3141, 40
            %s3200 = scalar_lea.vmem %s3198, 4294967295
            %v3201 = vld [vmem:[%s3200] sm:$0xfe]
            %v3202 = vlaneseq
            %v3203 = vshrl.u32 %v3202, 7
            %vm3204 = vcmp.eq.s32.totalorder %v3203, 0
            %v3205 = vsel %vm3204, %v3196, %v3201
            %s3206 = scalar_lea.vmem %s3198, 7
            %v3207 = vld [vmem:[%s3206] ss:$0 sm:$0xff]
            %3208 = vst [vmem:[%s3198] sm:$0xff] %v3205
            %s3209 = scalar_lea.vmem %s3141, 48
            %s3211 = scalar_lea.vmem %s3209, 4294967295
            %v3212 = vld [vmem:[%s3211] sm:$0x2]
            %v3213 = vlaneseq
            %v3214 = vshrl.u32 %v3213, 7
            %vm3215 = vcmp.eq.s32.totalorder %v3214, 0
            %v3216 = vsel %vm3215, %v3207, %v3212
            %s3217 = scalar_lea.vmem %s3209, 1
            %v3218 = vld [vmem:[%s3217] ss:$0 sm:$0xff]
            %3219 = vst [vmem:[%s3209] sm:$0x3] %v3216
            %v3220 = vld [vmem:[%s3142] ss:$0 sm:$0xff]
            %s3221 = scalar_lea.vmem %s3141, 1
            %3222 = vst [vmem:[%s3221] sm:$0x1] %v3220
            %s3223 = scalar_lea.vmem %s3142, 48
            %s3224 = scalar_lea.vmem %s3223, 1
            %v3225 = vld [vmem:[%s3224] sm:$0x1]
            %v3226 = vlaneseq
            %v3227 = vshrl.u32 %v3226, 7
            %vm3228 = vcmp.eq.s32.totalorder %v3227, 1
            %v3229 = vsel %vm3228, %v3218, %v3225
            %v3230 = vld [vmem:[%s3223] ss:$0 sm:$0xff]
            %3231 = vst [vmem:[%s3223] sm:$0x3] %v3229
            %s3232 = scalar_lea.vmem %s3142, 40
            %s3233 = scalar_lea.vmem %s3232, 1
            %v3234 = vld [vmem:[%s3233] sm:$0x7f]
            %v3235 = vlaneseq
            %v3236 = vshrl.u32 %v3235, 7
            %vm3237 = vcmp.eq.s32.totalorder %v3236, 7
            %v3238 = vsel %vm3237, %v3230, %v3234
            %v3239 = vld [vmem:[%s3232] ss:$0 sm:$0xff]
            %3240 = vst [vmem:[%s3232] sm:$0xff] %v3238
            %s3241 = scalar_lea.vmem %s3142, 32
            %s3242 = scalar_lea.vmem %s3241, 1
            %v3243 = vld [vmem:[%s3242] sm:$0x7f]
            %v3244 = vlaneseq
            %v3245 = vshrl.u32 %v3244, 7
            %vm3246 = vcmp.eq.s32.totalorder %v3245, 7
            %v3247 = vsel %vm3246, %v3239, %v3243
            %v3248 = vld [vmem:[%s3241] ss:$0 sm:$0xff]
            %3249 = vst [vmem:[%s3241] sm:$0xff] %v3247
            %s3250 = scalar_lea.vmem %s3142, 24
            %s3251 = scalar_lea.vmem %s3250, 1
            %v3252 = vld [vmem:[%s3251] sm:$0x7f]
            %v3253 = vlaneseq
            %v3254 = vshrl.u32 %v3253, 7
            %vm3255 = vcmp.eq.s32.totalorder %v3254, 7
            %v3256 = vsel %vm3255, %v3248, %v3252
            %v3257 = vld [vmem:[%s3250] ss:$0 sm:$0xff]
            %3258 = vst [vmem:[%s3250] sm:$0xff] %v3256
            %s3259 = scalar_lea.vmem %s3142, 16
            %s3260 = scalar_lea.vmem %s3259, 1
            %v3261 = vld [vmem:[%s3260] sm:$0x7f]
            %v3262 = vlaneseq
            %v3263 = vshrl.u32 %v3262, 7
            %vm3264 = vcmp.eq.s32.totalorder %v3263, 7
            %v3265 = vsel %vm3264, %v3257, %v3261
            %v3266 = vld [vmem:[%s3259] ss:$0 sm:$0xff]
            %3267 = vst [vmem:[%s3259] sm:$0xff] %v3265
            %s3268 = scalar_lea.vmem %s3142, 8
            %s3269 = scalar_lea.vmem %s3268, 1
            %v3270 = vld [vmem:[%s3269] sm:$0x7f]
            %v3271 = vlaneseq
            %v3272 = vshrl.u32 %v3271, 7
            %vm3273 = vcmp.eq.s32.totalorder %v3272, 7
            %v3274 = vsel %vm3273, %v3266, %v3270
            %v3275 = vld [vmem:[%s3268] ss:$0 sm:$0xff]
            %3276 = vst [vmem:[%s3268] sm:$0xff] %v3274
            %s3277 = scalar_lea.vmem %s3142, 1
            %v3278 = vld [vmem:[%s3277] sm:$0x7f]
            %v3279 = vlaneseq
            %v3280 = vshrl.u32 %v3279, 7
            %vm3281 = vcmp.eq.s32.totalorder %v3280, 7
            %v3282 = vsel %vm3281, %v3275, %v3278
            %v3283 = vld [vmem:[%s3142] ss:$0 sm:$0xff]
            %3284 = vst [vmem:[%s3142] sm:$0xff] %v3282
          $region108: #{custom-call.2} parent=100 // loop_footer
            %s861 = sadd.s32 1, %s857
          $region109: #{custom-call.2} parent=100 // loop_footer_branch
            %856 = sbr.rel target = $region105
          $region110: #{custom-call.2} parent=100 // loop_exit
            _
          %s3285 = sadd.s32 %s567, 1
        $region101: #{custom-call.2} parent=95 // loop_footer
          _
        $region102: #{custom-call.2} parent=95 // loop_footer_branch
          %566 = sbr.rel target = $region98
        $region103: #{custom-call.2} parent=95 // loop_exit
          _
        %s3288 = sand.u32 %s17, 7
        %s3289 = scalar_lea.vmem [#allocation4], %s3288
        %s3290 = sand.u32 %s17, 7
        %s3291 = scalar_lea.vmem [#allocation6], %s3290
        %s3292 = smov [#allocation12]
        %s3293 = smov %s3289
        %v3294 = vlaneseq
        %v3295 = vand.u32 %v3294, 127
        %v3296 = vmov %v3295
        %v3297 = vlaneseq
        %v3298 = vshrl.u32 %v3297, 7
        %v3299 = vmov %v3298
        %v3300 = vld [vmem:[%s3292] sm:$0xff]
        %vm3303 = vcmp.eq.s32.totalorder %v3299, %v3296
        %v3304 = vsel %vm3303, %v3300, 0.0
        %s3305 = scalar_lea.vmem %s3292, 8
        %v3306 = vld [vmem:[%s3305] sm:$0xff]
        %v3308 = vadd.s32 %v3299, 8
        %vm3309 = vcmp.eq.s32.totalorder %v3308, %v3296
        %v3310 = vsel %vm3309, %v3306, %v3304
        %s3311 = scalar_lea.vmem %s3292, 16
        %v3312 = vld [vmem:[%s3311] sm:$0xff]
        %v3314 = vadd.s32 %v3299, 16
        %vm3315 = vcmp.eq.s32.totalorder %v3314, %v3296
        %v3316 = vsel %vm3315, %v3312, %v3310
        %s3317 = scalar_lea.vmem %s3292, 24
        %v3318 = vld [vmem:[%s3317] sm:$0xff]
        %v3320 = vadd.s32 %v3299, 24
        %vm3321 = vcmp.eq.s32.totalorder %v3320, %v3296
        %v3322 = vsel %vm3321, %v3318, %v3316
        %s3323 = scalar_lea.vmem %s3292, 32
        %v3324 = vld [vmem:[%s3323] sm:$0xff]
        %v3326 = vadd.s32 %v3299, 32
        %vm3327 = vcmp.eq.s32.totalorder %v3326, %v3296
        %v3328 = vsel %vm3327, %v3324, %v3322
        %s3329 = scalar_lea.vmem %s3292, 40
        %v3330 = vld [vmem:[%s3329] sm:$0xff]
        %v3332 = vadd.s32 %v3299, 40
        %vm3333 = vcmp.eq.s32.totalorder %v3332, %v3296
        %v3334 = vsel %vm3333, %v3330, %v3328
        %s3335 = scalar_lea.vmem %s3292, 48
        %v3336 = vld [vmem:[%s3335] sm:$0x3]
        %v3338 = vadd.s32 %v3299, 48
        %vm3339 = vcmp.eq.s32.totalorder %v3338, %v3296
        %v3340 = vsel %vm3339, %v3336, %v3334
        %v3341 = vrot.slane %v3340, 4
        %v3342 = vadd.f32 %v3340, %v3341
        %v3343 = vrot.slane %v3342, 2
        %v3344 = vadd.f32 %v3342, %v3343
        %v3345 = vrot.slane %v3344, 1
        %v3346 = vadd.f32 %v3344, %v3345
        %3347 = vst [vmem:[%s3293] sm:$0x1] %v3346
        %s3348 = smov [#allocation15]
        %s3349 = smov %s3291
        %v3350 = vlaneseq
        %v3351 = vand.u32 %v3350, 127
        %v3352 = vmov %v3351
        %v3353 = vlaneseq
        %v3354 = vshrl.u32 %v3353, 7
        %v3355 = vmov %v3354
        %v3356 = vld [vmem:[%s3348] sm:$0xff]
        %vm3359 = vcmp.eq.s32.totalorder %v3355, %v3352
        %v3360 = vsel %vm3359, %v3356, 0.0
        %s3361 = scalar_lea.vmem %s3348, 8
        %v3362 = vld [vmem:[%s3361] sm:$0xff]
        %v3364 = vadd.s32 %v3355, 8
        %vm3365 = vcmp.eq.s32.totalorder %v3364, %v3352
        %v3366 = vsel %vm3365, %v3362, %v3360
        %s3367 = scalar_lea.vmem %s3348, 16
        %v3368 = vld [vmem:[%s3367] sm:$0xff]
        %v3370 = vadd.s32 %v3355, 16
        %vm3371 = vcmp.eq.s32.totalorder %v3370, %v3352
        %v3372 = vsel %vm3371, %v3368, %v3366
        %s3373 = scalar_lea.vmem %s3348, 24
        %v3374 = vld [vmem:[%s3373] sm:$0xff]
        %v3376 = vadd.s32 %v3355, 24
        %vm3377 = vcmp.eq.s32.totalorder %v3376, %v3352
        %v3378 = vsel %vm3377, %v3374, %v3372
        %s3379 = scalar_lea.vmem %s3348, 32
        %v3380 = vld [vmem:[%s3379] sm:$0xff]
        %v3382 = vadd.s32 %v3355, 32
        %vm3383 = vcmp.eq.s32.totalorder %v3382, %v3352
        %v3384 = vsel %vm3383, %v3380, %v3378
        %s3385 = scalar_lea.vmem %s3348, 40
        %v3386 = vld [vmem:[%s3385] sm:$0xff]
        %v3388 = vadd.s32 %v3355, 40
        %vm3389 = vcmp.eq.s32.totalorder %v3388, %v3352
        %v3390 = vsel %vm3389, %v3386, %v3384
        %s3391 = scalar_lea.vmem %s3348, 48
        %v3392 = vld [vmem:[%s3391] sm:$0x3]
        %v3394 = vadd.s32 %v3355, 48
        %vm3395 = vcmp.eq.s32.totalorder %v3394, %v3352
        %v3396 = vsel %vm3395, %v3392, %v3390
        %v3397 = vrot.slane %v3396, 4
        %v3398 = vadd.f32 %v3396, %v3397
        %v3399 = vrot.slane %v3398, 2
        %v3400 = vadd.f32 %v3398, %v3399
        %v3401 = vrot.slane %v3400, 1
        %v3402 = vadd.f32 %v3400, %v3401
        %3403 = vst [vmem:[%s3349] sm:$0x1] %v3402
        %s3405 = ssub.s32 4, 1
        %v3406 = vld [vmem:[#allocation4] sm:%s3405]
        %s3408 = ssub.s32 4, 1
        %3409 = vst [vmem:[%s271] sm:%s3408] %v3406
        %s3411 = ssub.s32 4, 1
        %v3412 = vld [vmem:[#allocation6] sm:%s3411]
        %s3414 = ssub.s32 4, 1
        %3415 = vst [vmem:[%s277] sm:%s3414] %v3412
        %s3416 = sand.u32 %s27, 1
        %s3417 = sand.u32 %s27, 1
        %s3418 = smul.addr %s3417, 2
        %s3419 = scalar_lea.vmem [#allocation5], %s3418
        %s3420 = sand.u32 %s55, 1
        %s3421 = sand.u32 %s55, 1
        %s3422 = smul.addr %s3421, 2
        %s3423 = scalar_lea.vmem [#allocation7], %s3422
        %s3424 = sand.u32 %s17, 1
        %s3425 = sand.u32 %s17, 1
        %s3426 = smul.addr %s3425, 56
        %s3427 = scalar_lea.vmem [#allocation8], %s3426
        %s3428 = sand.u32 %s17, 1
        %s3429 = sand.u32 %s17, 1
        %s3430 = smul.addr %s3429, 56
        %s3431 = scalar_lea.vmem [#allocation9], %s3430
        %s3432 = sand.u32 %s17, 1
        %s3433 = sand.u32 %s17, 1
        %s3434 = smul.addr %s3433, 56
        %s3435 = scalar_lea.vmem [#allocation10], %s3434
        %s3436 = sand.u32 %s17, 1
        %s3437 = sand.u32 %s17, 1
        %s3438 = smul.addr %s3437, 56
        %s3439 = scalar_lea.vmem [#allocation11], %s3438
        // Predicated region
        $region111: #{custom-call.2} parent=95 // pred_check
          %p3440 = pneg %p37
        $region112: #{custom-call.2} parent=95 // pred_check_branch
          %3442 = sbr.rel (%p3440) target = $region114
        $region113: #{custom-call.2} parent=95 // pred_region
          %s3443 = sshrl.u32 %s17, 3
          %s3444 = smul.addr %s3443, 2
          %s3445 = scalar_lea.vmem %s4, %s3444
          // Predicated region
          $region115: #{custom-call.2} parent=113 // pred_check
            _
          $region116: #{custom-call.2} parent=113 // pred_check_branch
            %3447 = sbr.rel (0) target = $region118
          $region117: #{custom-call.2} parent=113 // pred_region
            // Predicated region
            $region119: #{custom-call.2} parent=117 // pred_check
              _
            $region120: #{custom-call.2} parent=117 // pred_check_branch
              %3449 = sbr.rel target = $region122
            $region121: #{custom-call.2} parent=117 // pred_region
              // Predicated region
              $region134: #{custom-call.2} parent=121 // pred_check
                _
              $region135: #{custom-call.2} parent=121 // pred_check_branch
                %3465 = sbr.rel (0) target = $region137
              $region136: #{custom-call.2} parent=121 // pred_region
                %s3467 = ssub.s32 4, 1
                loop: start=0, step=1, limit=1
                $region138: #{custom-call.2} parent=136 // loop_pre_header
                  _
                $region139: #{custom-call.2} parent=136 // loop_header
                  %s3469 = sphi 0, %s3473
                  %p3470 = scmp.ge.s32.totalorder %s3469, 1
                  %s3474 = sphi %s3419, %s3419
                  %s3475 = sphi %s3445, %s3445
                $region140: #{custom-call.2} parent=136 // loop_header_branch
                  %3472 = sbr.rel (%p3470) target = $region144
                $region141: #{custom-call.2} parent=136 // loop_body
                  %v3476 = vld [vmem:[%s3474] sm:%s3467]
                  %3477 = vst [vmem:[%s3475] sm:%s3467] %v3476
                $region142: #{custom-call.2} parent=136 // loop_footer
                  %s3473 = sadd.s32 1, %s3469
                $region143: #{custom-call.2} parent=136 // loop_footer_branch
                  %3468 = sbr.rel target = $region139
                $region144: #{custom-call.2} parent=136 // loop_exit
                  _
              $region137: #{custom-call.2} parent=121 // pred_fallthru
                _
            $region122: #{custom-call.2} parent=117 // pred_fallthru
              _
            // Predicated region
            $region123: #{custom-call.2} parent=117 // pred_check
              _
            $region124: #{custom-call.2} parent=117 // pred_check_branch
              %3451 = sbr.rel (0) target = $region126
            $region125: #{custom-call.2} parent=117 // pred_region
              %s3453 = ssub.s32 4, 1
              loop: start=0, step=1, limit=1
              $region127: #{custom-call.2} parent=125 // loop_pre_header
                _
              $region128: #{custom-call.2} parent=125 // loop_header
                %s3455 = sphi 0, %s3459
                %p3456 = scmp.ge.s32.totalorder %s3455, 1
                %s3460 = sphi %s3419, %s3419
                %s3461 = sphi %s3445, %s3445
              $region129: #{custom-call.2} parent=125 // loop_header_branch
                %3458 = sbr.rel (%p3456) target = $region133
              $region130: #{custom-call.2} parent=125 // loop_body
                %v3462 = vld [vmem:[%s3460] sm:%s3453]
                %3463 = vst [vmem:[%s3461] sm:%s3453] %v3462
              $region131: #{custom-call.2} parent=125 // loop_footer
                %s3459 = sadd.s32 1, %s3455
              $region132: #{custom-call.2} parent=125 // loop_footer_branch
                %3454 = sbr.rel target = $region128
              $region133: #{custom-call.2} parent=125 // loop_exit
                _
            $region126: #{custom-call.2} parent=117 // pred_fallthru
              _
          $region118: #{custom-call.2} parent=113 // pred_fallthru
            _
          %3478 = vnop
        $region114: #{custom-call.2} parent=95 // pred_fallthru
          _
        // Predicated region
        $region145: #{custom-call.2} parent=95 // pred_check
          %p3479 = pneg %p65
        $region146: #{custom-call.2} parent=95 // pred_check_branch
          %3481 = sbr.rel (%p3479) target = $region148
        $region147: #{custom-call.2} parent=95 // pred_region
          %s3482 = sshrl.u32 %s17, 3
          %s3483 = smul.addr %s3482, 2
          %s3484 = scalar_lea.vmem %s5, %s3483
          // Predicated region
          $region149: #{custom-call.2} parent=147 // pred_check
            _
          $region150: #{custom-call.2} parent=147 // pred_check_branch
            %3486 = sbr.rel (0) target = $region152
          $region151: #{custom-call.2} parent=147 // pred_region
            // Predicated region
            $region153: #{custom-call.2} parent=151 // pred_check
              _
            $region154: #{custom-call.2} parent=151 // pred_check_branch
              %3488 = sbr.rel target = $region156
            $region155: #{custom-call.2} parent=151 // pred_region
              // Predicated region
              $region168: #{custom-call.2} parent=155 // pred_check
                _
              $region169: #{custom-call.2} parent=155 // pred_check_branch
                %3504 = sbr.rel (0) target = $region171
              $region170: #{custom-call.2} parent=155 // pred_region
                %s3506 = ssub.s32 4, 1
                loop: start=0, step=1, limit=1
                $region172: #{custom-call.2} parent=170 // loop_pre_header
                  _
                $region173: #{custom-call.2} parent=170 // loop_header
                  %s3508 = sphi 0, %s3512
                  %p3509 = scmp.ge.s32.totalorder %s3508, 1
                  %s3513 = sphi %s3423, %s3423
                  %s3514 = sphi %s3484, %s3484
                $region174: #{custom-call.2} parent=170 // loop_header_branch
                  %3511 = sbr.rel (%p3509) target = $region178
                $region175: #{custom-call.2} parent=170 // loop_body
                  %v3515 = vld [vmem:[%s3513] sm:%s3506]
                  %3516 = vst [vmem:[%s3514] sm:%s3506] %v3515
                $region176: #{custom-call.2} parent=170 // loop_footer
                  %s3512 = sadd.s32 1, %s3508
                $region177: #{custom-call.2} parent=170 // loop_footer_branch
                  %3507 = sbr.rel target = $region173
                $region178: #{custom-call.2} parent=170 // loop_exit
                  _
              $region171: #{custom-call.2} parent=155 // pred_fallthru
                _
            $region156: #{custom-call.2} parent=151 // pred_fallthru
              _
            // Predicated region
            $region157: #{custom-call.2} parent=151 // pred_check
              _
            $region158: #{custom-call.2} parent=151 // pred_check_branch
              %3490 = sbr.rel (0) target = $region160
            $region159: #{custom-call.2} parent=151 // pred_region
              %s3492 = ssub.s32 4, 1
              loop: start=0, step=1, limit=1
              $region161: #{custom-call.2} parent=159 // loop_pre_header
                _
              $region162: #{custom-call.2} parent=159 // loop_header
                %s3494 = sphi 0, %s3498
                %p3495 = scmp.ge.s32.totalorder %s3494, 1
                %s3499 = sphi %s3423, %s3423
                %s3500 = sphi %s3484, %s3484
              $region163: #{custom-call.2} parent=159 // loop_header_branch
                %3497 = sbr.rel (%p3495) target = $region167
              $region164: #{custom-call.2} parent=159 // loop_body
                %v3501 = vld [vmem:[%s3499] sm:%s3492]
                %3502 = vst [vmem:[%s3500] sm:%s3492] %v3501
              $region165: #{custom-call.2} parent=159 // loop_footer
                %s3498 = sadd.s32 1, %s3494
              $region166: #{custom-call.2} parent=159 // loop_footer_branch
                %3493 = sbr.rel target = $region162
              $region167: #{custom-call.2} parent=159 // loop_exit
                _
            $region160: #{custom-call.2} parent=151 // pred_fallthru
              _
          $region152: #{custom-call.2} parent=147 // pred_fallthru
            _
          %3517 = vnop
        $region148: #{custom-call.2} parent=95 // pred_fallthru
          _
        %s3518 = smul.addr %s17, 56
        %s3519 = scalar_lea.vmem %s6, %s3518
        // Predicated region
        $region179: #{custom-call.2} parent=95 // pred_check
          _
        $region180: #{custom-call.2} parent=95 // pred_check_branch
          %3521 = sbr.rel (0) target = $region182
        $region181: #{custom-call.2} parent=95 // pred_region
          // Predicated region
          $region183: #{custom-call.2} parent=181 // pred_check
            _
          $region184: #{custom-call.2} parent=181 // pred_check_branch
            %3523 = sbr.rel (0) target = $region186
          $region185: #{custom-call.2} parent=181 // pred_region
            loop: start=0, step=1, limit=1
            $region187: #{custom-call.2} parent=185 // loop_pre_header
              _
            $region188: #{custom-call.2} parent=185 // loop_header
              %s3525 = sphi 0, %s3529
              %p3526 = scmp.ge.s32.totalorder %s3525, 1
              %s3530 = sphi %s3427, %s3427
              %s3531 = sphi %s3519, %s3519
            $region189: #{custom-call.2} parent=185 // loop_header_branch
              %3528 = sbr.rel (%p3526) target = $region193
            $region190: #{custom-call.2} parent=185 // loop_body
              %v3532 = vld [vmem:[%s3530] sm:$0xff]
              %3533 = vst [vmem:[%s3531] sm:$0xff] %v3532
              %v3534 = vld [vmem:[%s3530 + $0x8] sm:$0xff]
              %3535 = vst [vmem:[%s3531 + $0x8] sm:$0xff] %v3534
              %v3536 = vld [vmem:[%s3530 + $0x10] sm:$0xff]
              %3537 = vst [vmem:[%s3531 + $0x10] sm:$0xff] %v3536
              %v3538 = vld [vmem:[%s3530 + $0x18] sm:$0xff]
              %3539 = vst [vmem:[%s3531 + $0x18] sm:$0xff] %v3538
              %v3540 = vld [vmem:[%s3530 + $0x20] sm:$0xff]
              %3541 = vst [vmem:[%s3531 + $0x20] sm:$0xff] %v3540
              %v3542 = vld [vmem:[%s3530 + $0x28] sm:$0xff]
              %3543 = vst [vmem:[%s3531 + $0x28] sm:$0xff] %v3542
              %v3544 = vld [vmem:[%s3530 + $0x30] sm:$0xff]
              %3545 = vst [vmem:[%s3531 + $0x30] sm:$0xff] %v3544
            $region191: #{custom-call.2} parent=185 // loop_footer
              %s3529 = sadd.s32 1, %s3525
            $region192: #{custom-call.2} parent=185 // loop_footer_branch
              %3524 = sbr.rel target = $region188
            $region193: #{custom-call.2} parent=185 // loop_exit
              _
          $region186: #{custom-call.2} parent=181 // pred_fallthru
            _
          // Predicated region
          $region194: #{custom-call.2} parent=181 // pred_check
            _
          $region195: #{custom-call.2} parent=181 // pred_check_branch
            %3547 = sbr.rel target = $region197
          $region196: #{custom-call.2} parent=181 // pred_region
            _
          $region197: #{custom-call.2} parent=181 // pred_fallthru
            _
        $region182: #{custom-call.2} parent=95 // pred_fallthru
          _
        %3548 = vnop
        %s3549 = smul.addr %s17, 56
        %s3550 = scalar_lea.vmem %s7, %s3549
        // Predicated region
        $region198: #{custom-call.2} parent=95 // pred_check
          _
        $region199: #{custom-call.2} parent=95 // pred_check_branch
          %3552 = sbr.rel (0) target = $region201
        $region200: #{custom-call.2} parent=95 // pred_region
          // Predicated region
          $region202: #{custom-call.2} parent=200 // pred_check
            _
          $region203: #{custom-call.2} parent=200 // pred_check_branch
            %3554 = sbr.rel (0) target = $region205
          $region204: #{custom-call.2} parent=200 // pred_region
            loop: start=0, step=1, limit=1
            $region206: #{custom-call.2} parent=204 // loop_pre_header
              _
            $region207: #{custom-call.2} parent=204 // loop_header
              %s3556 = sphi 0, %s3560
              %p3557 = scmp.ge.s32.totalorder %s3556, 1
              %s3561 = sphi %s3431, %s3431
              %s3562 = sphi %s3550, %s3550
            $region208: #{custom-call.2} parent=204 // loop_header_branch
              %3559 = sbr.rel (%p3557) target = $region212
            $region209: #{custom-call.2} parent=204 // loop_body
              %v3563 = vld [vmem:[%s3561] sm:$0xff]
              %3564 = vst [vmem:[%s3562] sm:$0xff] %v3563
              %v3565 = vld [vmem:[%s3561 + $0x8] sm:$0xff]
              %3566 = vst [vmem:[%s3562 + $0x8] sm:$0xff] %v3565
              %v3567 = vld [vmem:[%s3561 + $0x10] sm:$0xff]
              %3568 = vst [vmem:[%s3562 + $0x10] sm:$0xff] %v3567
              %v3569 = vld [vmem:[%s3561 + $0x18] sm:$0xff]
              %3570 = vst [vmem:[%s3562 + $0x18] sm:$0xff] %v3569
              %v3571 = vld [vmem:[%s3561 + $0x20] sm:$0xff]
              %3572 = vst [vmem:[%s3562 + $0x20] sm:$0xff] %v3571
              %v3573 = vld [vmem:[%s3561 + $0x28] sm:$0xff]
              %3574 = vst [vmem:[%s3562 + $0x28] sm:$0xff] %v3573
              %v3575 = vld [vmem:[%s3561 + $0x30] sm:$0xff]
              %3576 = vst [vmem:[%s3562 + $0x30] sm:$0xff] %v3575
            $region210: #{custom-call.2} parent=204 // loop_footer
              %s3560 = sadd.s32 1, %s3556
            $region211: #{custom-call.2} parent=204 // loop_footer_branch
              %3555 = sbr.rel target = $region207
            $region212: #{custom-call.2} parent=204 // loop_exit
              _
          $region205: #{custom-call.2} parent=200 // pred_fallthru
            _
          // Predicated region
          $region213: #{custom-call.2} parent=200 // pred_check
            _
          $region214: #{custom-call.2} parent=200 // pred_check_branch
            %3578 = sbr.rel target = $region216
          $region215: #{custom-call.2} parent=200 // pred_region
            _
          $region216: #{custom-call.2} parent=200 // pred_fallthru
            _
        $region201: #{custom-call.2} parent=95 // pred_fallthru
          _
        %3579 = vnop
        %s3580 = smul.addr %s17, 56
        %s3581 = scalar_lea.vmem %s8, %s3580
        // Predicated region
        $region217: #{custom-call.2} parent=95 // pred_check
          _
        $region218: #{custom-call.2} parent=95 // pred_check_branch
          %3583 = sbr.rel (0) target = $region220
        $region219: #{custom-call.2} parent=95 // pred_region
          // Predicated region
          $region221: #{custom-call.2} parent=219 // pred_check
            _
          $region222: #{custom-call.2} parent=219 // pred_check_branch
            %3585 = sbr.rel (0) target = $region224
          $region223: #{custom-call.2} parent=219 // pred_region
            loop: start=0, step=1, limit=1
            $region225: #{custom-call.2} parent=223 // loop_pre_header
              _
            $region226: #{custom-call.2} parent=223 // loop_header
              %s3587 = sphi 0, %s3591
              %p3588 = scmp.ge.s32.totalorder %s3587, 1
              %s3592 = sphi %s3435, %s3435
              %s3593 = sphi %s3581, %s3581
            $region227: #{custom-call.2} parent=223 // loop_header_branch
              %3590 = sbr.rel (%p3588) target = $region231
            $region228: #{custom-call.2} parent=223 // loop_body
              %v3594 = vld [vmem:[%s3592] sm:$0xff]
              %3595 = vst [vmem:[%s3593] sm:$0xff] %v3594
              %v3596 = vld [vmem:[%s3592 + $0x8] sm:$0xff]
              %3597 = vst [vmem:[%s3593 + $0x8] sm:$0xff] %v3596
              %v3598 = vld [vmem:[%s3592 + $0x10] sm:$0xff]
              %3599 = vst [vmem:[%s3593 + $0x10] sm:$0xff] %v3598
              %v3600 = vld [vmem:[%s3592 + $0x18] sm:$0xff]
              %3601 = vst [vmem:[%s3593 + $0x18] sm:$0xff] %v3600
              %v3602 = vld [vmem:[%s3592 + $0x20] sm:$0xff]
              %3603 = vst [vmem:[%s3593 + $0x20] sm:$0xff] %v3602
              %v3604 = vld [vmem:[%s3592 + $0x28] sm:$0xff]
              %3605 = vst [vmem:[%s3593 + $0x28] sm:$0xff] %v3604
              %v3606 = vld [vmem:[%s3592 + $0x30] sm:$0xff]
              %3607 = vst [vmem:[%s3593 + $0x30] sm:$0xff] %v3606
            $region229: #{custom-call.2} parent=223 // loop_footer
              %s3591 = sadd.s32 1, %s3587
            $region230: #{custom-call.2} parent=223 // loop_footer_branch
              %3586 = sbr.rel target = $region226
            $region231: #{custom-call.2} parent=223 // loop_exit
              _
          $region224: #{custom-call.2} parent=219 // pred_fallthru
            _
          // Predicated region
          $region232: #{custom-call.2} parent=219 // pred_check
            _
          $region233: #{custom-call.2} parent=219 // pred_check_branch
            %3609 = sbr.rel target = $region235
          $region234: #{custom-call.2} parent=219 // pred_region
            _
          $region235: #{custom-call.2} parent=219 // pred_fallthru
            _
        $region220: #{custom-call.2} parent=95 // pred_fallthru
          _
        %3610 = vnop
        %s3611 = smul.addr %s17, 56
        %s3612 = scalar_lea.vmem %s9, %s3611
        // Predicated region
        $region236: #{custom-call.2} parent=95 // pred_check
          _
        $region237: #{custom-call.2} parent=95 // pred_check_branch
          %3614 = sbr.rel (0) target = $region239
        $region238: #{custom-call.2} parent=95 // pred_region
          // Predicated region
          $region240: #{custom-call.2} parent=238 // pred_check
            _
          $region241: #{custom-call.2} parent=238 // pred_check_branch
            %3616 = sbr.rel (0) target = $region243
          $region242: #{custom-call.2} parent=238 // pred_region
            loop: start=0, step=1, limit=1
            $region244: #{custom-call.2} parent=242 // loop_pre_header
              _
            $region245: #{custom-call.2} parent=242 // loop_header
              %s3618 = sphi 0, %s3622
              %p3619 = scmp.ge.s32.totalorder %s3618, 1
              %s3623 = sphi %s3439, %s3439
              %s3624 = sphi %s3612, %s3612
            $region246: #{custom-call.2} parent=242 // loop_header_branch
              %3621 = sbr.rel (%p3619) target = $region250
            $region247: #{custom-call.2} parent=242 // loop_body
              %v3625 = vld [vmem:[%s3623] sm:$0xff]
              %3626 = vst [vmem:[%s3624] sm:$0xff] %v3625
              %v3627 = vld [vmem:[%s3623 + $0x8] sm:$0xff]
              %3628 = vst [vmem:[%s3624 + $0x8] sm:$0xff] %v3627
              %v3629 = vld [vmem:[%s3623 + $0x10] sm:$0xff]
              %3630 = vst [vmem:[%s3624 + $0x10] sm:$0xff] %v3629
              %v3631 = vld [vmem:[%s3623 + $0x18] sm:$0xff]
              %3632 = vst [vmem:[%s3624 + $0x18] sm:$0xff] %v3631
              %v3633 = vld [vmem:[%s3623 + $0x20] sm:$0xff]
              %3634 = vst [vmem:[%s3624 + $0x20] sm:$0xff] %v3633
              %v3635 = vld [vmem:[%s3623 + $0x28] sm:$0xff]
              %3636 = vst [vmem:[%s3624 + $0x28] sm:$0xff] %v3635
              %v3637 = vld [vmem:[%s3623 + $0x30] sm:$0xff]
              %3638 = vst [vmem:[%s3624 + $0x30] sm:$0xff] %v3637
            $region248: #{custom-call.2} parent=242 // loop_footer
              %s3622 = sadd.s32 1, %s3618
            $region249: #{custom-call.2} parent=242 // loop_footer_branch
              %3617 = sbr.rel target = $region245
            $region250: #{custom-call.2} parent=242 // loop_exit
              _
          $region243: #{custom-call.2} parent=238 // pred_fallthru
            _
          // Predicated region
          $region251: #{custom-call.2} parent=238 // pred_check
            _
          $region252: #{custom-call.2} parent=238 // pred_check_branch
            %3640 = sbr.rel target = $region254
          $region253: #{custom-call.2} parent=238 // pred_region
            _
          $region254: #{custom-call.2} parent=238 // pred_fallthru
            _
        $region239: #{custom-call.2} parent=95 // pred_fallthru
          _
        %3641 = vnop
      $region96: #{custom-call.2} parent=5 // pred_fallthru
        _
      %p3642 = scmp.le.s32.totalorder 2, %s12
      // Predicated region
      $region255: #{custom-call.2} parent=5 // pred_check
        %p3643 = pneg %p3642
      $region256: #{custom-call.2} parent=5 // pred_check_branch
        %3645 = sbr.rel (%p3643) target = $region258
      $region257: #{custom-call.2} parent=5 // pred_region
        %s3646 = ssub.s32 %s12, 2
        // Predicated region
        $region259: #{custom-call.2} parent=257 // pred_check
          %p3647 = pneg %p43
        $region260: #{custom-call.2} parent=257 // pred_check_branch
          %3649 = sbr.rel (%p3647) target = $region262
        $region261: #{custom-call.2} parent=257 // pred_region
          %s3650 = sand.u32 %s28, 1
          %s3651 = sand.u32 %s28, 1
          %s3652 = smul.addr %s3651, 2
          %s3653 = scalar_lea.vmem [#allocation5], %s3652
        $region262: #{custom-call.2} parent=257 // pred_fallthru
          _
        // Predicated region
        $region263: #{custom-call.2} parent=257 // pred_check
          %p3654 = pneg %p71
        $region264: #{custom-call.2} parent=257 // pred_check_branch
          %3656 = sbr.rel (%p3654) target = $region266
        $region265: #{custom-call.2} parent=257 // pred_region
          %s3657 = sand.u32 %s56, 1
          %s3658 = sand.u32 %s56, 1
          %s3659 = smul.addr %s3658, 2
          %s3660 = scalar_lea.vmem [#allocation7], %s3659
        $region266: #{custom-call.2} parent=257 // pred_fallthru
          _
        %s3661 = sand.u32 %s18, 1
        %s3662 = sand.u32 %s18, 1
        %s3663 = smul.addr %s3662, 56
        %s3664 = scalar_lea.vmem [#allocation8], %s3663
        %s3665 = sand.u32 %s18, 1
        %s3666 = sand.u32 %s18, 1
        %s3667 = smul.addr %s3666, 56
        %s3668 = scalar_lea.vmem [#allocation9], %s3667
        %s3669 = sand.u32 %s18, 1
        %s3670 = sand.u32 %s18, 1
        %s3671 = smul.addr %s3670, 56
        %s3672 = scalar_lea.vmem [#allocation10], %s3671
        %s3673 = sand.u32 %s18, 1
        %s3674 = sand.u32 %s18, 1
        %s3675 = smul.addr %s3674, 56
        %s3676 = scalar_lea.vmem [#allocation11], %s3675
      $region258: #{custom-call.2} parent=5 // pred_fallthru
        _
    $region6: #{custom-call.2} parent=1 // loop_footer
      %s16 = sadd.s32 1, %s12
    $region7: #{custom-call.2} parent=1 // loop_footer_branch
      %11 = sbr.rel target = $region3
    $region8: #{custom-call.2} parent=1 // loop_exit
      _

// kernel: network_forward.3
$region0: #{network_forward.3}
  #allocation0 [shape = 'u32[]', space=smem, size = 0x4, offset = 0x4, fixed_abs, tag = 'smem constant byte address 0x4 - core index']
  #allocation1 [shape = 'u32[72,128]{1,0:T(1,128)}', space=vmem, size = 0x9000, scoped, tag = 'internal scratch']
  #allocation2 [shape = 'f32[100,100]{1,0:T(8,128)}', space=vmem, size = 0xd000, scoped, tag = 'scratch operand']
  %s0 = inlined_call_operand.vmem [shape: f32[2,512,8], index: 0, kind: input, shape index: {}]
  %s1 = inlined_call_operand.hbm [shape: bf16[100,512], index: 1, kind: input, shape index: {}]
  %s2 = inlined_call_operand.vmem [shape: f32[100,1], index: 2, kind: input, shape index: {}]
  %s3 = inlined_call_operand.hbm [shape: f32[100,100], index: 3, kind: input, shape index: {}]
  %s4 = inlined_call_operand.vmem [shape: f32[2,100,100], index: 4, kind: output, shape index: {}]
  %s5 = sld [smem:[#allocation0]]
  $region65: #{network_forward.3} parent=0
    _
  %s7 = ssub.s32 1, %s5
  %s8 = scalar_select 0, %s7, %s5
  $region1: #{network_forward.3} parent=0
    #allocation3 [shape = 'u8[106496]{0}', space=vmem, size = 0x1a000, scoped, tag = 'input window, operand 1, single buffered']
    #allocation4 [shape = 's32[2]{0}', space=sflag, size = 0x8, scoped, tag = 'scoped memory for network_forward.3']
    #allocation5 [shape = 'u8[53248]{0}', space=vmem, size = 0xd000, scoped, tag = 'input window, operand 3, single buffered']
    #allocation6 [shape = 's32[1]{0}', space=sflag, size = 0x4, scoped, tag = 'scoped memory for network_forward.3']
    %9 = vsyncpa [#allocation4], 0
    %10 = vsyncpa [#allocation6], 0
    loop: start=0, step=1, limit=4
    $region2: #{network_forward.3} parent=1 // loop_pre_header
      _
    $region3: #{network_forward.3} parent=1 // loop_header
      %s12 = sphi 0, %s16
      %p13 = scmp.ge.s32.totalorder %s12, 4
      %s19 = sphi 0, %s31
      %s20 = sphi 0, %s27
      %s21 = sphi 0, %s19
      %s22 = sphi 0, %s20
      %s23 = sphi 0, %s21
      %s24 = sphi 0, %s22
      %s36 = sphi 0, %s38
      %s39 = sphi 0, %s36
      %s40 = sphi 0, %s39
      %s56 = sphi 0, %s40
      %s60 = sphi 0, %s60
      %s62 = sphi 0, %s60
      %s63 = sphi 0, %s62
      %s77 = sphi 0, %s63
      %s81 = sphi 0, %s81
      %s83 = sphi 0, %s81
      %s84 = sphi 0, %s83
      %s98 = sphi 0, %s84
      %s102 = sphi 0, %s102
      %s104 = sphi 0, %s102
      %s105 = sphi 0, %s104
      %s119 = sphi 0, %s105
      %s125 = sphi 0, %s127
      %s128 = sphi 0, %s125
      %s129 = sphi 0, %s128
      %s145 = sphi 0, %s129
    $region4: #{network_forward.3} parent=1 // loop_header_branch
      %15 = sbr.rel (%p13) target = $region8
    $region5: #{network_forward.3} parent=1 // loop_body
      %s17 = ssub.s32 %s12, 1
      %s18 = ssub.s32 %s12, 2
      %s25 = sadd.s32 1, %s20
      %p26 = scmp.ge.s32.totalorder %s25, 1
      %s27 = scalar_select %p26, 0, %s25
      %s28 = sadd.s32 1, %s19
      %s29 = scalar_select %p26, %s28, %s19
      %p30 = scmp.ge.s32.totalorder %s29, 2
      %s31 = scalar_select %p30, 0, %s29
      %s32 = ssub.s32 %s19, %s31
      %s33 = ssub.s32 %s20, %s27
      %s34 = sor.u32 %s32, %s33
      %p35 = scmp.eq.s32.totalorder %s34, 0
      %s37 = sadd.s32 %s36, 1
      %s38 = scalar_select %p35, %s36, %s37
      %p41 = pneg %p35
      %p42 = scmp.eq.s32.totalorder %s12, 1
      %p43 = por %p41, %p42
      %p44 = scmp.ne.s32.totalorder %s36, %s39
      %p45 = scmp.eq.s32.totalorder %s12, 0
      %p46 = por %p44, %p45
      %p47 = scmp.ne.s32.totalorder %s36, %s39
      %p48 = scmp.eq.s32.totalorder %s17, 1
      %p49 = por %p47, %p48
      %p50 = scmp.ne.s32.totalorder %s39, %s40
      %p51 = scmp.eq.s32.totalorder %s17, 0
      %p52 = por %p50, %p51
      %p53 = scmp.ne.s32.totalorder %s39, %s40
      %p54 = scmp.eq.s32.totalorder %s18, 1
      %p55 = por %p53, %p54
      %p57 = scmp.ne.s32.totalorder %s40, %s56
      %p58 = scmp.eq.s32.totalorder %s18, 0
      %p59 = por %p57, %p58
      %s61 = sadd.s32 %s60, 1
      %p64 = scmp.eq.s32.totalorder %s12, 1
      %p65 = scmp.ne.s32.totalorder %s60, %s62
      %p66 = scmp.eq.s32.totalorder %s12, 0
      %p67 = por %p65, %p66
      %p68 = scmp.ne.s32.totalorder %s60, %s62
      %p69 = scmp.eq.s32.totalorder %s17, 1
      %p70 = por %p68, %p69
      %p71 = scmp.ne.s32.totalorder %s62, %s63
      %p72 = scmp.eq.s32.totalorder %s17, 0
      %p73 = por %p71, %p72
      %p74 = scmp.ne.s32.totalorder %s62, %s63
      %p75 = scmp.eq.s32.totalorder %s18, 1
      %p76 = por %p74, %p75
      %p78 = scmp.ne.s32.totalorder %s63, %s77
      %p79 = scmp.eq.s32.totalorder %s18, 0
      %p80 = por %p78, %p79
      %s82 = sadd.s32 %s81, 1
      %p85 = scmp.eq.s32.totalorder %s12, 1
      %p86 = scmp.ne.s32.totalorder %s81, %s83
      %p87 = scmp.eq.s32.totalorder %s12, 0
      %p88 = por %p86, %p87
      %p89 = scmp.ne.s32.totalorder %s81, %s83
      %p90 = scmp.eq.s32.totalorder %s17, 1
      %p91 = por %p89, %p90
      %p92 = scmp.ne.s32.totalorder %s83, %s84
      %p93 = scmp.eq.s32.totalorder %s17, 0
      %p94 = por %p92, %p93
      %p95 = scmp.ne.s32.totalorder %s83, %s84
      %p96 = scmp.eq.s32.totalorder %s18, 1
      %p97 = por %p95, %p96
      %p99 = scmp.ne.s32.totalorder %s84, %s98
      %p100 = scmp.eq.s32.totalorder %s18, 0
      %p101 = por %p99, %p100
      %s103 = sadd.s32 %s102, 1
      %p106 = scmp.eq.s32.totalorder %s12, 1
      %p107 = scmp.ne.s32.totalorder %s102, %s104
      %p108 = scmp.eq.s32.totalorder %s12, 0
      %p109 = por %p107, %p108
      %p110 = scmp.ne.s32.totalorder %s102, %s104
      %p111 = scmp.eq.s32.totalorder %s17, 1
      %p112 = por %p110, %p111
      %p113 = scmp.ne.s32.totalorder %s104, %s105
      %p114 = scmp.eq.s32.totalorder %s17, 0
      %p115 = por %p113, %p114
      %p116 = scmp.ne.s32.totalorder %s104, %s105
      %p117 = scmp.eq.s32.totalorder %s18, 1
      %p118 = por %p116, %p117
      %p120 = scmp.ne.s32.totalorder %s105, %s119
      %p121 = scmp.eq.s32.totalorder %s18, 0
      %p122 = por %p120, %p121
      %s123 = ssub.s32 %s19, %s31
      %p124 = scmp.eq.s32.totalorder %s123, 0
      %s126 = sadd.s32 %s125, 1
      %s127 = scalar_select %p124, %s125, %s126
      %p130 = pneg %p124
      %p131 = scmp.eq.s32.totalorder %s12, 1
      %p132 = por %p130, %p131
      %p133 = scmp.ne.s32.totalorder %s125, %s128
      %p134 = scmp.eq.s32.totalorder %s12, 0
      %p135 = por %p133, %p134
      %p136 = scmp.ne.s32.totalorder %s125, %s128
      %p137 = scmp.eq.s32.totalorder %s17, 1
      %p138 = por %p136, %p137
      %p139 = scmp.ne.s32.totalorder %s128, %s129
      %p140 = scmp.eq.s32.totalorder %s17, 0
      %p141 = por %p139, %p140
      %p142 = scmp.ne.s32.totalorder %s128, %s129
      %p143 = scmp.eq.s32.totalorder %s18, 1
      %p144 = por %p142, %p143
      %p146 = scmp.ne.s32.totalorder %s129, %s145
      %p147 = scmp.eq.s32.totalorder %s18, 0
      %p148 = por %p146, %p147
      %p149 = scmp.le.s32.totalorder 1, %s12
      %p150 = scmp.lt.s32.totalorder %s12, 3
      %p151 = pnand %p149, %p150
      %p152 = pneg %p151
      // Predicated region
      $region9: #{network_forward.3} parent=5 // pred_check
        _
      $region10: #{network_forward.3} parent=5 // pred_check_branch
        %154 = sbr.rel (%p151) target = $region12
      $region11: #{network_forward.3} parent=5 // pred_region
        %s155 = ssub.s32 %s12, 1
        // Predicated region
        $region13: #{network_forward.3} parent=11 // pred_check
          %p156 = pneg %p73
        $region14: #{network_forward.3} parent=11 // pred_check_branch
          %158 = sbr.rel (%p156) target = $region16
        $region15: #{network_forward.3} parent=11 // pred_region
          %160 = vsyncadd [#allocation4], 0
          %s161 = sshll.u32 %s1, 4
          %s162 = int_to_ptr.hbm [resolvable:$true] %s161
          %s163 = sshll.u32 [#allocation3], 4
          %s164 = int_to_ptr.vmem [resolvable:$true] %s163
          %169 = dma.hbm_to_vmem [thread:$0]  %s162, 3328, %s164, [#allocation4], 256, 256, 16
        $region16: #{network_forward.3} parent=11 // pred_fallthru
          _
        // Predicated region
        $region17: #{network_forward.3} parent=11 // pred_check
          %p170 = pneg %p94
        $region18: #{network_forward.3} parent=11 // pred_check_branch
          %172 = sbr.rel (%p170) target = $region20
        $region19: #{network_forward.3} parent=11 // pred_region
          _
        $region20: #{network_forward.3} parent=11 // pred_fallthru
          _
        // Predicated region
        $region21: #{network_forward.3} parent=11 // pred_check
          %p173 = pneg %p115
        $region22: #{network_forward.3} parent=11 // pred_check_branch
          %175 = sbr.rel (%p173) target = $region24
        $region23: #{network_forward.3} parent=11 // pred_region
          %177 = vsyncadd [#allocation6], 0
          %s178 = sshll.u32 %s3, 4
          %s179 = int_to_ptr.hbm [resolvable:$true] %s178
          %s180 = sshll.u32 [#allocation5], 4
          %s181 = int_to_ptr.vmem [resolvable:$true] %s180
          %186 = dma.hbm_to_vmem [thread:$0]  %s179, 1664, %s181, [#allocation6], 128, 128, 8
        $region24: #{network_forward.3} parent=11 // pred_fallthru
          _
      $region12: #{network_forward.3} parent=5 // pred_fallthru
        _
      %p187 = scmp.lt.s32.totalorder %s12, 2
      // Predicated region
      $region25: #{network_forward.3} parent=5 // pred_check
        %p188 = pneg %p187
      $region26: #{network_forward.3} parent=5 // pred_check_branch
        %190 = sbr.rel (%p188) target = $region28
      $region27: #{network_forward.3} parent=5 // pred_region
        // Predicated region
        $region29: #{network_forward.3} parent=27 // pred_check
          %p191 = pneg %p46
        $region30: #{network_forward.3} parent=27 // pred_check_branch
          %193 = sbr.rel (%p191) target = $region32
        $region31: #{network_forward.3} parent=27 // pred_region
          %p194 = scmp.lt.s32.totalorder %s19, 1
          %s195 = scalar_select %p194, %s19, 1
          %p196 = scmp.lt.s32.totalorder %s20, 0
          %s197 = scalar_select %p196, %s20, 0
          %s198 = smul.addr %s195, 64
          %s199 = sadd.s32 %s197, %s198
          %s200 = smul.addr %s199, 8
          %s201 = scalar_lea.vmem %s0, %s200
        $region32: #{network_forward.3} parent=27 // pred_fallthru
          _
      $region28: #{network_forward.3} parent=5 // pred_fallthru
        _
      %p202 = scmp.le.s32.totalorder 1, %s12
      %p203 = scmp.lt.s32.totalorder %s12, 3
      %p204 = pnand %p202, %p203
      %p205 = pneg %p204
      // Predicated region
      $region33: #{network_forward.3} parent=5 // pred_check
        _
      $region34: #{network_forward.3} parent=5 // pred_check_branch
        %207 = sbr.rel (%p204) target = $region36
      $region35: #{network_forward.3} parent=5 // pred_region
        %s208 = ssub.s32 %s12, 1
        // Predicated region
        $region37: #{network_forward.3} parent=35 // pred_check
          %p209 = pneg %p73
        $region38: #{network_forward.3} parent=35 // pred_check_branch
          %211 = sbr.rel (%p209) target = $region40
        $region39: #{network_forward.3} parent=35 // pred_region
          %213 = dma.done [#allocation4], 3328
        $region40: #{network_forward.3} parent=35 // pred_fallthru
          _
        // Predicated region
        $region41: #{network_forward.3} parent=35 // pred_check
          %p214 = pneg %p115
        $region42: #{network_forward.3} parent=35 // pred_check_branch
          %216 = sbr.rel (%p214) target = $region44
        $region43: #{network_forward.3} parent=35 // pred_region
          %218 = dma.done [#allocation6], 1664
        $region44: #{network_forward.3} parent=35 // pred_fallthru
          _
        %p219 = scmp.lt.s32.totalorder %s21, 1
        %s220 = scalar_select %p219, %s21, 1
        %p221 = scmp.lt.s32.totalorder %s22, 0
        %s222 = scalar_select %p221, %s22, 0
        %s223 = smul.addr %s220, 64
        %s224 = sadd.s32 %s222, %s223
        %s225 = smul.addr %s224, 8
        %s226 = scalar_lea.vmem %s0, %s225
        %p227 = pneg %p52
        %p228 = pneg %p49
        %p229 = pneg %p73
        %p230 = pneg %p70
        %p231 = pneg %p94
        %p232 = pneg %p91
        %p233 = pneg %p115
        %p234 = pneg %p112
        %p235 = pneg %p141
        %p236 = pneg %p138
        %p237 = scmp.lt.s32.totalorder %s21, 1
        %s238 = scalar_select %p237, %s21, 1
        %s239 = smul.addr %s238, 13
        %s240 = smul.addr %s239, 8
        %s241 = scalar_lea.vmem %s4, %s240
        %p242 = scmp.lt.s32.totalorder %s21, 1
        %s243 = scalar_select %p242, %s21, 1
        %p244 = scmp.lt.s32.totalorder %s22, 0
        %s245 = scalar_select %p244, %s22, 0
        %s246 = smul.addr %s243, 64
        %s247 = sadd.s32 %s245, %s246
        %s248 = smul.addr %s247, 8
        %s249 = scalar_lea.vmem %s0, %s248
        %p250 = scmp.lt.s32.totalorder %s21, 1
        %s251 = scalar_select %p250, %s21, 1
        %s252 = smul.addr %s251, 13
        %s253 = smul.addr %s252, 8
        %s254 = scalar_lea.vmem %s4, %s253
        %p255 = scmp.eq.s32.totalorder %s22, 0
        // Predicated region
        $region45: #{network_forward.3} parent=35 // pred_check
          %p256 = pneg %p255
        $region46: #{network_forward.3} parent=35 // pred_check_branch
          %258 = sbr.rel (%p256) target = $region48
        $region47: #{network_forward.3} parent=35 // pred_region
          %vm259 = vcmask 818176
          %260 = vst.msk [vmem:[#allocation2] sm:$0xff] %vm259, 0.0
          %261 = vst.msk [vmem:[#allocation2 + $0x8] sm:$0xff] %vm259, 0.0
          %262 = vst.msk [vmem:[#allocation2 + $0x10] sm:$0xff] %vm259, 0.0
          %263 = vst.msk [vmem:[#allocation2 + $0x18] sm:$0xff] %vm259, 0.0
          %264 = vst.msk [vmem:[#allocation2 + $0x20] sm:$0xff] %vm259, 0.0
          %265 = vst.msk [vmem:[#allocation2 + $0x28] sm:$0xff] %vm259, 0.0
          %266 = vst.msk [vmem:[#allocation2 + $0x30] sm:$0xff] %vm259, 0.0
          %267 = vst.msk [vmem:[#allocation2 + $0x38] sm:$0xff] %vm259, 0.0
          %268 = vst.msk [vmem:[#allocation2 + $0x40] sm:$0xff] %vm259, 0.0
          %269 = vst.msk [vmem:[#allocation2 + $0x48] sm:$0xff] %vm259, 0.0
          %270 = vst.msk [vmem:[#allocation2 + $0x50] sm:$0xff] %vm259, 0.0
          %271 = vst.msk [vmem:[#allocation2 + $0x58] sm:$0xff] %vm259, 0.0
          %vm272 = vcmask 814080
          %273 = vst.msk [vmem:[#allocation2 + $0x60] sm:$0xf] %vm272, 0.0
        $region48: #{network_forward.3} parent=35 // pred_fallthru
          _
        %v274 = vld [vmem:[%s249] sm:$0xff]
        %v275 = vld [vmem:[%s249 + $0x8] sm:$0xff]
        %v276 = vld [vmem:[%s249 + $0x10] sm:$0xff]
        %v277 = vld [vmem:[%s249 + $0x18] sm:$0xff]
        %v278 = vld [vmem:[%s249 + $0x20] sm:$0xff]
        %v279 = vld [vmem:[%s249 + $0x28] sm:$0xff]
        %v280 = vld [vmem:[%s249 + $0x30] sm:$0xff]
        %v281 = vld [vmem:[%s249 + $0x38] sm:$0xff]
        %v282 = vld [vmem:[%s249 + $0x40] sm:$0xff]
        %v283 = vld [vmem:[%s249 + $0x48] sm:$0xff]
        %v284 = vld [vmem:[%s249 + $0x50] sm:$0xff]
        %v285 = vld [vmem:[%s249 + $0x58] sm:$0xff]
        %v286 = vld [vmem:[%s249 + $0x60] sm:$0xff]
        %v287 = vld [vmem:[%s249 + $0x68] sm:$0xff]
        %v288 = vld [vmem:[%s249 + $0x70] sm:$0xff]
        %v289 = vld [vmem:[%s249 + $0x78] sm:$0xff]
        %v290 = vld [vmem:[%s249 + $0x80] sm:$0xff]
        %v291 = vld [vmem:[%s249 + $0x88] sm:$0xff]
        %v292 = vld [vmem:[%s249 + $0x90] sm:$0xff]
        %v293 = vld [vmem:[%s249 + $0x98] sm:$0xff]
        %v294 = vld [vmem:[%s249 + $0xa0] sm:$0xff]
        %v295 = vld [vmem:[%s249 + $0xa8] sm:$0xff]
        %v296 = vld [vmem:[%s249 + $0xb0] sm:$0xff]
        %v297 = vld [vmem:[%s249 + $0xb8] sm:$0xff]
        %v298 = vld [vmem:[%s249 + $0xc0] sm:$0xff]
        %v299 = vld [vmem:[%s249 + $0xc8] sm:$0xff]
        %v300 = vld [vmem:[%s249 + $0xd0] sm:$0xff]
        %v301 = vld [vmem:[%s249 + $0xd8] sm:$0xff]
        %v302 = vld [vmem:[%s249 + $0xe0] sm:$0xff]
        %v303 = vld [vmem:[%s249 + $0xe8] sm:$0xff]
        %v304 = vld [vmem:[%s249 + $0xf0] sm:$0xff]
        %v305 = vld [vmem:[%s249 + $0xf8] sm:$0xff]
        %v306 = vld [vmem:[%s249 + $0x100] sm:$0xff]
        %v307 = vld [vmem:[%s249 + $0x108] sm:$0xff]
        %v308 = vld [vmem:[%s249 + $0x110] sm:$0xff]
        %v309 = vld [vmem:[%s249 + $0x118] sm:$0xff]
        %v310 = vld [vmem:[%s249 + $0x120] sm:$0xff]
        %v311 = vld [vmem:[%s249 + $0x128] sm:$0xff]
        %v312 = vld [vmem:[%s249 + $0x130] sm:$0xff]
        %v313 = vld [vmem:[%s249 + $0x138] sm:$0xff]
        %v314 = vld [vmem:[%s249 + $0x140] sm:$0xff]
        %v315 = vld [vmem:[%s249 + $0x148] sm:$0xff]
        %v316 = vld [vmem:[%s249 + $0x150] sm:$0xff]
        %v317 = vld [vmem:[%s249 + $0x158] sm:$0xff]
        %v318 = vld [vmem:[%s249 + $0x160] sm:$0xff]
        %v319 = vld [vmem:[%s249 + $0x168] sm:$0xff]
        %v320 = vld [vmem:[%s249 + $0x170] sm:$0xff]
        %v321 = vld [vmem:[%s249 + $0x178] sm:$0xff]
        %v322 = vld [vmem:[%s249 + $0x180] sm:$0xff]
        %v323 = vld [vmem:[%s249 + $0x188] sm:$0xff]
        %v324 = vld [vmem:[%s249 + $0x190] sm:$0xff]
        %v325 = vld [vmem:[%s249 + $0x198] sm:$0xff]
        %v326 = vld [vmem:[%s249 + $0x1a0] sm:$0xff]
        %v327 = vld [vmem:[%s249 + $0x1a8] sm:$0xff]
        %v328 = vld [vmem:[%s249 + $0x1b0] sm:$0xff]
        %v329 = vld [vmem:[%s249 + $0x1b8] sm:$0xff]
        %v330 = vld [vmem:[%s249 + $0x1c0] sm:$0xff]
        %v331 = vld [vmem:[%s249 + $0x1c8] sm:$0xff]
        %v332 = vld [vmem:[%s249 + $0x1d0] sm:$0xff]
        %v333 = vld [vmem:[%s249 + $0x1d8] sm:$0xff]
        %v334 = vld [vmem:[%s249 + $0x1e0] sm:$0xff]
        %v335 = vld [vmem:[%s249 + $0x1e8] sm:$0xff]
        %v336 = vld [vmem:[%s249 + $0x1f0] sm:$0xff]
        %v337 = vld [vmem:[%s249 + $0x1f8] sm:$0xff]
        %v338 = vpack.c.bf16 %v275, %v274
        %v339 = vpack.c.bf16 %v277, %v276
        %v340 = vpack.c.bf16 %v279, %v278
        %v341 = vpack.c.bf16 %v281, %v280
        %v342 = vpack.c.bf16 %v283, %v282
        %v343 = vpack.c.bf16 %v285, %v284
        %v344 = vpack.c.bf16 %v287, %v286
        %v345 = vpack.c.bf16 %v289, %v288
        %v346 = vpack.c.bf16 %v291, %v290
        %v347 = vpack.c.bf16 %v293, %v292
        %v348 = vpack.c.bf16 %v295, %v294
        %v349 = vpack.c.bf16 %v297, %v296
        %v350 = vpack.c.bf16 %v299, %v298
        %v351 = vpack.c.bf16 %v301, %v300
        %v352 = vpack.c.bf16 %v303, %v302
        %v353 = vpack.c.bf16 %v305, %v304
        %v354 = vpack.c.bf16 %v307, %v306
        %v355 = vpack.c.bf16 %v309, %v308
        %v356 = vpack.c.bf16 %v311, %v310
        %v357 = vpack.c.bf16 %v313, %v312
        %v358 = vpack.c.bf16 %v315, %v314
        %v359 = vpack.c.bf16 %v317, %v316
        %v360 = vpack.c.bf16 %v319, %v318
        %v361 = vpack.c.bf16 %v321, %v320
        %v362 = vpack.c.bf16 %v323, %v322
        %v363 = vpack.c.bf16 %v325, %v324
        %v364 = vpack.c.bf16 %v327, %v326
        %v365 = vpack.c.bf16 %v329, %v328
        %v366 = vpack.c.bf16 %v331, %v330
        %v367 = vpack.c.bf16 %v333, %v332
        %v368 = vpack.c.bf16 %v335, %v334
        %v369 = vpack.c.bf16 %v337, %v336
        %v370 = vld [vmem:[#allocation3] sm:$0xff]
        %v371 = vld [vmem:[#allocation3 + $0x8] sm:$0xff]
        %v372 = vld [vmem:[#allocation3 + $0x10] sm:$0xff]
        %v373 = vld [vmem:[#allocation3 + $0x18] sm:$0xff]
        %v374 = vld [vmem:[#allocation3 + $0x20] sm:$0xff]
        %v375 = vld [vmem:[#allocation3 + $0x28] sm:$0xff]
        %v376 = vld [vmem:[#allocation3 + $0x30] sm:$0xff]
        %v377 = vld [vmem:[#allocation3 + $0x38] sm:$0xff]
        %v378 = vld [vmem:[#allocation3 + $0x40] sm:$0xff]
        %v379 = vld [vmem:[#allocation3 + $0x48] sm:$0xff]
        %v380 = vld [vmem:[#allocation3 + $0x50] sm:$0xff]
        %v381 = vld [vmem:[#allocation3 + $0x58] sm:$0xff]
        %v382 = vld [vmem:[#allocation3 + $0x60] sm:$0xff]
        %v383 = vld [vmem:[#allocation3 + $0x68] sm:$0xff]
        %v384 = vld [vmem:[#allocation3 + $0x70] sm:$0xff]
        %v385 = vld [vmem:[#allocation3 + $0x78] sm:$0xff]
        %v386 = vld [vmem:[#allocation3 + $0x80] sm:$0xff]
        %v387 = vld [vmem:[#allocation3 + $0x88] sm:$0xff]
        %v388 = vld [vmem:[#allocation3 + $0x90] sm:$0xff]
        %v389 = vld [vmem:[#allocation3 + $0x98] sm:$0xff]
        %v390 = vld [vmem:[#allocation3 + $0xa0] sm:$0xff]
        %v391 = vld [vmem:[#allocation3 + $0xa8] sm:$0xff]
        %v392 = vld [vmem:[#allocation3 + $0xb0] sm:$0xff]
        %v393 = vld [vmem:[#allocation3 + $0xb8] sm:$0xff]
        %v394 = vld [vmem:[#allocation3 + $0xc0] sm:$0x33]
        %v395 = vld [vmem:[#allocation3 + $0xc8] sm:$0x33]
        %v396 = vld [vmem:[%s2] sm:$0xff]
        %v397 = vld [vmem:[%s2 + $0x8] sm:$0xff]
        %v398 = vld [vmem:[%s2 + $0x10] sm:$0xff]
        %v399 = vld [vmem:[%s2 + $0x18] sm:$0xff]
        %v400 = vld [vmem:[%s2 + $0x20] sm:$0xff]
        %v401 = vld [vmem:[%s2 + $0x28] sm:$0xff]
        %v402 = vld [vmem:[%s2 + $0x30] sm:$0xff]
        %v403 = vld [vmem:[%s2 + $0x38] sm:$0xff]
        %v404 = vld [vmem:[%s2 + $0x40] sm:$0xff]
        %v405 = vld [vmem:[%s2 + $0x48] sm:$0xff]
        %v406 = vld [vmem:[%s2 + $0x50] sm:$0xff]
        %v407 = vld [vmem:[%s2 + $0x58] sm:$0xff]
        %v408 = vld [vmem:[%s2 + $0x60] sm:$0xf]
        %410 = vset.pattern.permute.xlu0 0
        %411 = vperm.xlu0 %410, %v396
        %v412 = vpop.permute.xlu0 %411
        %415 = vset.pattern.permute.xlu0 0
        %416 = vperm.xlu0 %415, %v397
        %v417 = vpop.permute.xlu0 %416
        %420 = vset.pattern.permute.xlu0 0
        %421 = vperm.xlu0 %420, %v398
        %v422 = vpop.permute.xlu0 %421
        %425 = vset.pattern.permute.xlu0 0
        %426 = vperm.xlu0 %425, %v399
        %v427 = vpop.permute.xlu0 %426
        %430 = vset.pattern.permute.xlu0 0
        %431 = vperm.xlu0 %430, %v400
        %v432 = vpop.permute.xlu0 %431
        %435 = vset.pattern.permute.xlu0 0
        %436 = vperm.xlu0 %435, %v401
        %v437 = vpop.permute.xlu0 %436
        %440 = vset.pattern.permute.xlu0 0
        %441 = vperm.xlu0 %440, %v402
        %v442 = vpop.permute.xlu0 %441
        %445 = vset.pattern.permute.xlu0 0
        %446 = vperm.xlu0 %445, %v403
        %v447 = vpop.permute.xlu0 %446
        %450 = vset.pattern.permute.xlu0 0
        %451 = vperm.xlu0 %450, %v404
        %v452 = vpop.permute.xlu0 %451
        %455 = vset.pattern.permute.xlu0 0
        %456 = vperm.xlu0 %455, %v405
        %v457 = vpop.permute.xlu0 %456
        %460 = vset.pattern.permute.xlu0 0
        %461 = vperm.xlu0 %460, %v406
        %v462 = vpop.permute.xlu0 %461
        %465 = vset.pattern.permute.xlu0 0
        %466 = vperm.xlu0 %465, %v407
        %v467 = vpop.permute.xlu0 %466
        %470 = vset.pattern.permute.xlu0 0
        %471 = vperm.xlu0 %470, %v408
        %v472 = vpop.permute.xlu0 %471
        %v500 = vunpack.c.l.b16 %v370
        %v501 = vunpack.c.h.b16 %v370
        %v502 = vunpack.c.l.b16 %v371
        %v503 = vunpack.c.h.b16 %v371
        %v504 = vunpack.c.l.b16 %v372
        %v505 = vunpack.c.h.b16 %v372
        %v506 = vunpack.c.l.b16 %v373
        %v507 = vunpack.c.h.b16 %v373
        %v508 = vunpack.c.l.b16 %v374
        %v509 = vunpack.c.h.b16 %v374
        %v510 = vunpack.c.l.b16 %v375
        %v511 = vunpack.c.h.b16 %v375
        %v512 = vunpack.c.l.b16 %v376
        %v513 = vunpack.c.h.b16 %v376
        %v514 = vunpack.c.l.b16 %v377
        %v515 = vunpack.c.h.b16 %v377
        %v516 = vunpack.c.l.b16 %v378
        %v517 = vunpack.c.h.b16 %v378
        %v518 = vunpack.c.l.b16 %v379
        %v519 = vunpack.c.h.b16 %v379
        %v520 = vunpack.c.l.b16 %v380
        %v521 = vunpack.c.h.b16 %v380
        %v522 = vunpack.c.l.b16 %v381
        %v523 = vunpack.c.h.b16 %v381
        %v524 = vunpack.c.l.b16 %v382
        %v525 = vunpack.c.h.b16 %v382
        %v526 = vunpack.c.l.b16 %v383
        %v527 = vunpack.c.h.b16 %v383
        %v528 = vunpack.c.l.b16 %v384
        %v529 = vunpack.c.h.b16 %v384
        %v530 = vunpack.c.l.b16 %v385
        %v531 = vunpack.c.h.b16 %v385
        %v532 = vunpack.c.l.b16 %v386
        %v533 = vunpack.c.h.b16 %v386
        %v534 = vunpack.c.l.b16 %v387
        %v535 = vunpack.c.h.b16 %v387
        %v536 = vunpack.c.l.b16 %v388
        %v537 = vunpack.c.h.b16 %v388
        %v538 = vunpack.c.l.b16 %v389
        %v539 = vunpack.c.h.b16 %v389
        %v540 = vunpack.c.l.b16 %v390
        %v541 = vunpack.c.h.b16 %v390
        %v542 = vunpack.c.l.b16 %v391
        %v543 = vunpack.c.h.b16 %v391
        %v544 = vunpack.c.l.b16 %v392
        %v545 = vunpack.c.h.b16 %v392
        %v546 = vunpack.c.l.b16 %v393
        %v547 = vunpack.c.h.b16 %v393
        %v548 = vunpack.c.l.b16 %v394
        %v549 = vunpack.c.h.b16 %v394
        %v550 = vunpack.c.l.b16 %v395
        %v551 = vunpack.c.h.b16 %v395
        %v552 = vpack.c.b16 %v504, %v500
        %v553 = vpack.c.b16 %v505, %v501
        %v554 = vpack.c.b16 %v506, %v502
        %v555 = vpack.c.b16 %v507, %v503
        %v556 = vpack.c.b16 %v512, %v508
        %v557 = vpack.c.b16 %v513, %v509
        %v558 = vpack.c.b16 %v514, %v510
        %v559 = vpack.c.b16 %v515, %v511
        %v560 = vpack.c.b16 %v520, %v516
        %v561 = vpack.c.b16 %v521, %v517
        %v562 = vpack.c.b16 %v522, %v518
        %v563 = vpack.c.b16 %v523, %v519
        %v564 = vpack.c.b16 %v528, %v524
        %v565 = vpack.c.b16 %v529, %v525
        %v566 = vpack.c.b16 %v530, %v526
        %v567 = vpack.c.b16 %v531, %v527
        %v568 = vpack.c.b16 %v536, %v532
        %v569 = vpack.c.b16 %v537, %v533
        %v570 = vpack.c.b16 %v538, %v534
        %v571 = vpack.c.b16 %v539, %v535
        %v572 = vpack.c.b16 %v544, %v540
        %v573 = vpack.c.b16 %v545, %v541
        %v574 = vpack.c.b16 %v546, %v542
        %v575 = vpack.c.b16 %v547, %v543
        %v576 = vpack.c.b16 %v548, %v548
        %v577 = vpack.c.b16 %v549, %v549
        %v578 = vpack.c.b16 %v550, %v550
        %v579 = vpack.c.b16 %v551, %v551
        %608 = vmatpush.bf16.msra.mxu0 %v345
        %609 = vmatpush.bf16.msra.mxu0 %v344
        %610 = vmatpush.bf16.msra.mxu0 %v343
        %611 = vmatpush.bf16.msra.mxu0 %v342
        %612 = vmatpush.bf16.msra.mxu0 %v341
        %613 = vmatpush.bf16.msra.mxu0 %v340
        %614 = vmatpush.bf16.msra.mxu0 %v339
        %615 = vmatpush.bf16.msra.mxu0 %v338
        %616 = vmatmul.bf16.gmra.mxu0 %v552
        %v617 = vpop.f32.mrf.mxu0
        %v618 = vadd.f32 %v412, %v617
        %v619 = vpop.f32.mrf.mxu0
        %v620 = vadd.f32 %v417, %v619
        %621 = vmatmul.bf16.gmra.mxu0 %v556
        %v622 = vpop.f32.mrf.mxu0
        %v623 = vadd.f32 %v422, %v622
        %v624 = vpop.f32.mrf.mxu0
        %v625 = vadd.f32 %v427, %v624
        %626 = vmatmul.bf16.gmra.mxu0 %v560
        %v627 = vpop.f32.mrf.mxu0
        %v628 = vadd.f32 %v432, %v627
        %v629 = vpop.f32.mrf.mxu0
        %v630 = vadd.f32 %v437, %v629
        %631 = vmatmul.bf16.gmra.mxu0 %v564
        %v632 = vpop.f32.mrf.mxu0
        %v633 = vadd.f32 %v442, %v632
        %v634 = vpop.f32.mrf.mxu0
        %v635 = vadd.f32 %v447, %v634
        %636 = vmatmul.bf16.gmra.mxu0 %v568
        %v637 = vpop.f32.mrf.mxu0
        %v638 = vadd.f32 %v452, %v637
        %v639 = vpop.f32.mrf.mxu0
        %v640 = vadd.f32 %v457, %v639
        %641 = vmatmul.bf16.gmra.mxu0 %v572
        %v642 = vpop.f32.mrf.mxu0
        %v643 = vadd.f32 %v462, %v642
        %v644 = vpop.f32.mrf.mxu0
        %v645 = vadd.f32 %v467, %v644
        %646 = vmatmul.bf16.gmra.mxu0 %v576
        %v647 = vpop.f32.mrf.mxu0
        %v648 = vadd.f32 %v472, %v647
        %v649 = vpop.f32.mrf.mxu0
        %650 = vdwg.mxu0
        %651 = vmatpush.bf16.msra.mxu0 %v353
        %652 = vmatpush.bf16.msra.mxu0 %v352
        %653 = vmatpush.bf16.msra.mxu0 %v351
        %654 = vmatpush.bf16.msra.mxu0 %v350
        %655 = vmatpush.bf16.msra.mxu0 %v349
        %656 = vmatpush.bf16.msra.mxu0 %v348
        %657 = vmatpush.bf16.msra.mxu0 %v347
        %658 = vmatpush.bf16.msra.mxu0 %v346
        %659 = vmatmul.bf16.gmra.mxu0 %v553
        %v660 = vpop.f32.mrf.mxu0
        %v661 = vadd.f32 %v618, %v660
        %v662 = vpop.f32.mrf.mxu0
        %v663 = vadd.f32 %v620, %v662
        %664 = vmatmul.bf16.gmra.mxu0 %v557
        %v665 = vpop.f32.mrf.mxu0
        %v666 = vadd.f32 %v623, %v665
        %v667 = vpop.f32.mrf.mxu0
        %v668 = vadd.f32 %v625, %v667
        %669 = vmatmul.bf16.gmra.mxu0 %v561
        %v670 = vpop.f32.mrf.mxu0
        %v671 = vadd.f32 %v628, %v670
        %v672 = vpop.f32.mrf.mxu0
        %v673 = vadd.f32 %v630, %v672
        %674 = vmatmul.bf16.gmra.mxu0 %v565
        %v675 = vpop.f32.mrf.mxu0
        %v676 = vadd.f32 %v633, %v675
        %v677 = vpop.f32.mrf.mxu0
        %v678 = vadd.f32 %v635, %v677
        %679 = vmatmul.bf16.gmra.mxu0 %v569
        %v680 = vpop.f32.mrf.mxu0
        %v681 = vadd.f32 %v638, %v680
        %v682 = vpop.f32.mrf.mxu0
        %v683 = vadd.f32 %v640, %v682
        %684 = vmatmul.bf16.gmra.mxu0 %v573
        %v685 = vpop.f32.mrf.mxu0
        %v686 = vadd.f32 %v643, %v685
        %v687 = vpop.f32.mrf.mxu0
        %v688 = vadd.f32 %v645, %v687
        %689 = vmatmul.bf16.gmra.mxu0 %v577
        %v690 = vpop.f32.mrf.mxu0
        %v691 = vadd.f32 %v648, %v690
        %v692 = vpop.f32.mrf.mxu0
        %693 = vdwg.mxu0
        %694 = vmatpush.bf16.msra.mxu0 %v361
        %695 = vmatpush.bf16.msra.mxu0 %v360
        %696 = vmatpush.bf16.msra.mxu0 %v359
        %697 = vmatpush.bf16.msra.mxu0 %v358
        %698 = vmatpush.bf16.msra.mxu0 %v357
        %699 = vmatpush.bf16.msra.mxu0 %v356
        %700 = vmatpush.bf16.msra.mxu0 %v355
        %701 = vmatpush.bf16.msra.mxu0 %v354
        %702 = vmatmul.bf16.gmra.mxu0 %v554
        %v703 = vpop.f32.mrf.mxu0
        %v704 = vadd.f32 %v661, %v703
        %v705 = vpop.f32.mrf.mxu0
        %v706 = vadd.f32 %v663, %v705
        %707 = vmatmul.bf16.gmra.mxu0 %v558
        %v708 = vpop.f32.mrf.mxu0
        %v709 = vadd.f32 %v666, %v708
        %v710 = vpop.f32.mrf.mxu0
        %v711 = vadd.f32 %v668, %v710
        %712 = vmatmul.bf16.gmra.mxu0 %v562
        %v713 = vpop.f32.mrf.mxu0
        %v714 = vadd.f32 %v671, %v713
        %v715 = vpop.f32.mrf.mxu0
        %v716 = vadd.f32 %v673, %v715
        %717 = vmatmul.bf16.gmra.mxu0 %v566
        %v718 = vpop.f32.mrf.mxu0
        %v719 = vadd.f32 %v676, %v718
        %v720 = vpop.f32.mrf.mxu0
        %v721 = vadd.f32 %v678, %v720
        %722 = vmatmul.bf16.gmra.mxu0 %v570
        %v723 = vpop.f32.mrf.mxu0
        %v724 = vadd.f32 %v681, %v723
        %v725 = vpop.f32.mrf.mxu0
        %v726 = vadd.f32 %v683, %v725
        %727 = vmatmul.bf16.gmra.mxu0 %v574
        %v728 = vpop.f32.mrf.mxu0
        %v729 = vadd.f32 %v686, %v728
        %v730 = vpop.f32.mrf.mxu0
        %v731 = vadd.f32 %v688, %v730
        %732 = vmatmul.bf16.gmra.mxu0 %v578
        %v733 = vpop.f32.mrf.mxu0
        %v734 = vadd.f32 %v691, %v733
        %v735 = vpop.f32.mrf.mxu0
        %736 = vdwg.mxu0
        %737 = vmatpush.bf16.msra.mxu0 %v369
        %738 = vmatpush.bf16.msra.mxu0 %v368
        %739 = vmatpush.bf16.msra.mxu0 %v367
        %740 = vmatpush.bf16.msra.mxu0 %v366
        %741 = vmatpush.bf16.msra.mxu0 %v365
        %742 = vmatpush.bf16.msra.mxu0 %v364
        %743 = vmatpush.bf16.msra.mxu0 %v363
        %744 = vmatpush.bf16.msra.mxu0 %v362
        %745 = vmatmul.bf16.gmra.mxu0 %v555
        %v746 = vpop.f32.mrf.mxu0
        %v747 = vadd.f32 %v704, %v746
        %v748 = vpop.f32.mrf.mxu0
        %v749 = vadd.f32 %v706, %v748
        %750 = vmatmul.bf16.gmra.mxu0 %v559
        %v751 = vpop.f32.mrf.mxu0
        %v752 = vadd.f32 %v709, %v751
        %v753 = vpop.f32.mrf.mxu0
        %v754 = vadd.f32 %v711, %v753
        %755 = vmatmul.bf16.gmra.mxu0 %v563
        %v756 = vpop.f32.mrf.mxu0
        %v757 = vadd.f32 %v714, %v756
        %v758 = vpop.f32.mrf.mxu0
        %v759 = vadd.f32 %v716, %v758
        %760 = vmatmul.bf16.gmra.mxu0 %v567
        %v761 = vpop.f32.mrf.mxu0
        %v762 = vadd.f32 %v719, %v761
        %v763 = vpop.f32.mrf.mxu0
        %v764 = vadd.f32 %v721, %v763
        %765 = vmatmul.bf16.gmra.mxu0 %v571
        %v766 = vpop.f32.mrf.mxu0
        %v767 = vadd.f32 %v724, %v766
        %v768 = vpop.f32.mrf.mxu0
        %v769 = vadd.f32 %v726, %v768
        %770 = vmatmul.bf16.gmra.mxu0 %v575
        %v771 = vpop.f32.mrf.mxu0
        %v772 = vadd.f32 %v729, %v771
        %v773 = vpop.f32.mrf.mxu0
        %v774 = vadd.f32 %v731, %v773
        %775 = vmatmul.bf16.gmra.mxu0 %v579
        %v776 = vpop.f32.mrf.mxu0
        %v777 = vadd.f32 %v734, %v776
        %v778 = vpop.f32.mrf.mxu0
        %779 = vdwg.mxu0
        %vm780 = vcmask 64512
        %v781 = vsel %vm780, %v747, 0.0
        %v782 = vsel %vm780, %v749, 0.0
        %v783 = vadd.f32 %v781, %v782
        %v784 = vsel %vm780, %v752, 0.0
        %v785 = vadd.f32 %v783, %v784
        %v786 = vsel %vm780, %v754, 0.0
        %v787 = vadd.f32 %v785, %v786
        %v788 = vsel %vm780, %v757, 0.0
        %v789 = vadd.f32 %v787, %v788
        %v790 = vsel %vm780, %v759, 0.0
        %v791 = vadd.f32 %v789, %v790
        %v792 = vsel %vm780, %v762, 0.0
        %v793 = vadd.f32 %v791, %v792
        %v794 = vsel %vm780, %v764, 0.0
        %v795 = vadd.f32 %v793, %v794
        %v796 = vsel %vm780, %v767, 0.0
        %v797 = vadd.f32 %v795, %v796
        %v798 = vsel %vm780, %v769, 0.0
        %v799 = vadd.f32 %v797, %v798
        %v800 = vsel %vm780, %v772, 0.0
        %v801 = vadd.f32 %v799, %v800
        %v802 = vsel %vm780, %v774, 0.0
        %v803 = vadd.f32 %v801, %v802
        %vm804 = vcmask 60416
        %v805 = vsel %vm804, %v777, 0.0
        %v806 = vadd.f32 %v803, %v805
        %v807 = vrot.slane %v806, 4
        %v808 = vadd.f32 %v806, %v807
        %v809 = vrot.slane %v808, 2
        %v810 = vadd.f32 %v808, %v809
        %v811 = vrot.slane %v810, 1
        %v812 = vadd.f32 %v810, %v811
        %v813 = vrcp.pop 100.0
        %v814 = vmul.f32 100.0, %v813
        %v815 = vsub.f32 1.0, %v814
        %v816 = vmul.f32 %v813, %v815
        %v817 = vadd.f32 %v813, %v816
        %vm818 = vweird.f32 %v813
        %v819 = vsel %vm818, %v813, %v817
        %v820 = vmul.f32 %v812, %v819
        %v821 = vsub.f32 %v747, %v820
        %v822 = vsub.f32 %v749, %v820
        %v823 = vsub.f32 %v752, %v820
        %v824 = vsub.f32 %v754, %v820
        %v825 = vsub.f32 %v757, %v820
        %v826 = vsub.f32 %v759, %v820
        %v827 = vsub.f32 %v762, %v820
        %v828 = vsub.f32 %v764, %v820
        %v829 = vsub.f32 %v767, %v820
        %v830 = vsub.f32 %v769, %v820
        %v831 = vsub.f32 %v772, %v820
        %v832 = vsub.f32 %v774, %v820
        %v833 = vsub.f32 %v777, %v820
        %v834 = vld [vmem:[#allocation2] sm:$0xff]
        %v835 = vld [vmem:[#allocation2 + $0x8] sm:$0xff]
        %v836 = vld [vmem:[#allocation2 + $0x10] sm:$0xff]
        %v837 = vld [vmem:[#allocation2 + $0x18] sm:$0xff]
        %v838 = vld [vmem:[#allocation2 + $0x20] sm:$0xff]
        %v839 = vld [vmem:[#allocation2 + $0x28] sm:$0xff]
        %v840 = vld [vmem:[#allocation2 + $0x30] sm:$0xff]
        %v841 = vld [vmem:[#allocation2 + $0x38] sm:$0xff]
        %v842 = vld [vmem:[#allocation2 + $0x40] sm:$0xff]
        %v843 = vld [vmem:[#allocation2 + $0x48] sm:$0xff]
        %v844 = vld [vmem:[#allocation2 + $0x50] sm:$0xff]
        %v845 = vld [vmem:[#allocation2 + $0x58] sm:$0xff]
        %v846 = vld [vmem:[#allocation2 + $0x60] sm:$0xf]
        %v848 = vsel %vm780, %v821, 0
        %v851 = vsel %vm780, %v822, 0
        %v854 = vsel %vm780, %v823, 0
        %v857 = vsel %vm780, %v824, 0
        %v860 = vsel %vm780, %v825, 0
        %v863 = vsel %vm780, %v826, 0
        %v866 = vsel %vm780, %v827, 0
        %v869 = vsel %vm780, %v828, 0
        %v872 = vsel %vm780, %v829, 0
        %v875 = vsel %vm780, %v830, 0
        %v878 = vsel %vm780, %v831, 0
        %v881 = vsel %vm780, %v832, 0
        %v884 = vsel %vm780, %v833, 0
        %886 = vmatpush.xpose.msra.mxu0 0.0
        %887 = vmatpush.xpose.msra.mxu0 0.0
        %888 = vmatpush.xpose.msra.mxu0 0.0
        %889 = vmatpush.xpose.msra.mxu0 %v884
        %890 = vmatpush.xpose.msra.mxu0 %v881
        %891 = vmatpush.xpose.msra.mxu0 %v878
        %892 = vmatpush.xpose.msra.mxu0 %v875
        %893 = vmatpush.xpose.msra.mxu0 %v872
        %894 = vmatpush.xpose.msra.mxu0 %v869
        %895 = vmatpush.xpose.msra.mxu0 %v866
        %896 = vmatpush.xpose.msra.mxu0 %v863
        %897 = vmatpush.xpose.msra.mxu0 %v860
        %898 = vmatpush.xpose.msra.mxu0 %v857
        %899 = vmatpush.xpose.msra.mxu0 %v854
        %900 = vmatpush.xpose.msra.mxu0 %v851
        %901 = vmatpush.xpose.msra.mxu0 %v848
        %902 = vmatmul.f32.gmra.mxu0 %v848
        %v903 = vpop.f32.mrf.mxu0
        %v904 = vadd.f32 0.0, %v903
        %905 = vmatmul.f32.gmra.mxu0 %v851
        %v906 = vpop.f32.mrf.mxu0
        %v907 = vadd.f32 0.0, %v906
        %908 = vmatmul.f32.gmra.mxu0 %v854
        %v909 = vpop.f32.mrf.mxu0
        %v910 = vadd.f32 0.0, %v909
        %911 = vmatmul.f32.gmra.mxu0 %v857
        %v912 = vpop.f32.mrf.mxu0
        %v913 = vadd.f32 0.0, %v912
        %914 = vmatmul.f32.gmra.mxu0 %v860
        %v915 = vpop.f32.mrf.mxu0
        %v916 = vadd.f32 0.0, %v915
        %917 = vmatmul.f32.gmra.mxu0 %v863
        %v918 = vpop.f32.mrf.mxu0
        %v919 = vadd.f32 0.0, %v918
        %920 = vmatmul.f32.gmra.mxu0 %v866
        %v921 = vpop.f32.mrf.mxu0
        %v922 = vadd.f32 0.0, %v921
        %923 = vmatmul.f32.gmra.mxu0 %v869
        %v924 = vpop.f32.mrf.mxu0
        %v925 = vadd.f32 0.0, %v924
        %926 = vmatmul.f32.gmra.mxu0 %v872
        %v927 = vpop.f32.mrf.mxu0
        %v928 = vadd.f32 0.0, %v927
        %929 = vmatmul.f32.gmra.mxu0 %v875
        %v930 = vpop.f32.mrf.mxu0
        %v931 = vadd.f32 0.0, %v930
        %932 = vmatmul.f32.gmra.mxu0 %v878
        %v933 = vpop.f32.mrf.mxu0
        %v934 = vadd.f32 0.0, %v933
        %935 = vmatmul.f32.gmra.mxu0 %v881
        %v936 = vpop.f32.mrf.mxu0
        %v937 = vadd.f32 0.0, %v936
        %938 = vmatmul.f32.gmra.mxu0 %v884
        %v939 = vpop.f32.mrf.mxu0
        %v940 = vadd.f32 0.0, %v939
        %941 = vdwg.mxu0
        %v942 = vadd.f32 %v834, %v904
        %v943 = vadd.f32 %v835, %v907
        %v944 = vadd.f32 %v836, %v910
        %v945 = vadd.f32 %v837, %v913
        %v946 = vadd.f32 %v838, %v916
        %v947 = vadd.f32 %v839, %v919
        %v948 = vadd.f32 %v840, %v922
        %v949 = vadd.f32 %v841, %v925
        %v950 = vadd.f32 %v842, %v928
        %v951 = vadd.f32 %v843, %v931
        %v952 = vadd.f32 %v844, %v934
        %v953 = vadd.f32 %v845, %v937
        %v954 = vadd.f32 %v846, %v940
        %vm955 = vcmask 818176
        %956 = vst.msk [vmem:[#allocation2] sm:$0xff] %vm955, %v942
        %957 = vst.msk [vmem:[#allocation2 + $0x8] sm:$0xff] %vm955, %v943
        %958 = vst.msk [vmem:[#allocation2 + $0x10] sm:$0xff] %vm955, %v944
        %959 = vst.msk [vmem:[#allocation2 + $0x18] sm:$0xff] %vm955, %v945
        %960 = vst.msk [vmem:[#allocation2 + $0x20] sm:$0xff] %vm955, %v946
        %961 = vst.msk [vmem:[#allocation2 + $0x28] sm:$0xff] %vm955, %v947
        %962 = vst.msk [vmem:[#allocation2 + $0x30] sm:$0xff] %vm955, %v948
        %963 = vst.msk [vmem:[#allocation2 + $0x38] sm:$0xff] %vm955, %v949
        %964 = vst.msk [vmem:[#allocation2 + $0x40] sm:$0xff] %vm955, %v950
        %965 = vst.msk [vmem:[#allocation2 + $0x48] sm:$0xff] %vm955, %v951
        %966 = vst.msk [vmem:[#allocation2 + $0x50] sm:$0xff] %vm955, %v952
        %967 = vst.msk [vmem:[#allocation2 + $0x58] sm:$0xff] %vm955, %v953
        %vm968 = vcmask 814080
        %969 = vst.msk [vmem:[#allocation2 + $0x60] sm:$0xf] %vm968, %v954
        // Predicated region
        $region49: #{network_forward.3} parent=35 // pred_check
          %p970 = pneg %p255
        $region50: #{network_forward.3} parent=35 // pred_check_branch
          %972 = sbr.rel (%p970) target = $region52
        $region51: #{network_forward.3} parent=35 // pred_region
          %v973 = vld [vmem:[#allocation2] sm:$0xff]
          %v974 = vld [vmem:[#allocation2 + $0x8] sm:$0xff]
          %v975 = vld [vmem:[#allocation2 + $0x10] sm:$0xff]
          %v976 = vld [vmem:[#allocation2 + $0x18] sm:$0xff]
          %v977 = vld [vmem:[#allocation2 + $0x20] sm:$0xff]
          %v978 = vld [vmem:[#allocation2 + $0x28] sm:$0xff]
          %v979 = vld [vmem:[#allocation2 + $0x30] sm:$0xff]
          %v980 = vld [vmem:[#allocation2 + $0x38] sm:$0xff]
          %v981 = vld [vmem:[#allocation2 + $0x40] sm:$0xff]
          %v982 = vld [vmem:[#allocation2 + $0x48] sm:$0xff]
          %v983 = vld [vmem:[#allocation2 + $0x50] sm:$0xff]
          %v984 = vld [vmem:[#allocation2 + $0x58] sm:$0xff]
          %v985 = vld [vmem:[#allocation2 + $0x60] sm:$0xf]
          %v986 = vmul.f32 %v973, 0.14285715
          %v987 = vmul.f32 %v974, 0.14285715
          %v988 = vmul.f32 %v975, 0.14285715
          %v989 = vmul.f32 %v976, 0.14285715
          %v990 = vmul.f32 %v977, 0.14285715
          %v991 = vmul.f32 %v978, 0.14285715
          %v992 = vmul.f32 %v979, 0.14285715
          %v993 = vmul.f32 %v980, 0.14285715
          %v994 = vmul.f32 %v981, 0.14285715
          %v995 = vmul.f32 %v982, 0.14285715
          %v996 = vmul.f32 %v983, 0.14285715
          %v997 = vmul.f32 %v984, 0.14285715
          %v998 = vmul.f32 %v985, 0.14285715
          %v999 = vlaneseq
          %v1000 = vshrl.u32 %v999, 7
          %v1001 = vadd.s32 %v1000, 8
          %v1002 = vadd.s32 %v1000, 16
          %v1003 = vadd.s32 %v1000, 24
          %v1004 = vadd.s32 %v1000, 32
          %v1005 = vadd.s32 %v1000, 40
          %v1006 = vadd.s32 %v1000, 48
          %v1007 = vadd.s32 %v1000, 56
          %v1008 = vadd.s32 %v1000, 64
          %v1009 = vadd.s32 %v1000, 72
          %v1010 = vadd.s32 %v1000, 80
          %v1011 = vadd.s32 %v1000, 88
          %v1012 = vadd.s32 %v1000, 96
          %v1013 = vlaneseq
          %v1014 = vand.u32 %v1013, 127
          %vm1015 = vcmp.eq.s32.totalorder %v1000, %v1014
          %vm1016 = vcmp.eq.s32.totalorder %v1001, %v1014
          %vm1017 = vcmp.eq.s32.totalorder %v1002, %v1014
          %vm1018 = vcmp.eq.s32.totalorder %v1003, %v1014
          %vm1019 = vcmp.eq.s32.totalorder %v1004, %v1014
          %vm1020 = vcmp.eq.s32.totalorder %v1005, %v1014
          %vm1021 = vcmp.eq.s32.totalorder %v1006, %v1014
          %vm1022 = vcmp.eq.s32.totalorder %v1007, %v1014
          %vm1023 = vcmp.eq.s32.totalorder %v1008, %v1014
          %vm1024 = vcmp.eq.s32.totalorder %v1009, %v1014
          %vm1025 = vcmp.eq.s32.totalorder %v1010, %v1014
          %vm1026 = vcmp.eq.s32.totalorder %v1011, %v1014
          %vm1027 = vcmp.eq.s32.totalorder %v1012, %v1014
          %v1028 = vsel %vm1015, %v986, 0.0
          %v1029 = vsel %vm1016, %v987, 0.0
          %v1030 = vsel %vm1017, %v988, 0.0
          %v1031 = vsel %vm1018, %v989, 0.0
          %v1032 = vsel %vm1019, %v990, 0.0
          %v1033 = vsel %vm1020, %v991, 0.0
          %v1034 = vsel %vm1021, %v992, 0.0
          %v1035 = vsel %vm1022, %v993, 0.0
          %v1036 = vsel %vm1023, %v994, 0.0
          %v1037 = vsel %vm1024, %v995, 0.0
          %v1038 = vsel %vm1025, %v996, 0.0
          %v1039 = vsel %vm1026, %v997, 0.0
          %v1040 = vsel %vm1027, %v998, 0.0
          %v1041 = vsel %vm955, %v1028, 0.0
          %v1042 = vsel %vm955, %v1029, 0.0
          %v1043 = vadd.f32 %v1041, %v1042
          %v1044 = vsel %vm955, %v1030, 0.0
          %v1045 = vadd.f32 %v1043, %v1044
          %v1046 = vsel %vm955, %v1031, 0.0
          %v1047 = vadd.f32 %v1045, %v1046
          %v1048 = vsel %vm955, %v1032, 0.0
          %v1049 = vadd.f32 %v1047, %v1048
          %v1050 = vsel %vm955, %v1033, 0.0
          %v1051 = vadd.f32 %v1049, %v1050
          %v1052 = vsel %vm955, %v1034, 0.0
          %v1053 = vadd.f32 %v1051, %v1052
          %v1054 = vsel %vm955, %v1035, 0.0
          %v1055 = vadd.f32 %v1053, %v1054
          %v1056 = vsel %vm955, %v1036, 0.0
          %v1057 = vadd.f32 %v1055, %v1056
          %v1058 = vsel %vm955, %v1037, 0.0
          %v1059 = vadd.f32 %v1057, %v1058
          %v1060 = vsel %vm955, %v1038, 0.0
          %v1061 = vadd.f32 %v1059, %v1060
          %v1062 = vsel %vm955, %v1039, 0.0
          %v1063 = vadd.f32 %v1061, %v1062
          %v1064 = vsel %vm968, %v1040, 0.0
          %v1065 = vadd.f32 %v1063, %v1064
          %1066 = vadd.xlane.f32.xlu0 %v1065
          %v1067 = vpop.xlane.xlu0 %1066
          %v1068 = vrot.slane %v1067, 4
          %v1069 = vadd.f32 %v1067, %v1068
          %v1070 = vrot.slane %v1069, 2
          %v1071 = vadd.f32 %v1069, %v1070
          %v1072 = vrot.slane %v1071, 1
          %v1073 = vadd.f32 %v1071, %v1072
          %s1074 = vtos %v1073
          %v1075 = vstv %s1074
          %v1076 = vmul.f32 %v1075, 1e-05
          %v1077 = vadd.f32 %v986, %v1076
          %v1078 = vadd.f32 %v987, %v1076
          %v1079 = vadd.f32 %v988, %v1076
          %v1080 = vadd.f32 %v989, %v1076
          %v1081 = vadd.f32 %v990, %v1076
          %v1082 = vadd.f32 %v991, %v1076
          %v1083 = vadd.f32 %v992, %v1076
          %v1084 = vadd.f32 %v993, %v1076
          %v1085 = vadd.f32 %v994, %v1076
          %v1086 = vadd.f32 %v995, %v1076
          %v1087 = vadd.f32 %v996, %v1076
          %v1088 = vadd.f32 %v997, %v1076
          %v1089 = vadd.f32 %v998, %v1076
          %v1090 = vsel %vm1015, %v1077, %v986
          %v1091 = vsel %vm1016, %v1078, %v987
          %v1092 = vsel %vm1017, %v1079, %v988
          %v1093 = vsel %vm1018, %v1080, %v989
          %v1094 = vsel %vm1019, %v1081, %v990
          %v1095 = vsel %vm1020, %v1082, %v991
          %v1096 = vsel %vm1021, %v1083, %v992
          %v1097 = vsel %vm1022, %v1084, %v993
          %v1098 = vsel %vm1023, %v1085, %v994
          %v1099 = vsel %vm1024, %v1086, %v995
          %v1100 = vsel %vm1025, %v1087, %v996
          %v1101 = vsel %vm1026, %v1088, %v997
          %v1102 = vsel %vm1027, %v1089, %v998
          %v1103 = vld [vmem:[#allocation5] sm:$0xff]
          %v1104 = vld [vmem:[#allocation5 + $0x8] sm:$0xff]
          %v1105 = vld [vmem:[#allocation5 + $0x10] sm:$0xff]
          %v1106 = vld [vmem:[#allocation5 + $0x18] sm:$0xff]
          %v1107 = vld [vmem:[#allocation5 + $0x20] sm:$0xff]
          %v1108 = vld [vmem:[#allocation5 + $0x28] sm:$0xff]
          %v1109 = vld [vmem:[#allocation5 + $0x30] sm:$0xff]
          %v1110 = vld [vmem:[#allocation5 + $0x38] sm:$0xff]
          %v1111 = vld [vmem:[#allocation5 + $0x40] sm:$0xff]
          %v1112 = vld [vmem:[#allocation5 + $0x48] sm:$0xff]
          %v1113 = vld [vmem:[#allocation5 + $0x50] sm:$0xff]
          %v1114 = vld [vmem:[#allocation5 + $0x58] sm:$0xff]
          %v1115 = vld [vmem:[#allocation5 + $0x60] sm:$0xf]
          %1116 = vxpose.xlu0.b32.start [1/16] %v1103, 128
          %1117 = vxpose.xlu0.b32.cont [2/16] %v1104, 128
          %1118 = vxpose.xlu0.b32.cont [3/16] %v1105, 128
          %1119 = vxpose.xlu0.b32.cont [4/16] %v1106, 128
          %1120 = vxpose.xlu0.b32.cont [5/16] %v1107, 128
          %1121 = vxpose.xlu0.b32.cont [6/16] %v1108, 128
          %1122 = vxpose.xlu0.b32.cont [7/16] %v1109, 128
          %1123 = vxpose.xlu0.b32.cont [8/16] %v1110, 128
          %1124 = vxpose.xlu0.b32.cont [9/16] %v1111, 128
          %1125 = vxpose.xlu0.b32.cont [10/16] %v1112, 128
          %1126 = vxpose.xlu0.b32.cont [11/16] %v1113, 128
          %1127 = vxpose.xlu0.b32.cont [12/16] %v1114, 128
          %1128 = vxpose.xlu0.b32.cont [13/16] %v1115, 128
          %1129 = vxpose.xlu0.b32.cont [14/16] 0.0, 128
          %1130 = vxpose.xlu0.b32.cont [15/16] 0.0, 128
          %1131 = vxpose.xlu0.b32.end [16/16] 0.0, 128
          %v1132 = vpop.trf.xlu0
          %v1133 = vpop.trf.xlu0
          %v1134 = vpop.trf.xlu0
          %v1135 = vpop.trf.xlu0
          %v1136 = vpop.trf.xlu0
          %v1137 = vpop.trf.xlu0
          %v1138 = vpop.trf.xlu0
          %v1139 = vpop.trf.xlu0
          %v1140 = vpop.trf.xlu0
          %v1141 = vpop.trf.xlu0
          %v1142 = vpop.trf.xlu0
          %v1143 = vpop.trf.xlu0
          %v1144 = vpop.trf.xlu0
          %v1145 = vpop.trf.xlu0
          %v1146 = vpop.trf.xlu0
          %v1147 = vpop.trf.xlu0
          %v1149 = vsel %vm955, %v1132, 0
          %v1152 = vsel %vm955, %v1133, 0
          %v1155 = vsel %vm955, %v1134, 0
          %v1158 = vsel %vm955, %v1135, 0
          %v1161 = vsel %vm955, %v1136, 0
          %v1164 = vsel %vm955, %v1137, 0
          %v1167 = vsel %vm955, %v1138, 0
          %v1170 = vsel %vm955, %v1139, 0
          %v1173 = vsel %vm955, %v1140, 0
          %v1176 = vsel %vm955, %v1141, 0
          %v1179 = vsel %vm955, %v1142, 0
          %v1182 = vsel %vm955, %v1143, 0
          %v1185 = vsel %vm955, %v1144, 0
          %vm1187 = vcmask 1043456
          %v1189 = vsel %vm1187, %v1102, 0
          %1191 = vmatpush.msra.mxu0 0.0
          %1192 = vmatpush.msra.mxu0 0.0
          %1193 = vmatpush.msra.mxu0 0.0
          %1194 = vmatpush.msra.mxu0 %v1189
          %1195 = vmatpush.msra.mxu0 %v1101
          %1196 = vmatpush.msra.mxu0 %v1100
          %1197 = vmatpush.msra.mxu0 %v1099
          %1198 = vmatpush.msra.mxu0 %v1098
          %1199 = vmatpush.msra.mxu0 %v1097
          %1200 = vmatpush.msra.mxu0 %v1096
          %1201 = vmatpush.msra.mxu0 %v1095
          %1202 = vmatpush.msra.mxu0 %v1094
          %1203 = vmatpush.msra.mxu0 %v1093
          %1204 = vmatpush.msra.mxu0 %v1092
          %1205 = vmatpush.msra.mxu0 %v1091
          %1206 = vmatpush.msra.mxu0 %v1090
          %1207 = vmatmul.f32.gmra.mxu0 %v1149
          %v1208 = vpop.f32.mrf.mxu0
          %v1209 = vadd.f32 0.0, %v1208
          %1210 = vmatmul.f32.gmra.mxu0 %v1152
          %v1211 = vpop.f32.mrf.mxu0
          %v1212 = vadd.f32 0.0, %v1211
          %1213 = vmatmul.f32.gmra.mxu0 %v1155
          %v1214 = vpop.f32.mrf.mxu0
          %v1215 = vadd.f32 0.0, %v1214
          %1216 = vmatmul.f32.gmra.mxu0 %v1158
          %v1217 = vpop.f32.mrf.mxu0
          %v1218 = vadd.f32 0.0, %v1217
          %1219 = vmatmul.f32.gmra.mxu0 %v1161
          %v1220 = vpop.f32.mrf.mxu0
          %v1221 = vadd.f32 0.0, %v1220
          %1222 = vmatmul.f32.gmra.mxu0 %v1164
          %v1223 = vpop.f32.mrf.mxu0
          %v1224 = vadd.f32 0.0, %v1223
          %1225 = vmatmul.f32.gmra.mxu0 %v1167
          %v1226 = vpop.f32.mrf.mxu0
          %v1227 = vadd.f32 0.0, %v1226
          %1228 = vmatmul.f32.gmra.mxu0 %v1170
          %v1229 = vpop.f32.mrf.mxu0
          %v1230 = vadd.f32 0.0, %v1229
          %1231 = vmatmul.f32.gmra.mxu0 %v1173
          %v1232 = vpop.f32.mrf.mxu0
          %v1233 = vadd.f32 0.0, %v1232
          %1234 = vmatmul.f32.gmra.mxu0 %v1176
          %v1235 = vpop.f32.mrf.mxu0
          %v1236 = vadd.f32 0.0, %v1235
          %1237 = vmatmul.f32.gmra.mxu0 %v1179
          %v1238 = vpop.f32.mrf.mxu0
          %v1239 = vadd.f32 0.0, %v1238
          %1240 = vmatmul.f32.gmra.mxu0 %v1182
          %v1241 = vpop.f32.mrf.mxu0
          %v1242 = vadd.f32 0.0, %v1241
          %1243 = vmatmul.f32.gmra.mxu0 %v1185
          %v1244 = vpop.f32.mrf.mxu0
          %v1245 = vadd.f32 0.0, %v1244
          %1246 = vdwg.mxu0
          %v1248 = vsel %vm955, %v1209, 0
          %v1251 = vsel %vm955, %v1212, 0
          %v1254 = vsel %vm955, %v1215, 0
          %v1257 = vsel %vm955, %v1218, 0
          %v1260 = vsel %vm955, %v1221, 0
          %v1263 = vsel %vm955, %v1224, 0
          %v1266 = vsel %vm955, %v1227, 0
          %v1269 = vsel %vm955, %v1230, 0
          %v1272 = vsel %vm955, %v1233, 0
          %v1275 = vsel %vm955, %v1236, 0
          %v1278 = vsel %vm955, %v1239, 0
          %v1281 = vsel %vm955, %v1242, 0
          %v1284 = vsel %vm955, %v1245, 0
          %v1287 = vsel %vm1187, %v1115, 0
          %1289 = vmatpush.msra.mxu0 0.0
          %1290 = vmatpush.msra.mxu0 0.0
          %1291 = vmatpush.msra.mxu0 0.0
          %1292 = vmatpush.msra.mxu0 %v1287
          %1293 = vmatpush.msra.mxu0 %v1114
          %1294 = vmatpush.msra.mxu0 %v1113
          %1295 = vmatpush.msra.mxu0 %v1112
          %1296 = vmatpush.msra.mxu0 %v1111
          %1297 = vmatpush.msra.mxu0 %v1110
          %1298 = vmatpush.msra.mxu0 %v1109
          %1299 = vmatpush.msra.mxu0 %v1108
          %1300 = vmatpush.msra.mxu0 %v1107
          %1301 = vmatpush.msra.mxu0 %v1106
          %1302 = vmatpush.msra.mxu0 %v1105
          %1303 = vmatpush.msra.mxu0 %v1104
          %1304 = vmatpush.msra.mxu0 %v1103
          %1305 = vmatmul.f32.gmra.mxu0 %v1248
          %v1306 = vpop.f32.mrf.mxu0
          %v1307 = vadd.f32 0.0, %v1306
          %1308 = vmatmul.f32.gmra.mxu0 %v1251
          %v1309 = vpop.f32.mrf.mxu0
          %v1310 = vadd.f32 0.0, %v1309
          %1311 = vmatmul.f32.gmra.mxu0 %v1254
          %v1312 = vpop.f32.mrf.mxu0
          %v1313 = vadd.f32 0.0, %v1312
          %1314 = vmatmul.f32.gmra.mxu0 %v1257
          %v1315 = vpop.f32.mrf.mxu0
          %v1316 = vadd.f32 0.0, %v1315
          %1317 = vmatmul.f32.gmra.mxu0 %v1260
          %v1318 = vpop.f32.mrf.mxu0
          %v1319 = vadd.f32 0.0, %v1318
          %1320 = vmatmul.f32.gmra.mxu0 %v1263
          %v1321 = vpop.f32.mrf.mxu0
          %v1322 = vadd.f32 0.0, %v1321
          %1323 = vmatmul.f32.gmra.mxu0 %v1266
          %v1324 = vpop.f32.mrf.mxu0
          %v1325 = vadd.f32 0.0, %v1324
          %1326 = vmatmul.f32.gmra.mxu0 %v1269
          %v1327 = vpop.f32.mrf.mxu0
          %v1328 = vadd.f32 0.0, %v1327
          %1329 = vmatmul.f32.gmra.mxu0 %v1272
          %v1330 = vpop.f32.mrf.mxu0
          %v1331 = vadd.f32 0.0, %v1330
          %1332 = vmatmul.f32.gmra.mxu0 %v1275
          %v1333 = vpop.f32.mrf.mxu0
          %v1334 = vadd.f32 0.0, %v1333
          %1335 = vmatmul.f32.gmra.mxu0 %v1278
          %v1336 = vpop.f32.mrf.mxu0
          %v1337 = vadd.f32 0.0, %v1336
          %1338 = vmatmul.f32.gmra.mxu0 %v1281
          %v1339 = vpop.f32.mrf.mxu0
          %v1340 = vadd.f32 0.0, %v1339
          %1341 = vmatmul.f32.gmra.mxu0 %v1284
          %v1342 = vpop.f32.mrf.mxu0
          %v1343 = vadd.f32 0.0, %v1342
          %1344 = vdwg.mxu0
          %1345 = vst.msk [vmem:[%s254] sm:$0xff] %vm955, %v1307
          %1346 = vst.msk [vmem:[%s254 + $0x8] sm:$0xff] %vm955, %v1310
          %1347 = vst.msk [vmem:[%s254 + $0x10] sm:$0xff] %vm955, %v1313
          %1348 = vst.msk [vmem:[%s254 + $0x18] sm:$0xff] %vm955, %v1316
          %1349 = vst.msk [vmem:[%s254 + $0x20] sm:$0xff] %vm955, %v1319
          %1350 = vst.msk [vmem:[%s254 + $0x28] sm:$0xff] %vm955, %v1322
          %1351 = vst.msk [vmem:[%s254 + $0x30] sm:$0xff] %vm955, %v1325
          %1352 = vst.msk [vmem:[%s254 + $0x38] sm:$0xff] %vm955, %v1328
          %1353 = vst.msk [vmem:[%s254 + $0x40] sm:$0xff] %vm955, %v1331
          %1354 = vst.msk [vmem:[%s254 + $0x48] sm:$0xff] %vm955, %v1334
          %1355 = vst.msk [vmem:[%s254 + $0x50] sm:$0xff] %vm955, %v1337
          %1356 = vst.msk [vmem:[%s254 + $0x58] sm:$0xff] %vm955, %v1340
          %1357 = vst.msk [vmem:[%s254 + $0x60] sm:$0xf] %vm968, %v1343
        $region52: #{network_forward.3} parent=35 // pred_fallthru
          _
        %p1358 = scmp.lt.s32.totalorder %s21, 1
        %s1359 = scalar_select %p1358, %s21, 1
        %s1360 = smul.addr %s1359, 13
        %s1361 = smul.addr %s1360, 8
        %s1362 = scalar_lea.vmem %s4, %s1361
        // Predicated region
        $region53: #{network_forward.3} parent=35 // pred_check
          %p1363 = pneg %p138
        $region54: #{network_forward.3} parent=35 // pred_check_branch
          %1365 = sbr.rel (%p1363) target = $region56
        $region55: #{network_forward.3} parent=35 // pred_region
          _
        $region56: #{network_forward.3} parent=35 // pred_fallthru
          _
      $region36: #{network_forward.3} parent=5 // pred_fallthru
        _
      %p1366 = scmp.le.s32.totalorder 2, %s12
      // Predicated region
      $region57: #{network_forward.3} parent=5 // pred_check
        %p1367 = pneg %p1366
      $region58: #{network_forward.3} parent=5 // pred_check_branch
        %1369 = sbr.rel (%p1367) target = $region60
      $region59: #{network_forward.3} parent=5 // pred_region
        %s1370 = ssub.s32 %s12, 2
        // Predicated region
        $region61: #{network_forward.3} parent=59 // pred_check
          %p1371 = pneg %p144
        $region62: #{network_forward.3} parent=59 // pred_check_branch
          %1373 = sbr.rel (%p1371) target = $region64
        $region63: #{network_forward.3} parent=59 // pred_region
          %p1374 = scmp.lt.s32.totalorder %s23, 1
          %s1375 = scalar_select %p1374, %s23, 1
          %s1376 = smul.addr %s1375, 13
          %s1377 = smul.addr %s1376, 8
          %s1378 = scalar_lea.vmem %s4, %s1377
        $region64: #{network_forward.3} parent=59 // pred_fallthru
          _
      $region60: #{network_forward.3} parent=5 // pred_fallthru
        _
    $region6: #{network_forward.3} parent=1 // loop_footer
      %s16 = sadd.s32 1, %s12
    $region7: #{network_forward.3} parent=1 // loop_footer_branch
      %11 = sbr.rel target = $region3
    $region8: #{network_forward.3} parent=1 // loop_exit
      _
    %1379 = vsyncpa [#allocation4], 1
    %s1380 = scalar_lea.sflag [#allocation4], 1
    %1381 = vsyncpa %s1380, 1
    %1382 = vsyncpa [#allocation6], 1

// kernel: network_forward.4
$region0: #{network_forward.4}
  #allocation0 [shape = 'u32[]', space=smem, size = 0x4, offset = 0x4, fixed_abs, tag = 'smem constant byte address 0x4 - core index']
  #allocation1 [shape = 'u32[72,128]{1,0:T(1,128)}', space=vmem, size = 0x9000, scoped, tag = 'internal scratch']
  %s0 = inlined_call_operand.vmem [shape: f32[2,128,128], index: 0, kind: input, shape index: {}]
  %s1 = inlined_call_operand.vmem [shape: f32[2,1,128], index: 1, kind: input, shape index: {}]
  %s2 = inlined_call_operand.vmem [shape: bf16[2,112,128], index: 2, kind: output, shape index: {}]
  %s3 = sld [smem:[#allocation0]]
  $region41: #{network_forward.4} parent=0
    _
  %s5 = ssub.s32 1, %s3
  %s6 = scalar_select 0, %s5, %s3
  loop: start=0, step=1, limit=4
  $region2: #{network_forward.4} parent=0 // loop_pre_header
    _
  $region3: #{network_forward.4} parent=0 // loop_header
    %s8 = sphi 0, %s12
    %p9 = scmp.ge.s32.totalorder %s8, 4
    %s18 = sphi 0, %s20
    %s21 = sphi 0, %s18
    %s22 = sphi 0, %s21
    %s38 = sphi 0, %s22
    %s44 = sphi 0, %s46
    %s47 = sphi 0, %s44
    %s48 = sphi 0, %s47
    %s64 = sphi 0, %s48
    %s70 = sphi 0, %s72
    %s73 = sphi 0, %s70
    %s74 = sphi 0, %s73
    %s90 = sphi 0, %s74
  $region4: #{network_forward.4} parent=0 // loop_header_branch
    %11 = sbr.rel (%p9) target = $region8
  $region5: #{network_forward.4} parent=0 // loop_body
    %s13 = ssub.s32 %s8, 1
    %s14 = ssub.s32 %s8, 2
    %s15 = sadd.s32 %s8, 1
    %s16 = ssub.s32 %s8, %s15
    %p17 = scmp.eq.s32.totalorder %s16, 0
    %s19 = sadd.s32 %s18, 1
    %s20 = scalar_select %p17, %s18, %s19
    %p23 = pneg %p17
    %p24 = scmp.eq.s32.totalorder %s8, 1
    %p25 = por %p23, %p24
    %p26 = scmp.ne.s32.totalorder %s18, %s21
    %p27 = scmp.eq.s32.totalorder %s8, 0
    %p28 = por %p26, %p27
    %p29 = scmp.ne.s32.totalorder %s18, %s21
    %p30 = scmp.eq.s32.totalorder %s13, 1
    %p31 = por %p29, %p30
    %p32 = scmp.ne.s32.totalorder %s21, %s22
    %p33 = scmp.eq.s32.totalorder %s13, 0
    %p34 = por %p32, %p33
    %p35 = scmp.ne.s32.totalorder %s21, %s22
    %p36 = scmp.eq.s32.totalorder %s14, 1
    %p37 = por %p35, %p36
    %p39 = scmp.ne.s32.totalorder %s22, %s38
    %p40 = scmp.eq.s32.totalorder %s14, 0
    %p41 = por %p39, %p40
    %s42 = ssub.s32 %s8, %s15
    %p43 = scmp.eq.s32.totalorder %s42, 0
    %s45 = sadd.s32 %s44, 1
    %s46 = scalar_select %p43, %s44, %s45
    %p49 = pneg %p43
    %p50 = scmp.eq.s32.totalorder %s8, 1
    %p51 = por %p49, %p50
    %p52 = scmp.ne.s32.totalorder %s44, %s47
    %p53 = scmp.eq.s32.totalorder %s8, 0
    %p54 = por %p52, %p53
    %p55 = scmp.ne.s32.totalorder %s44, %s47
    %p56 = scmp.eq.s32.totalorder %s13, 1
    %p57 = por %p55, %p56
    %p58 = scmp.ne.s32.totalorder %s47, %s48
    %p59 = scmp.eq.s32.totalorder %s13, 0
    %p60 = por %p58, %p59
    %p61 = scmp.ne.s32.totalorder %s47, %s48
    %p62 = scmp.eq.s32.totalorder %s14, 1
    %p63 = por %p61, %p62
    %p65 = scmp.ne.s32.totalorder %s48, %s64
    %p66 = scmp.eq.s32.totalorder %s14, 0
    %p67 = por %p65, %p66
    %s68 = ssub.s32 %s8, %s15
    %p69 = scmp.eq.s32.totalorder %s68, 0
    %s71 = sadd.s32 %s70, 1
    %s72 = scalar_select %p69, %s70, %s71
    %p75 = pneg %p69
    %p76 = scmp.eq.s32.totalorder %s8, 1
    %p77 = por %p75, %p76
    %p78 = scmp.ne.s32.totalorder %s70, %s73
    %p79 = scmp.eq.s32.totalorder %s8, 0
    %p80 = por %p78, %p79
    %p81 = scmp.ne.s32.totalorder %s70, %s73
    %p82 = scmp.eq.s32.totalorder %s13, 1
    %p83 = por %p81, %p82
    %p84 = scmp.ne.s32.totalorder %s73, %s74
    %p85 = scmp.eq.s32.totalorder %s13, 0
    %p86 = por %p84, %p85
    %p87 = scmp.ne.s32.totalorder %s73, %s74
    %p88 = scmp.eq.s32.totalorder %s14, 1
    %p89 = por %p87, %p88
    %p91 = scmp.ne.s32.totalorder %s74, %s90
    %p92 = scmp.eq.s32.totalorder %s14, 0
    %p93 = por %p91, %p92
    %p94 = scmp.le.s32.totalorder 1, %s8
    %p95 = scmp.lt.s32.totalorder %s8, 3
    %p96 = pnand %p94, %p95
    %p97 = pneg %p96
    // Predicated region
    $region9: #{network_forward.4} parent=5 // pred_check
      _
    $region10: #{network_forward.4} parent=5 // pred_check_branch
      %99 = sbr.rel (%p96) target = $region12
    $region11: #{network_forward.4} parent=5 // pred_region
      %s100 = ssub.s32 %s8, 1
    $region12: #{network_forward.4} parent=5 // pred_fallthru
      _
    %p101 = scmp.lt.s32.totalorder %s8, 2
    // Predicated region
    $region13: #{network_forward.4} parent=5 // pred_check
      %p102 = pneg %p101
    $region14: #{network_forward.4} parent=5 // pred_check_branch
      %104 = sbr.rel (%p102) target = $region16
    $region15: #{network_forward.4} parent=5 // pred_region
      // Predicated region
      $region17: #{network_forward.4} parent=15 // pred_check
        %p105 = pneg %p28
      $region18: #{network_forward.4} parent=15 // pred_check_branch
        %107 = sbr.rel (%p105) target = $region20
      $region19: #{network_forward.4} parent=15 // pred_region
        %p108 = scmp.lt.s32.totalorder %s8, 1
        %s109 = scalar_select %p108, %s8, 1
        %s110 = smul.addr %s109, 16
        %s111 = smul.addr %s110, 8
        %s112 = scalar_lea.vmem %s0, %s111
      $region20: #{network_forward.4} parent=15 // pred_fallthru
        _
      // Predicated region
      $region21: #{network_forward.4} parent=15 // pred_check
        %p113 = pneg %p54
      $region22: #{network_forward.4} parent=15 // pred_check_branch
        %115 = sbr.rel (%p113) target = $region24
      $region23: #{network_forward.4} parent=15 // pred_region
        %p116 = scmp.lt.s32.totalorder %s8, 1
        %s117 = scalar_select %p116, %s8, 1
        %s118 = scalar_lea.vmem %s1, %s117
      $region24: #{network_forward.4} parent=15 // pred_fallthru
        _
    $region16: #{network_forward.4} parent=5 // pred_fallthru
      _
    %p119 = scmp.le.s32.totalorder 1, %s8
    %p120 = scmp.lt.s32.totalorder %s8, 3
    %p121 = pnand %p119, %p120
    %p122 = pneg %p121
    // Predicated region
    $region25: #{network_forward.4} parent=5 // pred_check
      _
    $region26: #{network_forward.4} parent=5 // pred_check_branch
      %124 = sbr.rel (%p121) target = $region28
    $region27: #{network_forward.4} parent=5 // pred_region
      %s125 = ssub.s32 %s8, 1
      %p126 = scmp.lt.s32.totalorder %s13, 1
      %s127 = scalar_select %p126, %s13, 1
      %s128 = smul.addr %s127, 16
      %s129 = smul.addr %s128, 8
      %s130 = scalar_lea.vmem %s0, %s129
      %p131 = pneg %p34
      %p132 = pneg %p31
      %p133 = scmp.lt.s32.totalorder %s13, 1
      %s134 = scalar_select %p133, %s13, 1
      %s135 = scalar_lea.vmem %s1, %s134
      %p136 = pneg %p60
      %p137 = pneg %p57
      %p138 = pneg %p86
      %p139 = pneg %p83
      %p140 = scmp.lt.s32.totalorder %s13, 1
      %s141 = scalar_select %p140, %s13, 1
      %s142 = smul.addr %s141, 14
      %s143 = smul.addr %s142, 4
      %s144 = scalar_lea.vmem %s2, %s143
      %p145 = scmp.lt.s32.totalorder %s13, 1
      %s146 = scalar_select %p145, %s13, 1
      %s147 = smul.addr %s146, 16
      %s148 = smul.addr %s147, 8
      %s149 = scalar_lea.vmem %s0, %s148
      %p150 = scmp.lt.s32.totalorder %s13, 1
      %s151 = scalar_select %p150, %s13, 1
      %s152 = scalar_lea.vmem %s1, %s151
      %p153 = scmp.lt.s32.totalorder %s13, 1
      %s154 = scalar_select %p153, %s13, 1
      %s155 = smul.addr %s154, 14
      %s156 = smul.addr %s155, 4
      %s157 = scalar_lea.vmem %s2, %s156
      %v158 = vld [vmem:[%s149] sm:$0xff]
      %v159 = vld [vmem:[%s149 + $0x8] sm:$0xff]
      %v160 = vld [vmem:[%s149 + $0x10] sm:$0xff]
      %v161 = vld [vmem:[%s149 + $0x18] sm:$0xff]
      %v162 = vld [vmem:[%s149 + $0x20] sm:$0xff]
      %v163 = vld [vmem:[%s149 + $0x28] sm:$0xff]
      %v164 = vld [vmem:[%s149 + $0x30] sm:$0xff]
      %v165 = vld [vmem:[%s149 + $0x38] sm:$0xff]
      %v166 = vld [vmem:[%s149 + $0x40] sm:$0xff]
      %v167 = vld [vmem:[%s149 + $0x48] sm:$0xff]
      %v168 = vld [vmem:[%s149 + $0x50] sm:$0xff]
      %v169 = vld [vmem:[%s149 + $0x58] sm:$0xff]
      %v170 = vld [vmem:[%s149 + $0x60] sm:$0xff]
      %v171 = vld [vmem:[%s149 + $0x68] sm:$0xff]
      %v172 = vld [vmem:[%s149 + $0x70] sm:$0xff]
      %v173 = vld [vmem:[%s149 + $0x78] sm:$0xff]
      %v174 = vld [vmem:[%s152] sm:$0x1]
      %v176 = vperm.slane %v174, 0
      %v178 = vmul.f32 %v158, %v176
      %v179 = vmul.f32 %v159, %v176
      %v180 = vmul.f32 %v160, %v176
      %v181 = vmul.f32 %v161, %v176
      %v182 = vmul.f32 %v162, %v176
      %v183 = vmul.f32 %v163, %v176
      %v184 = vmul.f32 %v164, %v176
      %v185 = vmul.f32 %v165, %v176
      %v186 = vmul.f32 %v166, %v176
      %v187 = vmul.f32 %v167, %v176
      %v188 = vmul.f32 %v168, %v176
      %v189 = vmul.f32 %v169, %v176
      %v190 = vmul.f32 %v170, %v176
      %v191 = vmul.f32 %v171, %v176
      %v192 = vmul.f32 %v172, %v176
      %v193 = vmul.f32 %v173, %v176
      %v194 = vpack.c.bf16 %v179, %v178
      %v195 = vpack.c.bf16 %v181, %v180
      %v196 = vpack.c.bf16 %v183, %v182
      %v197 = vpack.c.bf16 %v185, %v184
      %v198 = vpack.c.bf16 %v187, %v186
      %v199 = vpack.c.bf16 %v189, %v188
      %v200 = vpack.c.bf16 %v191, %v190
      %v201 = vpack.c.bf16 %v193, %v192
      %v202 = vpack.c.bf16 %v159, %v158
      %v203 = vpack.c.bf16 %v161, %v160
      %v204 = vpack.c.bf16 %v163, %v162
      %v205 = vpack.c.bf16 %v165, %v164
      %v206 = vpack.c.bf16 %v167, %v166
      %v207 = vpack.c.bf16 %v169, %v168
      %v208 = vpack.c.bf16 %v171, %v170
      %v209 = vpack.c.bf16 %v173, %v172
      %210 = vmatpush.bf16.xpose.msra.mxu0 %v209
      %211 = vmatpush.bf16.xpose.msra.mxu0 %v208
      %212 = vmatpush.bf16.xpose.msra.mxu0 %v207
      %213 = vmatpush.bf16.xpose.msra.mxu0 %v206
      %214 = vmatpush.bf16.xpose.msra.mxu0 %v205
      %215 = vmatpush.bf16.xpose.msra.mxu0 %v204
      %216 = vmatpush.bf16.xpose.msra.mxu0 %v203
      %217 = vmatpush.bf16.xpose.msra.mxu0 %v202
      %218 = vmatmul.bf16.gmra.mxu0 %v194
      %v219 = vpop.f32.mrf.mxu0
      %v220 = vadd.f32 0.0, %v219
      %v221 = vpop.f32.mrf.mxu0
      %v222 = vadd.f32 0.0, %v221
      %223 = vmatmul.bf16.gmra.mxu0 %v195
      %v224 = vpop.f32.mrf.mxu0
      %v225 = vadd.f32 0.0, %v224
      %v226 = vpop.f32.mrf.mxu0
      %v227 = vadd.f32 0.0, %v226
      %228 = vmatmul.bf16.gmra.mxu0 %v196
      %v229 = vpop.f32.mrf.mxu0
      %v230 = vadd.f32 0.0, %v229
      %v231 = vpop.f32.mrf.mxu0
      %v232 = vadd.f32 0.0, %v231
      %233 = vmatmul.bf16.gmra.mxu0 %v197
      %v234 = vpop.f32.mrf.mxu0
      %v235 = vadd.f32 0.0, %v234
      %v236 = vpop.f32.mrf.mxu0
      %v237 = vadd.f32 0.0, %v236
      %238 = vmatmul.bf16.gmra.mxu0 %v198
      %v239 = vpop.f32.mrf.mxu0
      %v240 = vadd.f32 0.0, %v239
      %v241 = vpop.f32.mrf.mxu0
      %v242 = vadd.f32 0.0, %v241
      %243 = vmatmul.bf16.gmra.mxu0 %v199
      %v244 = vpop.f32.mrf.mxu0
      %v245 = vadd.f32 0.0, %v244
      %v246 = vpop.f32.mrf.mxu0
      %v247 = vadd.f32 0.0, %v246
      %248 = vmatmul.bf16.gmra.mxu0 %v200
      %v249 = vpop.f32.mrf.mxu0
      %v250 = vadd.f32 0.0, %v249
      %v251 = vpop.f32.mrf.mxu0
      %v252 = vadd.f32 0.0, %v251
      %253 = vmatmul.bf16.gmra.mxu0 %v201
      %v254 = vpop.f32.mrf.mxu0
      %v255 = vpop.f32.mrf.mxu0
      %256 = vdwg.mxu0
      %v257 = vpack.c.bf16 %v220, %v220
      %v258 = vpack.c.bf16 %v222, %v222
      %v259 = vpack.c.bf16 %v225, %v225
      %v260 = vpack.c.bf16 %v227, %v227
      %v261 = vpack.c.bf16 %v230, %v230
      %v262 = vpack.c.bf16 %v232, %v232
      %v263 = vpack.c.bf16 %v235, %v235
      %v264 = vpack.c.bf16 %v237, %v237
      %v265 = vpack.c.bf16 %v240, %v240
      %v266 = vpack.c.bf16 %v242, %v242
      %v267 = vpack.c.bf16 %v245, %v245
      %v268 = vpack.c.bf16 %v247, %v247
      %v269 = vpack.c.bf16 %v250, %v250
      %v270 = vpack.c.bf16 %v252, %v252
      %271 = vst [vmem:[%s157] sm:$0xf] %v257
      %272 = vst [vmem:[%s157 + $0x4] sm:$0xf] %v258
      %273 = vst [vmem:[%s157 + $0x8] sm:$0xf] %v259
      %274 = vst [vmem:[%s157 + $0xc] sm:$0xf] %v260
      %275 = vst [vmem:[%s157 + $0x10] sm:$0xf] %v261
      %276 = vst [vmem:[%s157 + $0x14] sm:$0xf] %v262
      %277 = vst [vmem:[%s157 + $0x18] sm:$0xf] %v263
      %278 = vst [vmem:[%s157 + $0x1c] sm:$0xf] %v264
      %279 = vst [vmem:[%s157 + $0x20] sm:$0xf] %v265
      %280 = vst [vmem:[%s157 + $0x24] sm:$0xf] %v266
      %281 = vst [vmem:[%s157 + $0x28] sm:$0xf] %v267
      %282 = vst [vmem:[%s157 + $0x2c] sm:$0xf] %v268
      %283 = vst [vmem:[%s157 + $0x30] sm:$0xf] %v269
      %284 = vst [vmem:[%s157 + $0x34] sm:$0xf] %v270
      %p285 = scmp.lt.s32.totalorder %s13, 1
      %s286 = scalar_select %p285, %s13, 1
      %s287 = smul.addr %s286, 14
      %s288 = smul.addr %s287, 4
      %s289 = scalar_lea.vmem %s2, %s288
      // Predicated region
      $region29: #{network_forward.4} parent=27 // pred_check
        %p290 = pneg %p83
      $region30: #{network_forward.4} parent=27 // pred_check_branch
        %292 = sbr.rel (%p290) target = $region32
      $region31: #{network_forward.4} parent=27 // pred_region
        _
      $region32: #{network_forward.4} parent=27 // pred_fallthru
        _
    $region28: #{network_forward.4} parent=5 // pred_fallthru
      _
    %p293 = scmp.le.s32.totalorder 2, %s8
    // Predicated region
    $region33: #{network_forward.4} parent=5 // pred_check
      %p294 = pneg %p293
    $region34: #{network_forward.4} parent=5 // pred_check_branch
      %296 = sbr.rel (%p294) target = $region36
    $region35: #{network_forward.4} parent=5 // pred_region
      %s297 = ssub.s32 %s8, 2
      // Predicated region
      $region37: #{network_forward.4} parent=35 // pred_check
        %p298 = pneg %p89
      $region38: #{network_forward.4} parent=35 // pred_check_branch
        %300 = sbr.rel (%p298) target = $region40
      $region39: #{network_forward.4} parent=35 // pred_region
        %p301 = scmp.lt.s32.totalorder %s14, 1
        %s302 = scalar_select %p301, %s14, 1
        %s303 = smul.addr %s302, 14
        %s304 = smul.addr %s303, 4
        %s305 = scalar_lea.vmem %s2, %s304
      $region40: #{network_forward.4} parent=35 // pred_fallthru
        _
    $region36: #{network_forward.4} parent=5 // pred_fallthru
      _
  $region6: #{network_forward.4} parent=0 // loop_footer
    %s12 = sadd.s32 1, %s8
  $region7: #{network_forward.4} parent=0 // loop_footer_branch
    %7 = sbr.rel target = $region3
  $region8: #{network_forward.4} parent=0 // loop_exit
    _

// kernel: network_forward.5
$region0: #{network_forward.5}
  #allocation0 [shape = 'u32[]', space=smem, size = 0x4, offset = 0x4, fixed_abs, tag = 'smem constant byte address 0x4 - core index']
  #allocation1 [shape = 'u32[72,128]{1,0:T(1,128)}', space=vmem, size = 0x9000, scoped, tag = 'internal scratch']
  %s0 = inlined_call_operand.vmem [shape: bf16[2,14336], index: 0, kind: input, shape index: {}]
  %s1 = inlined_call_operand.vmem [shape: bf16[14336,128], index: 1, kind: input, shape index: {}]
  %s2 = inlined_call_operand.vmem [shape: f32[1,128], index: 2, kind: input, shape index: {}]
  %s3 = inlined_call_operand.hbm [shape: f32[2,128], index: 3, kind: output, shape index: {}]
  %s4 = sld [smem:[#allocation0]]
  $region49: #{network_forward.5} parent=0
    _
  %s6 = ssub.s32 1, %s4
  %s7 = scalar_select 0, %s6, %s4
  $region1: #{network_forward.5} parent=0
    #allocation2 [shape = 'u8[1024]{0}', space=vmem, size = 0x400, scoped, tag = 'output window, operand 0, single buffered']
    #allocation3 [shape = 's32[2]{0}', space=sflag, size = 0x8, scoped, tag = 'scoped memory for network_forward.5']
    %8 = vsyncpa [#allocation3], 0
    loop: start=0, step=1, limit=4
    $region2: #{network_forward.5} parent=1 // loop_pre_header
      _
    $region3: #{network_forward.5} parent=1 // loop_header
      %s10 = sphi 0, %s14
      %p11 = scmp.ge.s32.totalorder %s10, 4
      %s20 = sphi 0, %s22
      %s23 = sphi 0, %s20
      %s24 = sphi 0, %s23
      %s40 = sphi 0, %s24
      %s46 = sphi 0, %s48
      %s49 = sphi 0, %s46
      %s50 = sphi 0, %s49
      %s66 = sphi 0, %s50
      %s70 = sphi 0, %s70
      %s72 = sphi 0, %s70
      %s73 = sphi 0, %s72
      %s87 = sphi 0, %s73
      %s91 = sphi 0, %s91
      %s93 = sphi 0, %s91
      %s94 = sphi 0, %s93
      %s108 = sphi 0, %s94
    $region4: #{network_forward.5} parent=1 // loop_header_branch
      %13 = sbr.rel (%p11) target = $region8
    $region5: #{network_forward.5} parent=1 // loop_body
      %s15 = ssub.s32 %s10, 1
      %s16 = ssub.s32 %s10, 2
      %s17 = sadd.s32 %s10, 1
      %s18 = ssub.s32 %s10, %s17
      %p19 = scmp.eq.s32.totalorder %s18, 0
      %s21 = sadd.s32 %s20, 1
      %s22 = scalar_select %p19, %s20, %s21
      %p25 = pneg %p19
      %p26 = scmp.eq.s32.totalorder %s10, 1
      %p27 = por %p25, %p26
      %p28 = scmp.ne.s32.totalorder %s20, %s23
      %p29 = scmp.eq.s32.totalorder %s10, 0
      %p30 = por %p28, %p29
      %p31 = scmp.ne.s32.totalorder %s20, %s23
      %p32 = scmp.eq.s32.totalorder %s15, 1
      %p33 = por %p31, %p32
      %p34 = scmp.ne.s32.totalorder %s23, %s24
      %p35 = scmp.eq.s32.totalorder %s15, 0
      %p36 = por %p34, %p35
      %p37 = scmp.ne.s32.totalorder %s23, %s24
      %p38 = scmp.eq.s32.totalorder %s16, 1
      %p39 = por %p37, %p38
      %p41 = scmp.ne.s32.totalorder %s24, %s40
      %p42 = scmp.eq.s32.totalorder %s16, 0
      %p43 = por %p41, %p42
      %s44 = ssub.s32 %s10, %s17
      %p45 = scmp.eq.s32.totalorder %s44, 0
      %s47 = sadd.s32 %s46, 1
      %s48 = scalar_select %p45, %s46, %s47
      %p51 = pneg %p45
      %p52 = scmp.eq.s32.totalorder %s10, 1
      %p53 = por %p51, %p52
      %p54 = scmp.ne.s32.totalorder %s46, %s49
      %p55 = scmp.eq.s32.totalorder %s10, 0
      %p56 = por %p54, %p55
      %p57 = scmp.ne.s32.totalorder %s46, %s49
      %p58 = scmp.eq.s32.totalorder %s15, 1
      %p59 = por %p57, %p58
      %p60 = scmp.ne.s32.totalorder %s49, %s50
      %p61 = scmp.eq.s32.totalorder %s15, 0
      %p62 = por %p60, %p61
      %p63 = scmp.ne.s32.totalorder %s49, %s50
      %p64 = scmp.eq.s32.totalorder %s16, 1
      %p65 = por %p63, %p64
      %p67 = scmp.ne.s32.totalorder %s50, %s66
      %p68 = scmp.eq.s32.totalorder %s16, 0
      %p69 = por %p67, %p68
      %s71 = sadd.s32 %s70, 1
      %p74 = scmp.eq.s32.totalorder %s10, 1
      %p75 = scmp.ne.s32.totalorder %s70, %s72
      %p76 = scmp.eq.s32.totalorder %s10, 0
      %p77 = por %p75, %p76
      %p78 = scmp.ne.s32.totalorder %s70, %s72
      %p79 = scmp.eq.s32.totalorder %s15, 1
      %p80 = por %p78, %p79
      %p81 = scmp.ne.s32.totalorder %s72, %s73
      %p82 = scmp.eq.s32.totalorder %s15, 0
      %p83 = por %p81, %p82
      %p84 = scmp.ne.s32.totalorder %s72, %s73
      %p85 = scmp.eq.s32.totalorder %s16, 1
      %p86 = por %p84, %p85
      %p88 = scmp.ne.s32.totalorder %s73, %s87
      %p89 = scmp.eq.s32.totalorder %s16, 0
      %p90 = por %p88, %p89
      %s92 = sadd.s32 %s91, 1
      %p95 = scmp.eq.s32.totalorder %s10, 1
      %p96 = scmp.ne.s32.totalorder %s91, %s93
      %p97 = scmp.eq.s32.totalorder %s10, 0
      %p98 = por %p96, %p97
      %p99 = scmp.ne.s32.totalorder %s91, %s93
      %p100 = scmp.eq.s32.totalorder %s15, 1
      %p101 = por %p99, %p100
      %p102 = scmp.ne.s32.totalorder %s93, %s94
      %p103 = scmp.eq.s32.totalorder %s15, 0
      %p104 = por %p102, %p103
      %p105 = scmp.ne.s32.totalorder %s93, %s94
      %p106 = scmp.eq.s32.totalorder %s16, 1
      %p107 = por %p105, %p106
      %p109 = scmp.ne.s32.totalorder %s94, %s108
      %p110 = scmp.eq.s32.totalorder %s16, 0
      %p111 = por %p109, %p110
      %p112 = scmp.le.s32.totalorder 1, %s10
      %p113 = scmp.lt.s32.totalorder %s10, 3
      %p114 = pnand %p112, %p113
      %p115 = pneg %p114
      // Predicated region
      $region9: #{network_forward.5} parent=5 // pred_check
        _
      $region10: #{network_forward.5} parent=5 // pred_check_branch
        %117 = sbr.rel (%p114) target = $region12
      $region11: #{network_forward.5} parent=5 // pred_region
        %s118 = ssub.s32 %s10, 1
        // Predicated region
        $region13: #{network_forward.5} parent=11 // pred_check
          %p119 = pneg %p83
        $region14: #{network_forward.5} parent=11 // pred_check_branch
          %121 = sbr.rel (%p119) target = $region16
        $region15: #{network_forward.5} parent=11 // pred_region
          _
        $region16: #{network_forward.5} parent=11 // pred_fallthru
          _
      $region12: #{network_forward.5} parent=5 // pred_fallthru
        _
      %p122 = scmp.lt.s32.totalorder %s10, 2
      // Predicated region
      $region17: #{network_forward.5} parent=5 // pred_check
        %p123 = pneg %p122
      $region18: #{network_forward.5} parent=5 // pred_check_branch
        %125 = sbr.rel (%p123) target = $region20
      $region19: #{network_forward.5} parent=5 // pred_region
        // Predicated region
        $region21: #{network_forward.5} parent=19 // pred_check
          %p126 = pneg %p30
        $region22: #{network_forward.5} parent=19 // pred_check_branch
          %128 = sbr.rel (%p126) target = $region24
        $region23: #{network_forward.5} parent=19 // pred_region
          %s129 = smul.u32 56, %s10
          %p130 = scmp.lt.s32.totalorder %s129, 111
          %s131 = scalar_select %p130, %s129, 111
          %s132 = scalar_lea.vmem %s0, %s131
          %s133 = smul.u32 56, %s10
        $region24: #{network_forward.5} parent=19 // pred_fallthru
          _
        // Predicated region
        $region25: #{network_forward.5} parent=19 // pred_check
          %p134 = pneg %p56
        $region26: #{network_forward.5} parent=19 // pred_check_branch
          %136 = sbr.rel (%p134) target = $region28
        $region27: #{network_forward.5} parent=19 // pred_region
          %s137 = smul.u32 896, %s10
          %p138 = scmp.lt.s32.totalorder %s137, 1791
          %s139 = scalar_select %p138, %s137, 1791
          %s140 = smul.addr %s139, 4
          %s141 = scalar_lea.vmem %s1, %s140
          %s142 = smul.u32 896, %s10
        $region28: #{network_forward.5} parent=19 // pred_fallthru
          _
      $region20: #{network_forward.5} parent=5 // pred_fallthru
        _
      %p143 = scmp.le.s32.totalorder 1, %s10
      %p144 = scmp.lt.s32.totalorder %s10, 3
      %p145 = pnand %p143, %p144
      %p146 = pneg %p145
      // Predicated region
      $region29: #{network_forward.5} parent=5 // pred_check
        _
      $region30: #{network_forward.5} parent=5 // pred_check_branch
        %148 = sbr.rel (%p145) target = $region32
      $region31: #{network_forward.5} parent=5 // pred_region
        %s149 = ssub.s32 %s10, 1
        %s150 = smul.u32 56, %s15
        %p151 = scmp.lt.s32.totalorder %s150, 111
        %s152 = scalar_select %p151, %s150, 111
        %s153 = scalar_lea.vmem %s0, %s152
        %p154 = pneg %p36
        %p155 = pneg %p33
        %s156 = smul.u32 896, %s15
        %p157 = scmp.lt.s32.totalorder %s156, 1791
        %s158 = scalar_select %p157, %s156, 1791
        %s159 = smul.addr %s158, 4
        %s160 = scalar_lea.vmem %s1, %s159
        %p161 = pneg %p62
        %p162 = pneg %p59
        %p163 = pneg %p83
        %p164 = pneg %p80
        %p165 = pneg %p104
        %p166 = pneg %p101
        %s167 = smul.u32 56, %s15
        %p168 = scmp.lt.s32.totalorder %s167, 111
        %s169 = scalar_select %p168, %s167, 111
        %s170 = scalar_lea.vmem %s0, %s169
        %s171 = smul.u32 56, %s15
        %s172 = smul.u32 896, %s15
        %p173 = scmp.lt.s32.totalorder %s172, 1791
        %s174 = scalar_select %p173, %s172, 1791
        %s175 = smul.addr %s174, 4
        %s176 = scalar_lea.vmem %s1, %s175
        %s177 = smul.u32 896, %s15
        %p178 = scmp.eq.s32.totalorder %s15, 0
        // Predicated region
        $region33: #{network_forward.5} parent=31 // pred_check
          %p179 = pneg %p178
        $region34: #{network_forward.5} parent=31 // pred_check_branch
          %181 = sbr.rel (%p179) target = $region36
        $region35: #{network_forward.5} parent=31 // pred_region
          %v182 = vld [vmem:[%s2] sm:$0x1]
          %v184 = vperm.slane %v182, 0
          %186 = vst [vmem:[#allocation2] sm:$0x3] %v184
        $region36: #{network_forward.5} parent=31 // pred_fallthru
          _
        %v187 = vld [vmem:[#allocation2] sm:$0x3]
        %v188 = vld [vmem:[%s170] sm:$0xff]
        %v189 = vld [vmem:[%s170 + $0x8] sm:$0xff]
        %v190 = vld [vmem:[%s170 + $0x10] sm:$0xff]
        %v191 = vld [vmem:[%s170 + $0x18] sm:$0xff]
        %v192 = vld [vmem:[%s170 + $0x20] sm:$0xff]
        %v193 = vld [vmem:[%s170 + $0x28] sm:$0xff]
        %v194 = vld [vmem:[%s170 + $0x30] sm:$0xff]
        %v195 = vld [vmem:[%s176] sm:$0xf]
        %v196 = vld [vmem:[%s176 + $0x4] sm:$0xf]
        %v197 = vld [vmem:[%s176 + $0x8] sm:$0xf]
        %v198 = vld [vmem:[%s176 + $0xc] sm:$0xf]
        %v199 = vld [vmem:[%s176 + $0x10] sm:$0xf]
        %v200 = vld [vmem:[%s176 + $0x14] sm:$0xf]
        %v201 = vld [vmem:[%s176 + $0x18] sm:$0xf]
        %v202 = vld [vmem:[%s176 + $0x1c] sm:$0xf]
        %v203 = vld [vmem:[%s176 + $0x20] sm:$0xf]
        %v204 = vld [vmem:[%s176 + $0x24] sm:$0xf]
        %v205 = vld [vmem:[%s176 + $0x28] sm:$0xf]
        %v206 = vld [vmem:[%s176 + $0x2c] sm:$0xf]
        %v207 = vld [vmem:[%s176 + $0x30] sm:$0xf]
        %v208 = vld [vmem:[%s176 + $0x34] sm:$0xf]
        %v209 = vld [vmem:[%s176 + $0x38] sm:$0xf]
        %v210 = vld [vmem:[%s176 + $0x3c] sm:$0xf]
        %v211 = vld [vmem:[%s176 + $0x40] sm:$0xf]
        %v212 = vld [vmem:[%s176 + $0x44] sm:$0xf]
        %v213 = vld [vmem:[%s176 + $0x48] sm:$0xf]
        %v214 = vld [vmem:[%s176 + $0x4c] sm:$0xf]
        %v215 = vld [vmem:[%s176 + $0x50] sm:$0xf]
        %v216 = vld [vmem:[%s176 + $0x54] sm:$0xf]
        %v217 = vld [vmem:[%s176 + $0x58] sm:$0xf]
        %v218 = vld [vmem:[%s176 + $0x5c] sm:$0xf]
        %v219 = vld [vmem:[%s176 + $0x60] sm:$0xf]
        %v220 = vld [vmem:[%s176 + $0x64] sm:$0xf]
        %v221 = vld [vmem:[%s176 + $0x68] sm:$0xf]
        %v222 = vld [vmem:[%s176 + $0x6c] sm:$0xf]
        %v223 = vld [vmem:[%s176 + $0x70] sm:$0xf]
        %v224 = vld [vmem:[%s176 + $0x74] sm:$0xf]
        %v225 = vld [vmem:[%s176 + $0x78] sm:$0xf]
        %v226 = vld [vmem:[%s176 + $0x7c] sm:$0xf]
        %v227 = vld [vmem:[%s176 + $0x80] sm:$0xf]
        %v228 = vld [vmem:[%s176 + $0x84] sm:$0xf]
        %v229 = vld [vmem:[%s176 + $0x88] sm:$0xf]
        %v230 = vld [vmem:[%s176 + $0x8c] sm:$0xf]
        %v231 = vld [vmem:[%s176 + $0x90] sm:$0xf]
        %v232 = vld [vmem:[%s176 + $0x94] sm:$0xf]
        %v233 = vld [vmem:[%s176 + $0x98] sm:$0xf]
        %v234 = vld [vmem:[%s176 + $0x9c] sm:$0xf]
        %v235 = vld [vmem:[%s176 + $0xa0] sm:$0xf]
        %v236 = vld [vmem:[%s176 + $0xa4] sm:$0xf]
        %v237 = vld [vmem:[%s176 + $0xa8] sm:$0xf]
        %v238 = vld [vmem:[%s176 + $0xac] sm:$0xf]
        %v239 = vld [vmem:[%s176 + $0xb0] sm:$0xf]
        %v240 = vld [vmem:[%s176 + $0xb4] sm:$0xf]
        %v241 = vld [vmem:[%s176 + $0xb8] sm:$0xf]
        %v242 = vld [vmem:[%s176 + $0xbc] sm:$0xf]
        %v243 = vld [vmem:[%s176 + $0xc0] sm:$0xf]
        %v244 = vld [vmem:[%s176 + $0xc4] sm:$0xf]
        %v245 = vld [vmem:[%s176 + $0xc8] sm:$0xf]
        %v246 = vld [vmem:[%s176 + $0xcc] sm:$0xf]
        %v247 = vld [vmem:[%s176 + $0xd0] sm:$0xf]
        %v248 = vld [vmem:[%s176 + $0xd4] sm:$0xf]
        %v249 = vld [vmem:[%s176 + $0xd8] sm:$0xf]
        %v250 = vld [vmem:[%s176 + $0xdc] sm:$0xf]
        %v251 = vld [vmem:[%s176 + $0xe0] sm:$0xf]
        %v252 = vld [vmem:[%s176 + $0xe4] sm:$0xf]
        %v253 = vld [vmem:[%s176 + $0xe8] sm:$0xf]
        %v254 = vld [vmem:[%s176 + $0xec] sm:$0xf]
        %v255 = vld [vmem:[%s176 + $0xf0] sm:$0xf]
        %v256 = vld [vmem:[%s176 + $0xf4] sm:$0xf]
        %v257 = vld [vmem:[%s176 + $0xf8] sm:$0xf]
        %v258 = vld [vmem:[%s176 + $0xfc] sm:$0xf]
        %v259 = vld [vmem:[%s176 + $0x100] sm:$0xf]
        %v260 = vld [vmem:[%s176 + $0x104] sm:$0xf]
        %v261 = vld [vmem:[%s176 + $0x108] sm:$0xf]
        %v262 = vld [vmem:[%s176 + $0x10c] sm:$0xf]
        %v263 = vld [vmem:[%s176 + $0x110] sm:$0xf]
        %v264 = vld [vmem:[%s176 + $0x114] sm:$0xf]
        %v265 = vld [vmem:[%s176 + $0x118] sm:$0xf]
        %v266 = vld [vmem:[%s176 + $0x11c] sm:$0xf]
        %v267 = vld [vmem:[%s176 + $0x120] sm:$0xf]
        %v268 = vld [vmem:[%s176 + $0x124] sm:$0xf]
        %v269 = vld [vmem:[%s176 + $0x128] sm:$0xf]
        %v270 = vld [vmem:[%s176 + $0x12c] sm:$0xf]
        %v271 = vld [vmem:[%s176 + $0x130] sm:$0xf]
        %v272 = vld [vmem:[%s176 + $0x134] sm:$0xf]
        %v273 = vld [vmem:[%s176 + $0x138] sm:$0xf]
        %v274 = vld [vmem:[%s176 + $0x13c] sm:$0xf]
        %v275 = vld [vmem:[%s176 + $0x140] sm:$0xf]
        %v276 = vld [vmem:[%s176 + $0x144] sm:$0xf]
        %v277 = vld [vmem:[%s176 + $0x148] sm:$0xf]
        %v278 = vld [vmem:[%s176 + $0x14c] sm:$0xf]
        %v279 = vld [vmem:[%s176 + $0x150] sm:$0xf]
        %v280 = vld [vmem:[%s176 + $0x154] sm:$0xf]
        %v281 = vld [vmem:[%s176 + $0x158] sm:$0xf]
        %v282 = vld [vmem:[%s176 + $0x15c] sm:$0xf]
        %v283 = vld [vmem:[%s176 + $0x160] sm:$0xf]
        %v284 = vld [vmem:[%s176 + $0x164] sm:$0xf]
        %v285 = vld [vmem:[%s176 + $0x168] sm:$0xf]
        %v286 = vld [vmem:[%s176 + $0x16c] sm:$0xf]
        %v287 = vld [vmem:[%s176 + $0x170] sm:$0xf]
        %v288 = vld [vmem:[%s176 + $0x174] sm:$0xf]
        %v289 = vld [vmem:[%s176 + $0x178] sm:$0xf]
        %v290 = vld [vmem:[%s176 + $0x17c] sm:$0xf]
        %v291 = vld [vmem:[%s176 + $0x180] sm:$0xf]
        %v292 = vld [vmem:[%s176 + $0x184] sm:$0xf]
        %v293 = vld [vmem:[%s176 + $0x188] sm:$0xf]
        %v294 = vld [vmem:[%s176 + $0x18c] sm:$0xf]
        %v295 = vld [vmem:[%s176 + $0x190] sm:$0xf]
        %v296 = vld [vmem:[%s176 + $0x194] sm:$0xf]
        %v297 = vld [vmem:[%s176 + $0x198] sm:$0xf]
        %v298 = vld [vmem:[%s176 + $0x19c] sm:$0xf]
        %v299 = vld [vmem:[%s176 + $0x1a0] sm:$0xf]
        %v300 = vld [vmem:[%s176 + $0x1a4] sm:$0xf]
        %v301 = vld [vmem:[%s176 + $0x1a8] sm:$0xf]
        %v302 = vld [vmem:[%s176 + $0x1ac] sm:$0xf]
        %v303 = vld [vmem:[%s176 + $0x1b0] sm:$0xf]
        %v304 = vld [vmem:[%s176 + $0x1b4] sm:$0xf]
        %v305 = vld [vmem:[%s176 + $0x1b8] sm:$0xf]
        %v306 = vld [vmem:[%s176 + $0x1bc] sm:$0xf]
        %v307 = vld [vmem:[%s176 + $0x1c0] sm:$0xf]
        %v308 = vld [vmem:[%s176 + $0x1c4] sm:$0xf]
        %v309 = vld [vmem:[%s176 + $0x1c8] sm:$0xf]
        %v310 = vld [vmem:[%s176 + $0x1cc] sm:$0xf]
        %v311 = vld [vmem:[%s176 + $0x1d0] sm:$0xf]
        %v312 = vld [vmem:[%s176 + $0x1d4] sm:$0xf]
        %v313 = vld [vmem:[%s176 + $0x1d8] sm:$0xf]
        %v314 = vld [vmem:[%s176 + $0x1dc] sm:$0xf]
        %v315 = vld [vmem:[%s176 + $0x1e0] sm:$0xf]
        %v316 = vld [vmem:[%s176 + $0x1e4] sm:$0xf]
        %v317 = vld [vmem:[%s176 + $0x1e8] sm:$0xf]
        %v318 = vld [vmem:[%s176 + $0x1ec] sm:$0xf]
        %v319 = vld [vmem:[%s176 + $0x1f0] sm:$0xf]
        %v320 = vld [vmem:[%s176 + $0x1f4] sm:$0xf]
        %v321 = vld [vmem:[%s176 + $0x1f8] sm:$0xf]
        %v322 = vld [vmem:[%s176 + $0x1fc] sm:$0xf]
        %v323 = vld [vmem:[%s176 + $0x200] sm:$0xf]
        %v324 = vld [vmem:[%s176 + $0x204] sm:$0xf]
        %v325 = vld [vmem:[%s176 + $0x208] sm:$0xf]
        %v326 = vld [vmem:[%s176 + $0x20c] sm:$0xf]
        %v327 = vld [vmem:[%s176 + $0x210] sm:$0xf]
        %v328 = vld [vmem:[%s176 + $0x214] sm:$0xf]
        %v329 = vld [vmem:[%s176 + $0x218] sm:$0xf]
        %v330 = vld [vmem:[%s176 + $0x21c] sm:$0xf]
        %v331 = vld [vmem:[%s176 + $0x220] sm:$0xf]
        %v332 = vld [vmem:[%s176 + $0x224] sm:$0xf]
        %v333 = vld [vmem:[%s176 + $0x228] sm:$0xf]
        %v334 = vld [vmem:[%s176 + $0x22c] sm:$0xf]
        %v335 = vld [vmem:[%s176 + $0x230] sm:$0xf]
        %v336 = vld [vmem:[%s176 + $0x234] sm:$0xf]
        %v337 = vld [vmem:[%s176 + $0x238] sm:$0xf]
        %v338 = vld [vmem:[%s176 + $0x23c] sm:$0xf]
        %v339 = vld [vmem:[%s176 + $0x240] sm:$0xf]
        %v340 = vld [vmem:[%s176 + $0x244] sm:$0xf]
        %v341 = vld [vmem:[%s176 + $0x248] sm:$0xf]
        %v342 = vld [vmem:[%s176 + $0x24c] sm:$0xf]
        %v343 = vld [vmem:[%s176 + $0x250] sm:$0xf]
        %v344 = vld [vmem:[%s176 + $0x254] sm:$0xf]
        %v345 = vld [vmem:[%s176 + $0x258] sm:$0xf]
        %v346 = vld [vmem:[%s176 + $0x25c] sm:$0xf]
        %v347 = vld [vmem:[%s176 + $0x260] sm:$0xf]
        %v348 = vld [vmem:[%s176 + $0x264] sm:$0xf]
        %v349 = vld [vmem:[%s176 + $0x268] sm:$0xf]
        %v350 = vld [vmem:[%s176 + $0x26c] sm:$0xf]
        %v351 = vld [vmem:[%s176 + $0x270] sm:$0xf]
        %v352 = vld [vmem:[%s176 + $0x274] sm:$0xf]
        %v353 = vld [vmem:[%s176 + $0x278] sm:$0xf]
        %v354 = vld [vmem:[%s176 + $0x27c] sm:$0xf]
        %v355 = vld [vmem:[%s176 + $0x280] sm:$0xf]
        %v356 = vld [vmem:[%s176 + $0x284] sm:$0xf]
        %v357 = vld [vmem:[%s176 + $0x288] sm:$0xf]
        %v358 = vld [vmem:[%s176 + $0x28c] sm:$0xf]
        %v359 = vld [vmem:[%s176 + $0x290] sm:$0xf]
        %v360 = vld [vmem:[%s176 + $0x294] sm:$0xf]
        %v361 = vld [vmem:[%s176 + $0x298] sm:$0xf]
        %v362 = vld [vmem:[%s176 + $0x29c] sm:$0xf]
        %v363 = vld [vmem:[%s176 + $0x2a0] sm:$0xf]
        %v364 = vld [vmem:[%s176 + $0x2a4] sm:$0xf]
        %v365 = vld [vmem:[%s176 + $0x2a8] sm:$0xf]
        %v366 = vld [vmem:[%s176 + $0x2ac] sm:$0xf]
        %v367 = vld [vmem:[%s176 + $0x2b0] sm:$0xf]
        %v368 = vld [vmem:[%s176 + $0x2b4] sm:$0xf]
        %v369 = vld [vmem:[%s176 + $0x2b8] sm:$0xf]
        %v370 = vld [vmem:[%s176 + $0x2bc] sm:$0xf]
        %v371 = vld [vmem:[%s176 + $0x2c0] sm:$0xf]
        %v372 = vld [vmem:[%s176 + $0x2c4] sm:$0xf]
        %v373 = vld [vmem:[%s176 + $0x2c8] sm:$0xf]
        %v374 = vld [vmem:[%s176 + $0x2cc] sm:$0xf]
        %v375 = vld [vmem:[%s176 + $0x2d0] sm:$0xf]
        %v376 = vld [vmem:[%s176 + $0x2d4] sm:$0xf]
        %v377 = vld [vmem:[%s176 + $0x2d8] sm:$0xf]
        %v378 = vld [vmem:[%s176 + $0x2dc] sm:$0xf]
        %v379 = vld [vmem:[%s176 + $0x2e0] sm:$0xf]
        %v380 = vld [vmem:[%s176 + $0x2e4] sm:$0xf]
        %v381 = vld [vmem:[%s176 + $0x2e8] sm:$0xf]
        %v382 = vld [vmem:[%s176 + $0x2ec] sm:$0xf]
        %v383 = vld [vmem:[%s176 + $0x2f0] sm:$0xf]
        %v384 = vld [vmem:[%s176 + $0x2f4] sm:$0xf]
        %v385 = vld [vmem:[%s176 + $0x2f8] sm:$0xf]
        %v386 = vld [vmem:[%s176 + $0x2fc] sm:$0xf]
        %v387 = vld [vmem:[%s176 + $0x300] sm:$0xf]
        %v388 = vld [vmem:[%s176 + $0x304] sm:$0xf]
        %v389 = vld [vmem:[%s176 + $0x308] sm:$0xf]
        %v390 = vld [vmem:[%s176 + $0x30c] sm:$0xf]
        %v391 = vld [vmem:[%s176 + $0x310] sm:$0xf]
        %v392 = vld [vmem:[%s176 + $0x314] sm:$0xf]
        %v393 = vld [vmem:[%s176 + $0x318] sm:$0xf]
        %v394 = vld [vmem:[%s176 + $0x31c] sm:$0xf]
        %v395 = vld [vmem:[%s176 + $0x320] sm:$0xf]
        %v396 = vld [vmem:[%s176 + $0x324] sm:$0xf]
        %v397 = vld [vmem:[%s176 + $0x328] sm:$0xf]
        %v398 = vld [vmem:[%s176 + $0x32c] sm:$0xf]
        %v399 = vld [vmem:[%s176 + $0x330] sm:$0xf]
        %v400 = vld [vmem:[%s176 + $0x334] sm:$0xf]
        %v401 = vld [vmem:[%s176 + $0x338] sm:$0xf]
        %v402 = vld [vmem:[%s176 + $0x33c] sm:$0xf]
        %v403 = vld [vmem:[%s176 + $0x340] sm:$0xf]
        %v404 = vld [vmem:[%s176 + $0x344] sm:$0xf]
        %v405 = vld [vmem:[%s176 + $0x348] sm:$0xf]
        %v406 = vld [vmem:[%s176 + $0x34c] sm:$0xf]
        %v407 = vld [vmem:[%s176 + $0x350] sm:$0xf]
        %v408 = vld [vmem:[%s176 + $0x354] sm:$0xf]
        %v409 = vld [vmem:[%s176 + $0x358] sm:$0xf]
        %v410 = vld [vmem:[%s176 + $0x35c] sm:$0xf]
        %v411 = vld [vmem:[%s176 + $0x360] sm:$0xf]
        %v412 = vld [vmem:[%s176 + $0x364] sm:$0xf]
        %v413 = vld [vmem:[%s176 + $0x368] sm:$0xf]
        %v414 = vld [vmem:[%s176 + $0x36c] sm:$0xf]
        %v415 = vld [vmem:[%s176 + $0x370] sm:$0xf]
        %v416 = vld [vmem:[%s176 + $0x374] sm:$0xf]
        %v417 = vld [vmem:[%s176 + $0x378] sm:$0xf]
        %v418 = vld [vmem:[%s176 + $0x37c] sm:$0xf]
        %v419 = vld [vmem:[%s176 + $0x380] sm:$0xf]
        %v420 = vld [vmem:[%s176 + $0x384] sm:$0xf]
        %v421 = vld [vmem:[%s176 + $0x388] sm:$0xf]
        %v422 = vld [vmem:[%s176 + $0x38c] sm:$0xf]
        %v423 = vld [vmem:[%s176 + $0x390] sm:$0xf]
        %v424 = vld [vmem:[%s176 + $0x394] sm:$0xf]
        %v425 = vld [vmem:[%s176 + $0x398] sm:$0xf]
        %v426 = vld [vmem:[%s176 + $0x39c] sm:$0xf]
        %v427 = vld [vmem:[%s176 + $0x3a0] sm:$0xf]
        %v428 = vld [vmem:[%s176 + $0x3a4] sm:$0xf]
        %v429 = vld [vmem:[%s176 + $0x3a8] sm:$0xf]
        %v430 = vld [vmem:[%s176 + $0x3ac] sm:$0xf]
        %v431 = vld [vmem:[%s176 + $0x3b0] sm:$0xf]
        %v432 = vld [vmem:[%s176 + $0x3b4] sm:$0xf]
        %v433 = vld [vmem:[%s176 + $0x3b8] sm:$0xf]
        %v434 = vld [vmem:[%s176 + $0x3bc] sm:$0xf]
        %v435 = vld [vmem:[%s176 + $0x3c0] sm:$0xf]
        %v436 = vld [vmem:[%s176 + $0x3c4] sm:$0xf]
        %v437 = vld [vmem:[%s176 + $0x3c8] sm:$0xf]
        %v438 = vld [vmem:[%s176 + $0x3cc] sm:$0xf]
        %v439 = vld [vmem:[%s176 + $0x3d0] sm:$0xf]
        %v440 = vld [vmem:[%s176 + $0x3d4] sm:$0xf]
        %v441 = vld [vmem:[%s176 + $0x3d8] sm:$0xf]
        %v442 = vld [vmem:[%s176 + $0x3dc] sm:$0xf]
        %v443 = vld [vmem:[%s176 + $0x3e0] sm:$0xf]
        %v444 = vld [vmem:[%s176 + $0x3e4] sm:$0xf]
        %v445 = vld [vmem:[%s176 + $0x3e8] sm:$0xf]
        %v446 = vld [vmem:[%s176 + $0x3ec] sm:$0xf]
        %v447 = vld [vmem:[%s176 + $0x3f0] sm:$0xf]
        %v448 = vld [vmem:[%s176 + $0x3f4] sm:$0xf]
        %v449 = vld [vmem:[%s176 + $0x3f8] sm:$0xf]
        %v450 = vld [vmem:[%s176 + $0x3fc] sm:$0xf]
        %v451 = vld [vmem:[%s176 + $0x400] sm:$0xf]
        %v452 = vld [vmem:[%s176 + $0x404] sm:$0xf]
        %v453 = vld [vmem:[%s176 + $0x408] sm:$0xf]
        %v454 = vld [vmem:[%s176 + $0x40c] sm:$0xf]
        %v455 = vld [vmem:[%s176 + $0x410] sm:$0xf]
        %v456 = vld [vmem:[%s176 + $0x414] sm:$0xf]
        %v457 = vld [vmem:[%s176 + $0x418] sm:$0xf]
        %v458 = vld [vmem:[%s176 + $0x41c] sm:$0xf]
        %v459 = vld [vmem:[%s176 + $0x420] sm:$0xf]
        %v460 = vld [vmem:[%s176 + $0x424] sm:$0xf]
        %v461 = vld [vmem:[%s176 + $0x428] sm:$0xf]
        %v462 = vld [vmem:[%s176 + $0x42c] sm:$0xf]
        %v463 = vld [vmem:[%s176 + $0x430] sm:$0xf]
        %v464 = vld [vmem:[%s176 + $0x434] sm:$0xf]
        %v465 = vld [vmem:[%s176 + $0x438] sm:$0xf]
        %v466 = vld [vmem:[%s176 + $0x43c] sm:$0xf]
        %v467 = vld [vmem:[%s176 + $0x440] sm:$0xf]
        %v468 = vld [vmem:[%s176 + $0x444] sm:$0xf]
        %v469 = vld [vmem:[%s176 + $0x448] sm:$0xf]
        %v470 = vld [vmem:[%s176 + $0x44c] sm:$0xf]
        %v471 = vld [vmem:[%s176 + $0x450] sm:$0xf]
        %v472 = vld [vmem:[%s176 + $0x454] sm:$0xf]
        %v473 = vld [vmem:[%s176 + $0x458] sm:$0xf]
        %v474 = vld [vmem:[%s176 + $0x45c] sm:$0xf]
        %v475 = vld [vmem:[%s176 + $0x460] sm:$0xf]
        %v476 = vld [vmem:[%s176 + $0x464] sm:$0xf]
        %v477 = vld [vmem:[%s176 + $0x468] sm:$0xf]
        %v478 = vld [vmem:[%s176 + $0x46c] sm:$0xf]
        %v479 = vld [vmem:[%s176 + $0x470] sm:$0xf]
        %v480 = vld [vmem:[%s176 + $0x474] sm:$0xf]
        %v481 = vld [vmem:[%s176 + $0x478] sm:$0xf]
        %v482 = vld [vmem:[%s176 + $0x47c] sm:$0xf]
        %v483 = vld [vmem:[%s176 + $0x480] sm:$0xf]
        %v484 = vld [vmem:[%s176 + $0x484] sm:$0xf]
        %v485 = vld [vmem:[%s176 + $0x488] sm:$0xf]
        %v486 = vld [vmem:[%s176 + $0x48c] sm:$0xf]
        %v487 = vld [vmem:[%s176 + $0x490] sm:$0xf]
        %v488 = vld [vmem:[%s176 + $0x494] sm:$0xf]
        %v489 = vld [vmem:[%s176 + $0x498] sm:$0xf]
        %v490 = vld [vmem:[%s176 + $0x49c] sm:$0xf]
        %v491 = vld [vmem:[%s176 + $0x4a0] sm:$0xf]
        %v492 = vld [vmem:[%s176 + $0x4a4] sm:$0xf]
        %v493 = vld [vmem:[%s176 + $0x4a8] sm:$0xf]
        %v494 = vld [vmem:[%s176 + $0x4ac] sm:$0xf]
        %v495 = vld [vmem:[%s176 + $0x4b0] sm:$0xf]
        %v496 = vld [vmem:[%s176 + $0x4b4] sm:$0xf]
        %v497 = vld [vmem:[%s176 + $0x4b8] sm:$0xf]
        %v498 = vld [vmem:[%s176 + $0x4bc] sm:$0xf]
        %v499 = vld [vmem:[%s176 + $0x4c0] sm:$0xf]
        %v500 = vld [vmem:[%s176 + $0x4c4] sm:$0xf]
        %v501 = vld [vmem:[%s176 + $0x4c8] sm:$0xf]
        %v502 = vld [vmem:[%s176 + $0x4cc] sm:$0xf]
        %v503 = vld [vmem:[%s176 + $0x4d0] sm:$0xf]
        %v504 = vld [vmem:[%s176 + $0x4d4] sm:$0xf]
        %v505 = vld [vmem:[%s176 + $0x4d8] sm:$0xf]
        %v506 = vld [vmem:[%s176 + $0x4dc] sm:$0xf]
        %v507 = vld [vmem:[%s176 + $0x4e0] sm:$0xf]
        %v508 = vld [vmem:[%s176 + $0x4e4] sm:$0xf]
        %v509 = vld [vmem:[%s176 + $0x4e8] sm:$0xf]
        %v510 = vld [vmem:[%s176 + $0x4ec] sm:$0xf]
        %v511 = vld [vmem:[%s176 + $0x4f0] sm:$0xf]
        %v512 = vld [vmem:[%s176 + $0x4f4] sm:$0xf]
        %v513 = vld [vmem:[%s176 + $0x4f8] sm:$0xf]
        %v514 = vld [vmem:[%s176 + $0x4fc] sm:$0xf]
        %v515 = vld [vmem:[%s176 + $0x500] sm:$0xf]
        %v516 = vld [vmem:[%s176 + $0x504] sm:$0xf]
        %v517 = vld [vmem:[%s176 + $0x508] sm:$0xf]
        %v518 = vld [vmem:[%s176 + $0x50c] sm:$0xf]
        %v519 = vld [vmem:[%s176 + $0x510] sm:$0xf]
        %v520 = vld [vmem:[%s176 + $0x514] sm:$0xf]
        %v521 = vld [vmem:[%s176 + $0x518] sm:$0xf]
        %v522 = vld [vmem:[%s176 + $0x51c] sm:$0xf]
        %v523 = vld [vmem:[%s176 + $0x520] sm:$0xf]
        %v524 = vld [vmem:[%s176 + $0x524] sm:$0xf]
        %v525 = vld [vmem:[%s176 + $0x528] sm:$0xf]
        %v526 = vld [vmem:[%s176 + $0x52c] sm:$0xf]
        %v527 = vld [vmem:[%s176 + $0x530] sm:$0xf]
        %v528 = vld [vmem:[%s176 + $0x534] sm:$0xf]
        %v529 = vld [vmem:[%s176 + $0x538] sm:$0xf]
        %v530 = vld [vmem:[%s176 + $0x53c] sm:$0xf]
        %v531 = vld [vmem:[%s176 + $0x540] sm:$0xf]
        %v532 = vld [vmem:[%s176 + $0x544] sm:$0xf]
        %v533 = vld [vmem:[%s176 + $0x548] sm:$0xf]
        %v534 = vld [vmem:[%s176 + $0x54c] sm:$0xf]
        %v535 = vld [vmem:[%s176 + $0x550] sm:$0xf]
        %v536 = vld [vmem:[%s176 + $0x554] sm:$0xf]
        %v537 = vld [vmem:[%s176 + $0x558] sm:$0xf]
        %v538 = vld [vmem:[%s176 + $0x55c] sm:$0xf]
        %v539 = vld [vmem:[%s176 + $0x560] sm:$0xf]
        %v540 = vld [vmem:[%s176 + $0x564] sm:$0xf]
        %v541 = vld [vmem:[%s176 + $0x568] sm:$0xf]
        %v542 = vld [vmem:[%s176 + $0x56c] sm:$0xf]
        %v543 = vld [vmem:[%s176 + $0x570] sm:$0xf]
        %v544 = vld [vmem:[%s176 + $0x574] sm:$0xf]
        %v545 = vld [vmem:[%s176 + $0x578] sm:$0xf]
        %v546 = vld [vmem:[%s176 + $0x57c] sm:$0xf]
        %v547 = vld [vmem:[%s176 + $0x580] sm:$0xf]
        %v548 = vld [vmem:[%s176 + $0x584] sm:$0xf]
        %v549 = vld [vmem:[%s176 + $0x588] sm:$0xf]
        %v550 = vld [vmem:[%s176 + $0x58c] sm:$0xf]
        %v551 = vld [vmem:[%s176 + $0x590] sm:$0xf]
        %v552 = vld [vmem:[%s176 + $0x594] sm:$0xf]
        %v553 = vld [vmem:[%s176 + $0x598] sm:$0xf]
        %v554 = vld [vmem:[%s176 + $0x59c] sm:$0xf]
        %v555 = vld [vmem:[%s176 + $0x5a0] sm:$0xf]
        %v556 = vld [vmem:[%s176 + $0x5a4] sm:$0xf]
        %v557 = vld [vmem:[%s176 + $0x5a8] sm:$0xf]
        %v558 = vld [vmem:[%s176 + $0x5ac] sm:$0xf]
        %v559 = vld [vmem:[%s176 + $0x5b0] sm:$0xf]
        %v560 = vld [vmem:[%s176 + $0x5b4] sm:$0xf]
        %v561 = vld [vmem:[%s176 + $0x5b8] sm:$0xf]
        %v562 = vld [vmem:[%s176 + $0x5bc] sm:$0xf]
        %v563 = vld [vmem:[%s176 + $0x5c0] sm:$0xf]
        %v564 = vld [vmem:[%s176 + $0x5c4] sm:$0xf]
        %v565 = vld [vmem:[%s176 + $0x5c8] sm:$0xf]
        %v566 = vld [vmem:[%s176 + $0x5cc] sm:$0xf]
        %v567 = vld [vmem:[%s176 + $0x5d0] sm:$0xf]
        %v568 = vld [vmem:[%s176 + $0x5d4] sm:$0xf]
        %v569 = vld [vmem:[%s176 + $0x5d8] sm:$0xf]
        %v570 = vld [vmem:[%s176 + $0x5dc] sm:$0xf]
        %v571 = vld [vmem:[%s176 + $0x5e0] sm:$0xf]
        %v572 = vld [vmem:[%s176 + $0x5e4] sm:$0xf]
        %v573 = vld [vmem:[%s176 + $0x5e8] sm:$0xf]
        %v574 = vld [vmem:[%s176 + $0x5ec] sm:$0xf]
        %v575 = vld [vmem:[%s176 + $0x5f0] sm:$0xf]
        %v576 = vld [vmem:[%s176 + $0x5f4] sm:$0xf]
        %v577 = vld [vmem:[%s176 + $0x5f8] sm:$0xf]
        %v578 = vld [vmem:[%s176 + $0x5fc] sm:$0xf]
        %v579 = vld [vmem:[%s176 + $0x600] sm:$0xf]
        %v580 = vld [vmem:[%s176 + $0x604] sm:$0xf]
        %v581 = vld [vmem:[%s176 + $0x608] sm:$0xf]
        %v582 = vld [vmem:[%s176 + $0x60c] sm:$0xf]
        %v583 = vld [vmem:[%s176 + $0x610] sm:$0xf]
        %v584 = vld [vmem:[%s176 + $0x614] sm:$0xf]
        %v585 = vld [vmem:[%s176 + $0x618] sm:$0xf]
        %v586 = vld [vmem:[%s176 + $0x61c] sm:$0xf]
        %v587 = vld [vmem:[%s176 + $0x620] sm:$0xf]
        %v588 = vld [vmem:[%s176 + $0x624] sm:$0xf]
        %v589 = vld [vmem:[%s176 + $0x628] sm:$0xf]
        %v590 = vld [vmem:[%s176 + $0x62c] sm:$0xf]
        %v591 = vld [vmem:[%s176 + $0x630] sm:$0xf]
        %v592 = vld [vmem:[%s176 + $0x634] sm:$0xf]
        %v593 = vld [vmem:[%s176 + $0x638] sm:$0xf]
        %v594 = vld [vmem:[%s176 + $0x63c] sm:$0xf]
        %v595 = vld [vmem:[%s176 + $0x640] sm:$0xf]
        %v596 = vld [vmem:[%s176 + $0x644] sm:$0xf]
        %v597 = vld [vmem:[%s176 + $0x648] sm:$0xf]
        %v598 = vld [vmem:[%s176 + $0x64c] sm:$0xf]
        %v599 = vld [vmem:[%s176 + $0x650] sm:$0xf]
        %v600 = vld [vmem:[%s176 + $0x654] sm:$0xf]
        %v601 = vld [vmem:[%s176 + $0x658] sm:$0xf]
        %v602 = vld [vmem:[%s176 + $0x65c] sm:$0xf]
        %v603 = vld [vmem:[%s176 + $0x660] sm:$0xf]
        %v604 = vld [vmem:[%s176 + $0x664] sm:$0xf]
        %v605 = vld [vmem:[%s176 + $0x668] sm:$0xf]
        %v606 = vld [vmem:[%s176 + $0x66c] sm:$0xf]
        %v607 = vld [vmem:[%s176 + $0x670] sm:$0xf]
        %v608 = vld [vmem:[%s176 + $0x674] sm:$0xf]
        %v609 = vld [vmem:[%s176 + $0x678] sm:$0xf]
        %v610 = vld [vmem:[%s176 + $0x67c] sm:$0xf]
        %v611 = vld [vmem:[%s176 + $0x680] sm:$0xf]
        %v612 = vld [vmem:[%s176 + $0x684] sm:$0xf]
        %v613 = vld [vmem:[%s176 + $0x688] sm:$0xf]
        %v614 = vld [vmem:[%s176 + $0x68c] sm:$0xf]
        %v615 = vld [vmem:[%s176 + $0x690] sm:$0xf]
        %v616 = vld [vmem:[%s176 + $0x694] sm:$0xf]
        %v617 = vld [vmem:[%s176 + $0x698] sm:$0xf]
        %v618 = vld [vmem:[%s176 + $0x69c] sm:$0xf]
        %v619 = vld [vmem:[%s176 + $0x6a0] sm:$0xf]
        %v620 = vld [vmem:[%s176 + $0x6a4] sm:$0xf]
        %v621 = vld [vmem:[%s176 + $0x6a8] sm:$0xf]
        %v622 = vld [vmem:[%s176 + $0x6ac] sm:$0xf]
        %v623 = vld [vmem:[%s176 + $0x6b0] sm:$0xf]
        %v624 = vld [vmem:[%s176 + $0x6b4] sm:$0xf]
        %v625 = vld [vmem:[%s176 + $0x6b8] sm:$0xf]
        %v626 = vld [vmem:[%s176 + $0x6bc] sm:$0xf]
        %v627 = vld [vmem:[%s176 + $0x6c0] sm:$0xf]
        %v628 = vld [vmem:[%s176 + $0x6c4] sm:$0xf]
        %v629 = vld [vmem:[%s176 + $0x6c8] sm:$0xf]
        %v630 = vld [vmem:[%s176 + $0x6cc] sm:$0xf]
        %v631 = vld [vmem:[%s176 + $0x6d0] sm:$0xf]
        %v632 = vld [vmem:[%s176 + $0x6d4] sm:$0xf]
        %v633 = vld [vmem:[%s176 + $0x6d8] sm:$0xf]
        %v634 = vld [vmem:[%s176 + $0x6dc] sm:$0xf]
        %v635 = vld [vmem:[%s176 + $0x6e0] sm:$0xf]
        %v636 = vld [vmem:[%s176 + $0x6e4] sm:$0xf]
        %v637 = vld [vmem:[%s176 + $0x6e8] sm:$0xf]
        %v638 = vld [vmem:[%s176 + $0x6ec] sm:$0xf]
        %v639 = vld [vmem:[%s176 + $0x6f0] sm:$0xf]
        %v640 = vld [vmem:[%s176 + $0x6f4] sm:$0xf]
        %v641 = vld [vmem:[%s176 + $0x6f8] sm:$0xf]
        %v642 = vld [vmem:[%s176 + $0x6fc] sm:$0xf]
        %v643 = vld [vmem:[%s176 + $0x700] sm:$0xf]
        %v644 = vld [vmem:[%s176 + $0x704] sm:$0xf]
        %v645 = vld [vmem:[%s176 + $0x708] sm:$0xf]
        %v646 = vld [vmem:[%s176 + $0x70c] sm:$0xf]
        %v647 = vld [vmem:[%s176 + $0x710] sm:$0xf]
        %v648 = vld [vmem:[%s176 + $0x714] sm:$0xf]
        %v649 = vld [vmem:[%s176 + $0x718] sm:$0xf]
        %v650 = vld [vmem:[%s176 + $0x71c] sm:$0xf]
        %v651 = vld [vmem:[%s176 + $0x720] sm:$0xf]
        %v652 = vld [vmem:[%s176 + $0x724] sm:$0xf]
        %v653 = vld [vmem:[%s176 + $0x728] sm:$0xf]
        %v654 = vld [vmem:[%s176 + $0x72c] sm:$0xf]
        %v655 = vld [vmem:[%s176 + $0x730] sm:$0xf]
        %v656 = vld [vmem:[%s176 + $0x734] sm:$0xf]
        %v657 = vld [vmem:[%s176 + $0x738] sm:$0xf]
        %v658 = vld [vmem:[%s176 + $0x73c] sm:$0xf]
        %v659 = vld [vmem:[%s176 + $0x740] sm:$0xf]
        %v660 = vld [vmem:[%s176 + $0x744] sm:$0xf]
        %v661 = vld [vmem:[%s176 + $0x748] sm:$0xf]
        %v662 = vld [vmem:[%s176 + $0x74c] sm:$0xf]
        %v663 = vld [vmem:[%s176 + $0x750] sm:$0xf]
        %v664 = vld [vmem:[%s176 + $0x754] sm:$0xf]
        %v665 = vld [vmem:[%s176 + $0x758] sm:$0xf]
        %v666 = vld [vmem:[%s176 + $0x75c] sm:$0xf]
        %v667 = vld [vmem:[%s176 + $0x760] sm:$0xf]
        %v668 = vld [vmem:[%s176 + $0x764] sm:$0xf]
        %v669 = vld [vmem:[%s176 + $0x768] sm:$0xf]
        %v670 = vld [vmem:[%s176 + $0x76c] sm:$0xf]
        %v671 = vld [vmem:[%s176 + $0x770] sm:$0xf]
        %v672 = vld [vmem:[%s176 + $0x774] sm:$0xf]
        %v673 = vld [vmem:[%s176 + $0x778] sm:$0xf]
        %v674 = vld [vmem:[%s176 + $0x77c] sm:$0xf]
        %v675 = vld [vmem:[%s176 + $0x780] sm:$0xf]
        %v676 = vld [vmem:[%s176 + $0x784] sm:$0xf]
        %v677 = vld [vmem:[%s176 + $0x788] sm:$0xf]
        %v678 = vld [vmem:[%s176 + $0x78c] sm:$0xf]
        %v679 = vld [vmem:[%s176 + $0x790] sm:$0xf]
        %v680 = vld [vmem:[%s176 + $0x794] sm:$0xf]
        %v681 = vld [vmem:[%s176 + $0x798] sm:$0xf]
        %v682 = vld [vmem:[%s176 + $0x79c] sm:$0xf]
        %v683 = vld [vmem:[%s176 + $0x7a0] sm:$0xf]
        %v684 = vld [vmem:[%s176 + $0x7a4] sm:$0xf]
        %v685 = vld [vmem:[%s176 + $0x7a8] sm:$0xf]
        %v686 = vld [vmem:[%s176 + $0x7ac] sm:$0xf]
        %v687 = vld [vmem:[%s176 + $0x7b0] sm:$0xf]
        %v688 = vld [vmem:[%s176 + $0x7b4] sm:$0xf]
        %v689 = vld [vmem:[%s176 + $0x7b8] sm:$0xf]
        %v690 = vld [vmem:[%s176 + $0x7bc] sm:$0xf]
        %v691 = vld [vmem:[%s176 + $0x7c0] sm:$0xf]
        %v692 = vld [vmem:[%s176 + $0x7c4] sm:$0xf]
        %v693 = vld [vmem:[%s176 + $0x7c8] sm:$0xf]
        %v694 = vld [vmem:[%s176 + $0x7cc] sm:$0xf]
        %v695 = vld [vmem:[%s176 + $0x7d0] sm:$0xf]
        %v696 = vld [vmem:[%s176 + $0x7d4] sm:$0xf]
        %v697 = vld [vmem:[%s176 + $0x7d8] sm:$0xf]
        %v698 = vld [vmem:[%s176 + $0x7dc] sm:$0xf]
        %v699 = vld [vmem:[%s176 + $0x7e0] sm:$0xf]
        %v700 = vld [vmem:[%s176 + $0x7e4] sm:$0xf]
        %v701 = vld [vmem:[%s176 + $0x7e8] sm:$0xf]
        %v702 = vld [vmem:[%s176 + $0x7ec] sm:$0xf]
        %v703 = vld [vmem:[%s176 + $0x7f0] sm:$0xf]
        %v704 = vld [vmem:[%s176 + $0x7f4] sm:$0xf]
        %v705 = vld [vmem:[%s176 + $0x7f8] sm:$0xf]
        %v706 = vld [vmem:[%s176 + $0x7fc] sm:$0xf]
        %v707 = vld [vmem:[%s176 + $0x800] sm:$0xf]
        %v708 = vld [vmem:[%s176 + $0x804] sm:$0xf]
        %v709 = vld [vmem:[%s176 + $0x808] sm:$0xf]
        %v710 = vld [vmem:[%s176 + $0x80c] sm:$0xf]
        %v711 = vld [vmem:[%s176 + $0x810] sm:$0xf]
        %v712 = vld [vmem:[%s176 + $0x814] sm:$0xf]
        %v713 = vld [vmem:[%s176 + $0x818] sm:$0xf]
        %v714 = vld [vmem:[%s176 + $0x81c] sm:$0xf]
        %v715 = vld [vmem:[%s176 + $0x820] sm:$0xf]
        %v716 = vld [vmem:[%s176 + $0x824] sm:$0xf]
        %v717 = vld [vmem:[%s176 + $0x828] sm:$0xf]
        %v718 = vld [vmem:[%s176 + $0x82c] sm:$0xf]
        %v719 = vld [vmem:[%s176 + $0x830] sm:$0xf]
        %v720 = vld [vmem:[%s176 + $0x834] sm:$0xf]
        %v721 = vld [vmem:[%s176 + $0x838] sm:$0xf]
        %v722 = vld [vmem:[%s176 + $0x83c] sm:$0xf]
        %v723 = vld [vmem:[%s176 + $0x840] sm:$0xf]
        %v724 = vld [vmem:[%s176 + $0x844] sm:$0xf]
        %v725 = vld [vmem:[%s176 + $0x848] sm:$0xf]
        %v726 = vld [vmem:[%s176 + $0x84c] sm:$0xf]
        %v727 = vld [vmem:[%s176 + $0x850] sm:$0xf]
        %v728 = vld [vmem:[%s176 + $0x854] sm:$0xf]
        %v729 = vld [vmem:[%s176 + $0x858] sm:$0xf]
        %v730 = vld [vmem:[%s176 + $0x85c] sm:$0xf]
        %v731 = vld [vmem:[%s176 + $0x860] sm:$0xf]
        %v732 = vld [vmem:[%s176 + $0x864] sm:$0xf]
        %v733 = vld [vmem:[%s176 + $0x868] sm:$0xf]
        %v734 = vld [vmem:[%s176 + $0x86c] sm:$0xf]
        %v735 = vld [vmem:[%s176 + $0x870] sm:$0xf]
        %v736 = vld [vmem:[%s176 + $0x874] sm:$0xf]
        %v737 = vld [vmem:[%s176 + $0x878] sm:$0xf]
        %v738 = vld [vmem:[%s176 + $0x87c] sm:$0xf]
        %v739 = vld [vmem:[%s176 + $0x880] sm:$0xf]
        %v740 = vld [vmem:[%s176 + $0x884] sm:$0xf]
        %v741 = vld [vmem:[%s176 + $0x888] sm:$0xf]
        %v742 = vld [vmem:[%s176 + $0x88c] sm:$0xf]
        %v743 = vld [vmem:[%s176 + $0x890] sm:$0xf]
        %v744 = vld [vmem:[%s176 + $0x894] sm:$0xf]
        %v745 = vld [vmem:[%s176 + $0x898] sm:$0xf]
        %v746 = vld [vmem:[%s176 + $0x89c] sm:$0xf]
        %v747 = vld [vmem:[%s176 + $0x8a0] sm:$0xf]
        %v748 = vld [vmem:[%s176 + $0x8a4] sm:$0xf]
        %v749 = vld [vmem:[%s176 + $0x8a8] sm:$0xf]
        %v750 = vld [vmem:[%s176 + $0x8ac] sm:$0xf]
        %v751 = vld [vmem:[%s176 + $0x8b0] sm:$0xf]
        %v752 = vld [vmem:[%s176 + $0x8b4] sm:$0xf]
        %v753 = vld [vmem:[%s176 + $0x8b8] sm:$0xf]
        %v754 = vld [vmem:[%s176 + $0x8bc] sm:$0xf]
        %v755 = vld [vmem:[%s176 + $0x8c0] sm:$0xf]
        %v756 = vld [vmem:[%s176 + $0x8c4] sm:$0xf]
        %v757 = vld [vmem:[%s176 + $0x8c8] sm:$0xf]
        %v758 = vld [vmem:[%s176 + $0x8cc] sm:$0xf]
        %v759 = vld [vmem:[%s176 + $0x8d0] sm:$0xf]
        %v760 = vld [vmem:[%s176 + $0x8d4] sm:$0xf]
        %v761 = vld [vmem:[%s176 + $0x8d8] sm:$0xf]
        %v762 = vld [vmem:[%s176 + $0x8dc] sm:$0xf]
        %v763 = vld [vmem:[%s176 + $0x8e0] sm:$0xf]
        %v764 = vld [vmem:[%s176 + $0x8e4] sm:$0xf]
        %v765 = vld [vmem:[%s176 + $0x8e8] sm:$0xf]
        %v766 = vld [vmem:[%s176 + $0x8ec] sm:$0xf]
        %v767 = vld [vmem:[%s176 + $0x8f0] sm:$0xf]
        %v768 = vld [vmem:[%s176 + $0x8f4] sm:$0xf]
        %v769 = vld [vmem:[%s176 + $0x8f8] sm:$0xf]
        %v770 = vld [vmem:[%s176 + $0x8fc] sm:$0xf]
        %v771 = vld [vmem:[%s176 + $0x900] sm:$0xf]
        %v772 = vld [vmem:[%s176 + $0x904] sm:$0xf]
        %v773 = vld [vmem:[%s176 + $0x908] sm:$0xf]
        %v774 = vld [vmem:[%s176 + $0x90c] sm:$0xf]
        %v775 = vld [vmem:[%s176 + $0x910] sm:$0xf]
        %v776 = vld [vmem:[%s176 + $0x914] sm:$0xf]
        %v777 = vld [vmem:[%s176 + $0x918] sm:$0xf]
        %v778 = vld [vmem:[%s176 + $0x91c] sm:$0xf]
        %v779 = vld [vmem:[%s176 + $0x920] sm:$0xf]
        %v780 = vld [vmem:[%s176 + $0x924] sm:$0xf]
        %v781 = vld [vmem:[%s176 + $0x928] sm:$0xf]
        %v782 = vld [vmem:[%s176 + $0x92c] sm:$0xf]
        %v783 = vld [vmem:[%s176 + $0x930] sm:$0xf]
        %v784 = vld [vmem:[%s176 + $0x934] sm:$0xf]
        %v785 = vld [vmem:[%s176 + $0x938] sm:$0xf]
        %v786 = vld [vmem:[%s176 + $0x93c] sm:$0xf]
        %v787 = vld [vmem:[%s176 + $0x940] sm:$0xf]
        %v788 = vld [vmem:[%s176 + $0x944] sm:$0xf]
        %v789 = vld [vmem:[%s176 + $0x948] sm:$0xf]
        %v790 = vld [vmem:[%s176 + $0x94c] sm:$0xf]
        %v791 = vld [vmem:[%s176 + $0x950] sm:$0xf]
        %v792 = vld [vmem:[%s176 + $0x954] sm:$0xf]
        %v793 = vld [vmem:[%s176 + $0x958] sm:$0xf]
        %v794 = vld [vmem:[%s176 + $0x95c] sm:$0xf]
        %v795 = vld [vmem:[%s176 + $0x960] sm:$0xf]
        %v796 = vld [vmem:[%s176 + $0x964] sm:$0xf]
        %v797 = vld [vmem:[%s176 + $0x968] sm:$0xf]
        %v798 = vld [vmem:[%s176 + $0x96c] sm:$0xf]
        %v799 = vld [vmem:[%s176 + $0x970] sm:$0xf]
        %v800 = vld [vmem:[%s176 + $0x974] sm:$0xf]
        %v801 = vld [vmem:[%s176 + $0x978] sm:$0xf]
        %v802 = vld [vmem:[%s176 + $0x97c] sm:$0xf]
        %v803 = vld [vmem:[%s176 + $0x980] sm:$0xf]
        %v804 = vld [vmem:[%s176 + $0x984] sm:$0xf]
        %v805 = vld [vmem:[%s176 + $0x988] sm:$0xf]
        %v806 = vld [vmem:[%s176 + $0x98c] sm:$0xf]
        %v807 = vld [vmem:[%s176 + $0x990] sm:$0xf]
        %v808 = vld [vmem:[%s176 + $0x994] sm:$0xf]
        %v809 = vld [vmem:[%s176 + $0x998] sm:$0xf]
        %v810 = vld [vmem:[%s176 + $0x99c] sm:$0xf]
        %v811 = vld [vmem:[%s176 + $0x9a0] sm:$0xf]
        %v812 = vld [vmem:[%s176 + $0x9a4] sm:$0xf]
        %v813 = vld [vmem:[%s176 + $0x9a8] sm:$0xf]
        %v814 = vld [vmem:[%s176 + $0x9ac] sm:$0xf]
        %v815 = vld [vmem:[%s176 + $0x9b0] sm:$0xf]
        %v816 = vld [vmem:[%s176 + $0x9b4] sm:$0xf]
        %v817 = vld [vmem:[%s176 + $0x9b8] sm:$0xf]
        %v818 = vld [vmem:[%s176 + $0x9bc] sm:$0xf]
        %v819 = vld [vmem:[%s176 + $0x9c0] sm:$0xf]
        %v820 = vld [vmem:[%s176 + $0x9c4] sm:$0xf]
        %v821 = vld [vmem:[%s176 + $0x9c8] sm:$0xf]
        %v822 = vld [vmem:[%s176 + $0x9cc] sm:$0xf]
        %v823 = vld [vmem:[%s176 + $0x9d0] sm:$0xf]
        %v824 = vld [vmem:[%s176 + $0x9d4] sm:$0xf]
        %v825 = vld [vmem:[%s176 + $0x9d8] sm:$0xf]
        %v826 = vld [vmem:[%s176 + $0x9dc] sm:$0xf]
        %v827 = vld [vmem:[%s176 + $0x9e0] sm:$0xf]
        %v828 = vld [vmem:[%s176 + $0x9e4] sm:$0xf]
        %v829 = vld [vmem:[%s176 + $0x9e8] sm:$0xf]
        %v830 = vld [vmem:[%s176 + $0x9ec] sm:$0xf]
        %v831 = vld [vmem:[%s176 + $0x9f0] sm:$0xf]
        %v832 = vld [vmem:[%s176 + $0x9f4] sm:$0xf]
        %v833 = vld [vmem:[%s176 + $0x9f8] sm:$0xf]
        %v834 = vld [vmem:[%s176 + $0x9fc] sm:$0xf]
        %v835 = vld [vmem:[%s176 + $0xa00] sm:$0xf]
        %v836 = vld [vmem:[%s176 + $0xa04] sm:$0xf]
        %v837 = vld [vmem:[%s176 + $0xa08] sm:$0xf]
        %v838 = vld [vmem:[%s176 + $0xa0c] sm:$0xf]
        %v839 = vld [vmem:[%s176 + $0xa10] sm:$0xf]
        %v840 = vld [vmem:[%s176 + $0xa14] sm:$0xf]
        %v841 = vld [vmem:[%s176 + $0xa18] sm:$0xf]
        %v842 = vld [vmem:[%s176 + $0xa1c] sm:$0xf]
        %v843 = vld [vmem:[%s176 + $0xa20] sm:$0xf]
        %v844 = vld [vmem:[%s176 + $0xa24] sm:$0xf]
        %v845 = vld [vmem:[%s176 + $0xa28] sm:$0xf]
        %v846 = vld [vmem:[%s176 + $0xa2c] sm:$0xf]
        %v847 = vld [vmem:[%s176 + $0xa30] sm:$0xf]
        %v848 = vld [vmem:[%s176 + $0xa34] sm:$0xf]
        %v849 = vld [vmem:[%s176 + $0xa38] sm:$0xf]
        %v850 = vld [vmem:[%s176 + $0xa3c] sm:$0xf]
        %v851 = vld [vmem:[%s176 + $0xa40] sm:$0xf]
        %v852 = vld [vmem:[%s176 + $0xa44] sm:$0xf]
        %v853 = vld [vmem:[%s176 + $0xa48] sm:$0xf]
        %v854 = vld [vmem:[%s176 + $0xa4c] sm:$0xf]
        %v855 = vld [vmem:[%s176 + $0xa50] sm:$0xf]
        %v856 = vld [vmem:[%s176 + $0xa54] sm:$0xf]
        %v857 = vld [vmem:[%s176 + $0xa58] sm:$0xf]
        %v858 = vld [vmem:[%s176 + $0xa5c] sm:$0xf]
        %v859 = vld [vmem:[%s176 + $0xa60] sm:$0xf]
        %v860 = vld [vmem:[%s176 + $0xa64] sm:$0xf]
        %v861 = vld [vmem:[%s176 + $0xa68] sm:$0xf]
        %v862 = vld [vmem:[%s176 + $0xa6c] sm:$0xf]
        %v863 = vld [vmem:[%s176 + $0xa70] sm:$0xf]
        %v864 = vld [vmem:[%s176 + $0xa74] sm:$0xf]
        %v865 = vld [vmem:[%s176 + $0xa78] sm:$0xf]
        %v866 = vld [vmem:[%s176 + $0xa7c] sm:$0xf]
        %v867 = vld [vmem:[%s176 + $0xa80] sm:$0xf]
        %v868 = vld [vmem:[%s176 + $0xa84] sm:$0xf]
        %v869 = vld [vmem:[%s176 + $0xa88] sm:$0xf]
        %v870 = vld [vmem:[%s176 + $0xa8c] sm:$0xf]
        %v871 = vld [vmem:[%s176 + $0xa90] sm:$0xf]
        %v872 = vld [vmem:[%s176 + $0xa94] sm:$0xf]
        %v873 = vld [vmem:[%s176 + $0xa98] sm:$0xf]
        %v874 = vld [vmem:[%s176 + $0xa9c] sm:$0xf]
        %v875 = vld [vmem:[%s176 + $0xaa0] sm:$0xf]
        %v876 = vld [vmem:[%s176 + $0xaa4] sm:$0xf]
        %v877 = vld [vmem:[%s176 + $0xaa8] sm:$0xf]
        %v878 = vld [vmem:[%s176 + $0xaac] sm:$0xf]
        %v879 = vld [vmem:[%s176 + $0xab0] sm:$0xf]
        %v880 = vld [vmem:[%s176 + $0xab4] sm:$0xf]
        %v881 = vld [vmem:[%s176 + $0xab8] sm:$0xf]
        %v882 = vld [vmem:[%s176 + $0xabc] sm:$0xf]
        %v883 = vld [vmem:[%s176 + $0xac0] sm:$0xf]
        %v884 = vld [vmem:[%s176 + $0xac4] sm:$0xf]
        %v885 = vld [vmem:[%s176 + $0xac8] sm:$0xf]
        %v886 = vld [vmem:[%s176 + $0xacc] sm:$0xf]
        %v887 = vld [vmem:[%s176 + $0xad0] sm:$0xf]
        %v888 = vld [vmem:[%s176 + $0xad4] sm:$0xf]
        %v889 = vld [vmem:[%s176 + $0xad8] sm:$0xf]
        %v890 = vld [vmem:[%s176 + $0xadc] sm:$0xf]
        %v891 = vld [vmem:[%s176 + $0xae0] sm:$0xf]
        %v892 = vld [vmem:[%s176 + $0xae4] sm:$0xf]
        %v893 = vld [vmem:[%s176 + $0xae8] sm:$0xf]
        %v894 = vld [vmem:[%s176 + $0xaec] sm:$0xf]
        %v895 = vld [vmem:[%s176 + $0xaf0] sm:$0xf]
        %v896 = vld [vmem:[%s176 + $0xaf4] sm:$0xf]
        %v897 = vld [vmem:[%s176 + $0xaf8] sm:$0xf]
        %v898 = vld [vmem:[%s176 + $0xafc] sm:$0xf]
        %v899 = vld [vmem:[%s176 + $0xb00] sm:$0xf]
        %v900 = vld [vmem:[%s176 + $0xb04] sm:$0xf]
        %v901 = vld [vmem:[%s176 + $0xb08] sm:$0xf]
        %v902 = vld [vmem:[%s176 + $0xb0c] sm:$0xf]
        %v903 = vld [vmem:[%s176 + $0xb10] sm:$0xf]
        %v904 = vld [vmem:[%s176 + $0xb14] sm:$0xf]
        %v905 = vld [vmem:[%s176 + $0xb18] sm:$0xf]
        %v906 = vld [vmem:[%s176 + $0xb1c] sm:$0xf]
        %v907 = vld [vmem:[%s176 + $0xb20] sm:$0xf]
        %v908 = vld [vmem:[%s176 + $0xb24] sm:$0xf]
        %v909 = vld [vmem:[%s176 + $0xb28] sm:$0xf]
        %v910 = vld [vmem:[%s176 + $0xb2c] sm:$0xf]
        %v911 = vld [vmem:[%s176 + $0xb30] sm:$0xf]
        %v912 = vld [vmem:[%s176 + $0xb34] sm:$0xf]
        %v913 = vld [vmem:[%s176 + $0xb38] sm:$0xf]
        %v914 = vld [vmem:[%s176 + $0xb3c] sm:$0xf]
        %v915 = vld [vmem:[%s176 + $0xb40] sm:$0xf]
        %v916 = vld [vmem:[%s176 + $0xb44] sm:$0xf]
        %v917 = vld [vmem:[%s176 + $0xb48] sm:$0xf]
        %v918 = vld [vmem:[%s176 + $0xb4c] sm:$0xf]
        %v919 = vld [vmem:[%s176 + $0xb50] sm:$0xf]
        %v920 = vld [vmem:[%s176 + $0xb54] sm:$0xf]
        %v921 = vld [vmem:[%s176 + $0xb58] sm:$0xf]
        %v922 = vld [vmem:[%s176 + $0xb5c] sm:$0xf]
        %v923 = vld [vmem:[%s176 + $0xb60] sm:$0xf]
        %v924 = vld [vmem:[%s176 + $0xb64] sm:$0xf]
        %v925 = vld [vmem:[%s176 + $0xb68] sm:$0xf]
        %v926 = vld [vmem:[%s176 + $0xb6c] sm:$0xf]
        %v927 = vld [vmem:[%s176 + $0xb70] sm:$0xf]
        %v928 = vld [vmem:[%s176 + $0xb74] sm:$0xf]
        %v929 = vld [vmem:[%s176 + $0xb78] sm:$0xf]
        %v930 = vld [vmem:[%s176 + $0xb7c] sm:$0xf]
        %v931 = vld [vmem:[%s176 + $0xb80] sm:$0xf]
        %v932 = vld [vmem:[%s176 + $0xb84] sm:$0xf]
        %v933 = vld [vmem:[%s176 + $0xb88] sm:$0xf]
        %v934 = vld [vmem:[%s176 + $0xb8c] sm:$0xf]
        %v935 = vld [vmem:[%s176 + $0xb90] sm:$0xf]
        %v936 = vld [vmem:[%s176 + $0xb94] sm:$0xf]
        %v937 = vld [vmem:[%s176 + $0xb98] sm:$0xf]
        %v938 = vld [vmem:[%s176 + $0xb9c] sm:$0xf]
        %v939 = vld [vmem:[%s176 + $0xba0] sm:$0xf]
        %v940 = vld [vmem:[%s176 + $0xba4] sm:$0xf]
        %v941 = vld [vmem:[%s176 + $0xba8] sm:$0xf]
        %v942 = vld [vmem:[%s176 + $0xbac] sm:$0xf]
        %v943 = vld [vmem:[%s176 + $0xbb0] sm:$0xf]
        %v944 = vld [vmem:[%s176 + $0xbb4] sm:$0xf]
        %v945 = vld [vmem:[%s176 + $0xbb8] sm:$0xf]
        %v946 = vld [vmem:[%s176 + $0xbbc] sm:$0xf]
        %v947 = vld [vmem:[%s176 + $0xbc0] sm:$0xf]
        %v948 = vld [vmem:[%s176 + $0xbc4] sm:$0xf]
        %v949 = vld [vmem:[%s176 + $0xbc8] sm:$0xf]
        %v950 = vld [vmem:[%s176 + $0xbcc] sm:$0xf]
        %v951 = vld [vmem:[%s176 + $0xbd0] sm:$0xf]
        %v952 = vld [vmem:[%s176 + $0xbd4] sm:$0xf]
        %v953 = vld [vmem:[%s176 + $0xbd8] sm:$0xf]
        %v954 = vld [vmem:[%s176 + $0xbdc] sm:$0xf]
        %v955 = vld [vmem:[%s176 + $0xbe0] sm:$0xf]
        %v956 = vld [vmem:[%s176 + $0xbe4] sm:$0xf]
        %v957 = vld [vmem:[%s176 + $0xbe8] sm:$0xf]
        %v958 = vld [vmem:[%s176 + $0xbec] sm:$0xf]
        %v959 = vld [vmem:[%s176 + $0xbf0] sm:$0xf]
        %v960 = vld [vmem:[%s176 + $0xbf4] sm:$0xf]
        %v961 = vld [vmem:[%s176 + $0xbf8] sm:$0xf]
        %v962 = vld [vmem:[%s176 + $0xbfc] sm:$0xf]
        %v963 = vld [vmem:[%s176 + $0xc00] sm:$0xf]
        %v964 = vld [vmem:[%s176 + $0xc04] sm:$0xf]
        %v965 = vld [vmem:[%s176 + $0xc08] sm:$0xf]
        %v966 = vld [vmem:[%s176 + $0xc0c] sm:$0xf]
        %v967 = vld [vmem:[%s176 + $0xc10] sm:$0xf]
        %v968 = vld [vmem:[%s176 + $0xc14] sm:$0xf]
        %v969 = vld [vmem:[%s176 + $0xc18] sm:$0xf]
        %v970 = vld [vmem:[%s176 + $0xc1c] sm:$0xf]
        %v971 = vld [vmem:[%s176 + $0xc20] sm:$0xf]
        %v972 = vld [vmem:[%s176 + $0xc24] sm:$0xf]
        %v973 = vld [vmem:[%s176 + $0xc28] sm:$0xf]
        %v974 = vld [vmem:[%s176 + $0xc2c] sm:$0xf]
        %v975 = vld [vmem:[%s176 + $0xc30] sm:$0xf]
        %v976 = vld [vmem:[%s176 + $0xc34] sm:$0xf]
        %v977 = vld [vmem:[%s176 + $0xc38] sm:$0xf]
        %v978 = vld [vmem:[%s176 + $0xc3c] sm:$0xf]
        %v979 = vld [vmem:[%s176 + $0xc40] sm:$0xf]
        %v980 = vld [vmem:[%s176 + $0xc44] sm:$0xf]
        %v981 = vld [vmem:[%s176 + $0xc48] sm:$0xf]
        %v982 = vld [vmem:[%s176 + $0xc4c] sm:$0xf]
        %v983 = vld [vmem:[%s176 + $0xc50] sm:$0xf]
        %v984 = vld [vmem:[%s176 + $0xc54] sm:$0xf]
        %v985 = vld [vmem:[%s176 + $0xc58] sm:$0xf]
        %v986 = vld [vmem:[%s176 + $0xc5c] sm:$0xf]
        %v987 = vld [vmem:[%s176 + $0xc60] sm:$0xf]
        %v988 = vld [vmem:[%s176 + $0xc64] sm:$0xf]
        %v989 = vld [vmem:[%s176 + $0xc68] sm:$0xf]
        %v990 = vld [vmem:[%s176 + $0xc6c] sm:$0xf]
        %v991 = vld [vmem:[%s176 + $0xc70] sm:$0xf]
        %v992 = vld [vmem:[%s176 + $0xc74] sm:$0xf]
        %v993 = vld [vmem:[%s176 + $0xc78] sm:$0xf]
        %v994 = vld [vmem:[%s176 + $0xc7c] sm:$0xf]
        %v995 = vld [vmem:[%s176 + $0xc80] sm:$0xf]
        %v996 = vld [vmem:[%s176 + $0xc84] sm:$0xf]
        %v997 = vld [vmem:[%s176 + $0xc88] sm:$0xf]
        %v998 = vld [vmem:[%s176 + $0xc8c] sm:$0xf]
        %v999 = vld [vmem:[%s176 + $0xc90] sm:$0xf]
        %v1000 = vld [vmem:[%s176 + $0xc94] sm:$0xf]
        %v1001 = vld [vmem:[%s176 + $0xc98] sm:$0xf]
        %v1002 = vld [vmem:[%s176 + $0xc9c] sm:$0xf]
        %v1003 = vld [vmem:[%s176 + $0xca0] sm:$0xf]
        %v1004 = vld [vmem:[%s176 + $0xca4] sm:$0xf]
        %v1005 = vld [vmem:[%s176 + $0xca8] sm:$0xf]
        %v1006 = vld [vmem:[%s176 + $0xcac] sm:$0xf]
        %v1007 = vld [vmem:[%s176 + $0xcb0] sm:$0xf]
        %v1008 = vld [vmem:[%s176 + $0xcb4] sm:$0xf]
        %v1009 = vld [vmem:[%s176 + $0xcb8] sm:$0xf]
        %v1010 = vld [vmem:[%s176 + $0xcbc] sm:$0xf]
        %v1011 = vld [vmem:[%s176 + $0xcc0] sm:$0xf]
        %v1012 = vld [vmem:[%s176 + $0xcc4] sm:$0xf]
        %v1013 = vld [vmem:[%s176 + $0xcc8] sm:$0xf]
        %v1014 = vld [vmem:[%s176 + $0xccc] sm:$0xf]
        %v1015 = vld [vmem:[%s176 + $0xcd0] sm:$0xf]
        %v1016 = vld [vmem:[%s176 + $0xcd4] sm:$0xf]
        %v1017 = vld [vmem:[%s176 + $0xcd8] sm:$0xf]
        %v1018 = vld [vmem:[%s176 + $0xcdc] sm:$0xf]
        %v1019 = vld [vmem:[%s176 + $0xce0] sm:$0xf]
        %v1020 = vld [vmem:[%s176 + $0xce4] sm:$0xf]
        %v1021 = vld [vmem:[%s176 + $0xce8] sm:$0xf]
        %v1022 = vld [vmem:[%s176 + $0xcec] sm:$0xf]
        %v1023 = vld [vmem:[%s176 + $0xcf0] sm:$0xf]
        %v1024 = vld [vmem:[%s176 + $0xcf4] sm:$0xf]
        %v1025 = vld [vmem:[%s176 + $0xcf8] sm:$0xf]
        %v1026 = vld [vmem:[%s176 + $0xcfc] sm:$0xf]
        %v1027 = vld [vmem:[%s176 + $0xd00] sm:$0xf]
        %v1028 = vld [vmem:[%s176 + $0xd04] sm:$0xf]
        %v1029 = vld [vmem:[%s176 + $0xd08] sm:$0xf]
        %v1030 = vld [vmem:[%s176 + $0xd0c] sm:$0xf]
        %v1031 = vld [vmem:[%s176 + $0xd10] sm:$0xf]
        %v1032 = vld [vmem:[%s176 + $0xd14] sm:$0xf]
        %v1033 = vld [vmem:[%s176 + $0xd18] sm:$0xf]
        %v1034 = vld [vmem:[%s176 + $0xd1c] sm:$0xf]
        %v1035 = vld [vmem:[%s176 + $0xd20] sm:$0xf]
        %v1036 = vld [vmem:[%s176 + $0xd24] sm:$0xf]
        %v1037 = vld [vmem:[%s176 + $0xd28] sm:$0xf]
        %v1038 = vld [vmem:[%s176 + $0xd2c] sm:$0xf]
        %v1039 = vld [vmem:[%s176 + $0xd30] sm:$0xf]
        %v1040 = vld [vmem:[%s176 + $0xd34] sm:$0xf]
        %v1041 = vld [vmem:[%s176 + $0xd38] sm:$0xf]
        %v1042 = vld [vmem:[%s176 + $0xd3c] sm:$0xf]
        %v1043 = vld [vmem:[%s176 + $0xd40] sm:$0xf]
        %v1044 = vld [vmem:[%s176 + $0xd44] sm:$0xf]
        %v1045 = vld [vmem:[%s176 + $0xd48] sm:$0xf]
        %v1046 = vld [vmem:[%s176 + $0xd4c] sm:$0xf]
        %v1047 = vld [vmem:[%s176 + $0xd50] sm:$0xf]
        %v1048 = vld [vmem:[%s176 + $0xd54] sm:$0xf]
        %v1049 = vld [vmem:[%s176 + $0xd58] sm:$0xf]
        %v1050 = vld [vmem:[%s176 + $0xd5c] sm:$0xf]
        %v1051 = vld [vmem:[%s176 + $0xd60] sm:$0xf]
        %v1052 = vld [vmem:[%s176 + $0xd64] sm:$0xf]
        %v1053 = vld [vmem:[%s176 + $0xd68] sm:$0xf]
        %v1054 = vld [vmem:[%s176 + $0xd6c] sm:$0xf]
        %v1055 = vld [vmem:[%s176 + $0xd70] sm:$0xf]
        %v1056 = vld [vmem:[%s176 + $0xd74] sm:$0xf]
        %v1057 = vld [vmem:[%s176 + $0xd78] sm:$0xf]
        %v1058 = vld [vmem:[%s176 + $0xd7c] sm:$0xf]
        %v1059 = vld [vmem:[%s176 + $0xd80] sm:$0xf]
        %v1060 = vld [vmem:[%s176 + $0xd84] sm:$0xf]
        %v1061 = vld [vmem:[%s176 + $0xd88] sm:$0xf]
        %v1062 = vld [vmem:[%s176 + $0xd8c] sm:$0xf]
        %v1063 = vld [vmem:[%s176 + $0xd90] sm:$0xf]
        %v1064 = vld [vmem:[%s176 + $0xd94] sm:$0xf]
        %v1065 = vld [vmem:[%s176 + $0xd98] sm:$0xf]
        %v1066 = vld [vmem:[%s176 + $0xd9c] sm:$0xf]
        %v1067 = vld [vmem:[%s176 + $0xda0] sm:$0xf]
        %v1068 = vld [vmem:[%s176 + $0xda4] sm:$0xf]
        %v1069 = vld [vmem:[%s176 + $0xda8] sm:$0xf]
        %v1070 = vld [vmem:[%s176 + $0xdac] sm:$0xf]
        %v1071 = vld [vmem:[%s176 + $0xdb0] sm:$0xf]
        %v1072 = vld [vmem:[%s176 + $0xdb4] sm:$0xf]
        %v1073 = vld [vmem:[%s176 + $0xdb8] sm:$0xf]
        %v1074 = vld [vmem:[%s176 + $0xdbc] sm:$0xf]
        %v1075 = vld [vmem:[%s176 + $0xdc0] sm:$0xf]
        %v1076 = vld [vmem:[%s176 + $0xdc4] sm:$0xf]
        %v1077 = vld [vmem:[%s176 + $0xdc8] sm:$0xf]
        %v1078 = vld [vmem:[%s176 + $0xdcc] sm:$0xf]
        %v1079 = vld [vmem:[%s176 + $0xdd0] sm:$0xf]
        %v1080 = vld [vmem:[%s176 + $0xdd4] sm:$0xf]
        %v1081 = vld [vmem:[%s176 + $0xdd8] sm:$0xf]
        %v1082 = vld [vmem:[%s176 + $0xddc] sm:$0xf]
        %v1083 = vld [vmem:[%s176 + $0xde0] sm:$0xf]
        %v1084 = vld [vmem:[%s176 + $0xde4] sm:$0xf]
        %v1085 = vld [vmem:[%s176 + $0xde8] sm:$0xf]
        %v1086 = vld [vmem:[%s176 + $0xdec] sm:$0xf]
        %v1087 = vld [vmem:[%s176 + $0xdf0] sm:$0xf]
        %v1088 = vld [vmem:[%s176 + $0xdf4] sm:$0xf]
        %v1089 = vld [vmem:[%s176 + $0xdf8] sm:$0xf]
        %v1090 = vld [vmem:[%s176 + $0xdfc] sm:$0xf]
        %1092 = vst [vmem:[#allocation1] ss:$9 sm:$0xff] %v188
        %v1093 = vld [vmem:[#allocation1] sm:$0xff]
        %v1094 = vld [vmem:[#allocation1 + $0x9] sm:$0xff]
        %v1095 = vld [vmem:[#allocation1 + $0x12] sm:$0xff]
        %v1096 = vld [vmem:[#allocation1 + $0x1b] sm:$0xff]
        %v1097 = vld [vmem:[#allocation1 + $0x24] sm:$0xff]
        %v1098 = vld [vmem:[#allocation1 + $0x2d] sm:$0xff]
        %v1099 = vld [vmem:[#allocation1 + $0x36] sm:$0xff]
        %v1100 = vld [vmem:[#allocation1 + $0x3f] sm:$0xff]
        %1102 = vst [vmem:[#allocation1] ss:$9 sm:$0xff] %v189
        %v1103 = vld [vmem:[#allocation1] sm:$0xff]
        %v1104 = vld [vmem:[#allocation1 + $0x9] sm:$0xff]
        %v1105 = vld [vmem:[#allocation1 + $0x12] sm:$0xff]
        %v1106 = vld [vmem:[#allocation1 + $0x1b] sm:$0xff]
        %v1107 = vld [vmem:[#allocation1 + $0x24] sm:$0xff]
        %v1108 = vld [vmem:[#allocation1 + $0x2d] sm:$0xff]
        %v1109 = vld [vmem:[#allocation1 + $0x36] sm:$0xff]
        %v1110 = vld [vmem:[#allocation1 + $0x3f] sm:$0xff]
        %1112 = vst [vmem:[#allocation1] ss:$9 sm:$0xff] %v190
        %v1113 = vld [vmem:[#allocation1] sm:$0xff]
        %v1114 = vld [vmem:[#allocation1 + $0x9] sm:$0xff]
        %v1115 = vld [vmem:[#allocation1 + $0x12] sm:$0xff]
        %v1116 = vld [vmem:[#allocation1 + $0x1b] sm:$0xff]
        %v1117 = vld [vmem:[#allocation1 + $0x24] sm:$0xff]
        %v1118 = vld [vmem:[#allocation1 + $0x2d] sm:$0xff]
        %v1119 = vld [vmem:[#allocation1 + $0x36] sm:$0xff]
        %v1120 = vld [vmem:[#allocation1 + $0x3f] sm:$0xff]
        %1122 = vst [vmem:[#allocation1] ss:$9 sm:$0xff] %v191
        %v1123 = vld [vmem:[#allocation1] sm:$0xff]
        %v1124 = vld [vmem:[#allocation1 + $0x9] sm:$0xff]
        %v1125 = vld [vmem:[#allocation1 + $0x12] sm:$0xff]
        %v1126 = vld [vmem:[#allocation1 + $0x1b] sm:$0xff]
        %v1127 = vld [vmem:[#allocation1 + $0x24] sm:$0xff]
        %v1128 = vld [vmem:[#allocation1 + $0x2d] sm:$0xff]
        %v1129 = vld [vmem:[#allocation1 + $0x36] sm:$0xff]
        %v1130 = vld [vmem:[#allocation1 + $0x3f] sm:$0xff]
        %1132 = vst [vmem:[#allocation1] ss:$9 sm:$0xff] %v192
        %v1133 = vld [vmem:[#allocation1] sm:$0xff]
        %v1134 = vld [vmem:[#allocation1 + $0x9] sm:$0xff]
        %v1135 = vld [vmem:[#allocation1 + $0x12] sm:$0xff]
        %v1136 = vld [vmem:[#allocation1 + $0x1b] sm:$0xff]
        %v1137 = vld [vmem:[#allocation1 + $0x24] sm:$0xff]
        %v1138 = vld [vmem:[#allocation1 + $0x2d] sm:$0xff]
        %v1139 = vld [vmem:[#allocation1 + $0x36] sm:$0xff]
        %v1140 = vld [vmem:[#allocation1 + $0x3f] sm:$0xff]
        %1142 = vst [vmem:[#allocation1] ss:$9 sm:$0xff] %v193
        %v1143 = vld [vmem:[#allocation1] sm:$0xff]
        %v1144 = vld [vmem:[#allocation1 + $0x9] sm:$0xff]
        %v1145 = vld [vmem:[#allocation1 + $0x12] sm:$0xff]
        %v1146 = vld [vmem:[#allocation1 + $0x1b] sm:$0xff]
        %v1147 = vld [vmem:[#allocation1 + $0x24] sm:$0xff]
        %v1148 = vld [vmem:[#allocation1 + $0x2d] sm:$0xff]
        %v1149 = vld [vmem:[#allocation1 + $0x36] sm:$0xff]
        %v1150 = vld [vmem:[#allocation1 + $0x3f] sm:$0xff]
        %1152 = vst [vmem:[#allocation1] ss:$9 sm:$0xff] %v194
        %v1153 = vld [vmem:[#allocation1] sm:$0xff]
        %v1154 = vld [vmem:[#allocation1 + $0x9] sm:$0xff]
        %v1155 = vld [vmem:[#allocation1 + $0x12] sm:$0xff]
        %v1156 = vld [vmem:[#allocation1 + $0x1b] sm:$0xff]
        %v1157 = vld [vmem:[#allocation1 + $0x24] sm:$0xff]
        %v1158 = vld [vmem:[#allocation1 + $0x2d] sm:$0xff]
        %v1159 = vld [vmem:[#allocation1 + $0x36] sm:$0xff]
        %v1160 = vld [vmem:[#allocation1 + $0x3f] sm:$0xff]
        %v2113 = vunpack.c.l.b16 %v195
        %v2114 = vunpack.c.l.b16 %v196
        %v2115 = vunpack.c.l.b16 %v197
        %v2116 = vunpack.c.l.b16 %v198
        %v2117 = vunpack.c.l.b16 %v199
        %v2118 = vunpack.c.l.b16 %v200
        %v2119 = vunpack.c.l.b16 %v201
        %v2120 = vunpack.c.l.b16 %v202
        %v2121 = vunpack.c.l.b16 %v203
        %v2122 = vunpack.c.l.b16 %v204
        %v2123 = vunpack.c.l.b16 %v205
        %v2124 = vunpack.c.l.b16 %v206
        %v2125 = vunpack.c.l.b16 %v207
        %v2126 = vunpack.c.l.b16 %v208
        %v2127 = vunpack.c.l.b16 %v209
        %v2128 = vunpack.c.l.b16 %v210
        %v2129 = vunpack.c.l.b16 %v211
        %v2130 = vunpack.c.l.b16 %v212
        %v2131 = vunpack.c.l.b16 %v213
        %v2132 = vunpack.c.l.b16 %v214
        %v2133 = vunpack.c.l.b16 %v215
        %v2134 = vunpack.c.l.b16 %v216
        %v2135 = vunpack.c.l.b16 %v217
        %v2136 = vunpack.c.l.b16 %v218
        %v2137 = vunpack.c.l.b16 %v219
        %v2138 = vunpack.c.l.b16 %v220
        %v2139 = vunpack.c.l.b16 %v221
        %v2140 = vunpack.c.l.b16 %v222
        %v2141 = vunpack.c.l.b16 %v223
        %v2142 = vunpack.c.l.b16 %v224
        %v2143 = vunpack.c.l.b16 %v225
        %v2144 = vunpack.c.l.b16 %v226
        %v2145 = vunpack.c.l.b16 %v227
        %v2146 = vunpack.c.l.b16 %v228
        %v2147 = vunpack.c.l.b16 %v229
        %v2148 = vunpack.c.l.b16 %v230
        %v2149 = vunpack.c.l.b16 %v231
        %v2150 = vunpack.c.l.b16 %v232
        %v2151 = vunpack.c.l.b16 %v233
        %v2152 = vunpack.c.l.b16 %v234
        %v2153 = vunpack.c.l.b16 %v235
        %v2154 = vunpack.c.l.b16 %v236
        %v2155 = vunpack.c.l.b16 %v237
        %v2156 = vunpack.c.l.b16 %v238
        %v2157 = vunpack.c.l.b16 %v239
        %v2158 = vunpack.c.l.b16 %v240
        %v2159 = vunpack.c.l.b16 %v241
        %v2160 = vunpack.c.l.b16 %v242
        %v2161 = vunpack.c.l.b16 %v243
        %v2162 = vunpack.c.l.b16 %v244
        %v2163 = vunpack.c.l.b16 %v245
        %v2164 = vunpack.c.l.b16 %v246
        %v2165 = vunpack.c.l.b16 %v247
        %v2166 = vunpack.c.l.b16 %v248
        %v2167 = vunpack.c.l.b16 %v249
        %v2168 = vunpack.c.l.b16 %v250
        %v2169 = vunpack.c.l.b16 %v251
        %v2170 = vunpack.c.l.b16 %v252
        %v2171 = vunpack.c.l.b16 %v253
        %v2172 = vunpack.c.l.b16 %v254
        %v2173 = vunpack.c.l.b16 %v255
        %v2174 = vunpack.c.l.b16 %v256
        %v2175 = vunpack.c.l.b16 %v257
        %v2176 = vunpack.c.l.b16 %v258
        %v2177 = vunpack.c.l.b16 %v259
        %v2178 = vunpack.c.l.b16 %v260
        %v2179 = vunpack.c.l.b16 %v261
        %v2180 = vunpack.c.l.b16 %v262
        %v2181 = vunpack.c.l.b16 %v263
        %v2182 = vunpack.c.l.b16 %v264
        %v2183 = vunpack.c.l.b16 %v265
        %v2184 = vunpack.c.l.b16 %v266
        %v2185 = vunpack.c.l.b16 %v267
        %v2186 = vunpack.c.l.b16 %v268
        %v2187 = vunpack.c.l.b16 %v269
        %v2188 = vunpack.c.l.b16 %v270
        %v2189 = vunpack.c.l.b16 %v271
        %v2190 = vunpack.c.l.b16 %v272
        %v2191 = vunpack.c.l.b16 %v273
        %v2192 = vunpack.c.l.b16 %v274
        %v2193 = vunpack.c.l.b16 %v275
        %v2194 = vunpack.c.l.b16 %v276
        %v2195 = vunpack.c.l.b16 %v277
        %v2196 = vunpack.c.l.b16 %v278
        %v2197 = vunpack.c.l.b16 %v279
        %v2198 = vunpack.c.l.b16 %v280
        %v2199 = vunpack.c.l.b16 %v281
        %v2200 = vunpack.c.l.b16 %v282
        %v2201 = vunpack.c.l.b16 %v283
        %v2202 = vunpack.c.l.b16 %v284
        %v2203 = vunpack.c.l.b16 %v285
        %v2204 = vunpack.c.l.b16 %v286
        %v2205 = vunpack.c.l.b16 %v287
        %v2206 = vunpack.c.l.b16 %v288
        %v2207 = vunpack.c.l.b16 %v289
        %v2208 = vunpack.c.l.b16 %v290
        %v2209 = vunpack.c.l.b16 %v291
        %v2210 = vunpack.c.l.b16 %v292
        %v2211 = vunpack.c.l.b16 %v293
        %v2212 = vunpack.c.l.b16 %v294
        %v2213 = vunpack.c.l.b16 %v295
        %v2214 = vunpack.c.l.b16 %v296
        %v2215 = vunpack.c.l.b16 %v297
        %v2216 = vunpack.c.l.b16 %v298
        %v2217 = vunpack.c.l.b16 %v299
        %v2218 = vunpack.c.l.b16 %v300
        %v2219 = vunpack.c.l.b16 %v301
        %v2220 = vunpack.c.l.b16 %v302
        %v2221 = vunpack.c.l.b16 %v303
        %v2222 = vunpack.c.l.b16 %v304
        %v2223 = vunpack.c.l.b16 %v305
        %v2224 = vunpack.c.l.b16 %v306
        %v2225 = vunpack.c.l.b16 %v307
        %v2226 = vunpack.c.l.b16 %v308
        %v2227 = vunpack.c.l.b16 %v309
        %v2228 = vunpack.c.l.b16 %v310
        %v2229 = vunpack.c.l.b16 %v311
        %v2230 = vunpack.c.l.b16 %v312
        %v2231 = vunpack.c.l.b16 %v313
        %v2232 = vunpack.c.l.b16 %v314
        %v2233 = vunpack.c.l.b16 %v315
        %v2234 = vunpack.c.l.b16 %v316
        %v2235 = vunpack.c.l.b16 %v317
        %v2236 = vunpack.c.l.b16 %v318
        %v2237 = vunpack.c.l.b16 %v319
        %v2238 = vunpack.c.l.b16 %v320
        %v2239 = vunpack.c.l.b16 %v321
        %v2240 = vunpack.c.l.b16 %v322
        %v2241 = vunpack.c.l.b16 %v323
        %v2242 = vunpack.c.l.b16 %v324
        %v2243 = vunpack.c.l.b16 %v325
        %v2244 = vunpack.c.l.b16 %v326
        %v2245 = vunpack.c.l.b16 %v327
        %v2246 = vunpack.c.l.b16 %v328
        %v2247 = vunpack.c.l.b16 %v329
        %v2248 = vunpack.c.l.b16 %v330
        %v2249 = vunpack.c.l.b16 %v331
        %v2250 = vunpack.c.l.b16 %v332
        %v2251 = vunpack.c.l.b16 %v333
        %v2252 = vunpack.c.l.b16 %v334
        %v2253 = vunpack.c.l.b16 %v335
        %v2254 = vunpack.c.l.b16 %v336
        %v2255 = vunpack.c.l.b16 %v337
        %v2256 = vunpack.c.l.b16 %v338
        %v2257 = vunpack.c.l.b16 %v339
        %v2258 = vunpack.c.l.b16 %v340
        %v2259 = vunpack.c.l.b16 %v341
        %v2260 = vunpack.c.l.b16 %v342
        %v2261 = vunpack.c.l.b16 %v343
        %v2262 = vunpack.c.l.b16 %v344
        %v2263 = vunpack.c.l.b16 %v345
        %v2264 = vunpack.c.l.b16 %v346
        %v2265 = vunpack.c.l.b16 %v347
        %v2266 = vunpack.c.l.b16 %v348
        %v2267 = vunpack.c.l.b16 %v349
        %v2268 = vunpack.c.l.b16 %v350
        %v2269 = vunpack.c.l.b16 %v351
        %v2270 = vunpack.c.l.b16 %v352
        %v2271 = vunpack.c.l.b16 %v353
        %v2272 = vunpack.c.l.b16 %v354
        %v2273 = vunpack.c.l.b16 %v355
        %v2274 = vunpack.c.l.b16 %v356
        %v2275 = vunpack.c.l.b16 %v357
        %v2276 = vunpack.c.l.b16 %v358
        %v2277 = vunpack.c.l.b16 %v359
        %v2278 = vunpack.c.l.b16 %v360
        %v2279 = vunpack.c.l.b16 %v361
        %v2280 = vunpack.c.l.b16 %v362
        %v2281 = vunpack.c.l.b16 %v363
        %v2282 = vunpack.c.l.b16 %v364
        %v2283 = vunpack.c.l.b16 %v365
        %v2284 = vunpack.c.l.b16 %v366
        %v2285 = vunpack.c.l.b16 %v367
        %v2286 = vunpack.c.l.b16 %v368
        %v2287 = vunpack.c.l.b16 %v369
        %v2288 = vunpack.c.l.b16 %v370
        %v2289 = vunpack.c.l.b16 %v371
        %v2290 = vunpack.c.l.b16 %v372
        %v2291 = vunpack.c.l.b16 %v373
        %v2292 = vunpack.c.l.b16 %v374
        %v2293 = vunpack.c.l.b16 %v375
        %v2294 = vunpack.c.l.b16 %v376
        %v2295 = vunpack.c.l.b16 %v377
        %v2296 = vunpack.c.l.b16 %v378
        %v2297 = vunpack.c.l.b16 %v379
        %v2298 = vunpack.c.l.b16 %v380
        %v2299 = vunpack.c.l.b16 %v381
        %v2300 = vunpack.c.l.b16 %v382
        %v2301 = vunpack.c.l.b16 %v383
        %v2302 = vunpack.c.l.b16 %v384
        %v2303 = vunpack.c.l.b16 %v385
        %v2304 = vunpack.c.l.b16 %v386
        %v2305 = vunpack.c.l.b16 %v387
        %v2306 = vunpack.c.l.b16 %v388
        %v2307 = vunpack.c.l.b16 %v389
        %v2308 = vunpack.c.l.b16 %v390
        %v2309 = vunpack.c.l.b16 %v391
        %v2310 = vunpack.c.l.b16 %v392
        %v2311 = vunpack.c.l.b16 %v393
        %v2312 = vunpack.c.l.b16 %v394
        %v2313 = vunpack.c.l.b16 %v395
        %v2314 = vunpack.c.l.b16 %v396
        %v2315 = vunpack.c.l.b16 %v397
        %v2316 = vunpack.c.l.b16 %v398
        %v2317 = vunpack.c.l.b16 %v399
        %v2318 = vunpack.c.l.b16 %v400
        %v2319 = vunpack.c.l.b16 %v401
        %v2320 = vunpack.c.l.b16 %v402
        %v2321 = vunpack.c.l.b16 %v403
        %v2322 = vunpack.c.l.b16 %v404
        %v2323 = vunpack.c.l.b16 %v405
        %v2324 = vunpack.c.l.b16 %v406
        %v2325 = vunpack.c.l.b16 %v407
        %v2326 = vunpack.c.l.b16 %v408
        %v2327 = vunpack.c.l.b16 %v409
        %v2328 = vunpack.c.l.b16 %v410
        %v2329 = vunpack.c.l.b16 %v411
        %v2330 = vunpack.c.l.b16 %v412
        %v2331 = vunpack.c.l.b16 %v413
        %v2332 = vunpack.c.l.b16 %v414
        %v2333 = vunpack.c.l.b16 %v415
        %v2334 = vunpack.c.l.b16 %v416
        %v2335 = vunpack.c.l.b16 %v417
        %v2336 = vunpack.c.l.b16 %v418
        %v2337 = vunpack.c.l.b16 %v419
        %v2338 = vunpack.c.l.b16 %v420
        %v2339 = vunpack.c.l.b16 %v421
        %v2340 = vunpack.c.l.b16 %v422
        %v2341 = vunpack.c.l.b16 %v423
        %v2342 = vunpack.c.l.b16 %v424
        %v2343 = vunpack.c.l.b16 %v425
        %v2344 = vunpack.c.l.b16 %v426
        %v2345 = vunpack.c.l.b16 %v427
        %v2346 = vunpack.c.l.b16 %v428
        %v2347 = vunpack.c.l.b16 %v429
        %v2348 = vunpack.c.l.b16 %v430
        %v2349 = vunpack.c.l.b16 %v431
        %v2350 = vunpack.c.l.b16 %v432
        %v2351 = vunpack.c.l.b16 %v433
        %v2352 = vunpack.c.l.b16 %v434
        %v2353 = vunpack.c.l.b16 %v435
        %v2354 = vunpack.c.l.b16 %v436
        %v2355 = vunpack.c.l.b16 %v437
        %v2356 = vunpack.c.l.b16 %v438
        %v2357 = vunpack.c.l.b16 %v439
        %v2358 = vunpack.c.l.b16 %v440
        %v2359 = vunpack.c.l.b16 %v441
        %v2360 = vunpack.c.l.b16 %v442
        %v2361 = vunpack.c.l.b16 %v443
        %v2362 = vunpack.c.l.b16 %v444
        %v2363 = vunpack.c.l.b16 %v445
        %v2364 = vunpack.c.l.b16 %v446
        %v2365 = vunpack.c.l.b16 %v447
        %v2366 = vunpack.c.l.b16 %v448
        %v2367 = vunpack.c.l.b16 %v449
        %v2368 = vunpack.c.l.b16 %v450
        %v2369 = vunpack.c.l.b16 %v451
        %v2370 = vunpack.c.l.b16 %v452
        %v2371 = vunpack.c.l.b16 %v453
        %v2372 = vunpack.c.l.b16 %v454
        %v2373 = vunpack.c.l.b16 %v455
        %v2374 = vunpack.c.l.b16 %v456
        %v2375 = vunpack.c.l.b16 %v457
        %v2376 = vunpack.c.l.b16 %v458
        %v2377 = vunpack.c.l.b16 %v459
        %v2378 = vunpack.c.l.b16 %v460
        %v2379 = vunpack.c.l.b16 %v461
        %v2380 = vunpack.c.l.b16 %v462
        %v2381 = vunpack.c.l.b16 %v463
        %v2382 = vunpack.c.l.b16 %v464
        %v2383 = vunpack.c.l.b16 %v465
        %v2384 = vunpack.c.l.b16 %v466
        %v2385 = vunpack.c.l.b16 %v467
        %v2386 = vunpack.c.l.b16 %v468
        %v2387 = vunpack.c.l.b16 %v469
        %v2388 = vunpack.c.l.b16 %v470
        %v2389 = vunpack.c.l.b16 %v471
        %v2390 = vunpack.c.l.b16 %v472
        %v2391 = vunpack.c.l.b16 %v473
        %v2392 = vunpack.c.l.b16 %v474
        %v2393 = vunpack.c.l.b16 %v475
        %v2394 = vunpack.c.l.b16 %v476
        %v2395 = vunpack.c.l.b16 %v477
        %v2396 = vunpack.c.l.b16 %v478
        %v2397 = vunpack.c.l.b16 %v479
        %v2398 = vunpack.c.l.b16 %v480
        %v2399 = vunpack.c.l.b16 %v481
        %v2400 = vunpack.c.l.b16 %v482
        %v2401 = vunpack.c.l.b16 %v483
        %v2402 = vunpack.c.l.b16 %v484
        %v2403 = vunpack.c.l.b16 %v485
        %v2404 = vunpack.c.l.b16 %v486
        %v2405 = vunpack.c.l.b16 %v487
        %v2406 = vunpack.c.l.b16 %v488
        %v2407 = vunpack.c.l.b16 %v489
        %v2408 = vunpack.c.l.b16 %v490
        %v2409 = vunpack.c.l.b16 %v491
        %v2410 = vunpack.c.l.b16 %v492
        %v2411 = vunpack.c.l.b16 %v493
        %v2412 = vunpack.c.l.b16 %v494
        %v2413 = vunpack.c.l.b16 %v495
        %v2414 = vunpack.c.l.b16 %v496
        %v2415 = vunpack.c.l.b16 %v497
        %v2416 = vunpack.c.l.b16 %v498
        %v2417 = vunpack.c.l.b16 %v499
        %v2418 = vunpack.c.l.b16 %v500
        %v2419 = vunpack.c.l.b16 %v501
        %v2420 = vunpack.c.l.b16 %v502
        %v2421 = vunpack.c.l.b16 %v503
        %v2422 = vunpack.c.l.b16 %v504
        %v2423 = vunpack.c.l.b16 %v505
        %v2424 = vunpack.c.l.b16 %v506
        %v2425 = vunpack.c.l.b16 %v507
        %v2426 = vunpack.c.l.b16 %v508
        %v2427 = vunpack.c.l.b16 %v509
        %v2428 = vunpack.c.l.b16 %v510
        %v2429 = vunpack.c.l.b16 %v511
        %v2430 = vunpack.c.l.b16 %v512
        %v2431 = vunpack.c.l.b16 %v513
        %v2432 = vunpack.c.l.b16 %v514
        %v2433 = vunpack.c.l.b16 %v515
        %v2434 = vunpack.c.l.b16 %v516
        %v2435 = vunpack.c.l.b16 %v517
        %v2436 = vunpack.c.l.b16 %v518
        %v2437 = vunpack.c.l.b16 %v519
        %v2438 = vunpack.c.l.b16 %v520
        %v2439 = vunpack.c.l.b16 %v521
        %v2440 = vunpack.c.l.b16 %v522
        %v2441 = vunpack.c.l.b16 %v523
        %v2442 = vunpack.c.l.b16 %v524
        %v2443 = vunpack.c.l.b16 %v525
        %v2444 = vunpack.c.l.b16 %v526
        %v2445 = vunpack.c.l.b16 %v527
        %v2446 = vunpack.c.l.b16 %v528
        %v2447 = vunpack.c.l.b16 %v529
        %v2448 = vunpack.c.l.b16 %v530
        %v2449 = vunpack.c.l.b16 %v531
        %v2450 = vunpack.c.l.b16 %v532
        %v2451 = vunpack.c.l.b16 %v533
        %v2452 = vunpack.c.l.b16 %v534
        %v2453 = vunpack.c.l.b16 %v535
        %v2454 = vunpack.c.l.b16 %v536
        %v2455 = vunpack.c.l.b16 %v537
        %v2456 = vunpack.c.l.b16 %v538
        %v2457 = vunpack.c.l.b16 %v539
        %v2458 = vunpack.c.l.b16 %v540
        %v2459 = vunpack.c.l.b16 %v541
        %v2460 = vunpack.c.l.b16 %v542
        %v2461 = vunpack.c.l.b16 %v543
        %v2462 = vunpack.c.l.b16 %v544
        %v2463 = vunpack.c.l.b16 %v545
        %v2464 = vunpack.c.l.b16 %v546
        %v2465 = vunpack.c.l.b16 %v547
        %v2466 = vunpack.c.l.b16 %v548
        %v2467 = vunpack.c.l.b16 %v549
        %v2468 = vunpack.c.l.b16 %v550
        %v2469 = vunpack.c.l.b16 %v551
        %v2470 = vunpack.c.l.b16 %v552
        %v2471 = vunpack.c.l.b16 %v553
        %v2472 = vunpack.c.l.b16 %v554
        %v2473 = vunpack.c.l.b16 %v555
        %v2474 = vunpack.c.l.b16 %v556
        %v2475 = vunpack.c.l.b16 %v557
        %v2476 = vunpack.c.l.b16 %v558
        %v2477 = vunpack.c.l.b16 %v559
        %v2478 = vunpack.c.l.b16 %v560
        %v2479 = vunpack.c.l.b16 %v561
        %v2480 = vunpack.c.l.b16 %v562
        %v2481 = vunpack.c.l.b16 %v563
        %v2482 = vunpack.c.l.b16 %v564
        %v2483 = vunpack.c.l.b16 %v565
        %v2484 = vunpack.c.l.b16 %v566
        %v2485 = vunpack.c.l.b16 %v567
        %v2486 = vunpack.c.l.b16 %v568
        %v2487 = vunpack.c.l.b16 %v569
        %v2488 = vunpack.c.l.b16 %v570
        %v2489 = vunpack.c.l.b16 %v571
        %v2490 = vunpack.c.l.b16 %v572
        %v2491 = vunpack.c.l.b16 %v573
        %v2492 = vunpack.c.l.b16 %v574
        %v2493 = vunpack.c.l.b16 %v575
        %v2494 = vunpack.c.l.b16 %v576
        %v2495 = vunpack.c.l.b16 %v577
        %v2496 = vunpack.c.l.b16 %v578
        %v2497 = vunpack.c.l.b16 %v579
        %v2498 = vunpack.c.l.b16 %v580
        %v2499 = vunpack.c.l.b16 %v581
        %v2500 = vunpack.c.l.b16 %v582
        %v2501 = vunpack.c.l.b16 %v583
        %v2502 = vunpack.c.l.b16 %v584
        %v2503 = vunpack.c.l.b16 %v585
        %v2504 = vunpack.c.l.b16 %v586
        %v2505 = vunpack.c.l.b16 %v587
        %v2506 = vunpack.c.l.b16 %v588
        %v2507 = vunpack.c.l.b16 %v589
        %v2508 = vunpack.c.l.b16 %v590
        %v2509 = vunpack.c.l.b16 %v591
        %v2510 = vunpack.c.l.b16 %v592
        %v2511 = vunpack.c.l.b16 %v593
        %v2512 = vunpack.c.l.b16 %v594
        %v2513 = vunpack.c.l.b16 %v595
        %v2514 = vunpack.c.l.b16 %v596
        %v2515 = vunpack.c.l.b16 %v597
        %v2516 = vunpack.c.l.b16 %v598
        %v2517 = vunpack.c.l.b16 %v599
        %v2518 = vunpack.c.l.b16 %v600
        %v2519 = vunpack.c.l.b16 %v601
        %v2520 = vunpack.c.l.b16 %v602
        %v2521 = vunpack.c.l.b16 %v603
        %v2522 = vunpack.c.l.b16 %v604
        %v2523 = vunpack.c.l.b16 %v605
        %v2524 = vunpack.c.l.b16 %v606
        %v2525 = vunpack.c.l.b16 %v607
        %v2526 = vunpack.c.l.b16 %v608
        %v2527 = vunpack.c.l.b16 %v609
        %v2528 = vunpack.c.l.b16 %v610
        %v2529 = vunpack.c.l.b16 %v611
        %v2530 = vunpack.c.l.b16 %v612
        %v2531 = vunpack.c.l.b16 %v613
        %v2532 = vunpack.c.l.b16 %v614
        %v2533 = vunpack.c.l.b16 %v615
        %v2534 = vunpack.c.l.b16 %v616
        %v2535 = vunpack.c.l.b16 %v617
        %v2536 = vunpack.c.l.b16 %v618
        %v2537 = vunpack.c.l.b16 %v619
        %v2538 = vunpack.c.l.b16 %v620
        %v2539 = vunpack.c.l.b16 %v621
        %v2540 = vunpack.c.l.b16 %v622
        %v2541 = vunpack.c.l.b16 %v623
        %v2542 = vunpack.c.l.b16 %v624
        %v2543 = vunpack.c.l.b16 %v625
        %v2544 = vunpack.c.l.b16 %v626
        %v2545 = vunpack.c.l.b16 %v627
        %v2546 = vunpack.c.l.b16 %v628
        %v2547 = vunpack.c.l.b16 %v629
        %v2548 = vunpack.c.l.b16 %v630
        %v2549 = vunpack.c.l.b16 %v631
        %v2550 = vunpack.c.l.b16 %v632
        %v2551 = vunpack.c.l.b16 %v633
        %v2552 = vunpack.c.l.b16 %v634
        %v2553 = vunpack.c.l.b16 %v635
        %v2554 = vunpack.c.l.b16 %v636
        %v2555 = vunpack.c.l.b16 %v637
        %v2556 = vunpack.c.l.b16 %v638
        %v2557 = vunpack.c.l.b16 %v639
        %v2558 = vunpack.c.l.b16 %v640
        %v2559 = vunpack.c.l.b16 %v641
        %v2560 = vunpack.c.l.b16 %v642
        %v2561 = vunpack.c.l.b16 %v643
        %v2562 = vunpack.c.l.b16 %v644
        %v2563 = vunpack.c.l.b16 %v645
        %v2564 = vunpack.c.l.b16 %v646
        %v2565 = vunpack.c.l.b16 %v647
        %v2566 = vunpack.c.l.b16 %v648
        %v2567 = vunpack.c.l.b16 %v649
        %v2568 = vunpack.c.l.b16 %v650
        %v2569 = vunpack.c.l.b16 %v651
        %v2570 = vunpack.c.l.b16 %v652
        %v2571 = vunpack.c.l.b16 %v653
        %v2572 = vunpack.c.l.b16 %v654
        %v2573 = vunpack.c.l.b16 %v655
        %v2574 = vunpack.c.l.b16 %v656
        %v2575 = vunpack.c.l.b16 %v657
        %v2576 = vunpack.c.l.b16 %v658
        %v2577 = vunpack.c.l.b16 %v659
        %v2578 = vunpack.c.l.b16 %v660
        %v2579 = vunpack.c.l.b16 %v661
        %v2580 = vunpack.c.l.b16 %v662
        %v2581 = vunpack.c.l.b16 %v663
        %v2582 = vunpack.c.l.b16 %v664
        %v2583 = vunpack.c.l.b16 %v665
        %v2584 = vunpack.c.l.b16 %v666
        %v2585 = vunpack.c.l.b16 %v667
        %v2586 = vunpack.c.l.b16 %v668
        %v2587 = vunpack.c.l.b16 %v669
        %v2588 = vunpack.c.l.b16 %v670
        %v2589 = vunpack.c.l.b16 %v671
        %v2590 = vunpack.c.l.b16 %v672
        %v2591 = vunpack.c.l.b16 %v673
        %v2592 = vunpack.c.l.b16 %v674
        %v2593 = vunpack.c.l.b16 %v675
        %v2594 = vunpack.c.l.b16 %v676
        %v2595 = vunpack.c.l.b16 %v677
        %v2596 = vunpack.c.l.b16 %v678
        %v2597 = vunpack.c.l.b16 %v679
        %v2598 = vunpack.c.l.b16 %v680
        %v2599 = vunpack.c.l.b16 %v681
        %v2600 = vunpack.c.l.b16 %v682
        %v2601 = vunpack.c.l.b16 %v683
        %v2602 = vunpack.c.l.b16 %v684
        %v2603 = vunpack.c.l.b16 %v685
        %v2604 = vunpack.c.l.b16 %v686
        %v2605 = vunpack.c.l.b16 %v687
        %v2606 = vunpack.c.l.b16 %v688
        %v2607 = vunpack.c.l.b16 %v689
        %v2608 = vunpack.c.l.b16 %v690
        %v2609 = vunpack.c.l.b16 %v691
        %v2610 = vunpack.c.l.b16 %v692
        %v2611 = vunpack.c.l.b16 %v693
        %v2612 = vunpack.c.l.b16 %v694
        %v2613 = vunpack.c.l.b16 %v695
        %v2614 = vunpack.c.l.b16 %v696
        %v2615 = vunpack.c.l.b16 %v697
        %v2616 = vunpack.c.l.b16 %v698
        %v2617 = vunpack.c.l.b16 %v699
        %v2618 = vunpack.c.l.b16 %v700
        %v2619 = vunpack.c.l.b16 %v701
        %v2620 = vunpack.c.l.b16 %v702
        %v2621 = vunpack.c.l.b16 %v703
        %v2622 = vunpack.c.l.b16 %v704
        %v2623 = vunpack.c.l.b16 %v705
        %v2624 = vunpack.c.l.b16 %v706
        %v2625 = vunpack.c.l.b16 %v707
        %v2626 = vunpack.c.l.b16 %v708
        %v2627 = vunpack.c.l.b16 %v709
        %v2628 = vunpack.c.l.b16 %v710
        %v2629 = vunpack.c.l.b16 %v711
        %v2630 = vunpack.c.l.b16 %v712
        %v2631 = vunpack.c.l.b16 %v713
        %v2632 = vunpack.c.l.b16 %v714
        %v2633 = vunpack.c.l.b16 %v715
        %v2634 = vunpack.c.l.b16 %v716
        %v2635 = vunpack.c.l.b16 %v717
        %v2636 = vunpack.c.l.b16 %v718
        %v2637 = vunpack.c.l.b16 %v719
        %v2638 = vunpack.c.l.b16 %v720
        %v2639 = vunpack.c.l.b16 %v721
        %v2640 = vunpack.c.l.b16 %v722
        %v2641 = vunpack.c.l.b16 %v723
        %v2642 = vunpack.c.l.b16 %v724
        %v2643 = vunpack.c.l.b16 %v725
        %v2644 = vunpack.c.l.b16 %v726
        %v2645 = vunpack.c.l.b16 %v727
        %v2646 = vunpack.c.l.b16 %v728
        %v2647 = vunpack.c.l.b16 %v729
        %v2648 = vunpack.c.l.b16 %v730
        %v2649 = vunpack.c.l.b16 %v731
        %v2650 = vunpack.c.l.b16 %v732
        %v2651 = vunpack.c.l.b16 %v733
        %v2652 = vunpack.c.l.b16 %v734
        %v2653 = vunpack.c.l.b16 %v735
        %v2654 = vunpack.c.l.b16 %v736
        %v2655 = vunpack.c.l.b16 %v737
        %v2656 = vunpack.c.l.b16 %v738
        %v2657 = vunpack.c.l.b16 %v739
        %v2658 = vunpack.c.l.b16 %v740
        %v2659 = vunpack.c.l.b16 %v741
        %v2660 = vunpack.c.l.b16 %v742
        %v2661 = vunpack.c.l.b16 %v743
        %v2662 = vunpack.c.l.b16 %v744
        %v2663 = vunpack.c.l.b16 %v745
        %v2664 = vunpack.c.l.b16 %v746
        %v2665 = vunpack.c.l.b16 %v747
        %v2666 = vunpack.c.l.b16 %v748
        %v2667 = vunpack.c.l.b16 %v749
        %v2668 = vunpack.c.l.b16 %v750
        %v2669 = vunpack.c.l.b16 %v751
        %v2670 = vunpack.c.l.b16 %v752
        %v2671 = vunpack.c.l.b16 %v753
        %v2672 = vunpack.c.l.b16 %v754
        %v2673 = vunpack.c.l.b16 %v755
        %v2674 = vunpack.c.l.b16 %v756
        %v2675 = vunpack.c.l.b16 %v757
        %v2676 = vunpack.c.l.b16 %v758
        %v2677 = vunpack.c.l.b16 %v759
        %v2678 = vunpack.c.l.b16 %v760
        %v2679 = vunpack.c.l.b16 %v761
        %v2680 = vunpack.c.l.b16 %v762
        %v2681 = vunpack.c.l.b16 %v763
        %v2682 = vunpack.c.l.b16 %v764
        %v2683 = vunpack.c.l.b16 %v765
        %v2684 = vunpack.c.l.b16 %v766
        %v2685 = vunpack.c.l.b16 %v767
        %v2686 = vunpack.c.l.b16 %v768
        %v2687 = vunpack.c.l.b16 %v769
        %v2688 = vunpack.c.l.b16 %v770
        %v2689 = vunpack.c.l.b16 %v771
        %v2690 = vunpack.c.l.b16 %v772
        %v2691 = vunpack.c.l.b16 %v773
        %v2692 = vunpack.c.l.b16 %v774
        %v2693 = vunpack.c.l.b16 %v775
        %v2694 = vunpack.c.l.b16 %v776
        %v2695 = vunpack.c.l.b16 %v777
        %v2696 = vunpack.c.l.b16 %v778
        %v2697 = vunpack.c.l.b16 %v779
        %v2698 = vunpack.c.l.b16 %v780
        %v2699 = vunpack.c.l.b16 %v781
        %v2700 = vunpack.c.l.b16 %v782
        %v2701 = vunpack.c.l.b16 %v783
        %v2702 = vunpack.c.l.b16 %v784
        %v2703 = vunpack.c.l.b16 %v785
        %v2704 = vunpack.c.l.b16 %v786
        %v2705 = vunpack.c.l.b16 %v787
        %v2706 = vunpack.c.l.b16 %v788
        %v2707 = vunpack.c.l.b16 %v789
        %v2708 = vunpack.c.l.b16 %v790
        %v2709 = vunpack.c.l.b16 %v791
        %v2710 = vunpack.c.l.b16 %v792
        %v2711 = vunpack.c.l.b16 %v793
        %v2712 = vunpack.c.l.b16 %v794
        %v2713 = vunpack.c.l.b16 %v795
        %v2714 = vunpack.c.l.b16 %v796
        %v2715 = vunpack.c.l.b16 %v797
        %v2716 = vunpack.c.l.b16 %v798
        %v2717 = vunpack.c.l.b16 %v799
        %v2718 = vunpack.c.l.b16 %v800
        %v2719 = vunpack.c.l.b16 %v801
        %v2720 = vunpack.c.l.b16 %v802
        %v2721 = vunpack.c.l.b16 %v803
        %v2722 = vunpack.c.l.b16 %v804
        %v2723 = vunpack.c.l.b16 %v805
        %v2724 = vunpack.c.l.b16 %v806
        %v2725 = vunpack.c.l.b16 %v807
        %v2726 = vunpack.c.l.b16 %v808
        %v2727 = vunpack.c.l.b16 %v809
        %v2728 = vunpack.c.l.b16 %v810
        %v2729 = vunpack.c.l.b16 %v811
        %v2730 = vunpack.c.l.b16 %v812
        %v2731 = vunpack.c.l.b16 %v813
        %v2732 = vunpack.c.l.b16 %v814
        %v2733 = vunpack.c.l.b16 %v815
        %v2734 = vunpack.c.l.b16 %v816
        %v2735 = vunpack.c.l.b16 %v817
        %v2736 = vunpack.c.l.b16 %v818
        %v2737 = vunpack.c.l.b16 %v819
        %v2738 = vunpack.c.l.b16 %v820
        %v2739 = vunpack.c.l.b16 %v821
        %v2740 = vunpack.c.l.b16 %v822
        %v2741 = vunpack.c.l.b16 %v823
        %v2742 = vunpack.c.l.b16 %v824
        %v2743 = vunpack.c.l.b16 %v825
        %v2744 = vunpack.c.l.b16 %v826
        %v2745 = vunpack.c.l.b16 %v827
        %v2746 = vunpack.c.l.b16 %v828
        %v2747 = vunpack.c.l.b16 %v829
        %v2748 = vunpack.c.l.b16 %v830
        %v2749 = vunpack.c.l.b16 %v831
        %v2750 = vunpack.c.l.b16 %v832
        %v2751 = vunpack.c.l.b16 %v833
        %v2752 = vunpack.c.l.b16 %v834
        %v2753 = vunpack.c.l.b16 %v835
        %v2754 = vunpack.c.l.b16 %v836
        %v2755 = vunpack.c.l.b16 %v837
        %v2756 = vunpack.c.l.b16 %v838
        %v2757 = vunpack.c.l.b16 %v839
        %v2758 = vunpack.c.l.b16 %v840
        %v2759 = vunpack.c.l.b16 %v841
        %v2760 = vunpack.c.l.b16 %v842
        %v2761 = vunpack.c.l.b16 %v843
        %v2762 = vunpack.c.l.b16 %v844
        %v2763 = vunpack.c.l.b16 %v845
        %v2764 = vunpack.c.l.b16 %v846
        %v2765 = vunpack.c.l.b16 %v847
        %v2766 = vunpack.c.l.b16 %v848
        %v2767 = vunpack.c.l.b16 %v849
        %v2768 = vunpack.c.l.b16 %v850
        %v2769 = vunpack.c.l.b16 %v851
        %v2770 = vunpack.c.l.b16 %v852
        %v2771 = vunpack.c.l.b16 %v853
        %v2772 = vunpack.c.l.b16 %v854
        %v2773 = vunpack.c.l.b16 %v855
        %v2774 = vunpack.c.l.b16 %v856
        %v2775 = vunpack.c.l.b16 %v857
        %v2776 = vunpack.c.l.b16 %v858
        %v2777 = vunpack.c.l.b16 %v859
        %v2778 = vunpack.c.l.b16 %v860
        %v2779 = vunpack.c.l.b16 %v861
        %v2780 = vunpack.c.l.b16 %v862
        %v2781 = vunpack.c.l.b16 %v863
        %v2782 = vunpack.c.l.b16 %v864
        %v2783 = vunpack.c.l.b16 %v865
        %v2784 = vunpack.c.l.b16 %v866
        %v2785 = vunpack.c.l.b16 %v867
        %v2786 = vunpack.c.l.b16 %v868
        %v2787 = vunpack.c.l.b16 %v869
        %v2788 = vunpack.c.l.b16 %v870
        %v2789 = vunpack.c.l.b16 %v871
        %v2790 = vunpack.c.l.b16 %v872
        %v2791 = vunpack.c.l.b16 %v873
        %v2792 = vunpack.c.l.b16 %v874
        %v2793 = vunpack.c.l.b16 %v875
        %v2794 = vunpack.c.l.b16 %v876
        %v2795 = vunpack.c.l.b16 %v877
        %v2796 = vunpack.c.l.b16 %v878
        %v2797 = vunpack.c.l.b16 %v879
        %v2798 = vunpack.c.l.b16 %v880
        %v2799 = vunpack.c.l.b16 %v881
        %v2800 = vunpack.c.l.b16 %v882
        %v2801 = vunpack.c.l.b16 %v883
        %v2802 = vunpack.c.l.b16 %v884
        %v2803 = vunpack.c.l.b16 %v885
        %v2804 = vunpack.c.l.b16 %v886
        %v2805 = vunpack.c.l.b16 %v887
        %v2806 = vunpack.c.l.b16 %v888
        %v2807 = vunpack.c.l.b16 %v889
        %v2808 = vunpack.c.l.b16 %v890
        %v2809 = vunpack.c.l.b16 %v891
        %v2810 = vunpack.c.l.b16 %v892
        %v2811 = vunpack.c.l.b16 %v893
        %v2812 = vunpack.c.l.b16 %v894
        %v2813 = vunpack.c.l.b16 %v895
        %v2814 = vunpack.c.l.b16 %v896
        %v2815 = vunpack.c.l.b16 %v897
        %v2816 = vunpack.c.l.b16 %v898
        %v2817 = vunpack.c.l.b16 %v899
        %v2818 = vunpack.c.l.b16 %v900
        %v2819 = vunpack.c.l.b16 %v901
        %v2820 = vunpack.c.l.b16 %v902
        %v2821 = vunpack.c.l.b16 %v903
        %v2822 = vunpack.c.l.b16 %v904
        %v2823 = vunpack.c.l.b16 %v905
        %v2824 = vunpack.c.l.b16 %v906
        %v2825 = vunpack.c.l.b16 %v907
        %v2826 = vunpack.c.l.b16 %v908
        %v2827 = vunpack.c.l.b16 %v909
        %v2828 = vunpack.c.l.b16 %v910
        %v2829 = vunpack.c.l.b16 %v911
        %v2830 = vunpack.c.l.b16 %v912
        %v2831 = vunpack.c.l.b16 %v913
        %v2832 = vunpack.c.l.b16 %v914
        %v2833 = vunpack.c.l.b16 %v915
        %v2834 = vunpack.c.l.b16 %v916
        %v2835 = vunpack.c.l.b16 %v917
        %v2836 = vunpack.c.l.b16 %v918
        %v2837 = vunpack.c.l.b16 %v919
        %v2838 = vunpack.c.l.b16 %v920
        %v2839 = vunpack.c.l.b16 %v921
        %v2840 = vunpack.c.l.b16 %v922
        %v2841 = vunpack.c.l.b16 %v923
        %v2842 = vunpack.c.l.b16 %v924
        %v2843 = vunpack.c.l.b16 %v925
        %v2844 = vunpack.c.l.b16 %v926
        %v2845 = vunpack.c.l.b16 %v927
        %v2846 = vunpack.c.l.b16 %v928
        %v2847 = vunpack.c.l.b16 %v929
        %v2848 = vunpack.c.l.b16 %v930
        %v2849 = vunpack.c.l.b16 %v931
        %v2850 = vunpack.c.l.b16 %v932
        %v2851 = vunpack.c.l.b16 %v933
        %v2852 = vunpack.c.l.b16 %v934
        %v2853 = vunpack.c.l.b16 %v935
        %v2854 = vunpack.c.l.b16 %v936
        %v2855 = vunpack.c.l.b16 %v937
        %v2856 = vunpack.c.l.b16 %v938
        %v2857 = vunpack.c.l.b16 %v939
        %v2858 = vunpack.c.l.b16 %v940
        %v2859 = vunpack.c.l.b16 %v941
        %v2860 = vunpack.c.l.b16 %v942
        %v2861 = vunpack.c.l.b16 %v943
        %v2862 = vunpack.c.l.b16 %v944
        %v2863 = vunpack.c.l.b16 %v945
        %v2864 = vunpack.c.l.b16 %v946
        %v2865 = vunpack.c.l.b16 %v947
        %v2866 = vunpack.c.l.b16 %v948
        %v2867 = vunpack.c.l.b16 %v949
        %v2868 = vunpack.c.l.b16 %v950
        %v2869 = vunpack.c.l.b16 %v951
        %v2870 = vunpack.c.l.b16 %v952
        %v2871 = vunpack.c.l.b16 %v953
        %v2872 = vunpack.c.l.b16 %v954
        %v2873 = vunpack.c.l.b16 %v955
        %v2874 = vunpack.c.l.b16 %v956
        %v2875 = vunpack.c.l.b16 %v957
        %v2876 = vunpack.c.l.b16 %v958
        %v2877 = vunpack.c.l.b16 %v959
        %v2878 = vunpack.c.l.b16 %v960
        %v2879 = vunpack.c.l.b16 %v961
        %v2880 = vunpack.c.l.b16 %v962
        %v2881 = vunpack.c.l.b16 %v963
        %v2882 = vunpack.c.l.b16 %v964
        %v2883 = vunpack.c.l.b16 %v965
        %v2884 = vunpack.c.l.b16 %v966
        %v2885 = vunpack.c.l.b16 %v967
        %v2886 = vunpack.c.l.b16 %v968
        %v2887 = vunpack.c.l.b16 %v969
        %v2888 = vunpack.c.l.b16 %v970
        %v2889 = vunpack.c.l.b16 %v971
        %v2890 = vunpack.c.l.b16 %v972
        %v2891 = vunpack.c.l.b16 %v973
        %v2892 = vunpack.c.l.b16 %v974
        %v2893 = vunpack.c.l.b16 %v975
        %v2894 = vunpack.c.l.b16 %v976
        %v2895 = vunpack.c.l.b16 %v977
        %v2896 = vunpack.c.l.b16 %v978
        %v2897 = vunpack.c.l.b16 %v979
        %v2898 = vunpack.c.l.b16 %v980
        %v2899 = vunpack.c.l.b16 %v981
        %v2900 = vunpack.c.l.b16 %v982
        %v2901 = vunpack.c.l.b16 %v983
        %v2902 = vunpack.c.l.b16 %v984
        %v2903 = vunpack.c.l.b16 %v985
        %v2904 = vunpack.c.l.b16 %v986
        %v2905 = vunpack.c.l.b16 %v987
        %v2906 = vunpack.c.l.b16 %v988
        %v2907 = vunpack.c.l.b16 %v989
        %v2908 = vunpack.c.l.b16 %v990
        %v2909 = vunpack.c.l.b16 %v991
        %v2910 = vunpack.c.l.b16 %v992
        %v2911 = vunpack.c.l.b16 %v993
        %v2912 = vunpack.c.l.b16 %v994
        %v2913 = vunpack.c.l.b16 %v995
        %v2914 = vunpack.c.l.b16 %v996
        %v2915 = vunpack.c.l.b16 %v997
        %v2916 = vunpack.c.l.b16 %v998
        %v2917 = vunpack.c.l.b16 %v999
        %v2918 = vunpack.c.l.b16 %v1000
        %v2919 = vunpack.c.l.b16 %v1001
        %v2920 = vunpack.c.l.b16 %v1002
        %v2921 = vunpack.c.l.b16 %v1003
        %v2922 = vunpack.c.l.b16 %v1004
        %v2923 = vunpack.c.l.b16 %v1005
        %v2924 = vunpack.c.l.b16 %v1006
        %v2925 = vunpack.c.l.b16 %v1007
        %v2926 = vunpack.c.l.b16 %v1008
        %v2927 = vunpack.c.l.b16 %v1009
        %v2928 = vunpack.c.l.b16 %v1010
        %v2929 = vunpack.c.l.b16 %v1011
        %v2930 = vunpack.c.l.b16 %v1012
        %v2931 = vunpack.c.l.b16 %v1013
        %v2932 = vunpack.c.l.b16 %v1014
        %v2933 = vunpack.c.l.b16 %v1015
        %v2934 = vunpack.c.l.b16 %v1016
        %v2935 = vunpack.c.l.b16 %v1017
        %v2936 = vunpack.c.l.b16 %v1018
        %v2937 = vunpack.c.l.b16 %v1019
        %v2938 = vunpack.c.l.b16 %v1020
        %v2939 = vunpack.c.l.b16 %v1021
        %v2940 = vunpack.c.l.b16 %v1022
        %v2941 = vunpack.c.l.b16 %v1023
        %v2942 = vunpack.c.l.b16 %v1024
        %v2943 = vunpack.c.l.b16 %v1025
        %v2944 = vunpack.c.l.b16 %v1026
        %v2945 = vunpack.c.l.b16 %v1027
        %v2946 = vunpack.c.l.b16 %v1028
        %v2947 = vunpack.c.l.b16 %v1029
        %v2948 = vunpack.c.l.b16 %v1030
        %v2949 = vunpack.c.l.b16 %v1031
        %v2950 = vunpack.c.l.b16 %v1032
        %v2951 = vunpack.c.l.b16 %v1033
        %v2952 = vunpack.c.l.b16 %v1034
        %v2953 = vunpack.c.l.b16 %v1035
        %v2954 = vunpack.c.l.b16 %v1036
        %v2955 = vunpack.c.l.b16 %v1037
        %v2956 = vunpack.c.l.b16 %v1038
        %v2957 = vunpack.c.l.b16 %v1039
        %v2958 = vunpack.c.l.b16 %v1040
        %v2959 = vunpack.c.l.b16 %v1041
        %v2960 = vunpack.c.l.b16 %v1042
        %v2961 = vunpack.c.l.b16 %v1043
        %v2962 = vunpack.c.l.b16 %v1044
        %v2963 = vunpack.c.l.b16 %v1045
        %v2964 = vunpack.c.l.b16 %v1046
        %v2965 = vunpack.c.l.b16 %v1047
        %v2966 = vunpack.c.l.b16 %v1048
        %v2967 = vunpack.c.l.b16 %v1049
        %v2968 = vunpack.c.l.b16 %v1050
        %v2969 = vunpack.c.l.b16 %v1051
        %v2970 = vunpack.c.l.b16 %v1052
        %v2971 = vunpack.c.l.b16 %v1053
        %v2972 = vunpack.c.l.b16 %v1054
        %v2973 = vunpack.c.l.b16 %v1055
        %v2974 = vunpack.c.l.b16 %v1056
        %v2975 = vunpack.c.l.b16 %v1057
        %v2976 = vunpack.c.l.b16 %v1058
        %v2977 = vunpack.c.l.b16 %v1059
        %v2978 = vunpack.c.l.b16 %v1060
        %v2979 = vunpack.c.l.b16 %v1061
        %v2980 = vunpack.c.l.b16 %v1062
        %v2981 = vunpack.c.l.b16 %v1063
        %v2982 = vunpack.c.l.b16 %v1064
        %v2983 = vunpack.c.l.b16 %v1065
        %v2984 = vunpack.c.l.b16 %v1066
        %v2985 = vunpack.c.l.b16 %v1067
        %v2986 = vunpack.c.l.b16 %v1068
        %v2987 = vunpack.c.l.b16 %v1069
        %v2988 = vunpack.c.l.b16 %v1070
        %v2989 = vunpack.c.l.b16 %v1071
        %v2990 = vunpack.c.l.b16 %v1072
        %v2991 = vunpack.c.l.b16 %v1073
        %v2992 = vunpack.c.l.b16 %v1074
        %v2993 = vunpack.c.l.b16 %v1075
        %v2994 = vunpack.c.l.b16 %v1076
        %v2995 = vunpack.c.l.b16 %v1077
        %v2996 = vunpack.c.l.b16 %v1078
        %v2997 = vunpack.c.l.b16 %v1079
        %v2998 = vunpack.c.l.b16 %v1080
        %v2999 = vunpack.c.l.b16 %v1081
        %v3000 = vunpack.c.l.b16 %v1082
        %v3001 = vunpack.c.l.b16 %v1083
        %v3002 = vunpack.c.l.b16 %v1084
        %v3003 = vunpack.c.l.b16 %v1085
        %v3004 = vunpack.c.l.b16 %v1086
        %v3005 = vunpack.c.l.b16 %v1087
        %v3006 = vunpack.c.l.b16 %v1088
        %v3007 = vunpack.c.l.b16 %v1089
        %v3008 = vunpack.c.l.b16 %v1090
        %v3009 = vpack.c.b16 %v2114, %v2113
        %v3010 = vpack.c.b16 %v2116, %v2115
        %v3011 = vpack.c.b16 %v2118, %v2117
        %v3012 = vpack.c.b16 %v2120, %v2119
        %v3013 = vpack.c.b16 %v2122, %v2121
        %v3014 = vpack.c.b16 %v2124, %v2123
        %v3015 = vpack.c.b16 %v2126, %v2125
        %v3016 = vpack.c.b16 %v2128, %v2127
        %v3017 = vpack.c.b16 %v2130, %v2129
        %v3018 = vpack.c.b16 %v2132, %v2131
        %v3019 = vpack.c.b16 %v2134, %v2133
        %v3020 = vpack.c.b16 %v2136, %v2135
        %v3021 = vpack.c.b16 %v2138, %v2137
        %v3022 = vpack.c.b16 %v2140, %v2139
        %v3023 = vpack.c.b16 %v2142, %v2141
        %v3024 = vpack.c.b16 %v2144, %v2143
        %v3025 = vpack.c.b16 %v2146, %v2145
        %v3026 = vpack.c.b16 %v2148, %v2147
        %v3027 = vpack.c.b16 %v2150, %v2149
        %v3028 = vpack.c.b16 %v2152, %v2151
        %v3029 = vpack.c.b16 %v2154, %v2153
        %v3030 = vpack.c.b16 %v2156, %v2155
        %v3031 = vpack.c.b16 %v2158, %v2157
        %v3032 = vpack.c.b16 %v2160, %v2159
        %v3033 = vpack.c.b16 %v2162, %v2161
        %v3034 = vpack.c.b16 %v2164, %v2163
        %v3035 = vpack.c.b16 %v2166, %v2165
        %v3036 = vpack.c.b16 %v2168, %v2167
        %v3037 = vpack.c.b16 %v2170, %v2169
        %v3038 = vpack.c.b16 %v2172, %v2171
        %v3039 = vpack.c.b16 %v2174, %v2173
        %v3040 = vpack.c.b16 %v2176, %v2175
        %v3041 = vpack.c.b16 %v2178, %v2177
        %v3042 = vpack.c.b16 %v2180, %v2179
        %v3043 = vpack.c.b16 %v2182, %v2181
        %v3044 = vpack.c.b16 %v2184, %v2183
        %v3045 = vpack.c.b16 %v2186, %v2185
        %v3046 = vpack.c.b16 %v2188, %v2187
        %v3047 = vpack.c.b16 %v2190, %v2189
        %v3048 = vpack.c.b16 %v2192, %v2191
        %v3049 = vpack.c.b16 %v2194, %v2193
        %v3050 = vpack.c.b16 %v2196, %v2195
        %v3051 = vpack.c.b16 %v2198, %v2197
        %v3052 = vpack.c.b16 %v2200, %v2199
        %v3053 = vpack.c.b16 %v2202, %v2201
        %v3054 = vpack.c.b16 %v2204, %v2203
        %v3055 = vpack.c.b16 %v2206, %v2205
        %v3056 = vpack.c.b16 %v2208, %v2207
        %v3057 = vpack.c.b16 %v2210, %v2209
        %v3058 = vpack.c.b16 %v2212, %v2211
        %v3059 = vpack.c.b16 %v2214, %v2213
        %v3060 = vpack.c.b16 %v2216, %v2215
        %v3061 = vpack.c.b16 %v2218, %v2217
        %v3062 = vpack.c.b16 %v2220, %v2219
        %v3063 = vpack.c.b16 %v2222, %v2221
        %v3064 = vpack.c.b16 %v2224, %v2223
        %v3065 = vpack.c.b16 %v2226, %v2225
        %v3066 = vpack.c.b16 %v2228, %v2227
        %v3067 = vpack.c.b16 %v2230, %v2229
        %v3068 = vpack.c.b16 %v2232, %v2231
        %v3069 = vpack.c.b16 %v2234, %v2233
        %v3070 = vpack.c.b16 %v2236, %v2235
        %v3071 = vpack.c.b16 %v2238, %v2237
        %v3072 = vpack.c.b16 %v2240, %v2239
        %v3073 = vpack.c.b16 %v2242, %v2241
        %v3074 = vpack.c.b16 %v2244, %v2243
        %v3075 = vpack.c.b16 %v2246, %v2245
        %v3076 = vpack.c.b16 %v2248, %v2247
        %v3077 = vpack.c.b16 %v2250, %v2249
        %v3078 = vpack.c.b16 %v2252, %v2251
        %v3079 = vpack.c.b16 %v2254, %v2253
        %v3080 = vpack.c.b16 %v2256, %v2255
        %v3081 = vpack.c.b16 %v2258, %v2257
        %v3082 = vpack.c.b16 %v2260, %v2259
        %v3083 = vpack.c.b16 %v2262, %v2261
        %v3084 = vpack.c.b16 %v2264, %v2263
        %v3085 = vpack.c.b16 %v2266, %v2265
        %v3086 = vpack.c.b16 %v2268, %v2267
        %v3087 = vpack.c.b16 %v2270, %v2269
        %v3088 = vpack.c.b16 %v2272, %v2271
        %v3089 = vpack.c.b16 %v2274, %v2273
        %v3090 = vpack.c.b16 %v2276, %v2275
        %v3091 = vpack.c.b16 %v2278, %v2277
        %v3092 = vpack.c.b16 %v2280, %v2279
        %v3093 = vpack.c.b16 %v2282, %v2281
        %v3094 = vpack.c.b16 %v2284, %v2283
        %v3095 = vpack.c.b16 %v2286, %v2285
        %v3096 = vpack.c.b16 %v2288, %v2287
        %v3097 = vpack.c.b16 %v2290, %v2289
        %v3098 = vpack.c.b16 %v2292, %v2291
        %v3099 = vpack.c.b16 %v2294, %v2293
        %v3100 = vpack.c.b16 %v2296, %v2295
        %v3101 = vpack.c.b16 %v2298, %v2297
        %v3102 = vpack.c.b16 %v2300, %v2299
        %v3103 = vpack.c.b16 %v2302, %v2301
        %v3104 = vpack.c.b16 %v2304, %v2303
        %v3105 = vpack.c.b16 %v2306, %v2305
        %v3106 = vpack.c.b16 %v2308, %v2307
        %v3107 = vpack.c.b16 %v2310, %v2309
        %v3108 = vpack.c.b16 %v2312, %v2311
        %v3109 = vpack.c.b16 %v2314, %v2313
        %v3110 = vpack.c.b16 %v2316, %v2315
        %v3111 = vpack.c.b16 %v2318, %v2317
        %v3112 = vpack.c.b16 %v2320, %v2319
        %v3113 = vpack.c.b16 %v2322, %v2321
        %v3114 = vpack.c.b16 %v2324, %v2323
        %v3115 = vpack.c.b16 %v2326, %v2325
        %v3116 = vpack.c.b16 %v2328, %v2327
        %v3117 = vpack.c.b16 %v2330, %v2329
        %v3118 = vpack.c.b16 %v2332, %v2331
        %v3119 = vpack.c.b16 %v2334, %v2333
        %v3120 = vpack.c.b16 %v2336, %v2335
        %v3121 = vpack.c.b16 %v2338, %v2337
        %v3122 = vpack.c.b16 %v2340, %v2339
        %v3123 = vpack.c.b16 %v2342, %v2341
        %v3124 = vpack.c.b16 %v2344, %v2343
        %v3125 = vpack.c.b16 %v2346, %v2345
        %v3126 = vpack.c.b16 %v2348, %v2347
        %v3127 = vpack.c.b16 %v2350, %v2349
        %v3128 = vpack.c.b16 %v2352, %v2351
        %v3129 = vpack.c.b16 %v2354, %v2353
        %v3130 = vpack.c.b16 %v2356, %v2355
        %v3131 = vpack.c.b16 %v2358, %v2357
        %v3132 = vpack.c.b16 %v2360, %v2359
        %v3133 = vpack.c.b16 %v2362, %v2361
        %v3134 = vpack.c.b16 %v2364, %v2363
        %v3135 = vpack.c.b16 %v2366, %v2365
        %v3136 = vpack.c.b16 %v2368, %v2367
        %v3137 = vpack.c.b16 %v2370, %v2369
        %v3138 = vpack.c.b16 %v2372, %v2371
        %v3139 = vpack.c.b16 %v2374, %v2373
        %v3140 = vpack.c.b16 %v2376, %v2375
        %v3141 = vpack.c.b16 %v2378, %v2377
        %v3142 = vpack.c.b16 %v2380, %v2379
        %v3143 = vpack.c.b16 %v2382, %v2381
        %v3144 = vpack.c.b16 %v2384, %v2383
        %v3145 = vpack.c.b16 %v2386, %v2385
        %v3146 = vpack.c.b16 %v2388, %v2387
        %v3147 = vpack.c.b16 %v2390, %v2389
        %v3148 = vpack.c.b16 %v2392, %v2391
        %v3149 = vpack.c.b16 %v2394, %v2393
        %v3150 = vpack.c.b16 %v2396, %v2395
        %v3151 = vpack.c.b16 %v2398, %v2397
        %v3152 = vpack.c.b16 %v2400, %v2399
        %v3153 = vpack.c.b16 %v2402, %v2401
        %v3154 = vpack.c.b16 %v2404, %v2403
        %v3155 = vpack.c.b16 %v2406, %v2405
        %v3156 = vpack.c.b16 %v2408, %v2407
        %v3157 = vpack.c.b16 %v2410, %v2409
        %v3158 = vpack.c.b16 %v2412, %v2411
        %v3159 = vpack.c.b16 %v2414, %v2413
        %v3160 = vpack.c.b16 %v2416, %v2415
        %v3161 = vpack.c.b16 %v2418, %v2417
        %v3162 = vpack.c.b16 %v2420, %v2419
        %v3163 = vpack.c.b16 %v2422, %v2421
        %v3164 = vpack.c.b16 %v2424, %v2423
        %v3165 = vpack.c.b16 %v2426, %v2425
        %v3166 = vpack.c.b16 %v2428, %v2427
        %v3167 = vpack.c.b16 %v2430, %v2429
        %v3168 = vpack.c.b16 %v2432, %v2431
        %v3169 = vpack.c.b16 %v2434, %v2433
        %v3170 = vpack.c.b16 %v2436, %v2435
        %v3171 = vpack.c.b16 %v2438, %v2437
        %v3172 = vpack.c.b16 %v2440, %v2439
        %v3173 = vpack.c.b16 %v2442, %v2441
        %v3174 = vpack.c.b16 %v2444, %v2443
        %v3175 = vpack.c.b16 %v2446, %v2445
        %v3176 = vpack.c.b16 %v2448, %v2447
        %v3177 = vpack.c.b16 %v2450, %v2449
        %v3178 = vpack.c.b16 %v2452, %v2451
        %v3179 = vpack.c.b16 %v2454, %v2453
        %v3180 = vpack.c.b16 %v2456, %v2455
        %v3181 = vpack.c.b16 %v2458, %v2457
        %v3182 = vpack.c.b16 %v2460, %v2459
        %v3183 = vpack.c.b16 %v2462, %v2461
        %v3184 = vpack.c.b16 %v2464, %v2463
        %v3185 = vpack.c.b16 %v2466, %v2465
        %v3186 = vpack.c.b16 %v2468, %v2467
        %v3187 = vpack.c.b16 %v2470, %v2469
        %v3188 = vpack.c.b16 %v2472, %v2471
        %v3189 = vpack.c.b16 %v2474, %v2473
        %v3190 = vpack.c.b16 %v2476, %v2475
        %v3191 = vpack.c.b16 %v2478, %v2477
        %v3192 = vpack.c.b16 %v2480, %v2479
        %v3193 = vpack.c.b16 %v2482, %v2481
        %v3194 = vpack.c.b16 %v2484, %v2483
        %v3195 = vpack.c.b16 %v2486, %v2485
        %v3196 = vpack.c.b16 %v2488, %v2487
        %v3197 = vpack.c.b16 %v2490, %v2489
        %v3198 = vpack.c.b16 %v2492, %v2491
        %v3199 = vpack.c.b16 %v2494, %v2493
        %v3200 = vpack.c.b16 %v2496, %v2495
        %v3201 = vpack.c.b16 %v2498, %v2497
        %v3202 = vpack.c.b16 %v2500, %v2499
        %v3203 = vpack.c.b16 %v2502, %v2501
        %v3204 = vpack.c.b16 %v2504, %v2503
        %v3205 = vpack.c.b16 %v2506, %v2505
        %v3206 = vpack.c.b16 %v2508, %v2507
        %v3207 = vpack.c.b16 %v2510, %v2509
        %v3208 = vpack.c.b16 %v2512, %v2511
        %v3209 = vpack.c.b16 %v2514, %v2513
        %v3210 = vpack.c.b16 %v2516, %v2515
        %v3211 = vpack.c.b16 %v2518, %v2517
        %v3212 = vpack.c.b16 %v2520, %v2519
        %v3213 = vpack.c.b16 %v2522, %v2521
        %v3214 = vpack.c.b16 %v2524, %v2523
        %v3215 = vpack.c.b16 %v2526, %v2525
        %v3216 = vpack.c.b16 %v2528, %v2527
        %v3217 = vpack.c.b16 %v2530, %v2529
        %v3218 = vpack.c.b16 %v2532, %v2531
        %v3219 = vpack.c.b16 %v2534, %v2533
        %v3220 = vpack.c.b16 %v2536, %v2535
        %v3221 = vpack.c.b16 %v2538, %v2537
        %v3222 = vpack.c.b16 %v2540, %v2539
        %v3223 = vpack.c.b16 %v2542, %v2541
        %v3224 = vpack.c.b16 %v2544, %v2543
        %v3225 = vpack.c.b16 %v2546, %v2545
        %v3226 = vpack.c.b16 %v2548, %v2547
        %v3227 = vpack.c.b16 %v2550, %v2549
        %v3228 = vpack.c.b16 %v2552, %v2551
        %v3229 = vpack.c.b16 %v2554, %v2553
        %v3230 = vpack.c.b16 %v2556, %v2555
        %v3231 = vpack.c.b16 %v2558, %v2557
        %v3232 = vpack.c.b16 %v2560, %v2559
        %v3233 = vpack.c.b16 %v2562, %v2561
        %v3234 = vpack.c.b16 %v2564, %v2563
        %v3235 = vpack.c.b16 %v2566, %v2565
        %v3236 = vpack.c.b16 %v2568, %v2567
        %v3237 = vpack.c.b16 %v2570, %v2569
        %v3238 = vpack.c.b16 %v2572, %v2571
        %v3239 = vpack.c.b16 %v2574, %v2573
        %v3240 = vpack.c.b16 %v2576, %v2575
        %v3241 = vpack.c.b16 %v2578, %v2577
        %v3242 = vpack.c.b16 %v2580, %v2579
        %v3243 = vpack.c.b16 %v2582, %v2581
        %v3244 = vpack.c.b16 %v2584, %v2583
        %v3245 = vpack.c.b16 %v2586, %v2585
        %v3246 = vpack.c.b16 %v2588, %v2587
        %v3247 = vpack.c.b16 %v2590, %v2589
        %v3248 = vpack.c.b16 %v2592, %v2591
        %v3249 = vpack.c.b16 %v2594, %v2593
        %v3250 = vpack.c.b16 %v2596, %v2595
        %v3251 = vpack.c.b16 %v2598, %v2597
        %v3252 = vpack.c.b16 %v2600, %v2599
        %v3253 = vpack.c.b16 %v2602, %v2601
        %v3254 = vpack.c.b16 %v2604, %v2603
        %v3255 = vpack.c.b16 %v2606, %v2605
        %v3256 = vpack.c.b16 %v2608, %v2607
        %v3257 = vpack.c.b16 %v2610, %v2609
        %v3258 = vpack.c.b16 %v2612, %v2611
        %v3259 = vpack.c.b16 %v2614, %v2613
        %v3260 = vpack.c.b16 %v2616, %v2615
        %v3261 = vpack.c.b16 %v2618, %v2617
        %v3262 = vpack.c.b16 %v2620, %v2619
        %v3263 = vpack.c.b16 %v2622, %v2621
        %v3264 = vpack.c.b16 %v2624, %v2623
        %v3265 = vpack.c.b16 %v2626, %v2625
        %v3266 = vpack.c.b16 %v2628, %v2627
        %v3267 = vpack.c.b16 %v2630, %v2629
        %v3268 = vpack.c.b16 %v2632, %v2631
        %v3269 = vpack.c.b16 %v2634, %v2633
        %v3270 = vpack.c.b16 %v2636, %v2635
        %v3271 = vpack.c.b16 %v2638, %v2637
        %v3272 = vpack.c.b16 %v2640, %v2639
        %v3273 = vpack.c.b16 %v2642, %v2641
        %v3274 = vpack.c.b16 %v2644, %v2643
        %v3275 = vpack.c.b16 %v2646, %v2645
        %v3276 = vpack.c.b16 %v2648, %v2647
        %v3277 = vpack.c.b16 %v2650, %v2649
        %v3278 = vpack.c.b16 %v2652, %v2651
        %v3279 = vpack.c.b16 %v2654, %v2653
        %v3280 = vpack.c.b16 %v2656, %v2655
        %v3281 = vpack.c.b16 %v2658, %v2657
        %v3282 = vpack.c.b16 %v2660, %v2659
        %v3283 = vpack.c.b16 %v2662, %v2661
        %v3284 = vpack.c.b16 %v2664, %v2663
        %v3285 = vpack.c.b16 %v2666, %v2665
        %v3286 = vpack.c.b16 %v2668, %v2667
        %v3287 = vpack.c.b16 %v2670, %v2669
        %v3288 = vpack.c.b16 %v2672, %v2671
        %v3289 = vpack.c.b16 %v2674, %v2673
        %v3290 = vpack.c.b16 %v2676, %v2675
        %v3291 = vpack.c.b16 %v2678, %v2677
        %v3292 = vpack.c.b16 %v2680, %v2679
        %v3293 = vpack.c.b16 %v2682, %v2681
        %v3294 = vpack.c.b16 %v2684, %v2683
        %v3295 = vpack.c.b16 %v2686, %v2685
        %v3296 = vpack.c.b16 %v2688, %v2687
        %v3297 = vpack.c.b16 %v2690, %v2689
        %v3298 = vpack.c.b16 %v2692, %v2691
        %v3299 = vpack.c.b16 %v2694, %v2693
        %v3300 = vpack.c.b16 %v2696, %v2695
        %v3301 = vpack.c.b16 %v2698, %v2697
        %v3302 = vpack.c.b16 %v2700, %v2699
        %v3303 = vpack.c.b16 %v2702, %v2701
        %v3304 = vpack.c.b16 %v2704, %v2703
        %v3305 = vpack.c.b16 %v2706, %v2705
        %v3306 = vpack.c.b16 %v2708, %v2707
        %v3307 = vpack.c.b16 %v2710, %v2709
        %v3308 = vpack.c.b16 %v2712, %v2711
        %v3309 = vpack.c.b16 %v2714, %v2713
        %v3310 = vpack.c.b16 %v2716, %v2715
        %v3311 = vpack.c.b16 %v2718, %v2717
        %v3312 = vpack.c.b16 %v2720, %v2719
        %v3313 = vpack.c.b16 %v2722, %v2721
        %v3314 = vpack.c.b16 %v2724, %v2723
        %v3315 = vpack.c.b16 %v2726, %v2725
        %v3316 = vpack.c.b16 %v2728, %v2727
        %v3317 = vpack.c.b16 %v2730, %v2729
        %v3318 = vpack.c.b16 %v2732, %v2731
        %v3319 = vpack.c.b16 %v2734, %v2733
        %v3320 = vpack.c.b16 %v2736, %v2735
        %v3321 = vpack.c.b16 %v2738, %v2737
        %v3322 = vpack.c.b16 %v2740, %v2739
        %v3323 = vpack.c.b16 %v2742, %v2741
        %v3324 = vpack.c.b16 %v2744, %v2743
        %v3325 = vpack.c.b16 %v2746, %v2745
        %v3326 = vpack.c.b16 %v2748, %v2747
        %v3327 = vpack.c.b16 %v2750, %v2749
        %v3328 = vpack.c.b16 %v2752, %v2751
        %v3329 = vpack.c.b16 %v2754, %v2753
        %v3330 = vpack.c.b16 %v2756, %v2755
        %v3331 = vpack.c.b16 %v2758, %v2757
        %v3332 = vpack.c.b16 %v2760, %v2759
        %v3333 = vpack.c.b16 %v2762, %v2761
        %v3334 = vpack.c.b16 %v2764, %v2763
        %v3335 = vpack.c.b16 %v2766, %v2765
        %v3336 = vpack.c.b16 %v2768, %v2767
        %v3337 = vpack.c.b16 %v2770, %v2769
        %v3338 = vpack.c.b16 %v2772, %v2771
        %v3339 = vpack.c.b16 %v2774, %v2773
        %v3340 = vpack.c.b16 %v2776, %v2775
        %v3341 = vpack.c.b16 %v2778, %v2777
        %v3342 = vpack.c.b16 %v2780, %v2779
        %v3343 = vpack.c.b16 %v2782, %v2781
        %v3344 = vpack.c.b16 %v2784, %v2783
        %v3345 = vpack.c.b16 %v2786, %v2785
        %v3346 = vpack.c.b16 %v2788, %v2787
        %v3347 = vpack.c.b16 %v2790, %v2789
        %v3348 = vpack.c.b16 %v2792, %v2791
        %v3349 = vpack.c.b16 %v2794, %v2793
        %v3350 = vpack.c.b16 %v2796, %v2795
        %v3351 = vpack.c.b16 %v2798, %v2797
        %v3352 = vpack.c.b16 %v2800, %v2799
        %v3353 = vpack.c.b16 %v2802, %v2801
        %v3354 = vpack.c.b16 %v2804, %v2803
        %v3355 = vpack.c.b16 %v2806, %v2805
        %v3356 = vpack.c.b16 %v2808, %v2807
        %v3357 = vpack.c.b16 %v2810, %v2809
        %v3358 = vpack.c.b16 %v2812, %v2811
        %v3359 = vpack.c.b16 %v2814, %v2813
        %v3360 = vpack.c.b16 %v2816, %v2815
        %v3361 = vpack.c.b16 %v2818, %v2817
        %v3362 = vpack.c.b16 %v2820, %v2819
        %v3363 = vpack.c.b16 %v2822, %v2821
        %v3364 = vpack.c.b16 %v2824, %v2823
        %v3365 = vpack.c.b16 %v2826, %v2825
        %v3366 = vpack.c.b16 %v2828, %v2827
        %v3367 = vpack.c.b16 %v2830, %v2829
        %v3368 = vpack.c.b16 %v2832, %v2831
        %v3369 = vpack.c.b16 %v2834, %v2833
        %v3370 = vpack.c.b16 %v2836, %v2835
        %v3371 = vpack.c.b16 %v2838, %v2837
        %v3372 = vpack.c.b16 %v2840, %v2839
        %v3373 = vpack.c.b16 %v2842, %v2841
        %v3374 = vpack.c.b16 %v2844, %v2843
        %v3375 = vpack.c.b16 %v2846, %v2845
        %v3376 = vpack.c.b16 %v2848, %v2847
        %v3377 = vpack.c.b16 %v2850, %v2849
        %v3378 = vpack.c.b16 %v2852, %v2851
        %v3379 = vpack.c.b16 %v2854, %v2853
        %v3380 = vpack.c.b16 %v2856, %v2855
        %v3381 = vpack.c.b16 %v2858, %v2857
        %v3382 = vpack.c.b16 %v2860, %v2859
        %v3383 = vpack.c.b16 %v2862, %v2861
        %v3384 = vpack.c.b16 %v2864, %v2863
        %v3385 = vpack.c.b16 %v2866, %v2865
        %v3386 = vpack.c.b16 %v2868, %v2867
        %v3387 = vpack.c.b16 %v2870, %v2869
        %v3388 = vpack.c.b16 %v2872, %v2871
        %v3389 = vpack.c.b16 %v2874, %v2873
        %v3390 = vpack.c.b16 %v2876, %v2875
        %v3391 = vpack.c.b16 %v2878, %v2877
        %v3392 = vpack.c.b16 %v2880, %v2879
        %v3393 = vpack.c.b16 %v2882, %v2881
        %v3394 = vpack.c.b16 %v2884, %v2883
        %v3395 = vpack.c.b16 %v2886, %v2885
        %v3396 = vpack.c.b16 %v2888, %v2887
        %v3397 = vpack.c.b16 %v2890, %v2889
        %v3398 = vpack.c.b16 %v2892, %v2891
        %v3399 = vpack.c.b16 %v2894, %v2893
        %v3400 = vpack.c.b16 %v2896, %v2895
        %v3401 = vpack.c.b16 %v2898, %v2897
        %v3402 = vpack.c.b16 %v2900, %v2899
        %v3403 = vpack.c.b16 %v2902, %v2901
        %v3404 = vpack.c.b16 %v2904, %v2903
        %v3405 = vpack.c.b16 %v2906, %v2905
        %v3406 = vpack.c.b16 %v2908, %v2907
        %v3407 = vpack.c.b16 %v2910, %v2909
        %v3408 = vpack.c.b16 %v2912, %v2911
        %v3409 = vpack.c.b16 %v2914, %v2913
        %v3410 = vpack.c.b16 %v2916, %v2915
        %v3411 = vpack.c.b16 %v2918, %v2917
        %v3412 = vpack.c.b16 %v2920, %v2919
        %v3413 = vpack.c.b16 %v2922, %v2921
        %v3414 = vpack.c.b16 %v2924, %v2923
        %v3415 = vpack.c.b16 %v2926, %v2925
        %v3416 = vpack.c.b16 %v2928, %v2927
        %v3417 = vpack.c.b16 %v2930, %v2929
        %v3418 = vpack.c.b16 %v2932, %v2931
        %v3419 = vpack.c.b16 %v2934, %v2933
        %v3420 = vpack.c.b16 %v2936, %v2935
        %v3421 = vpack.c.b16 %v2938, %v2937
        %v3422 = vpack.c.b16 %v2940, %v2939
        %v3423 = vpack.c.b16 %v2942, %v2941
        %v3424 = vpack.c.b16 %v2944, %v2943
        %v3425 = vpack.c.b16 %v2946, %v2945
        %v3426 = vpack.c.b16 %v2948, %v2947
        %v3427 = vpack.c.b16 %v2950, %v2949
        %v3428 = vpack.c.b16 %v2952, %v2951
        %v3429 = vpack.c.b16 %v2954, %v2953
        %v3430 = vpack.c.b16 %v2956, %v2955
        %v3431 = vpack.c.b16 %v2958, %v2957
        %v3432 = vpack.c.b16 %v2960, %v2959
        %v3433 = vpack.c.b16 %v2962, %v2961
        %v3434 = vpack.c.b16 %v2964, %v2963
        %v3435 = vpack.c.b16 %v2966, %v2965
        %v3436 = vpack.c.b16 %v2968, %v2967
        %v3437 = vpack.c.b16 %v2970, %v2969
        %v3438 = vpack.c.b16 %v2972, %v2971
        %v3439 = vpack.c.b16 %v2974, %v2973
        %v3440 = vpack.c.b16 %v2976, %v2975
        %v3441 = vpack.c.b16 %v2978, %v2977
        %v3442 = vpack.c.b16 %v2980, %v2979
        %v3443 = vpack.c.b16 %v2982, %v2981
        %v3444 = vpack.c.b16 %v2984, %v2983
        %v3445 = vpack.c.b16 %v2986, %v2985
        %v3446 = vpack.c.b16 %v2988, %v2987
        %v3447 = vpack.c.b16 %v2990, %v2989
        %v3448 = vpack.c.b16 %v2992, %v2991
        %v3449 = vpack.c.b16 %v2994, %v2993
        %v3450 = vpack.c.b16 %v2996, %v2995
        %v3451 = vpack.c.b16 %v2998, %v2997
        %v3452 = vpack.c.b16 %v3000, %v2999
        %v3453 = vpack.c.b16 %v3002, %v3001
        %v3454 = vpack.c.b16 %v3004, %v3003
        %v3455 = vpack.c.b16 %v3006, %v3005
        %v3456 = vpack.c.b16 %v3008, %v3007
        %3905 = vmatpush.bf16.msra.mxu0 %v3016
        %3906 = vmatpush.bf16.msra.mxu0 %v3015
        %3907 = vmatpush.bf16.msra.mxu0 %v3014
        %3908 = vmatpush.bf16.msra.mxu0 %v3013
        %3909 = vmatpush.bf16.msra.mxu0 %v3012
        %3910 = vmatpush.bf16.msra.mxu0 %v3011
        %3911 = vmatpush.bf16.msra.mxu0 %v3010
        %3912 = vmatpush.bf16.msra.mxu0 %v3009
        %3913 = vmatmul.bf16.gmra.mxu0 %v1093
        %v3914 = vpop.f32.mrf.mxu0
        %v3915 = vadd.f32 0.0, %v3914
        %v3916 = vpop.f32.mrf.mxu0
        %3917 = vdwg.mxu0
        %3918 = vmatpush.bf16.msra.mxu0 %v3024
        %3919 = vmatpush.bf16.msra.mxu0 %v3023
        %3920 = vmatpush.bf16.msra.mxu0 %v3022
        %3921 = vmatpush.bf16.msra.mxu0 %v3021
        %3922 = vmatpush.bf16.msra.mxu0 %v3020
        %3923 = vmatpush.bf16.msra.mxu0 %v3019
        %3924 = vmatpush.bf16.msra.mxu0 %v3018
        %3925 = vmatpush.bf16.msra.mxu0 %v3017
        %3926 = vmatmul.bf16.gmra.mxu0 %v1094
        %v3927 = vpop.f32.mrf.mxu0
        %v3928 = vadd.f32 %v3915, %v3927
        %v3929 = vpop.f32.mrf.mxu0
        %3930 = vdwg.mxu0
        %3931 = vmatpush.bf16.msra.mxu0 %v3032
        %3932 = vmatpush.bf16.msra.mxu0 %v3031
        %3933 = vmatpush.bf16.msra.mxu0 %v3030
        %3934 = vmatpush.bf16.msra.mxu0 %v3029
        %3935 = vmatpush.bf16.msra.mxu0 %v3028
        %3936 = vmatpush.bf16.msra.mxu0 %v3027
        %3937 = vmatpush.bf16.msra.mxu0 %v3026
        %3938 = vmatpush.bf16.msra.mxu0 %v3025
        %3939 = vmatmul.bf16.gmra.mxu0 %v1095
        %v3940 = vpop.f32.mrf.mxu0
        %v3941 = vadd.f32 %v3928, %v3940
        %v3942 = vpop.f32.mrf.mxu0
        %3943 = vdwg.mxu0
        %3944 = vmatpush.bf16.msra.mxu0 %v3040
        %3945 = vmatpush.bf16.msra.mxu0 %v3039
        %3946 = vmatpush.bf16.msra.mxu0 %v3038
        %3947 = vmatpush.bf16.msra.mxu0 %v3037
        %3948 = vmatpush.bf16.msra.mxu0 %v3036
        %3949 = vmatpush.bf16.msra.mxu0 %v3035
        %3950 = vmatpush.bf16.msra.mxu0 %v3034
        %3951 = vmatpush.bf16.msra.mxu0 %v3033
        %3952 = vmatmul.bf16.gmra.mxu0 %v1096
        %v3953 = vpop.f32.mrf.mxu0
        %v3954 = vadd.f32 %v3941, %v3953
        %v3955 = vpop.f32.mrf.mxu0
        %3956 = vdwg.mxu0
        %3957 = vmatpush.bf16.msra.mxu0 %v3048
        %3958 = vmatpush.bf16.msra.mxu0 %v3047
        %3959 = vmatpush.bf16.msra.mxu0 %v3046
        %3960 = vmatpush.bf16.msra.mxu0 %v3045
        %3961 = vmatpush.bf16.msra.mxu0 %v3044
        %3962 = vmatpush.bf16.msra.mxu0 %v3043
        %3963 = vmatpush.bf16.msra.mxu0 %v3042
        %3964 = vmatpush.bf16.msra.mxu0 %v3041
        %3965 = vmatmul.bf16.gmra.mxu0 %v1097
        %v3966 = vpop.f32.mrf.mxu0
        %v3967 = vadd.f32 %v3954, %v3966
        %v3968 = vpop.f32.mrf.mxu0
        %3969 = vdwg.mxu0
        %3970 = vmatpush.bf16.msra.mxu0 %v3056
        %3971 = vmatpush.bf16.msra.mxu0 %v3055
        %3972 = vmatpush.bf16.msra.mxu0 %v3054
        %3973 = vmatpush.bf16.msra.mxu0 %v3053
        %3974 = vmatpush.bf16.msra.mxu0 %v3052
        %3975 = vmatpush.bf16.msra.mxu0 %v3051
        %3976 = vmatpush.bf16.msra.mxu0 %v3050
        %3977 = vmatpush.bf16.msra.mxu0 %v3049
        %3978 = vmatmul.bf16.gmra.mxu0 %v1098
        %v3979 = vpop.f32.mrf.mxu0
        %v3980 = vadd.f32 %v3967, %v3979
        %v3981 = vpop.f32.mrf.mxu0
        %3982 = vdwg.mxu0
        %3983 = vmatpush.bf16.msra.mxu0 %v3064
        %3984 = vmatpush.bf16.msra.mxu0 %v3063
        %3985 = vmatpush.bf16.msra.mxu0 %v3062
        %3986 = vmatpush.bf16.msra.mxu0 %v3061
        %3987 = vmatpush.bf16.msra.mxu0 %v3060
        %3988 = vmatpush.bf16.msra.mxu0 %v3059
        %3989 = vmatpush.bf16.msra.mxu0 %v3058
        %3990 = vmatpush.bf16.msra.mxu0 %v3057
        %3991 = vmatmul.bf16.gmra.mxu0 %v1099
        %v3992 = vpop.f32.mrf.mxu0
        %v3993 = vadd.f32 %v3980, %v3992
        %v3994 = vpop.f32.mrf.mxu0
        %3995 = vdwg.mxu0
        %3996 = vmatpush.bf16.msra.mxu0 %v3072
        %3997 = vmatpush.bf16.msra.mxu0 %v3071
        %3998 = vmatpush.bf16.msra.mxu0 %v3070
        %3999 = vmatpush.bf16.msra.mxu0 %v3069
        %4000 = vmatpush.bf16.msra.mxu0 %v3068
        %4001 = vmatpush.bf16.msra.mxu0 %v3067
        %4002 = vmatpush.bf16.msra.mxu0 %v3066
        %4003 = vmatpush.bf16.msra.mxu0 %v3065
        %4004 = vmatmul.bf16.gmra.mxu0 %v1100
        %v4005 = vpop.f32.mrf.mxu0
        %v4006 = vadd.f32 %v3993, %v4005
        %v4007 = vpop.f32.mrf.mxu0
        %4008 = vdwg.mxu0
        %4009 = vmatpush.bf16.msra.mxu0 %v3080
        %4010 = vmatpush.bf16.msra.mxu0 %v3079
        %4011 = vmatpush.bf16.msra.mxu0 %v3078
        %4012 = vmatpush.bf16.msra.mxu0 %v3077
        %4013 = vmatpush.bf16.msra.mxu0 %v3076
        %4014 = vmatpush.bf16.msra.mxu0 %v3075
        %4015 = vmatpush.bf16.msra.mxu0 %v3074
        %4016 = vmatpush.bf16.msra.mxu0 %v3073
        %4017 = vmatmul.bf16.gmra.mxu0 %v1103
        %v4018 = vpop.f32.mrf.mxu0
        %v4019 = vadd.f32 %v4006, %v4018
        %v4020 = vpop.f32.mrf.mxu0
        %4021 = vdwg.mxu0
        %4022 = vmatpush.bf16.msra.mxu0 %v3088
        %4023 = vmatpush.bf16.msra.mxu0 %v3087
        %4024 = vmatpush.bf16.msra.mxu0 %v3086
        %4025 = vmatpush.bf16.msra.mxu0 %v3085
        %4026 = vmatpush.bf16.msra.mxu0 %v3084
        %4027 = vmatpush.bf16.msra.mxu0 %v3083
        %4028 = vmatpush.bf16.msra.mxu0 %v3082
        %4029 = vmatpush.bf16.msra.mxu0 %v3081
        %4030 = vmatmul.bf16.gmra.mxu0 %v1104
        %v4031 = vpop.f32.mrf.mxu0
        %v4032 = vadd.f32 %v4019, %v4031
        %v4033 = vpop.f32.mrf.mxu0
        %4034 = vdwg.mxu0
        %4035 = vmatpush.bf16.msra.mxu0 %v3096
        %4036 = vmatpush.bf16.msra.mxu0 %v3095
        %4037 = vmatpush.bf16.msra.mxu0 %v3094
        %4038 = vmatpush.bf16.msra.mxu0 %v3093
        %4039 = vmatpush.bf16.msra.mxu0 %v3092
        %4040 = vmatpush.bf16.msra.mxu0 %v3091
        %4041 = vmatpush.bf16.msra.mxu0 %v3090
        %4042 = vmatpush.bf16.msra.mxu0 %v3089
        %4043 = vmatmul.bf16.gmra.mxu0 %v1105
        %v4044 = vpop.f32.mrf.mxu0
        %v4045 = vadd.f32 %v4032, %v4044
        %v4046 = vpop.f32.mrf.mxu0
        %4047 = vdwg.mxu0
        %4048 = vmatpush.bf16.msra.mxu0 %v3104
        %4049 = vmatpush.bf16.msra.mxu0 %v3103
        %4050 = vmatpush.bf16.msra.mxu0 %v3102
        %4051 = vmatpush.bf16.msra.mxu0 %v3101
        %4052 = vmatpush.bf16.msra.mxu0 %v3100
        %4053 = vmatpush.bf16.msra.mxu0 %v3099
        %4054 = vmatpush.bf16.msra.mxu0 %v3098
        %4055 = vmatpush.bf16.msra.mxu0 %v3097
        %4056 = vmatmul.bf16.gmra.mxu0 %v1106
        %v4057 = vpop.f32.mrf.mxu0
        %v4058 = vadd.f32 %v4045, %v4057
        %v4059 = vpop.f32.mrf.mxu0
        %4060 = vdwg.mxu0
        %4061 = vmatpush.bf16.msra.mxu0 %v3112
        %4062 = vmatpush.bf16.msra.mxu0 %v3111
        %4063 = vmatpush.bf16.msra.mxu0 %v3110
        %4064 = vmatpush.bf16.msra.mxu0 %v3109
        %4065 = vmatpush.bf16.msra.mxu0 %v3108
        %4066 = vmatpush.bf16.msra.mxu0 %v3107
        %4067 = vmatpush.bf16.msra.mxu0 %v3106
        %4068 = vmatpush.bf16.msra.mxu0 %v3105
        %4069 = vmatmul.bf16.gmra.mxu0 %v1107
        %v4070 = vpop.f32.mrf.mxu0
        %v4071 = vadd.f32 %v4058, %v4070
        %v4072 = vpop.f32.mrf.mxu0
        %4073 = vdwg.mxu0
        %4074 = vmatpush.bf16.msra.mxu0 %v3120
        %4075 = vmatpush.bf16.msra.mxu0 %v3119
        %4076 = vmatpush.bf16.msra.mxu0 %v3118
        %4077 = vmatpush.bf16.msra.mxu0 %v3117
        %4078 = vmatpush.bf16.msra.mxu0 %v3116
        %4079 = vmatpush.bf16.msra.mxu0 %v3115
        %4080 = vmatpush.bf16.msra.mxu0 %v3114
        %4081 = vmatpush.bf16.msra.mxu0 %v3113
        %4082 = vmatmul.bf16.gmra.mxu0 %v1108
        %v4083 = vpop.f32.mrf.mxu0
        %v4084 = vadd.f32 %v4071, %v4083
        %v4085 = vpop.f32.mrf.mxu0
        %4086 = vdwg.mxu0
        %4087 = vmatpush.bf16.msra.mxu0 %v3128
        %4088 = vmatpush.bf16.msra.mxu0 %v3127
        %4089 = vmatpush.bf16.msra.mxu0 %v3126
        %4090 = vmatpush.bf16.msra.mxu0 %v3125
        %4091 = vmatpush.bf16.msra.mxu0 %v3124
        %4092 = vmatpush.bf16.msra.mxu0 %v3123
        %4093 = vmatpush.bf16.msra.mxu0 %v3122
        %4094 = vmatpush.bf16.msra.mxu0 %v3121
        %4095 = vmatmul.bf16.gmra.mxu0 %v1109
        %v4096 = vpop.f32.mrf.mxu0
        %v4097 = vadd.f32 %v4084, %v4096
        %v4098 = vpop.f32.mrf.mxu0
        %4099 = vdwg.mxu0
        %4100 = vmatpush.bf16.msra.mxu0 %v3136
        %4101 = vmatpush.bf16.msra.mxu0 %v3135
        %4102 = vmatpush.bf16.msra.mxu0 %v3134
        %4103 = vmatpush.bf16.msra.mxu0 %v3133
        %4104 = vmatpush.bf16.msra.mxu0 %v3132
        %4105 = vmatpush.bf16.msra.mxu0 %v3131
        %4106 = vmatpush.bf16.msra.mxu0 %v3130
        %4107 = vmatpush.bf16.msra.mxu0 %v3129
        %4108 = vmatmul.bf16.gmra.mxu0 %v1110
        %v4109 = vpop.f32.mrf.mxu0
        %v4110 = vadd.f32 %v4097, %v4109
        %v4111 = vpop.f32.mrf.mxu0
        %4112 = vdwg.mxu0
        %4113 = vmatpush.bf16.msra.mxu0 %v3144
        %4114 = vmatpush.bf16.msra.mxu0 %v3143
        %4115 = vmatpush.bf16.msra.mxu0 %v3142
        %4116 = vmatpush.bf16.msra.mxu0 %v3141
        %4117 = vmatpush.bf16.msra.mxu0 %v3140
        %4118 = vmatpush.bf16.msra.mxu0 %v3139
        %4119 = vmatpush.bf16.msra.mxu0 %v3138
        %4120 = vmatpush.bf16.msra.mxu0 %v3137
        %4121 = vmatmul.bf16.gmra.mxu0 %v1113
        %v4122 = vpop.f32.mrf.mxu0
        %v4123 = vadd.f32 %v4110, %v4122
        %v4124 = vpop.f32.mrf.mxu0
        %4125 = vdwg.mxu0
        %4126 = vmatpush.bf16.msra.mxu0 %v3152
        %4127 = vmatpush.bf16.msra.mxu0 %v3151
        %4128 = vmatpush.bf16.msra.mxu0 %v3150
        %4129 = vmatpush.bf16.msra.mxu0 %v3149
        %4130 = vmatpush.bf16.msra.mxu0 %v3148
        %4131 = vmatpush.bf16.msra.mxu0 %v3147
        %4132 = vmatpush.bf16.msra.mxu0 %v3146
        %4133 = vmatpush.bf16.msra.mxu0 %v3145
        %4134 = vmatmul.bf16.gmra.mxu0 %v1114
        %v4135 = vpop.f32.mrf.mxu0
        %v4136 = vadd.f32 %v4123, %v4135
        %v4137 = vpop.f32.mrf.mxu0
        %4138 = vdwg.mxu0
        %4139 = vmatpush.bf16.msra.mxu0 %v3160
        %4140 = vmatpush.bf16.msra.mxu0 %v3159
        %4141 = vmatpush.bf16.msra.mxu0 %v3158
        %4142 = vmatpush.bf16.msra.mxu0 %v3157
        %4143 = vmatpush.bf16.msra.mxu0 %v3156
        %4144 = vmatpush.bf16.msra.mxu0 %v3155
        %4145 = vmatpush.bf16.msra.mxu0 %v3154
        %4146 = vmatpush.bf16.msra.mxu0 %v3153
        %4147 = vmatmul.bf16.gmra.mxu0 %v1115
        %v4148 = vpop.f32.mrf.mxu0
        %v4149 = vadd.f32 %v4136, %v4148
        %v4150 = vpop.f32.mrf.mxu0
        %4151 = vdwg.mxu0
        %4152 = vmatpush.bf16.msra.mxu0 %v3168
        %4153 = vmatpush.bf16.msra.mxu0 %v3167
        %4154 = vmatpush.bf16.msra.mxu0 %v3166
        %4155 = vmatpush.bf16.msra.mxu0 %v3165
        %4156 = vmatpush.bf16.msra.mxu0 %v3164
        %4157 = vmatpush.bf16.msra.mxu0 %v3163
        %4158 = vmatpush.bf16.msra.mxu0 %v3162
        %4159 = vmatpush.bf16.msra.mxu0 %v3161
        %4160 = vmatmul.bf16.gmra.mxu0 %v1116
        %v4161 = vpop.f32.mrf.mxu0
        %v4162 = vadd.f32 %v4149, %v4161
        %v4163 = vpop.f32.mrf.mxu0
        %4164 = vdwg.mxu0
        %4165 = vmatpush.bf16.msra.mxu0 %v3176
        %4166 = vmatpush.bf16.msra.mxu0 %v3175
        %4167 = vmatpush.bf16.msra.mxu0 %v3174
        %4168 = vmatpush.bf16.msra.mxu0 %v3173
        %4169 = vmatpush.bf16.msra.mxu0 %v3172
        %4170 = vmatpush.bf16.msra.mxu0 %v3171
        %4171 = vmatpush.bf16.msra.mxu0 %v3170
        %4172 = vmatpush.bf16.msra.mxu0 %v3169
        %4173 = vmatmul.bf16.gmra.mxu0 %v1117
        %v4174 = vpop.f32.mrf.mxu0
        %v4175 = vadd.f32 %v4162, %v4174
        %v4176 = vpop.f32.mrf.mxu0
        %4177 = vdwg.mxu0
        %4178 = vmatpush.bf16.msra.mxu0 %v3184
        %4179 = vmatpush.bf16.msra.mxu0 %v3183
        %4180 = vmatpush.bf16.msra.mxu0 %v3182
        %4181 = vmatpush.bf16.msra.mxu0 %v3181
        %4182 = vmatpush.bf16.msra.mxu0 %v3180
        %4183 = vmatpush.bf16.msra.mxu0 %v3179
        %4184 = vmatpush.bf16.msra.mxu0 %v3178
        %4185 = vmatpush.bf16.msra.mxu0 %v3177
        %4186 = vmatmul.bf16.gmra.mxu0 %v1118
        %v4187 = vpop.f32.mrf.mxu0
        %v4188 = vadd.f32 %v4175, %v4187
        %v4189 = vpop.f32.mrf.mxu0
        %4190 = vdwg.mxu0
        %4191 = vmatpush.bf16.msra.mxu0 %v3192
        %4192 = vmatpush.bf16.msra.mxu0 %v3191
        %4193 = vmatpush.bf16.msra.mxu0 %v3190
        %4194 = vmatpush.bf16.msra.mxu0 %v3189
        %4195 = vmatpush.bf16.msra.mxu0 %v3188
        %4196 = vmatpush.bf16.msra.mxu0 %v3187
        %4197 = vmatpush.bf16.msra.mxu0 %v3186
        %4198 = vmatpush.bf16.msra.mxu0 %v3185
        %4199 = vmatmul.bf16.gmra.mxu0 %v1119
        %v4200 = vpop.f32.mrf.mxu0
        %v4201 = vadd.f32 %v4188, %v4200
        %v4202 = vpop.f32.mrf.mxu0
        %4203 = vdwg.mxu0
        %4204 = vmatpush.bf16.msra.mxu0 %v3200
        %4205 = vmatpush.bf16.msra.mxu0 %v3199
        %4206 = vmatpush.bf16.msra.mxu0 %v3198
        %4207 = vmatpush.bf16.msra.mxu0 %v3197
        %4208 = vmatpush.bf16.msra.mxu0 %v3196
        %4209 = vmatpush.bf16.msra.mxu0 %v3195
        %4210 = vmatpush.bf16.msra.mxu0 %v3194
        %4211 = vmatpush.bf16.msra.mxu0 %v3193
        %4212 = vmatmul.bf16.gmra.mxu0 %v1120
        %v4213 = vpop.f32.mrf.mxu0
        %v4214 = vadd.f32 %v4201, %v4213
        %v4215 = vpop.f32.mrf.mxu0
        %4216 = vdwg.mxu0
        %4217 = vmatpush.bf16.msra.mxu0 %v3208
        %4218 = vmatpush.bf16.msra.mxu0 %v3207
        %4219 = vmatpush.bf16.msra.mxu0 %v3206
        %4220 = vmatpush.bf16.msra.mxu0 %v3205
        %4221 = vmatpush.bf16.msra.mxu0 %v3204
        %4222 = vmatpush.bf16.msra.mxu0 %v3203
        %4223 = vmatpush.bf16.msra.mxu0 %v3202
        %4224 = vmatpush.bf16.msra.mxu0 %v3201
        %4225 = vmatmul.bf16.gmra.mxu0 %v1123
        %v4226 = vpop.f32.mrf.mxu0
        %v4227 = vadd.f32 %v4214, %v4226
        %v4228 = vpop.f32.mrf.mxu0
        %4229 = vdwg.mxu0
        %4230 = vmatpush.bf16.msra.mxu0 %v3216
        %4231 = vmatpush.bf16.msra.mxu0 %v3215
        %4232 = vmatpush.bf16.msra.mxu0 %v3214
        %4233 = vmatpush.bf16.msra.mxu0 %v3213
        %4234 = vmatpush.bf16.msra.mxu0 %v3212
        %4235 = vmatpush.bf16.msra.mxu0 %v3211
        %4236 = vmatpush.bf16.msra.mxu0 %v3210
        %4237 = vmatpush.bf16.msra.mxu0 %v3209
        %4238 = vmatmul.bf16.gmra.mxu0 %v1124
        %v4239 = vpop.f32.mrf.mxu0
        %v4240 = vadd.f32 %v4227, %v4239
        %v4241 = vpop.f32.mrf.mxu0
        %4242 = vdwg.mxu0
        %4243 = vmatpush.bf16.msra.mxu0 %v3224
        %4244 = vmatpush.bf16.msra.mxu0 %v3223
        %4245 = vmatpush.bf16.msra.mxu0 %v3222
        %4246 = vmatpush.bf16.msra.mxu0 %v3221
        %4247 = vmatpush.bf16.msra.mxu0 %v3220
        %4248 = vmatpush.bf16.msra.mxu0 %v3219
        %4249 = vmatpush.bf16.msra.mxu0 %v3218
        %4250 = vmatpush.bf16.msra.mxu0 %v3217
        %4251 = vmatmul.bf16.gmra.mxu0 %v1125
        %v4252 = vpop.f32.mrf.mxu0
        %v4253 = vadd.f32 %v4240, %v4252
        %v4254 = vpop.f32.mrf.mxu0
        %4255 = vdwg.mxu0
        %4256 = vmatpush.bf16.msra.mxu0 %v3232
        %4257 = vmatpush.bf16.msra.mxu0 %v3231
        %4258 = vmatpush.bf16.msra.mxu0 %v3230
        %4259 = vmatpush.bf16.msra.mxu0 %v3229
        %4260 = vmatpush.bf16.msra.mxu0 %v3228
        %4261 = vmatpush.bf16.msra.mxu0 %v3227
        %4262 = vmatpush.bf16.msra.mxu0 %v3226
        %4263 = vmatpush.bf16.msra.mxu0 %v3225
        %4264 = vmatmul.bf16.gmra.mxu0 %v1126
        %v4265 = vpop.f32.mrf.mxu0
        %v4266 = vadd.f32 %v4253, %v4265
        %v4267 = vpop.f32.mrf.mxu0
        %4268 = vdwg.mxu0
        %4269 = vmatpush.bf16.msra.mxu0 %v3240
        %4270 = vmatpush.bf16.msra.mxu0 %v3239
        %4271 = vmatpush.bf16.msra.mxu0 %v3238
        %4272 = vmatpush.bf16.msra.mxu0 %v3237
        %4273 = vmatpush.bf16.msra.mxu0 %v3236
        %4274 = vmatpush.bf16.msra.mxu0 %v3235
        %4275 = vmatpush.bf16.msra.mxu0 %v3234
        %4276 = vmatpush.bf16.msra.mxu0 %v3233
        %4277 = vmatmul.bf16.gmra.mxu0 %v1127
        %v4278 = vpop.f32.mrf.mxu0
        %v4279 = vadd.f32 %v4266, %v4278
        %v4280 = vpop.f32.mrf.mxu0
        %4281 = vdwg.mxu0
        %4282 = vmatpush.bf16.msra.mxu0 %v3248
        %4283 = vmatpush.bf16.msra.mxu0 %v3247
        %4284 = vmatpush.bf16.msra.mxu0 %v3246
        %4285 = vmatpush.bf16.msra.mxu0 %v3245
        %4286 = vmatpush.bf16.msra.mxu0 %v3244
        %4287 = vmatpush.bf16.msra.mxu0 %v3243
        %4288 = vmatpush.bf16.msra.mxu0 %v3242
        %4289 = vmatpush.bf16.msra.mxu0 %v3241
        %4290 = vmatmul.bf16.gmra.mxu0 %v1128
        %v4291 = vpop.f32.mrf.mxu0
        %v4292 = vadd.f32 %v4279, %v4291
        %v4293 = vpop.f32.mrf.mxu0
        %4294 = vdwg.mxu0
        %4295 = vmatpush.bf16.msra.mxu0 %v3256
        %4296 = vmatpush.bf16.msra.mxu0 %v3255
        %4297 = vmatpush.bf16.msra.mxu0 %v3254
        %4298 = vmatpush.bf16.msra.mxu0 %v3253
        %4299 = vmatpush.bf16.msra.mxu0 %v3252
        %4300 = vmatpush.bf16.msra.mxu0 %v3251
        %4301 = vmatpush.bf16.msra.mxu0 %v3250
        %4302 = vmatpush.bf16.msra.mxu0 %v3249
        %4303 = vmatmul.bf16.gmra.mxu0 %v1129
        %v4304 = vpop.f32.mrf.mxu0
        %v4305 = vadd.f32 %v4292, %v4304
        %v4306 = vpop.f32.mrf.mxu0
        %4307 = vdwg.mxu0
        %4308 = vmatpush.bf16.msra.mxu0 %v3264
        %4309 = vmatpush.bf16.msra.mxu0 %v3263
        %4310 = vmatpush.bf16.msra.mxu0 %v3262
        %4311 = vmatpush.bf16.msra.mxu0 %v3261
        %4312 = vmatpush.bf16.msra.mxu0 %v3260
        %4313 = vmatpush.bf16.msra.mxu0 %v3259
        %4314 = vmatpush.bf16.msra.mxu0 %v3258
        %4315 = vmatpush.bf16.msra.mxu0 %v3257
        %4316 = vmatmul.bf16.gmra.mxu0 %v1130
        %v4317 = vpop.f32.mrf.mxu0
        %v4318 = vadd.f32 %v4305, %v4317
        %v4319 = vpop.f32.mrf.mxu0
        %4320 = vdwg.mxu0
        %4321 = vmatpush.bf16.msra.mxu0 %v3272
        %4322 = vmatpush.bf16.msra.mxu0 %v3271
        %4323 = vmatpush.bf16.msra.mxu0 %v3270
        %4324 = vmatpush.bf16.msra.mxu0 %v3269
        %4325 = vmatpush.bf16.msra.mxu0 %v3268
        %4326 = vmatpush.bf16.msra.mxu0 %v3267
        %4327 = vmatpush.bf16.msra.mxu0 %v3266
        %4328 = vmatpush.bf16.msra.mxu0 %v3265
        %4329 = vmatmul.bf16.gmra.mxu0 %v1133
        %v4330 = vpop.f32.mrf.mxu0
        %v4331 = vadd.f32 %v4318, %v4330
        %v4332 = vpop.f32.mrf.mxu0
        %4333 = vdwg.mxu0
        %4334 = vmatpush.bf16.msra.mxu0 %v3280
        %4335 = vmatpush.bf16.msra.mxu0 %v3279
        %4336 = vmatpush.bf16.msra.mxu0 %v3278
        %4337 = vmatpush.bf16.msra.mxu0 %v3277
        %4338 = vmatpush.bf16.msra.mxu0 %v3276
        %4339 = vmatpush.bf16.msra.mxu0 %v3275
        %4340 = vmatpush.bf16.msra.mxu0 %v3274
        %4341 = vmatpush.bf16.msra.mxu0 %v3273
        %4342 = vmatmul.bf16.gmra.mxu0 %v1134
        %v4343 = vpop.f32.mrf.mxu0
        %v4344 = vadd.f32 %v4331, %v4343
        %v4345 = vpop.f32.mrf.mxu0
        %4346 = vdwg.mxu0
        %4347 = vmatpush.bf16.msra.mxu0 %v3288
        %4348 = vmatpush.bf16.msra.mxu0 %v3287
        %4349 = vmatpush.bf16.msra.mxu0 %v3286
        %4350 = vmatpush.bf16.msra.mxu0 %v3285
        %4351 = vmatpush.bf16.msra.mxu0 %v3284
        %4352 = vmatpush.bf16.msra.mxu0 %v3283
        %4353 = vmatpush.bf16.msra.mxu0 %v3282
        %4354 = vmatpush.bf16.msra.mxu0 %v3281
        %4355 = vmatmul.bf16.gmra.mxu0 %v1135
        %v4356 = vpop.f32.mrf.mxu0
        %v4357 = vadd.f32 %v4344, %v4356
        %v4358 = vpop.f32.mrf.mxu0
        %4359 = vdwg.mxu0
        %4360 = vmatpush.bf16.msra.mxu0 %v3296
        %4361 = vmatpush.bf16.msra.mxu0 %v3295
        %4362 = vmatpush.bf16.msra.mxu0 %v3294
        %4363 = vmatpush.bf16.msra.mxu0 %v3293
        %4364 = vmatpush.bf16.msra.mxu0 %v3292
        %4365 = vmatpush.bf16.msra.mxu0 %v3291
        %4366 = vmatpush.bf16.msra.mxu0 %v3290
        %4367 = vmatpush.bf16.msra.mxu0 %v3289
        %4368 = vmatmul.bf16.gmra.mxu0 %v1136
        %v4369 = vpop.f32.mrf.mxu0
        %v4370 = vadd.f32 %v4357, %v4369
        %v4371 = vpop.f32.mrf.mxu0
        %4372 = vdwg.mxu0
        %4373 = vmatpush.bf16.msra.mxu0 %v3304
        %4374 = vmatpush.bf16.msra.mxu0 %v3303
        %4375 = vmatpush.bf16.msra.mxu0 %v3302
        %4376 = vmatpush.bf16.msra.mxu0 %v3301
        %4377 = vmatpush.bf16.msra.mxu0 %v3300
        %4378 = vmatpush.bf16.msra.mxu0 %v3299
        %4379 = vmatpush.bf16.msra.mxu0 %v3298
        %4380 = vmatpush.bf16.msra.mxu0 %v3297
        %4381 = vmatmul.bf16.gmra.mxu0 %v1137
        %v4382 = vpop.f32.mrf.mxu0
        %v4383 = vadd.f32 %v4370, %v4382
        %v4384 = vpop.f32.mrf.mxu0
        %4385 = vdwg.mxu0
        %4386 = vmatpush.bf16.msra.mxu0 %v3312
        %4387 = vmatpush.bf16.msra.mxu0 %v3311
        %4388 = vmatpush.bf16.msra.mxu0 %v3310
        %4389 = vmatpush.bf16.msra.mxu0 %v3309
        %4390 = vmatpush.bf16.msra.mxu0 %v3308
        %4391 = vmatpush.bf16.msra.mxu0 %v3307
        %4392 = vmatpush.bf16.msra.mxu0 %v3306
        %4393 = vmatpush.bf16.msra.mxu0 %v3305
        %4394 = vmatmul.bf16.gmra.mxu0 %v1138
        %v4395 = vpop.f32.mrf.mxu0
        %v4396 = vadd.f32 %v4383, %v4395
        %v4397 = vpop.f32.mrf.mxu0
        %4398 = vdwg.mxu0
        %4399 = vmatpush.bf16.msra.mxu0 %v3320
        %4400 = vmatpush.bf16.msra.mxu0 %v3319
        %4401 = vmatpush.bf16.msra.mxu0 %v3318
        %4402 = vmatpush.bf16.msra.mxu0 %v3317
        %4403 = vmatpush.bf16.msra.mxu0 %v3316
        %4404 = vmatpush.bf16.msra.mxu0 %v3315
        %4405 = vmatpush.bf16.msra.mxu0 %v3314
        %4406 = vmatpush.bf16.msra.mxu0 %v3313
        %4407 = vmatmul.bf16.gmra.mxu0 %v1139
        %v4408 = vpop.f32.mrf.mxu0
        %v4409 = vadd.f32 %v4396, %v4408
        %v4410 = vpop.f32.mrf.mxu0
        %4411 = vdwg.mxu0
        %4412 = vmatpush.bf16.msra.mxu0 %v3328
        %4413 = vmatpush.bf16.msra.mxu0 %v3327
        %4414 = vmatpush.bf16.msra.mxu0 %v3326
        %4415 = vmatpush.bf16.msra.mxu0 %v3325
        %4416 = vmatpush.bf16.msra.mxu0 %v3324
        %4417 = vmatpush.bf16.msra.mxu0 %v3323
        %4418 = vmatpush.bf16.msra.mxu0 %v3322
        %4419 = vmatpush.bf16.msra.mxu0 %v3321
        %4420 = vmatmul.bf16.gmra.mxu0 %v1140
        %v4421 = vpop.f32.mrf.mxu0
        %v4422 = vadd.f32 %v4409, %v4421
        %v4423 = vpop.f32.mrf.mxu0
        %4424 = vdwg.mxu0
        %4425 = vmatpush.bf16.msra.mxu0 %v3336
        %4426 = vmatpush.bf16.msra.mxu0 %v3335
        %4427 = vmatpush.bf16.msra.mxu0 %v3334
        %4428 = vmatpush.bf16.msra.mxu0 %v3333
        %4429 = vmatpush.bf16.msra.mxu0 %v3332
        %4430 = vmatpush.bf16.msra.mxu0 %v3331
        %4431 = vmatpush.bf16.msra.mxu0 %v3330
        %4432 = vmatpush.bf16.msra.mxu0 %v3329
        %4433 = vmatmul.bf16.gmra.mxu0 %v1143
        %v4434 = vpop.f32.mrf.mxu0
        %v4435 = vadd.f32 %v4422, %v4434
        %v4436 = vpop.f32.mrf.mxu0
        %4437 = vdwg.mxu0
        %4438 = vmatpush.bf16.msra.mxu0 %v3344
        %4439 = vmatpush.bf16.msra.mxu0 %v3343
        %4440 = vmatpush.bf16.msra.mxu0 %v3342
        %4441 = vmatpush.bf16.msra.mxu0 %v3341
        %4442 = vmatpush.bf16.msra.mxu0 %v3340
        %4443 = vmatpush.bf16.msra.mxu0 %v3339
        %4444 = vmatpush.bf16.msra.mxu0 %v3338
        %4445 = vmatpush.bf16.msra.mxu0 %v3337
        %4446 = vmatmul.bf16.gmra.mxu0 %v1144
        %v4447 = vpop.f32.mrf.mxu0
        %v4448 = vadd.f32 %v4435, %v4447
        %v4449 = vpop.f32.mrf.mxu0
        %4450 = vdwg.mxu0
        %4451 = vmatpush.bf16.msra.mxu0 %v3352
        %4452 = vmatpush.bf16.msra.mxu0 %v3351
        %4453 = vmatpush.bf16.msra.mxu0 %v3350
        %4454 = vmatpush.bf16.msra.mxu0 %v3349
        %4455 = vmatpush.bf16.msra.mxu0 %v3348
        %4456 = vmatpush.bf16.msra.mxu0 %v3347
        %4457 = vmatpush.bf16.msra.mxu0 %v3346
        %4458 = vmatpush.bf16.msra.mxu0 %v3345
        %4459 = vmatmul.bf16.gmra.mxu0 %v1145
        %v4460 = vpop.f32.mrf.mxu0
        %v4461 = vadd.f32 %v4448, %v4460
        %v4462 = vpop.f32.mrf.mxu0
        %4463 = vdwg.mxu0
        %4464 = vmatpush.bf16.msra.mxu0 %v3360
        %4465 = vmatpush.bf16.msra.mxu0 %v3359
        %4466 = vmatpush.bf16.msra.mxu0 %v3358
        %4467 = vmatpush.bf16.msra.mxu0 %v3357
        %4468 = vmatpush.bf16.msra.mxu0 %v3356
        %4469 = vmatpush.bf16.msra.mxu0 %v3355
        %4470 = vmatpush.bf16.msra.mxu0 %v3354
        %4471 = vmatpush.bf16.msra.mxu0 %v3353
        %4472 = vmatmul.bf16.gmra.mxu0 %v1146
        %v4473 = vpop.f32.mrf.mxu0
        %v4474 = vadd.f32 %v4461, %v4473
        %v4475 = vpop.f32.mrf.mxu0
        %4476 = vdwg.mxu0
        %4477 = vmatpush.bf16.msra.mxu0 %v3368
        %4478 = vmatpush.bf16.msra.mxu0 %v3367
        %4479 = vmatpush.bf16.msra.mxu0 %v3366
        %4480 = vmatpush.bf16.msra.mxu0 %v3365
        %4481 = vmatpush.bf16.msra.mxu0 %v3364
        %4482 = vmatpush.bf16.msra.mxu0 %v3363
        %4483 = vmatpush.bf16.msra.mxu0 %v3362
        %4484 = vmatpush.bf16.msra.mxu0 %v3361
        %4485 = vmatmul.bf16.gmra.mxu0 %v1147
        %v4486 = vpop.f32.mrf.mxu0
        %v4487 = vadd.f32 %v4474, %v4486
        %v4488 = vpop.f32.mrf.mxu0
        %4489 = vdwg.mxu0
        %4490 = vmatpush.bf16.msra.mxu0 %v3376
        %4491 = vmatpush.bf16.msra.mxu0 %v3375
        %4492 = vmatpush.bf16.msra.mxu0 %v3374
        %4493 = vmatpush.bf16.msra.mxu0 %v3373
        %4494 = vmatpush.bf16.msra.mxu0 %v3372
        %4495 = vmatpush.bf16.msra.mxu0 %v3371
        %4496 = vmatpush.bf16.msra.mxu0 %v3370
        %4497 = vmatpush.bf16.msra.mxu0 %v3369
        %4498 = vmatmul.bf16.gmra.mxu0 %v1148
        %v4499 = vpop.f32.mrf.mxu0
        %v4500 = vadd.f32 %v4487, %v4499
        %v4501 = vpop.f32.mrf.mxu0
        %4502 = vdwg.mxu0
        %4503 = vmatpush.bf16.msra.mxu0 %v3384
        %4504 = vmatpush.bf16.msra.mxu0 %v3383
        %4505 = vmatpush.bf16.msra.mxu0 %v3382
        %4506 = vmatpush.bf16.msra.mxu0 %v3381
        %4507 = vmatpush.bf16.msra.mxu0 %v3380
        %4508 = vmatpush.bf16.msra.mxu0 %v3379
        %4509 = vmatpush.bf16.msra.mxu0 %v3378
        %4510 = vmatpush.bf16.msra.mxu0 %v3377
        %4511 = vmatmul.bf16.gmra.mxu0 %v1149
        %v4512 = vpop.f32.mrf.mxu0
        %v4513 = vadd.f32 %v4500, %v4512
        %v4514 = vpop.f32.mrf.mxu0
        %4515 = vdwg.mxu0
        %4516 = vmatpush.bf16.msra.mxu0 %v3392
        %4517 = vmatpush.bf16.msra.mxu0 %v3391
        %4518 = vmatpush.bf16.msra.mxu0 %v3390
        %4519 = vmatpush.bf16.msra.mxu0 %v3389
        %4520 = vmatpush.bf16.msra.mxu0 %v3388
        %4521 = vmatpush.bf16.msra.mxu0 %v3387
        %4522 = vmatpush.bf16.msra.mxu0 %v3386
        %4523 = vmatpush.bf16.msra.mxu0 %v3385
        %4524 = vmatmul.bf16.gmra.mxu0 %v1150
        %v4525 = vpop.f32.mrf.mxu0
        %v4526 = vadd.f32 %v4513, %v4525
        %v4527 = vpop.f32.mrf.mxu0
        %4528 = vdwg.mxu0
        %4529 = vmatpush.bf16.msra.mxu0 %v3400
        %4530 = vmatpush.bf16.msra.mxu0 %v3399
        %4531 = vmatpush.bf16.msra.mxu0 %v3398
        %4532 = vmatpush.bf16.msra.mxu0 %v3397
        %4533 = vmatpush.bf16.msra.mxu0 %v3396
        %4534 = vmatpush.bf16.msra.mxu0 %v3395
        %4535 = vmatpush.bf16.msra.mxu0 %v3394
        %4536 = vmatpush.bf16.msra.mxu0 %v3393
        %4537 = vmatmul.bf16.gmra.mxu0 %v1153
        %v4538 = vpop.f32.mrf.mxu0
        %v4539 = vadd.f32 %v4526, %v4538
        %v4540 = vpop.f32.mrf.mxu0
        %4541 = vdwg.mxu0
        %4542 = vmatpush.bf16.msra.mxu0 %v3408
        %4543 = vmatpush.bf16.msra.mxu0 %v3407
        %4544 = vmatpush.bf16.msra.mxu0 %v3406
        %4545 = vmatpush.bf16.msra.mxu0 %v3405
        %4546 = vmatpush.bf16.msra.mxu0 %v3404
        %4547 = vmatpush.bf16.msra.mxu0 %v3403
        %4548 = vmatpush.bf16.msra.mxu0 %v3402
        %4549 = vmatpush.bf16.msra.mxu0 %v3401
        %4550 = vmatmul.bf16.gmra.mxu0 %v1154
        %v4551 = vpop.f32.mrf.mxu0
        %v4552 = vadd.f32 %v4539, %v4551
        %v4553 = vpop.f32.mrf.mxu0
        %4554 = vdwg.mxu0
        %4555 = vmatpush.bf16.msra.mxu0 %v3416
        %4556 = vmatpush.bf16.msra.mxu0 %v3415
        %4557 = vmatpush.bf16.msra.mxu0 %v3414
        %4558 = vmatpush.bf16.msra.mxu0 %v3413
        %4559 = vmatpush.bf16.msra.mxu0 %v3412
        %4560 = vmatpush.bf16.msra.mxu0 %v3411
        %4561 = vmatpush.bf16.msra.mxu0 %v3410
        %4562 = vmatpush.bf16.msra.mxu0 %v3409
        %4563 = vmatmul.bf16.gmra.mxu0 %v1155
        %v4564 = vpop.f32.mrf.mxu0
        %v4565 = vadd.f32 %v4552, %v4564
        %v4566 = vpop.f32.mrf.mxu0
        %4567 = vdwg.mxu0
        %4568 = vmatpush.bf16.msra.mxu0 %v3424
        %4569 = vmatpush.bf16.msra.mxu0 %v3423
        %4570 = vmatpush.bf16.msra.mxu0 %v3422
        %4571 = vmatpush.bf16.msra.mxu0 %v3421
        %4572 = vmatpush.bf16.msra.mxu0 %v3420
        %4573 = vmatpush.bf16.msra.mxu0 %v3419
        %4574 = vmatpush.bf16.msra.mxu0 %v3418
        %4575 = vmatpush.bf16.msra.mxu0 %v3417
        %4576 = vmatmul.bf16.gmra.mxu0 %v1156
        %v4577 = vpop.f32.mrf.mxu0
        %v4578 = vadd.f32 %v4565, %v4577
        %v4579 = vpop.f32.mrf.mxu0
        %4580 = vdwg.mxu0
        %4581 = vmatpush.bf16.msra.mxu0 %v3432
        %4582 = vmatpush.bf16.msra.mxu0 %v3431
        %4583 = vmatpush.bf16.msra.mxu0 %v3430
        %4584 = vmatpush.bf16.msra.mxu0 %v3429
        %4585 = vmatpush.bf16.msra.mxu0 %v3428
        %4586 = vmatpush.bf16.msra.mxu0 %v3427
        %4587 = vmatpush.bf16.msra.mxu0 %v3426
        %4588 = vmatpush.bf16.msra.mxu0 %v3425
        %4589 = vmatmul.bf16.gmra.mxu0 %v1157
        %v4590 = vpop.f32.mrf.mxu0
        %v4591 = vadd.f32 %v4578, %v4590
        %v4592 = vpop.f32.mrf.mxu0
        %4593 = vdwg.mxu0
        %4594 = vmatpush.bf16.msra.mxu0 %v3440
        %4595 = vmatpush.bf16.msra.mxu0 %v3439
        %4596 = vmatpush.bf16.msra.mxu0 %v3438
        %4597 = vmatpush.bf16.msra.mxu0 %v3437
        %4598 = vmatpush.bf16.msra.mxu0 %v3436
        %4599 = vmatpush.bf16.msra.mxu0 %v3435
        %4600 = vmatpush.bf16.msra.mxu0 %v3434
        %4601 = vmatpush.bf16.msra.mxu0 %v3433
        %4602 = vmatmul.bf16.gmra.mxu0 %v1158
        %v4603 = vpop.f32.mrf.mxu0
        %v4604 = vadd.f32 %v4591, %v4603
        %v4605 = vpop.f32.mrf.mxu0
        %4606 = vdwg.mxu0
        %4607 = vmatpush.bf16.msra.mxu0 %v3448
        %4608 = vmatpush.bf16.msra.mxu0 %v3447
        %4609 = vmatpush.bf16.msra.mxu0 %v3446
        %4610 = vmatpush.bf16.msra.mxu0 %v3445
        %4611 = vmatpush.bf16.msra.mxu0 %v3444
        %4612 = vmatpush.bf16.msra.mxu0 %v3443
        %4613 = vmatpush.bf16.msra.mxu0 %v3442
        %4614 = vmatpush.bf16.msra.mxu0 %v3441
        %4615 = vmatmul.bf16.gmra.mxu0 %v1159
        %v4616 = vpop.f32.mrf.mxu0
        %v4617 = vadd.f32 %v4604, %v4616
        %v4618 = vpop.f32.mrf.mxu0
        %4619 = vdwg.mxu0
        %4620 = vmatpush.bf16.msra.mxu0 %v3456
        %4621 = vmatpush.bf16.msra.mxu0 %v3455
        %4622 = vmatpush.bf16.msra.mxu0 %v3454
        %4623 = vmatpush.bf16.msra.mxu0 %v3453
        %4624 = vmatpush.bf16.msra.mxu0 %v3452
        %4625 = vmatpush.bf16.msra.mxu0 %v3451
        %4626 = vmatpush.bf16.msra.mxu0 %v3450
        %4627 = vmatpush.bf16.msra.mxu0 %v3449
        %4628 = vmatmul.bf16.gmra.mxu0 %v1160
        %v4629 = vpop.f32.mrf.mxu0
        %v4630 = vadd.f32 %v4617, %v4629
        %v4631 = vpop.f32.mrf.mxu0
        %4632 = vdwg.mxu0
        %v4633 = vadd.f32 %v187, %v4630
        %4634 = vst [vmem:[#allocation2] sm:$0x3] %v4633
        // Predicated region
        $region37: #{network_forward.5} parent=31 // pred_check
          %p4635 = pneg %p101
        $region38: #{network_forward.5} parent=31 // pred_check_branch
          %4637 = sbr.rel (%p4635) target = $region40
        $region39: #{network_forward.5} parent=31 // pred_region
          %4639 = vsyncadd [#allocation3], 0
          %s4641 = sshll.u32 [#allocation2], 4
          %s4642 = int_to_ptr.vmem [resolvable:$true] %s4641
          %s4643 = sshll.u32 %s3, 4
          %s4644 = int_to_ptr.hbm [resolvable:$true] %s4643
          %4646 = dma.vmem_to_hbm [thread:$0]  %s4642, 32, %s4644, [#allocation3]
        $region40: #{network_forward.5} parent=31 // pred_fallthru
          _
        // Predicated region
        $region41: #{network_forward.5} parent=31 // pred_check
          %p4647 = pneg %p101
        $region42: #{network_forward.5} parent=31 // pred_check_branch
          %4649 = sbr.rel (%p4647) target = $region44
        $region43: #{network_forward.5} parent=31 // pred_region
          %4651 = dma.done [#allocation3], 32
        $region44: #{network_forward.5} parent=31 // pred_fallthru
          _
      $region32: #{network_forward.5} parent=5 // pred_fallthru
        _
      %p4652 = scmp.le.s32.totalorder 2, %s10
      // Predicated region
      $region45: #{network_forward.5} parent=5 // pred_check
        %p4653 = pneg %p4652
      $region46: #{network_forward.5} parent=5 // pred_check_branch
        %4655 = sbr.rel (%p4653) target = $region48
      $region47: #{network_forward.5} parent=5 // pred_region
        %s4656 = ssub.s32 %s10, 2
      $region48: #{network_forward.5} parent=5 // pred_fallthru
        _
    $region6: #{network_forward.5} parent=1 // loop_footer
      %s14 = sadd.s32 1, %s10
    $region7: #{network_forward.5} parent=1 // loop_footer_branch
      %9 = sbr.rel target = $region3
    $region8: #{network_forward.5} parent=1 // loop_exit
      _
    %4657 = vsyncpa [#allocation3], 1
    %s4658 = scalar_lea.sflag [#allocation3], 1
    %4659 = vsyncpa %s4658, 1

</llo_original>
